<compile_context>
chip_gen: v6e
topology: v6e:2x2x1
jax: 0.10.0
libtpu: 0.0.40
codegen_flags: <defaults>
</compile_context>

<pallas_src>
import functools

import jax
import jax.numpy as jnp
from jax.experimental import pallas as pl
from jax.experimental.pallas import tpu as pltpu

EPS = 1e-5        # nn.BatchNorm2d default eps
LANES = 128       # output-channel padding target -> lane-dense stores
TM_CAP = 256      # max rows per M tile for the tiled (final) layer
VMEM_LIMIT = 32 * 1024 * 1024


def _round_up(n, m):
    return ((n + m - 1) // m) * m


# ----------------------------------------------------------------------------
# Pallas kernels
# ----------------------------------------------------------------------------
def _fused_conv_bn_kernel(p_ref, w_ref, b_ref, g_ref, be_ref, o_ref, y_ref,
                          *, act, inv_n):
    """Fused  y = patches @ w + b ; BN(batch stats) ; activation ; bf16 store.

    p_ref: (S, M, K) bf16    w_ref: (S, K, Cp) bf16
    b/g/be_ref: (1, Cp) f32  o_ref: (S, M, Cp) bf16
    y_ref: VMEM scratch (S, M, Cp) f32.  S indexes independent sub-convs
    (1 for the encoder, 4 parity classes for the decoder); BN statistics are
    reduced over all S*M rows (matches nn.BatchNorm2d over (B, H, W)).
    """
    S = p_ref.shape[0]
    # pass 1: matmul + bias, keep y in VMEM (f32), accumulate channel sums
    for s in range(S):
        y_s = jnp.dot(p_ref[s], w_ref[s],
                      preferred_element_type=jnp.float32) + b_ref[...]
        y_ref[s] = y_s
        part = jnp.sum(y_s, axis=0, keepdims=True)            # (1, Cp)
        s0 = part if s == 0 else s0 + part
    mean = s0 * inv_n                                          # (1, Cp)
    # pass 2: centered variance (y is VMEM resident -> cheap, no cancellation)
    for s in range(S):
        d = y_ref[s] - mean
        part = jnp.sum(d * d, axis=0, keepdims=True)
        v0 = part if s == 0 else v0 + part
    var = jnp.maximum(v0 * inv_n, 0.0)
    scale = g_ref[...] * jax.lax.rsqrt(var + EPS)              # (1, Cp)
    shift = be_ref[...] - mean * scale
    # pass 3: affine + activation + single bf16 store
    for s in range(S):
        z = y_ref[s] * scale + shift
        if act == "leaky_relu":
            z = jnp.where(z >= 0, z, 0.2 * z)
        else:  # relu
            z = jnp.maximum(z, 0.0)
        o_ref[s] = z.astype(o_ref.dtype)


def _mm_bias_tanh_kernel(p_ref, w_ref, b_ref, o_ref):
    # p_ref: (1, tm, K) bf16   w_ref: (1, K, Cp) bf16   b_ref: (1, Cp) f32
    y = jnp.dot(p_ref[0], w_ref[0],
                preferred_element_type=jnp.float32) + b_ref[...]
    o_ref[0] = jnp.tanh(y).astype(o_ref.dtype)


# ----------------------------------------------------------------------------
# pallas_call wrappers
# ----------------------------------------------------------------------------
def _fused_conv_bn(patches, w2d, bias, gamma, beta, act):
    """patches: (S, M, K) bf16, w2d: (S, K, Cp) bf16, bias/gamma/beta: (1, Cp) f32."""
    S, M, K = patches.shape
    Cp = w2d.shape[-1]
    inv_n = 1.0 / float(S * M)
    cost = pl.CostEstimate(
        flops=2 * S * M * K * Cp + 10 * S * M * Cp,
        transcendentals=Cp,
        bytes_accessed=2 * S * M * K + 2 * S * K * Cp + 2 * S * M * Cp + 12 * Cp)
    kernel = functools.partial(_fused_conv_bn_kernel, act=act, inv_n=inv_n)
    return pl.pallas_call(
        kernel,
        out_shape=jax.ShapeDtypeStruct((S, M, Cp), jnp.bfloat16),
        grid=(1,),
        in_specs=[
            pl.BlockSpec((S, M, K), lambda i: (0, 0, 0)),
            pl.BlockSpec((S, K, Cp), lambda i: (0, 0, 0)),
            pl.BlockSpec((1, Cp), lambda i: (0, 0)),
            pl.BlockSpec((1, Cp), lambda i: (0, 0)),
            pl.BlockSpec((1, Cp), lambda i: (0, 0)),
        ],
        out_specs=pl.BlockSpec((S, M, Cp), lambda i: (0, 0, 0)),
        scratch_shapes=[pltpu.VMEM((S, M, Cp), jnp.float32)],
        compiler_params=pltpu.CompilerParams(
            dimension_semantics=("arbitrary",),
            vmem_limit_bytes=VMEM_LIMIT),
        cost_estimate=cost,
    )(patches, w2d, bias, gamma, beta)


def _mm_bias_tanh(patches, w2d, bias):
    """Final decoder layer (no BN): tiled, parallel matmul + bias + tanh."""
    S, M, K = patches.shape
    Cp = w2d.shape[-1]
    tm = TM_CAP if M >= TM_CAP else _round_up(M, 8)
    Mp = _round_up(M, tm)                   # never an unbounded single tile
    if Mp != M:
        patches = jnp.pad(patches, ((0, 0), (0, Mp - M), (0, 0)))
    mt = Mp // tm
    cost = pl.CostEstimate(
        flops=2 * S * Mp * K * Cp,
        transcendentals=S * Mp * Cp,
        bytes_accessed=2 * S * Mp * K + 2 * S * K * Cp + 2 * S * Mp * Cp)
    out = pl.pallas_call(
        _mm_bias_tanh_kernel,
        out_shape=jax.ShapeDtypeStruct((S, Mp, Cp), jnp.bfloat16),
        grid=(S, mt),
        in_specs=[
            pl.BlockSpec((1, tm, K), lambda s, m: (s, m, 0)),
            pl.BlockSpec((1, K, Cp), lambda s, m: (s, 0, 0)),
            pl.BlockSpec((1, Cp), lambda s, m: (0, 0)),
        ],
        out_specs=pl.BlockSpec((1, tm, Cp), lambda s, m: (s, m, 0)),
        compiler_params=pltpu.CompilerParams(
            dimension_semantics=("parallel", "parallel"),
            vmem_limit_bytes=VMEM_LIMIT),
        cost_estimate=cost,
    )(patches, w2d, bias)
    return out[:, :M] if Mp != M else out


# ----------------------------------------------------------------------------
# Glue (plain JAX, bf16, real channel counts only)
# ----------------------------------------------------------------------------
# TODO(synk): im2col / parity-tap gather still materializes patches in HBM via
# XLA (kk-fold duplication); folding it into the kernel (shifted-window loads
# accumulated over taps) would remove that amplification at larger batch.
def _im2col_nhwc(x, k, stride, pad):
    """NHWC bf16 -> patches (B*Ho*Wo, k*k*C), inner K ordering (kh, kw, c)."""
    B, H, W, C = x.shape
    xp = jnp.pad(x, ((0, 0), (pad, pad), (pad, pad), (0, 0)))
    Ho = (H + 2 * pad - k) // stride + 1
    Wo = (W + 2 * pad - k) // stride + 1
    cols = []
    for kh in range(k):
        for kw in range(k):
            cols.append(xp[:, kh:kh + stride * (Ho - 1) + 1:stride,
                              kw:kw + stride * (Wo - 1) + 1:stride, :])
    p = jnp.stack(cols, axis=3)                            # (B, Ho, Wo, k*k, C)
    return p.reshape(B * Ho * Wo, k * k * C), Ho, Wo


def _deconv_patches(x):
    """Parity patches for ConvTranspose2d(k=4, s=2, p=1) stride decomposition.

    x: (B, H, W, Cin_real) bf16.  Returns (4, B*H*W, 4*Cin) with sub-conv
    order s = rh*2 + rw and inner K ordering (dy, dx, c).
    """
    B, H, W, Cin = x.shape
    xp = jnp.pad(x, ((0, 0), (1, 1), (1, 1), (0, 0)))
    patch_list = []
    for rh in range(2):
        for rw in range(2):
            cols = []
            for dy in range(2):
                for dx in range(2):
                    cols.append(xp[:, rh + dy:rh + dy + H,
                                      rw + dx:rw + dx + W, :])
            patch_list.append(
                jnp.stack(cols, axis=3).reshape(B * H * W, 4 * Cin))
    return jnp.stack(patch_list, axis=0)                   # (4, B*H*W, 4*Cin)


def conv_block(x, lp):
    """x: (B,H,W,Cin_real) bf16 NHWC.  Returns (B,Ho,Wo,Cp) bf16."""
    B = x.shape[0]
    patches, Ho, Wo = _im2col_nhwc(x, 4, 2, 1)
    y = _fused_conv_bn(patches[None], lp["w2d"], lp["b"],
                       lp["gamma"], lp["beta"], "leaky_relu")
    return y.reshape(B, Ho, Wo, -1)


def deconv_block(x, lp, act):
    """x: (B,H,W,Cin_real) bf16 NHWC.  Returns (B,2H,2W,Cp) bf16."""
    B, H, W, _ = x.shape
    patches = _deconv_patches(x)
    if act == "tanh":                                       # final layer, no BN
        y = _mm_bias_tanh(patches, lp["w2d"], lp["b"])
    else:
        y = _fused_conv_bn(patches, lp["w2d"], lp["b"],
                           lp["gamma"], lp["beta"], act)
    Cp = y.shape[-1]
    # interleave the 4 parity sub-grids -> (B, 2H, 2W, Cp)
    y = y.reshape(2, 2, B, H, W, Cp).transpose(2, 3, 0, 4, 1, 5)
    return y.reshape(B, 2 * H, 2 * W, Cp)


# ----------------------------------------------------------------------------
# One-time parameter preparation (transpose / parity-decompose / pad / cast)
# ----------------------------------------------------------------------------
def prepare_params(params):
    prepped = {"enc": [], "dec": []}
    for p in params["enc"]:
        w = p["w"]                                          # (Cout, Cin, 4, 4)
        Cout, Cin = int(w.shape[0]), int(w.shape[1])
        Cp = _round_up(max(Cout, LANES), LANES)
        wt = jnp.transpose(w, (2, 3, 1, 0))                 # (kh, kw, Cin, Cout)
        wt = jnp.pad(wt, ((0, 0), (0, 0), (0, 0), (0, Cp - Cout)))
        prepped["enc"].append(dict(
            w2d=wt.reshape(16 * Cin, Cp).astype(jnp.bfloat16)[None],
            b=jnp.pad(p["b"], (0, Cp - Cout)).reshape(1, -1).astype(jnp.float32),
            gamma=jnp.pad(p["gamma"], (0, Cp - Cout),
                          constant_values=1.0).reshape(1, -1).astype(jnp.float32),
            beta=jnp.pad(p["beta"], (0, Cp - Cout)).reshape(1, -1).astype(jnp.float32),
        ))
    for p in params["dec"]:
        w = p["w"]                                          # (Cin, Cout, 4, 4)
        Cin, Cout = int(w.shape[0]), int(w.shape[1])
        Cp = _round_up(max(Cout, LANES), LANES)
        wt = jnp.transpose(w, (2, 3, 0, 1))                 # (kh, kw, Cin, Cout)
        wt = jnp.pad(wt, ((0, 0), (0, 0), (0, 0), (0, Cp - Cout)))
        w_list = []
        for rh in range(2):
            for rw in range(2):
                khs = (3, 1) if rh == 0 else (2, 0)
                kws = (3, 1) if rw == 0 else (2, 0)
                ws = jnp.stack(
                    [jnp.stack([wt[khs[dy], kws[dx]] for dx in range(2)], axis=0)
                     for dy in range(2)], axis=0)           # (2, 2, Cin, Cp)
                w_list.append(ws.reshape(4 * Cin, Cp))
        prepped["dec"].append(dict(
            w2d=jnp.stack(w_list, axis=0).astype(jnp.bfloat16),   # (4, 4Cin, Cp)
            b=jnp.pad(p["b"], (0, Cp - Cout)).reshape(1, -1).astype(jnp.float32),
            gamma=jnp.pad(p["gamma"], (0, Cp - Cout),
                          constant_values=1.0).reshape(1, -1).astype(jnp.float32),
            beta=jnp.pad(p["beta"], (0, Cp - Cout)).reshape(1, -1).astype(jnp.float32),
        ))
    return prepped


# ----------------------------------------------------------------------------
# VAE forward (mirrors the PyTorch module)
# ----------------------------------------------------------------------------
def vae_forward(prepped, x, mu_h, std_h, *, z_dim, im_chan):
    hd = z_dim // 8
    enc_ch = [im_chan, hd * 2, hd * 4, hd * 8, hd * 16]
    dec_ch = [hd * 16, hd * 8, hd * 4, hd * 2, im_chan]
    B = x.shape[0]

    # NCHW -> NHWC once; cast to bf16 once BEFORE im2col
    h = x.transpose(0, 2, 3, 1).astype(jnp.bfloat16)
    for i, lp in enumerate(prepped["enc"]):
        h = conv_block(h, lp)
        h = h[..., :enc_ch[i + 1]]          # drop lane padding before next K

    # flatten in NCHW order to match torch's .view(B, -1); latent math in f32
    output_encoder = h.transpose(0, 3, 1, 2).reshape(B, -1).astype(jnp.float32)
    # reparameterize: deterministic branch z = mu_h + enc * std_h
    # TODO(synk): the mu_h/std_h=None branch samples torch.randn(...).cuda()
    # (non-deterministic RNG) and has no deterministic Pallas equivalent.
    z = mu_h + output_encoder * std_h

    # decode: .view(B, -1, 2, 2) (NCHW) -> NHWC, bf16
    h = z.reshape(B, -1, 2, 2).transpose(0, 2, 3, 1).astype(jnp.bfloat16)
    n_dec = len(prepped["dec"])
    for i, lp in enumerate(prepped["dec"]):
        final = i == n_dec - 1
        h = deconv_block(h, lp, act="tanh" if final else "relu")
        h = h[..., :dec_ch[i + 1]]          # drop lane padding (incl. final 2ch)
    recon = h.astype(jnp.float32).transpose(0, 3, 1, 2)     # back to NCHW f32
    return recon, z, z, (z, output_encoder)


def init_params(key, z_dim=64, im_chan=2):
    hd = z_dim // 8
    enc_ch = [im_chan, hd * 2, hd * 4, hd * 8, hd * 16]
    dec_ch = [hd * 16, hd * 8, hd * 4, hd * 2, im_chan]
    params = {"enc": [], "dec": []}
    for i in range(4):
        cin, cout = enc_ch[i], enc_ch[i + 1]
        key, k1, k2, k3, k4 = jax.random.split(key, 5)
        params["enc"].append(dict(
            w=jax.random.normal(k1, (cout, cin, 4, 4), jnp.float32) * 0.05,
            b=jax.random.normal(k2, (cout,), jnp.float32) * 0.01,
            gamma=1.0 + jax.random.normal(k3, (cout,), jnp.float32) * 0.01,
            beta=jax.random.normal(k4, (cout,), jnp.float32) * 0.01,
        ))
    for i in range(4):
        cin, cout = dec_ch[i], dec_ch[i + 1]
        key, k1, k2, k3, k4 = jax.random.split(key, 5)
        params["dec"].append(dict(
            w=jax.random.normal(k1, (cin, cout, 4, 4), jnp.float32) * 0.05,
            b=jax.random.normal(k2, (cout,), jnp.float32) * 0.01,
            gamma=1.0 + jax.random.normal(k3, (cout,), jnp.float32) * 0.01,
            beta=jax.random.normal(k4, (cout,), jnp.float32) * 0.01,
        ))
    return params, key


if __name__ == "__main__":
    # z_dim=64 -> hidden_dim=8: encoder channels 2->16->32->64->128,
    # decoder 128->64->32->16->2.  Spatial 32x32 so the encoder output is
    # (B, 128, 2, 2) and decode()'s .view(B, -1, 2, 2) is valid.
    z_dim, im_chan, B = 64, 2, 2
    key = jax.random.PRNGKey(0)
    params, key = init_params(key, z_dim, im_chan)
    prepped = prepare_params(params)        # one-time weight relayout / cast

    key, kx, kmu, kstd = jax.random.split(key, 4)
    x = jax.random.normal(kx, (B, im_chan, 32, 32), jnp.float32)

    flat = (z_dim // 8) * 16 * 2 * 2                        # 512
    mu_h = jax.random.normal(kmu, (flat,), jnp.float32)
    std_h = 1.0 + 0.1 * jax.random.normal(kstd, (flat,), jnp.float32)

    fwd = jax.jit(functools.partial(vae_forward, z_dim=z_dim, im_chan=im_chan))
    out = fwd(prepped, x, mu_h, std_h)
    jax.block_until_ready(out)

    recon, z, z2, (z3, enc_flat) = out
    assert recon.shape == (B, im_chan, 32, 32)
    assert z.shape == (B, flat) and enc_flat.shape == (B, flat)
    print("KERNEL_OK")
</pallas_src>

<mosaic_0001>
module attributes {stable_mosaic.version = 11 : i64} {
  func.func @_fused_conv_bn_kernel(%arg0: i32, %arg1: memref<1x512x32xbf16, #tpu.memory_space<vmem>>, %arg2: memref<1x32x128xbf16, #tpu.memory_space<vmem>>, %arg3: memref<1x128xf32, #tpu.memory_space<vmem>>, %arg4: memref<1x128xf32, #tpu.memory_space<vmem>>, %arg5: memref<1x128xf32, #tpu.memory_space<vmem>>, %arg6: memref<1x512x128xbf16, #tpu.memory_space<vmem>>, %arg7: memref<1x512x128xf32, #tpu.memory_space<vmem>>) attributes {dimension_semantics = [#tpu.dimension_semantics<arbitrary>], iteration_bounds = array<i64: 1>, scalar_prefetch = 0 : i64, scratch_operands = 1 : i64, tpu.core_type = #tpu.core_type<tc>, window_params = [{pipeline_mode = #tpu.pipeline_mode<synchronous>, transform_indices = @transform_0, window_bounds = array<i64: 1, 512, 32>}, {pipeline_mode = #tpu.pipeline_mode<synchronous>, transform_indices = @transform_1, window_bounds = array<i64: 1, 32, 128>}, {pipeline_mode = #tpu.pipeline_mode<synchronous>, transform_indices = @transform_2, window_bounds = array<i64: 1, 128>}, {pipeline_mode = #tpu.pipeline_mode<synchronous>, transform_indices = @transform_3, window_bounds = array<i64: 1, 128>}, {pipeline_mode = #tpu.pipeline_mode<synchronous>, transform_indices = @transform_4, window_bounds = array<i64: 1, 128>}, {pipeline_mode = #tpu.pipeline_mode<synchronous>, transform_indices = @transform_5, window_bounds = array<i64: 1, 512, 128>}]} {
    %c0 = arith.constant 0 : index
    %c0_0 = arith.constant 0 : index
    %c0_1 = arith.constant 0 : index
    %0 = vector.load %arg1[%c0, %c0_0, %c0_1] : memref<1x512x32xbf16, #tpu.memory_space<vmem>>, vector<1x512x32xbf16>
    %1 = vector.shape_cast %0 : vector<1x512x32xbf16> to vector<512x32xbf16>
    %c0_2 = arith.constant 0 : index
    %c0_3 = arith.constant 0 : index
    %c0_4 = arith.constant 0 : index
    %2 = vector.load %arg2[%c0_2, %c0_3, %c0_4] : memref<1x32x128xbf16, #tpu.memory_space<vmem>>, vector<1x32x128xbf16>
    %3 = vector.shape_cast %2 : vector<1x32x128xbf16> to vector<32x128xbf16>
    %cst = arith.constant dense<0.000000e+00> : vector<512x128xf32>
    %4 = tpu.matmul %1, %3, %cst {dimension_numbers = #tpu.dot_dimension_numbers<[1], [0], [0], [1], [0, 0, 1, 1], [], []>} : vector<512x32xbf16>, vector<32x128xbf16>, vector<512x128xf32> -> vector<512x128xf32>
    %c0_5 = arith.constant 0 : index
    %c0_6 = arith.constant 0 : index
    %5 = vector.load %arg3[%c0_5, %c0_6] : memref<1x128xf32, #tpu.memory_space<vmem>>, vector<1x128xf32>
    %6 = vector.broadcast %5 : vector<1x128xf32> to vector<512x128xf32>
    %7 = arith.addf %4, %6 : vector<512x128xf32>
    %c0_7 = arith.constant 0 : index
    %c0_8 = arith.constant 0 : index
    %c0_9 = arith.constant 0 : index
    %8 = vector.load %arg7[%c0_7, %c0_8, %c0_9] : memref<1x512x128xf32, #tpu.memory_space<vmem>>, vector<1x512x128xf32>
    %9 = vector.shape_cast %8 : vector<1x512x128xf32> to vector<512x128xf32>
    %10 = vector.shape_cast %7 : vector<512x128xf32> to vector<1x512x128xf32>
    tpu.vector_store %arg7[%c0_7, %c0_8, %c0_9], %10 {strides = array<i32>} : memref<1x512x128xf32, #tpu.memory_space<vmem>>, vector<1x512x128xf32>,
    %cst_10 = arith.constant dense<0.000000e+00> : vector<128xf32>
    %11 = vector.multi_reduction <add>, %7, %cst_10 [0] : vector<512x128xf32> to vector<128xf32>
    %12 = vector.shape_cast %11 : vector<128xf32> to vector<1x128xf32>
    %cst_11 = arith.constant 0.001953125 : f32
    %13 = vector.broadcast %cst_11 : f32 to vector<1x128xf32>
    %14 = arith.mulf %12, %13 : vector<1x128xf32>
    %c0_12 = arith.constant 0 : index
    %c0_13 = arith.constant 0 : index
    %c0_14 = arith.constant 0 : index
    %15 = vector.load %arg7[%c0_12, %c0_13, %c0_14] : memref<1x512x128xf32, #tpu.memory_space<vmem>>, vector<1x512x128xf32>
    %16 = vector.shape_cast %15 : vector<1x512x128xf32> to vector<512x128xf32>
    %17 = vector.broadcast %14 : vector<1x128xf32> to vector<512x128xf32>
    %18 = arith.subf %16, %17 : vector<512x128xf32>
    %19 = arith.mulf %18, %18 : vector<512x128xf32>
    %cst_15 = arith.constant dense<0.000000e+00> : vector<128xf32>
    %20 = vector.multi_reduction <add>, %19, %cst_15 [0] : vector<512x128xf32> to vector<128xf32>
    %21 = vector.shape_cast %20 : vector<128xf32> to vector<1x128xf32>
    %cst_16 = arith.constant 0.001953125 : f32
    %22 = vector.broadcast %cst_16 : f32 to vector<1x128xf32>
    %23 = arith.mulf %21, %22 : vector<1x128xf32>
    %cst_17 = arith.constant 0.000000e+00 : f32
    %24 = vector.broadcast %cst_17 : f32 to vector<1x128xf32>
    %25 = arith.maximumf %23, %24 : vector<1x128xf32>
    %c0_18 = arith.constant 0 : index
    %c0_19 = arith.constant 0 : index
    %26 = vector.load %arg4[%c0_18, %c0_19] : memref<1x128xf32, #tpu.memory_space<vmem>>, vector<1x128xf32>
    %cst_20 = arith.constant 9.99999974E-6 : f32
    %27 = vector.broadcast %cst_20 : f32 to vector<1x128xf32>
    %28 = arith.addf %25, %27 : vector<1x128xf32>
    %29 = math.rsqrt %28 : vector<1x128xf32>
    %30 = arith.mulf %26, %29 : vector<1x128xf32>
    %c0_21 = arith.constant 0 : index
    %c0_22 = arith.constant 0 : index
    %31 = vector.load %arg5[%c0_21, %c0_22] : memref<1x128xf32, #tpu.memory_space<vmem>>, vector<1x128xf32>
    %32 = arith.mulf %14, %30 : vector<1x128xf32>
    %33 = arith.subf %31, %32 : vector<1x128xf32>
    %c0_23 = arith.constant 0 : index
    %c0_24 = arith.constant 0 : index
    %c0_25 = arith.constant 0 : index
    %34 = vector.load %arg7[%c0_23, %c0_24, %c0_25] : memref<1x512x128xf32, #tpu.memory_space<vmem>>, vector<1x512x128xf32>
    %35 = vector.shape_cast %34 : vector<1x512x128xf32> to vector<512x128xf32>
    %36 = vector.broadcast %30 : vector<1x128xf32> to vector<512x128xf32>
    %37 = arith.mulf %35, %36 : vector<512x128xf32>
    %38 = vector.broadcast %33 : vector<1x128xf32> to vector<512x128xf32>
    %39 = arith.addf %37, %38 : vector<512x128xf32>
    %cst_26 = arith.constant 0.000000e+00 : f32
    %40 = vector.broadcast %cst_26 : f32 to vector<512x128xf32>
    %41 = arith.cmpf oge, %39, %40 : vector<512x128xf32>
    %cst_27 = arith.constant 2.000000e-01 : f32
    %42 = vector.broadcast %cst_27 : f32 to vector<512x128xf32>
    %43 = arith.mulf %42, %39 : vector<512x128xf32>
    %44 = arith.select %41, %39, %43 : vector<512x128xi1>, vector<512x128xf32>
    %45 = arith.truncf %44 : vector<512x128xf32> to vector<512x128xbf16>
    %c0_28 = arith.constant 0 : index
    %c0_29 = arith.constant 0 : index
    %c0_30 = arith.constant 0 : index
    %46 = vector.load %arg6[%c0_28, %c0_29, %c0_30] : memref<1x512x128xbf16, #tpu.memory_space<vmem>>, vector<1x512x128xbf16>
    %47 = vector.shape_cast %46 : vector<1x512x128xbf16> to vector<512x128xbf16>
    %48 = vector.shape_cast %45 : vector<512x128xbf16> to vector<1x512x128xbf16>
    tpu.vector_store %arg6[%c0_28, %c0_29, %c0_30], %48 {strides = array<i32>} : memref<1x512x128xbf16, #tpu.memory_space<vmem>>, vector<1x512x128xbf16>,
    return
  }
  func.func @transform_0(%arg0: i32) -> (i32, i32, i32) {
    %c0_i32 = arith.constant 0 : i32
    %c0_i32_0 = arith.constant 0 : i32
    %c0_i32_1 = arith.constant 0 : i32
    %c0_i32_2 = arith.constant 0 : i32
    return %c0_i32, %c0_i32_0, %c0_i32_1 : i32, i32, i32
  }
  func.func @transform_1(%arg0: i32) -> (i32, i32, i32) {
    %c0_i32 = arith.constant 0 : i32
    %c0_i32_0 = arith.constant 0 : i32
    %c0_i32_1 = arith.constant 0 : i32
    %c0_i32_2 = arith.constant 0 : i32
    return %c0_i32, %c0_i32_0, %c0_i32_1 : i32, i32, i32
  }
  func.func @transform_2(%arg0: i32) -> (i32, i32) {
    %c0_i32 = arith.constant 0 : i32
    %c0_i32_0 = arith.constant 0 : i32
    %c0_i32_1 = arith.constant 0 : i32
    return %c0_i32, %c0_i32_0 : i32, i32
  }
  func.func @transform_3(%arg0: i32) -> (i32, i32) {
    %c0_i32 = arith.constant 0 : i32
    %c0_i32_0 = arith.constant 0 : i32
    %c0_i32_1 = arith.constant 0 : i32
    return %c0_i32, %c0_i32_0 : i32, i32
  }
  func.func @transform_4(%arg0: i32) -> (i32, i32) {
    %c0_i32 = arith.constant 0 : i32
    %c0_i32_0 = arith.constant 0 : i32
    %c0_i32_1 = arith.constant 0 : i32
    return %c0_i32, %c0_i32_0 : i32, i32
  }
  func.func @transform_5(%arg0: i32) -> (i32, i32, i32) {
    %c0_i32 = arith.constant 0 : i32
    %c0_i32_0 = arith.constant 0 : i32
    %c0_i32_1 = arith.constant 0 : i32
    %c0_i32_2 = arith.constant 0 : i32
    return %c0_i32, %c0_i32_0, %c0_i32_1 : i32, i32, i32
  }
}

module attributes {stable_mosaic.version = 11 : i64} {
  func.func @_fused_conv_bn_kernel(%arg0: i32, %arg1: memref<1x128x256xbf16, #tpu.memory_space<vmem>>, %arg2: memref<1x256x128xbf16, #tpu.memory_space<vmem>>, %arg3: memref<1x128xf32, #tpu.memory_space<vmem>>, %arg4: memref<1x128xf32, #tpu.memory_space<vmem>>, %arg5: memref<1x128xf32, #tpu.memory_space<vmem>>, %arg6: memref<1x128x128xbf16, #tpu.memory_space<vmem>>, %arg7: memref<1x128x128xf32, #tpu.memory_space<vmem>>) attributes {dimension_semantics = [#tpu.dimension_semantics<arbitrary>], iteration_bounds = array<i64: 1>, scalar_prefetch = 0 : i64, scratch_operands = 1 : i64, tpu.core_type = #tpu.core_type<tc>, window_params = [{pipeline_mode = #tpu.pipeline_mode<synchronous>, transform_indices = @transform_0, window_bounds = array<i64: 1, 128, 256>}, {pipeline_mode = #tpu.pipeline_mode<synchronous>, transform_indices = @transform_1, window_bounds = array<i64: 1, 256, 128>}, {pipeline_mode = #tpu.pipeline_mode<synchronous>, transform_indices = @transform_2, window_bounds = array<i64: 1, 128>}, {pipeline_mode = #tpu.pipeline_mode<synchronous>, transform_indices = @transform_3, window_bounds = array<i64: 1, 128>}, {pipeline_mode = #tpu.pipeline_mode<synchronous>, transform_indices = @transform_4, window_bounds = array<i64: 1, 128>}, {pipeline_mode = #tpu.pipeline_mode<synchronous>, transform_indices = @transform_5, window_bounds = array<i64: 1, 128, 128>}]} {
    %c0 = arith.constant 0 : index
    %c0_0 = arith.constant 0 : index
    %c0_1 = arith.constant 0 : index
    %0 = vector.load %arg1[%c0, %c0_0, %c0_1] : memref<1x128x256xbf16, #tpu.memory_space<vmem>>, vector<1x128x256xbf16>
    %1 = vector.shape_cast %0 : vector<1x128x256xbf16> to vector<128x256xbf16>
    %c0_2 = arith.constant 0 : index
    %c0_3 = arith.constant 0 : index
    %c0_4 = arith.constant 0 : index
    %2 = vector.load %arg2[%c0_2, %c0_3, %c0_4] : memref<1x256x128xbf16, #tpu.memory_space<vmem>>, vector<1x256x128xbf16>
    %3 = vector.shape_cast %2 : vector<1x256x128xbf16> to vector<256x128xbf16>
    %cst = arith.constant dense<0.000000e+00> : vector<128x128xf32>
    %4 = tpu.matmul %1, %3, %cst {dimension_numbers = #tpu.dot_dimension_numbers<[1], [0], [0], [1], [0, 0, 1, 1], [], []>} : vector<128x256xbf16>, vector<256x128xbf16>, vector<128x128xf32> -> vector<128x128xf32>
    %c0_5 = arith.constant 0 : index
    %c0_6 = arith.constant 0 : index
    %5 = vector.load %arg3[%c0_5, %c0_6] : memref<1x128xf32, #tpu.memory_space<vmem>>, vector<1x128xf32>
    %6 = vector.broadcast %5 : vector<1x128xf32> to vector<128x128xf32>
    %7 = arith.addf %4, %6 : vector<128x128xf32>
    %c0_7 = arith.constant 0 : index
    %c0_8 = arith.constant 0 : index
    %c0_9 = arith.constant 0 : index
    %8 = vector.load %arg7[%c0_7, %c0_8, %c0_9] : memref<1x128x128xf32, #tpu.memory_space<vmem>>, vector<1x128x128xf32>
    %9 = vector.shape_cast %8 : vector<1x128x128xf32> to vector<128x128xf32>
    %10 = vector.shape_cast %7 : vector<128x128xf32> to vector<1x128x128xf32>
    tpu.vector_store %arg7[%c0_7, %c0_8, %c0_9], %10 {strides = array<i32>} : memref<1x128x128xf32, #tpu.memory_space<vmem>>, vector<1x128x128xf32>,
    %cst_10 = arith.constant dense<0.000000e+00> : vector<128xf32>
    %11 = vector.multi_reduction <add>, %7, %cst_10 [0] : vector<128x128xf32> to vector<128xf32>
    %12 = vector.shape_cast %11 : vector<128xf32> to vector<1x128xf32>
    %cst_11 = arith.constant 7.812500e-03 : f32
    %13 = vector.broadcast %cst_11 : f32 to vector<1x128xf32>
    %14 = arith.mulf %12, %13 : vector<1x128xf32>
    %c0_12 = arith.constant 0 : index
    %c0_13 = arith.constant 0 : index
    %c0_14 = arith.constant 0 : index
    %15 = vector.load %arg7[%c0_12, %c0_13, %c0_14] : memref<1x128x128xf32, #tpu.memory_space<vmem>>, vector<1x128x128xf32>
    %16 = vector.shape_cast %15 : vector<1x128x128xf32> to vector<128x128xf32>
    %17 = vector.broadcast %14 : vector<1x128xf32> to vector<128x128xf32>
    %18 = arith.subf %16, %17 : vector<128x128xf32>
    %19 = arith.mulf %18, %18 : vector<128x128xf32>
    %cst_15 = arith.constant dense<0.000000e+00> : vector<128xf32>
    %20 = vector.multi_reduction <add>, %19, %cst_15 [0] : vector<128x128xf32> to vector<128xf32>
    %21 = vector.shape_cast %20 : vector<128xf32> to vector<1x128xf32>
    %cst_16 = arith.constant 7.812500e-03 : f32
    %22 = vector.broadcast %cst_16 : f32 to vector<1x128xf32>
    %23 = arith.mulf %21, %22 : vector<1x128xf32>
    %cst_17 = arith.constant 0.000000e+00 : f32
    %24 = vector.broadcast %cst_17 : f32 to vector<1x128xf32>
    %25 = arith.maximumf %23, %24 : vector<1x128xf32>
    %c0_18 = arith.constant 0 : index
    %c0_19 = arith.constant 0 : index
    %26 = vector.load %arg4[%c0_18, %c0_19] : memref<1x128xf32, #tpu.memory_space<vmem>>, vector<1x128xf32>
    %cst_20 = arith.constant 9.99999974E-6 : f32
    %27 = vector.broadcast %cst_20 : f32 to vector<1x128xf32>
    %28 = arith.addf %25, %27 : vector<1x128xf32>
    %29 = math.rsqrt %28 : vector<1x128xf32>
    %30 = arith.mulf %26, %29 : vector<1x128xf32>
    %c0_21 = arith.constant 0 : index
    %c0_22 = arith.constant 0 : index
    %31 = vector.load %arg5[%c0_21, %c0_22] : memref<1x128xf32, #tpu.memory_space<vmem>>, vector<1x128xf32>
    %32 = arith.mulf %14, %30 : vector<1x128xf32>
    %33 = arith.subf %31, %32 : vector<1x128xf32>
    %c0_23 = arith.constant 0 : index
    %c0_24 = arith.constant 0 : index
    %c0_25 = arith.constant 0 : index
    %34 = vector.load %arg7[%c0_23, %c0_24, %c0_25] : memref<1x128x128xf32, #tpu.memory_space<vmem>>, vector<1x128x128xf32>
    %35 = vector.shape_cast %34 : vector<1x128x128xf32> to vector<128x128xf32>
    %36 = vector.broadcast %30 : vector<1x128xf32> to vector<128x128xf32>
    %37 = arith.mulf %35, %36 : vector<128x128xf32>
    %38 = vector.broadcast %33 : vector<1x128xf32> to vector<128x128xf32>
    %39 = arith.addf %37, %38 : vector<128x128xf32>
    %cst_26 = arith.constant 0.000000e+00 : f32
    %40 = vector.broadcast %cst_26 : f32 to vector<128x128xf32>
    %41 = arith.cmpf oge, %39, %40 : vector<128x128xf32>
    %cst_27 = arith.constant 2.000000e-01 : f32
    %42 = vector.broadcast %cst_27 : f32 to vector<128x128xf32>
    %43 = arith.mulf %42, %39 : vector<128x128xf32>
    %44 = arith.select %41, %39, %43 : vector<128x128xi1>, vector<128x128xf32>
    %45 = arith.truncf %44 : vector<128x128xf32> to vector<128x128xbf16>
    %c0_28 = arith.constant 0 : index
    %c0_29 = arith.constant 0 : index
    %c0_30 = arith.constant 0 : index
    %46 = vector.load %arg6[%c0_28, %c0_29, %c0_30] : memref<1x128x128xbf16, #tpu.memory_space<vmem>>, vector<1x128x128xbf16>
    %47 = vector.shape_cast %46 : vector<1x128x128xbf16> to vector<128x128xbf16>
    %48 = vector.shape_cast %45 : vector<128x128xbf16> to vector<1x128x128xbf16>
    tpu.vector_store %arg6[%c0_28, %c0_29, %c0_30], %48 {strides = array<i32>} : memref<1x128x128xbf16, #tpu.memory_space<vmem>>, vector<1x128x128xbf16>,
    return
  }
  func.func @transform_0(%arg0: i32) -> (i32, i32, i32) {
    %c0_i32 = arith.constant 0 : i32
    %c0_i32_0 = arith.constant 0 : i32
    %c0_i32_1 = arith.constant 0 : i32
    %c0_i32_2 = arith.constant 0 : i32
    return %c0_i32, %c0_i32_0, %c0_i32_1 : i32, i32, i32
  }
  func.func @transform_1(%arg0: i32) -> (i32, i32, i32) {
    %c0_i32 = arith.constant 0 : i32
    %c0_i32_0 = arith.constant 0 : i32
    %c0_i32_1 = arith.constant 0 : i32
    %c0_i32_2 = arith.constant 0 : i32
    return %c0_i32, %c0_i32_0, %c0_i32_1 : i32, i32, i32
  }
  func.func @transform_2(%arg0: i32) -> (i32, i32) {
    %c0_i32 = arith.constant 0 : i32
    %c0_i32_0 = arith.constant 0 : i32
    %c0_i32_1 = arith.constant 0 : i32
    return %c0_i32, %c0_i32_0 : i32, i32
  }
  func.func @transform_3(%arg0: i32) -> (i32, i32) {
    %c0_i32 = arith.constant 0 : i32
    %c0_i32_0 = arith.constant 0 : i32
    %c0_i32_1 = arith.constant 0 : i32
    return %c0_i32, %c0_i32_0 : i32, i32
  }
  func.func @transform_4(%arg0: i32) -> (i32, i32) {
    %c0_i32 = arith.constant 0 : i32
    %c0_i32_0 = arith.constant 0 : i32
    %c0_i32_1 = arith.constant 0 : i32
    return %c0_i32, %c0_i32_0 : i32, i32
  }
  func.func @transform_5(%arg0: i32) -> (i32, i32, i32) {
    %c0_i32 = arith.constant 0 : i32
    %c0_i32_0 = arith.constant 0 : i32
    %c0_i32_1 = arith.constant 0 : i32
    %c0_i32_2 = arith.constant 0 : i32
    return %c0_i32, %c0_i32_0, %c0_i32_1 : i32, i32, i32
  }
}

module attributes {stable_mosaic.version = 11 : i64} {
  func.func @_fused_conv_bn_kernel(%arg0: i32, %arg1: memref<1x32x512xbf16, #tpu.memory_space<vmem>>, %arg2: memref<1x512x128xbf16, #tpu.memory_space<vmem>>, %arg3: memref<1x128xf32, #tpu.memory_space<vmem>>, %arg4: memref<1x128xf32, #tpu.memory_space<vmem>>, %arg5: memref<1x128xf32, #tpu.memory_space<vmem>>, %arg6: memref<1x32x128xbf16, #tpu.memory_space<vmem>>, %arg7: memref<1x32x128xf32, #tpu.memory_space<vmem>>) attributes {dimension_semantics = [#tpu.dimension_semantics<arbitrary>], iteration_bounds = array<i64: 1>, scalar_prefetch = 0 : i64, scratch_operands = 1 : i64, tpu.core_type = #tpu.core_type<tc>, window_params = [{pipeline_mode = #tpu.pipeline_mode<synchronous>, transform_indices = @transform_0, window_bounds = array<i64: 1, 32, 512>}, {pipeline_mode = #tpu.pipeline_mode<synchronous>, transform_indices = @transform_1, window_bounds = array<i64: 1, 512, 128>}, {pipeline_mode = #tpu.pipeline_mode<synchronous>, transform_indices = @transform_2, window_bounds = array<i64: 1, 128>}, {pipeline_mode = #tpu.pipeline_mode<synchronous>, transform_indices = @transform_3, window_bounds = array<i64: 1, 128>}, {pipeline_mode = #tpu.pipeline_mode<synchronous>, transform_indices = @transform_4, window_bounds = array<i64: 1, 128>}, {pipeline_mode = #tpu.pipeline_mode<synchronous>, transform_indices = @transform_5, window_bounds = array<i64: 1, 32, 128>}]} {
    %c0 = arith.constant 0 : index
    %c0_0 = arith.constant 0 : index
    %c0_1 = arith.constant 0 : index
    %0 = vector.load %arg1[%c0, %c0_0, %c0_1] : memref<1x32x512xbf16, #tpu.memory_space<vmem>>, vector<1x32x512xbf16>
    %1 = vector.shape_cast %0 : vector<1x32x512xbf16> to vector<32x512xbf16>
    %c0_2 = arith.constant 0 : index
    %c0_3 = arith.constant 0 : index
    %c0_4 = arith.constant 0 : index
    %2 = vector.load %arg2[%c0_2, %c0_3, %c0_4] : memref<1x512x128xbf16, #tpu.memory_space<vmem>>, vector<1x512x128xbf16>
    %3 = vector.shape_cast %2 : vector<1x512x128xbf16> to vector<512x128xbf16>
    %cst = arith.constant dense<0.000000e+00> : vector<32x128xf32>
    %4 = tpu.matmul %1, %3, %cst {dimension_numbers = #tpu.dot_dimension_numbers<[1], [0], [0], [1], [0, 0, 1, 1], [], []>} : vector<32x512xbf16>, vector<512x128xbf16>, vector<32x128xf32> -> vector<32x128xf32>
    %c0_5 = arith.constant 0 : index
    %c0_6 = arith.constant 0 : index
    %5 = vector.load %arg3[%c0_5, %c0_6] : memref<1x128xf32, #tpu.memory_space<vmem>>, vector<1x128xf32>
    %6 = vector.broadcast %5 : vector<1x128xf32> to vector<32x128xf32>
    %7 = arith.addf %4, %6 : vector<32x128xf32>
    %c0_7 = arith.constant 0 : index
    %c0_8 = arith.constant 0 : index
    %c0_9 = arith.constant 0 : index
    %8 = vector.load %arg7[%c0_7, %c0_8, %c0_9] : memref<1x32x128xf32, #tpu.memory_space<vmem>>, vector<1x32x128xf32>
    %9 = vector.shape_cast %8 : vector<1x32x128xf32> to vector<32x128xf32>
    %10 = vector.shape_cast %7 : vector<32x128xf32> to vector<1x32x128xf32>
    tpu.vector_store %arg7[%c0_7, %c0_8, %c0_9], %10 {strides = array<i32>} : memref<1x32x128xf32, #tpu.memory_space<vmem>>, vector<1x32x128xf32>,
    %cst_10 = arith.constant dense<0.000000e+00> : vector<128xf32>
    %11 = vector.multi_reduction <add>, %7, %cst_10 [0] : vector<32x128xf32> to vector<128xf32>
    %12 = vector.shape_cast %11 : vector<128xf32> to vector<1x128xf32>
    %cst_11 = arith.constant 3.125000e-02 : f32
    %13 = vector.broadcast %cst_11 : f32 to vector<1x128xf32>
    %14 = arith.mulf %12, %13 : vector<1x128xf32>
    %c0_12 = arith.constant 0 : index
    %c0_13 = arith.constant 0 : index
    %c0_14 = arith.constant 0 : index
    %15 = vector.load %arg7[%c0_12, %c0_13, %c0_14] : memref<1x32x128xf32, #tpu.memory_space<vmem>>, vector<1x32x128xf32>
    %16 = vector.shape_cast %15 : vector<1x32x128xf32> to vector<32x128xf32>
    %17 = vector.broadcast %14 : vector<1x128xf32> to vector<32x128xf32>
    %18 = arith.subf %16, %17 : vector<32x128xf32>
    %19 = arith.mulf %18, %18 : vector<32x128xf32>
    %cst_15 = arith.constant dense<0.000000e+00> : vector<128xf32>
    %20 = vector.multi_reduction <add>, %19, %cst_15 [0] : vector<32x128xf32> to vector<128xf32>
    %21 = vector.shape_cast %20 : vector<128xf32> to vector<1x128xf32>
    %cst_16 = arith.constant 3.125000e-02 : f32
    %22 = vector.broadcast %cst_16 : f32 to vector<1x128xf32>
    %23 = arith.mulf %21, %22 : vector<1x128xf32>
    %cst_17 = arith.constant 0.000000e+00 : f32
    %24 = vector.broadcast %cst_17 : f32 to vector<1x128xf32>
    %25 = arith.maximumf %23, %24 : vector<1x128xf32>
    %c0_18 = arith.constant 0 : index
    %c0_19 = arith.constant 0 : index
    %26 = vector.load %arg4[%c0_18, %c0_19] : memref<1x128xf32, #tpu.memory_space<vmem>>, vector<1x128xf32>
    %cst_20 = arith.constant 9.99999974E-6 : f32
    %27 = vector.broadcast %cst_20 : f32 to vector<1x128xf32>
    %28 = arith.addf %25, %27 : vector<1x128xf32>
    %29 = math.rsqrt %28 : vector<1x128xf32>
    %30 = arith.mulf %26, %29 : vector<1x128xf32>
    %c0_21 = arith.constant 0 : index
    %c0_22 = arith.constant 0 : index
    %31 = vector.load %arg5[%c0_21, %c0_22] : memref<1x128xf32, #tpu.memory_space<vmem>>, vector<1x128xf32>
    %32 = arith.mulf %14, %30 : vector<1x128xf32>
    %33 = arith.subf %31, %32 : vector<1x128xf32>
    %c0_23 = arith.constant 0 : index
    %c0_24 = arith.constant 0 : index
    %c0_25 = arith.constant 0 : index
    %34 = vector.load %arg7[%c0_23, %c0_24, %c0_25] : memref<1x32x128xf32, #tpu.memory_space<vmem>>, vector<1x32x128xf32>
    %35 = vector.shape_cast %34 : vector<1x32x128xf32> to vector<32x128xf32>
    %36 = vector.broadcast %30 : vector<1x128xf32> to vector<32x128xf32>
    %37 = arith.mulf %35, %36 : vector<32x128xf32>
    %38 = vector.broadcast %33 : vector<1x128xf32> to vector<32x128xf32>
    %39 = arith.addf %37, %38 : vector<32x128xf32>
    %cst_26 = arith.constant 0.000000e+00 : f32
    %40 = vector.broadcast %cst_26 : f32 to vector<32x128xf32>
    %41 = arith.cmpf oge, %39, %40 : vector<32x128xf32>
    %cst_27 = arith.constant 2.000000e-01 : f32
    %42 = vector.broadcast %cst_27 : f32 to vector<32x128xf32>
    %43 = arith.mulf %42, %39 : vector<32x128xf32>
    %44 = arith.select %41, %39, %43 : vector<32x128xi1>, vector<32x128xf32>
    %45 = arith.truncf %44 : vector<32x128xf32> to vector<32x128xbf16>
    %c0_28 = arith.constant 0 : index
    %c0_29 = arith.constant 0 : index
    %c0_30 = arith.constant 0 : index
    %46 = vector.load %arg6[%c0_28, %c0_29, %c0_30] : memref<1x32x128xbf16, #tpu.memory_space<vmem>>, vector<1x32x128xbf16>
    %47 = vector.shape_cast %46 : vector<1x32x128xbf16> to vector<32x128xbf16>
    %48 = vector.shape_cast %45 : vector<32x128xbf16> to vector<1x32x128xbf16>
    tpu.vector_store %arg6[%c0_28, %c0_29, %c0_30], %48 {strides = array<i32>} : memref<1x32x128xbf16, #tpu.memory_space<vmem>>, vector<1x32x128xbf16>,
    return
  }
  func.func @transform_0(%arg0: i32) -> (i32, i32, i32) {
    %c0_i32 = arith.constant 0 : i32
    %c0_i32_0 = arith.constant 0 : i32
    %c0_i32_1 = arith.constant 0 : i32
    %c0_i32_2 = arith.constant 0 : i32
    return %c0_i32, %c0_i32_0, %c0_i32_1 : i32, i32, i32
  }
  func.func @transform_1(%arg0: i32) -> (i32, i32, i32) {
    %c0_i32 = arith.constant 0 : i32
    %c0_i32_0 = arith.constant 0 : i32
    %c0_i32_1 = arith.constant 0 : i32
    %c0_i32_2 = arith.constant 0 : i32
    return %c0_i32, %c0_i32_0, %c0_i32_1 : i32, i32, i32
  }
  func.func @transform_2(%arg0: i32) -> (i32, i32) {
    %c0_i32 = arith.constant 0 : i32
    %c0_i32_0 = arith.constant 0 : i32
    %c0_i32_1 = arith.constant 0 : i32
    return %c0_i32, %c0_i32_0 : i32, i32
  }
  func.func @transform_3(%arg0: i32) -> (i32, i32) {
    %c0_i32 = arith.constant 0 : i32
    %c0_i32_0 = arith.constant 0 : i32
    %c0_i32_1 = arith.constant 0 : i32
    return %c0_i32, %c0_i32_0 : i32, i32
  }
  func.func @transform_4(%arg0: i32) -> (i32, i32) {
    %c0_i32 = arith.constant 0 : i32
    %c0_i32_0 = arith.constant 0 : i32
    %c0_i32_1 = arith.constant 0 : i32
    return %c0_i32, %c0_i32_0 : i32, i32
  }
  func.func @transform_5(%arg0: i32) -> (i32, i32, i32) {
    %c0_i32 = arith.constant 0 : i32
    %c0_i32_0 = arith.constant 0 : i32
    %c0_i32_1 = arith.constant 0 : i32
    %c0_i32_2 = arith.constant 0 : i32
    return %c0_i32, %c0_i32_0, %c0_i32_1 : i32, i32, i32
  }
}

module attributes {stable_mosaic.version = 11 : i64} {
  func.func @_fused_conv_bn_kernel(%arg0: i32, %arg1: memref<1x8x1024xbf16, #tpu.memory_space<vmem>>, %arg2: memref<1x1024x128xbf16, #tpu.memory_space<vmem>>, %arg3: memref<1x128xf32, #tpu.memory_space<vmem>>, %arg4: memref<1x128xf32, #tpu.memory_space<vmem>>, %arg5: memref<1x128xf32, #tpu.memory_space<vmem>>, %arg6: memref<1x8x128xbf16, #tpu.memory_space<vmem>>, %arg7: memref<1x8x128xf32, #tpu.memory_space<vmem>>) attributes {dimension_semantics = [#tpu.dimension_semantics<arbitrary>], iteration_bounds = array<i64: 1>, scalar_prefetch = 0 : i64, scratch_operands = 1 : i64, tpu.core_type = #tpu.core_type<tc>, window_params = [{pipeline_mode = #tpu.pipeline_mode<synchronous>, transform_indices = @transform_0, window_bounds = array<i64: 1, 8, 1024>}, {pipeline_mode = #tpu.pipeline_mode<synchronous>, transform_indices = @transform_1, window_bounds = array<i64: 1, 1024, 128>}, {pipeline_mode = #tpu.pipeline_mode<synchronous>, transform_indices = @transform_2, window_bounds = array<i64: 1, 128>}, {pipeline_mode = #tpu.pipeline_mode<synchronous>, transform_indices = @transform_3, window_bounds = array<i64: 1, 128>}, {pipeline_mode = #tpu.pipeline_mode<synchronous>, transform_indices = @transform_4, window_bounds = array<i64: 1, 128>}, {pipeline_mode = #tpu.pipeline_mode<synchronous>, transform_indices = @transform_5, window_bounds = array<i64: 1, 8, 128>}]} {
    %c0 = arith.constant 0 : index
    %c0_0 = arith.constant 0 : index
    %c0_1 = arith.constant 0 : index
    %0 = vector.load %arg1[%c0, %c0_0, %c0_1] : memref<1x8x1024xbf16, #tpu.memory_space<vmem>>, vector<1x8x1024xbf16>
    %1 = vector.shape_cast %0 : vector<1x8x1024xbf16> to vector<8x1024xbf16>
    %c0_2 = arith.constant 0 : index
    %c0_3 = arith.constant 0 : index
    %c0_4 = arith.constant 0 : index
    %2 = vector.load %arg2[%c0_2, %c0_3, %c0_4] : memref<1x1024x128xbf16, #tpu.memory_space<vmem>>, vector<1x1024x128xbf16>
    %3 = vector.shape_cast %2 : vector<1x1024x128xbf16> to vector<1024x128xbf16>
    %cst = arith.constant dense<0.000000e+00> : vector<8x128xf32>
    %4 = tpu.matmul %1, %3, %cst {dimension_numbers = #tpu.dot_dimension_numbers<[1], [0], [0], [1], [0, 0, 1, 1], [], []>} : vector<8x1024xbf16>, vector<1024x128xbf16>, vector<8x128xf32> -> vector<8x128xf32>
    %c0_5 = arith.constant 0 : index
    %c0_6 = arith.constant 0 : index
    %5 = vector.load %arg3[%c0_5, %c0_6] : memref<1x128xf32, #tpu.memory_space<vmem>>, vector<1x128xf32>
    %6 = vector.broadcast %5 : vector<1x128xf32> to vector<8x128xf32>
    %7 = arith.addf %4, %6 : vector<8x128xf32>
    %c0_7 = arith.constant 0 : index
    %c0_8 = arith.constant 0 : index
    %c0_9 = arith.constant 0 : index
    %8 = vector.load %arg7[%c0_7, %c0_8, %c0_9] : memref<1x8x128xf32, #tpu.memory_space<vmem>>, vector<1x8x128xf32>
    %9 = vector.shape_cast %8 : vector<1x8x128xf32> to vector<8x128xf32>
    %10 = vector.shape_cast %7 : vector<8x128xf32> to vector<1x8x128xf32>
    tpu.vector_store %arg7[%c0_7, %c0_8, %c0_9], %10 {strides = array<i32>} : memref<1x8x128xf32, #tpu.memory_space<vmem>>, vector<1x8x128xf32>,
    %cst_10 = arith.constant dense<0.000000e+00> : vector<128xf32>
    %11 = vector.multi_reduction <add>, %7, %cst_10 [0] : vector<8x128xf32> to vector<128xf32>
    %12 = vector.shape_cast %11 : vector<128xf32> to vector<1x128xf32>
    %cst_11 = arith.constant 1.250000e-01 : f32
    %13 = vector.broadcast %cst_11 : f32 to vector<1x128xf32>
    %14 = arith.mulf %12, %13 : vector<1x128xf32>
    %c0_12 = arith.constant 0 : index
    %c0_13 = arith.constant 0 : index
    %c0_14 = arith.constant 0 : index
    %15 = vector.load %arg7[%c0_12, %c0_13, %c0_14] : memref<1x8x128xf32, #tpu.memory_space<vmem>>, vector<1x8x128xf32>
    %16 = vector.shape_cast %15 : vector<1x8x128xf32> to vector<8x128xf32>
    %17 = vector.broadcast %14 : vector<1x128xf32> to vector<8x128xf32>
    %18 = arith.subf %16, %17 : vector<8x128xf32>
    %19 = arith.mulf %18, %18 : vector<8x128xf32>
    %cst_15 = arith.constant dense<0.000000e+00> : vector<128xf32>
    %20 = vector.multi_reduction <add>, %19, %cst_15 [0] : vector<8x128xf32> to vector<128xf32>
    %21 = vector.shape_cast %20 : vector<128xf32> to vector<1x128xf32>
    %cst_16 = arith.constant 1.250000e-01 : f32
    %22 = vector.broadcast %cst_16 : f32 to vector<1x128xf32>
    %23 = arith.mulf %21, %22 : vector<1x128xf32>
    %cst_17 = arith.constant 0.000000e+00 : f32
    %24 = vector.broadcast %cst_17 : f32 to vector<1x128xf32>
    %25 = arith.maximumf %23, %24 : vector<1x128xf32>
    %c0_18 = arith.constant 0 : index
    %c0_19 = arith.constant 0 : index
    %26 = vector.load %arg4[%c0_18, %c0_19] : memref<1x128xf32, #tpu.memory_space<vmem>>, vector<1x128xf32>
    %cst_20 = arith.constant 9.99999974E-6 : f32
    %27 = vector.broadcast %cst_20 : f32 to vector<1x128xf32>
    %28 = arith.addf %25, %27 : vector<1x128xf32>
    %29 = math.rsqrt %28 : vector<1x128xf32>
    %30 = arith.mulf %26, %29 : vector<1x128xf32>
    %c0_21 = arith.constant 0 : index
    %c0_22 = arith.constant 0 : index
    %31 = vector.load %arg5[%c0_21, %c0_22] : memref<1x128xf32, #tpu.memory_space<vmem>>, vector<1x128xf32>
    %32 = arith.mulf %14, %30 : vector<1x128xf32>
    %33 = arith.subf %31, %32 : vector<1x128xf32>
    %c0_23 = arith.constant 0 : index
    %c0_24 = arith.constant 0 : index
    %c0_25 = arith.constant 0 : index
    %34 = vector.load %arg7[%c0_23, %c0_24, %c0_25] : memref<1x8x128xf32, #tpu.memory_space<vmem>>, vector<1x8x128xf32>
    %35 = vector.shape_cast %34 : vector<1x8x128xf32> to vector<8x128xf32>
    %36 = vector.broadcast %30 : vector<1x128xf32> to vector<8x128xf32>
    %37 = arith.mulf %35, %36 : vector<8x128xf32>
    %38 = vector.broadcast %33 : vector<1x128xf32> to vector<8x128xf32>
    %39 = arith.addf %37, %38 : vector<8x128xf32>
    %cst_26 = arith.constant 0.000000e+00 : f32
    %40 = vector.broadcast %cst_26 : f32 to vector<8x128xf32>
    %41 = arith.cmpf oge, %39, %40 : vector<8x128xf32>
    %cst_27 = arith.constant 2.000000e-01 : f32
    %42 = vector.broadcast %cst_27 : f32 to vector<8x128xf32>
    %43 = arith.mulf %42, %39 : vector<8x128xf32>
    %44 = arith.select %41, %39, %43 : vector<8x128xi1>, vector<8x128xf32>
    %45 = arith.truncf %44 : vector<8x128xf32> to vector<8x128xbf16>
    %c0_28 = arith.constant 0 : index
    %c0_29 = arith.constant 0 : index
    %c0_30 = arith.constant 0 : index
    %46 = vector.load %arg6[%c0_28, %c0_29, %c0_30] : memref<1x8x128xbf16, #tpu.memory_space<vmem>>, vector<1x8x128xbf16>
    %47 = vector.shape_cast %46 : vector<1x8x128xbf16> to vector<8x128xbf16>
    %48 = vector.shape_cast %45 : vector<8x128xbf16> to vector<1x8x128xbf16>
    tpu.vector_store %arg6[%c0_28, %c0_29, %c0_30], %48 {strides = array<i32>} : memref<1x8x128xbf16, #tpu.memory_space<vmem>>, vector<1x8x128xbf16>,
    return
  }
  func.func @transform_0(%arg0: i32) -> (i32, i32, i32) {
    %c0_i32 = arith.constant 0 : i32
    %c0_i32_0 = arith.constant 0 : i32
    %c0_i32_1 = arith.constant 0 : i32
    %c0_i32_2 = arith.constant 0 : i32
    return %c0_i32, %c0_i32_0, %c0_i32_1 : i32, i32, i32
  }
  func.func @transform_1(%arg0: i32) -> (i32, i32, i32) {
    %c0_i32 = arith.constant 0 : i32
    %c0_i32_0 = arith.constant 0 : i32
    %c0_i32_1 = arith.constant 0 : i32
    %c0_i32_2 = arith.constant 0 : i32
    return %c0_i32, %c0_i32_0, %c0_i32_1 : i32, i32, i32
  }
  func.func @transform_2(%arg0: i32) -> (i32, i32) {
    %c0_i32 = arith.constant 0 : i32
    %c0_i32_0 = arith.constant 0 : i32
    %c0_i32_1 = arith.constant 0 : i32
    return %c0_i32, %c0_i32_0 : i32, i32
  }
  func.func @transform_3(%arg0: i32) -> (i32, i32) {
    %c0_i32 = arith.constant 0 : i32
    %c0_i32_0 = arith.constant 0 : i32
    %c0_i32_1 = arith.constant 0 : i32
    return %c0_i32, %c0_i32_0 : i32, i32
  }
  func.func @transform_4(%arg0: i32) -> (i32, i32) {
    %c0_i32 = arith.constant 0 : i32
    %c0_i32_0 = arith.constant 0 : i32
    %c0_i32_1 = arith.constant 0 : i32
    return %c0_i32, %c0_i32_0 : i32, i32
  }
  func.func @transform_5(%arg0: i32) -> (i32, i32, i32) {
    %c0_i32 = arith.constant 0 : i32
    %c0_i32_0 = arith.constant 0 : i32
    %c0_i32_1 = arith.constant 0 : i32
    %c0_i32_2 = arith.constant 0 : i32
    return %c0_i32, %c0_i32_0, %c0_i32_1 : i32, i32, i32
  }
}

module attributes {stable_mosaic.version = 11 : i64} {
  func.func @_fused_conv_bn_kernel(%arg0: i32, %arg1: memref<4x8x512xbf16, #tpu.memory_space<vmem>>, %arg2: memref<4x512x128xbf16, #tpu.memory_space<vmem>>, %arg3: memref<1x128xf32, #tpu.memory_space<vmem>>, %arg4: memref<1x128xf32, #tpu.memory_space<vmem>>, %arg5: memref<1x128xf32, #tpu.memory_space<vmem>>, %arg6: memref<4x8x128xbf16, #tpu.memory_space<vmem>>, %arg7: memref<4x8x128xf32, #tpu.memory_space<vmem>>) attributes {dimension_semantics = [#tpu.dimension_semantics<arbitrary>], iteration_bounds = array<i64: 1>, scalar_prefetch = 0 : i64, scratch_operands = 1 : i64, tpu.core_type = #tpu.core_type<tc>, window_params = [{pipeline_mode = #tpu.pipeline_mode<synchronous>, transform_indices = @transform_0, window_bounds = array<i64: 4, 8, 512>}, {pipeline_mode = #tpu.pipeline_mode<synchronous>, transform_indices = @transform_1, window_bounds = array<i64: 4, 512, 128>}, {pipeline_mode = #tpu.pipeline_mode<synchronous>, transform_indices = @transform_2, window_bounds = array<i64: 1, 128>}, {pipeline_mode = #tpu.pipeline_mode<synchronous>, transform_indices = @transform_3, window_bounds = array<i64: 1, 128>}, {pipeline_mode = #tpu.pipeline_mode<synchronous>, transform_indices = @transform_4, window_bounds = array<i64: 1, 128>}, {pipeline_mode = #tpu.pipeline_mode<synchronous>, transform_indices = @transform_5, window_bounds = array<i64: 4, 8, 128>}]} {
    %c0 = arith.constant 0 : index
    %c0_0 = arith.constant 0 : index
    %c0_1 = arith.constant 0 : index
    %0 = vector.load %arg1[%c0, %c0_0, %c0_1] : memref<4x8x512xbf16, #tpu.memory_space<vmem>>, vector<1x8x512xbf16>
    %1 = vector.shape_cast %0 : vector<1x8x512xbf16> to vector<8x512xbf16>
    %c0_2 = arith.constant 0 : index
    %c0_3 = arith.constant 0 : index
    %c0_4 = arith.constant 0 : index
    %2 = vector.load %arg2[%c0_2, %c0_3, %c0_4] : memref<4x512x128xbf16, #tpu.memory_space<vmem>>, vector<1x512x128xbf16>
    %3 = vector.shape_cast %2 : vector<1x512x128xbf16> to vector<512x128xbf16>
    %cst = arith.constant dense<0.000000e+00> : vector<8x128xf32>
    %4 = tpu.matmul %1, %3, %cst {dimension_numbers = #tpu.dot_dimension_numbers<[1], [0], [0], [1], [0, 0, 1, 1], [], []>} : vector<8x512xbf16>, vector<512x128xbf16>, vector<8x128xf32> -> vector<8x128xf32>
    %c0_5 = arith.constant 0 : index
    %c0_6 = arith.constant 0 : index
    %5 = vector.load %arg3[%c0_5, %c0_6] : memref<1x128xf32, #tpu.memory_space<vmem>>, vector<1x128xf32>
    %6 = vector.broadcast %5 : vector<1x128xf32> to vector<8x128xf32>
    %7 = arith.addf %4, %6 : vector<8x128xf32>
    %c0_7 = arith.constant 0 : index
    %c0_8 = arith.constant 0 : index
    %c0_9 = arith.constant 0 : index
    %8 = vector.load %arg7[%c0_7, %c0_8, %c0_9] : memref<4x8x128xf32, #tpu.memory_space<vmem>>, vector<1x8x128xf32>
    %9 = vector.shape_cast %8 : vector<1x8x128xf32> to vector<8x128xf32>
    %10 = vector.shape_cast %7 : vector<8x128xf32> to vector<1x8x128xf32>
    tpu.vector_store %arg7[%c0_7, %c0_8, %c0_9], %10 {strides = array<i32>} : memref<4x8x128xf32, #tpu.memory_space<vmem>>, vector<1x8x128xf32>,
    %cst_10 = arith.constant dense<0.000000e+00> : vector<128xf32>
    %11 = vector.multi_reduction <add>, %7, %cst_10 [0] : vector<8x128xf32> to vector<128xf32>
    %12 = vector.shape_cast %11 : vector<128xf32> to vector<1x128xf32>
    %c1 = arith.constant 1 : index
    %c0_11 = arith.constant 0 : index
    %c0_12 = arith.constant 0 : index
    %13 = vector.load %arg1[%c1, %c0_11, %c0_12] : memref<4x8x512xbf16, #tpu.memory_space<vmem>>, vector<1x8x512xbf16>
    %14 = vector.shape_cast %13 : vector<1x8x512xbf16> to vector<8x512xbf16>
    %c1_13 = arith.constant 1 : index
    %c0_14 = arith.constant 0 : index
    %c0_15 = arith.constant 0 : index
    %15 = vector.load %arg2[%c1_13, %c0_14, %c0_15] : memref<4x512x128xbf16, #tpu.memory_space<vmem>>, vector<1x512x128xbf16>
    %16 = vector.shape_cast %15 : vector<1x512x128xbf16> to vector<512x128xbf16>
    %cst_16 = arith.constant dense<0.000000e+00> : vector<8x128xf32>
    %17 = tpu.matmul %14, %16, %cst_16 {dimension_numbers = #tpu.dot_dimension_numbers<[1], [0], [0], [1], [0, 0, 1, 1], [], []>} : vector<8x512xbf16>, vector<512x128xbf16>, vector<8x128xf32> -> vector<8x128xf32>
    %c0_17 = arith.constant 0 : index
    %c0_18 = arith.constant 0 : index
    %18 = vector.load %arg3[%c0_17, %c0_18] : memref<1x128xf32, #tpu.memory_space<vmem>>, vector<1x128xf32>
    %19 = vector.broadcast %18 : vector<1x128xf32> to vector<8x128xf32>
    %20 = arith.addf %17, %19 : vector<8x128xf32>
    %c1_19 = arith.constant 1 : index
    %c0_20 = arith.constant 0 : index
    %c0_21 = arith.constant 0 : index
    %21 = vector.load %arg7[%c1_19, %c0_20, %c0_21] : memref<4x8x128xf32, #tpu.memory_space<vmem>>, vector<1x8x128xf32>
    %22 = vector.shape_cast %21 : vector<1x8x128xf32> to vector<8x128xf32>
    %23 = vector.shape_cast %20 : vector<8x128xf32> to vector<1x8x128xf32>
    tpu.vector_store %arg7[%c1_19, %c0_20, %c0_21], %23 {strides = array<i32>} : memref<4x8x128xf32, #tpu.memory_space<vmem>>, vector<1x8x128xf32>,
    %cst_22 = arith.constant dense<0.000000e+00> : vector<128xf32>
    %24 = vector.multi_reduction <add>, %20, %cst_22 [0] : vector<8x128xf32> to vector<128xf32>
    %25 = vector.shape_cast %24 : vector<128xf32> to vector<1x128xf32>
    %26 = arith.addf %12, %25 : vector<1x128xf32>
    %c2 = arith.constant 2 : index
    %c0_23 = arith.constant 0 : index
    %c0_24 = arith.constant 0 : index
    %27 = vector.load %arg1[%c2, %c0_23, %c0_24] : memref<4x8x512xbf16, #tpu.memory_space<vmem>>, vector<1x8x512xbf16>
    %28 = vector.shape_cast %27 : vector<1x8x512xbf16> to vector<8x512xbf16>
    %c2_25 = arith.constant 2 : index
    %c0_26 = arith.constant 0 : index
    %c0_27 = arith.constant 0 : index
    %29 = vector.load %arg2[%c2_25, %c0_26, %c0_27] : memref<4x512x128xbf16, #tpu.memory_space<vmem>>, vector<1x512x128xbf16>
    %30 = vector.shape_cast %29 : vector<1x512x128xbf16> to vector<512x128xbf16>
    %cst_28 = arith.constant dense<0.000000e+00> : vector<8x128xf32>
    %31 = tpu.matmul %28, %30, %cst_28 {dimension_numbers = #tpu.dot_dimension_numbers<[1], [0], [0], [1], [0, 0, 1, 1], [], []>} : vector<8x512xbf16>, vector<512x128xbf16>, vector<8x128xf32> -> vector<8x128xf32>
    %c0_29 = arith.constant 0 : index
    %c0_30 = arith.constant 0 : index
    %32 = vector.load %arg3[%c0_29, %c0_30] : memref<1x128xf32, #tpu.memory_space<vmem>>, vector<1x128xf32>
    %33 = vector.broadcast %32 : vector<1x128xf32> to vector<8x128xf32>
    %34 = arith.addf %31, %33 : vector<8x128xf32>
    %c2_31 = arith.constant 2 : index
    %c0_32 = arith.constant 0 : index
    %c0_33 = arith.constant 0 : index
    %35 = vector.load %arg7[%c2_31, %c0_32, %c0_33] : memref<4x8x128xf32, #tpu.memory_space<vmem>>, vector<1x8x128xf32>
    %36 = vector.shape_cast %35 : vector<1x8x128xf32> to vector<8x128xf32>
    %37 = vector.shape_cast %34 : vector<8x128xf32> to vector<1x8x128xf32>
    tpu.vector_store %arg7[%c2_31, %c0_32, %c0_33], %37 {strides = array<i32>} : memref<4x8x128xf32, #tpu.memory_space<vmem>>, vector<1x8x128xf32>,
    %cst_34 = arith.constant dense<0.000000e+00> : vector<128xf32>
    %38 = vector.multi_reduction <add>, %34, %cst_34 [0] : vector<8x128xf32> to vector<128xf32>
    %39 = vector.shape_cast %38 : vector<128xf32> to vector<1x128xf32>
    %40 = arith.addf %26, %39 : vector<1x128xf32>
    %c3 = arith.constant 3 : index
    %c0_35 = arith.constant 0 : index
    %c0_36 = arith.constant 0 : index
    %41 = vector.load %arg1[%c3, %c0_35, %c0_36] : memref<4x8x512xbf16, #tpu.memory_space<vmem>>, vector<1x8x512xbf16>
    %42 = vector.shape_cast %41 : vector<1x8x512xbf16> to vector<8x512xbf16>
    %c3_37 = arith.constant 3 : index
    %c0_38 = arith.constant 0 : index
    %c0_39 = arith.constant 0 : index
    %43 = vector.load %arg2[%c3_37, %c0_38, %c0_39] : memref<4x512x128xbf16, #tpu.memory_space<vmem>>, vector<1x512x128xbf16>
    %44 = vector.shape_cast %43 : vector<1x512x128xbf16> to vector<512x128xbf16>
    %cst_40 = arith.constant dense<0.000000e+00> : vector<8x128xf32>
    %45 = tpu.matmul %42, %44, %cst_40 {dimension_numbers = #tpu.dot_dimension_numbers<[1], [0], [0], [1], [0, 0, 1, 1], [], []>} : vector<8x512xbf16>, vector<512x128xbf16>, vector<8x128xf32> -> vector<8x128xf32>
    %c0_41 = arith.constant 0 : index
    %c0_42 = arith.constant 0 : index
    %46 = vector.load %arg3[%c0_41, %c0_42] : memref<1x128xf32, #tpu.memory_space<vmem>>, vector<1x128xf32>
    %47 = vector.broadcast %46 : vector<1x128xf32> to vector<8x128xf32>
    %48 = arith.addf %45, %47 : vector<8x128xf32>
    %c3_43 = arith.constant 3 : index
    %c0_44 = arith.constant 0 : index
    %c0_45 = arith.constant 0 : index
    %49 = vector.load %arg7[%c3_43, %c0_44, %c0_45] : memref<4x8x128xf32, #tpu.memory_space<vmem>>, vector<1x8x128xf32>
    %50 = vector.shape_cast %49 : vector<1x8x128xf32> to vector<8x128xf32>
    %51 = vector.shape_cast %48 : vector<8x128xf32> to vector<1x8x128xf32>
    tpu.vector_store %arg7[%c3_43, %c0_44, %c0_45], %51 {strides = array<i32>} : memref<4x8x128xf32, #tpu.memory_space<vmem>>, vector<1x8x128xf32>,
    %cst_46 = arith.constant dense<0.000000e+00> : vector<128xf32>
    %52 = vector.multi_reduction <add>, %48, %cst_46 [0] : vector<8x128xf32> to vector<128xf32>
    %53 = vector.shape_cast %52 : vector<128xf32> to vector<1x128xf32>
    %54 = arith.addf %40, %53 : vector<1x128xf32>
    %cst_47 = arith.constant 3.125000e-02 : f32
    %55 = vector.broadcast %cst_47 : f32 to vector<1x128xf32>
    %56 = arith.mulf %54, %55 : vector<1x128xf32>
    %c0_48 = arith.constant 0 : index
    %c0_49 = arith.constant 0 : index
    %c0_50 = arith.constant 0 : index
    %57 = vector.load %arg7[%c0_48, %c0_49, %c0_50] : memref<4x8x128xf32, #tpu.memory_space<vmem>>, vector<1x8x128xf32>
    %58 = vector.shape_cast %57 : vector<1x8x128xf32> to vector<8x128xf32>
    %59 = vector.broadcast %56 : vector<1x128xf32> to vector<8x128xf32>
    %60 = arith.subf %58, %59 : vector<8x128xf32>
    %61 = arith.mulf %60, %60 : vector<8x128xf32>
    %cst_51 = arith.constant dense<0.000000e+00> : vector<128xf32>
    %62 = vector.multi_reduction <add>, %61, %cst_51 [0] : vector<8x128xf32> to vector<128xf32>
    %63 = vector.shape_cast %62 : vector<128xf32> to vector<1x128xf32>
    %c1_52 = arith.constant 1 : index
    %c0_53 = arith.constant 0 : index
    %c0_54 = arith.constant 0 : index
    %64 = vector.load %arg7[%c1_52, %c0_53, %c0_54] : memref<4x8x128xf32, #tpu.memory_space<vmem>>, vector<1x8x128xf32>
    %65 = vector.shape_cast %64 : vector<1x8x128xf32> to vector<8x128xf32>
    %66 = vector.broadcast %56 : vector<1x128xf32> to vector<8x128xf32>
    %67 = arith.subf %65, %66 : vector<8x128xf32>
    %68 = arith.mulf %67, %67 : vector<8x128xf32>
    %cst_55 = arith.constant dense<0.000000e+00> : vector<128xf32>
    %69 = vector.multi_reduction <add>, %68, %cst_55 [0] : vector<8x128xf32> to vector<128xf32>
    %70 = vector.shape_cast %69 : vector<128xf32> to vector<1x128xf32>
    %71 = arith.addf %63, %70 : vector<1x128xf32>
    %c2_56 = arith.constant 2 : index
    %c0_57 = arith.constant 0 : index
    %c0_58 = arith.constant 0 : index
    %72 = vector.load %arg7[%c2_56, %c0_57, %c0_58] : memref<4x8x128xf32, #tpu.memory_space<vmem>>, vector<1x8x128xf32>
    %73 = vector.shape_cast %72 : vector<1x8x128xf32> to vector<8x128xf32>
    %74 = vector.broadcast %56 : vector<1x128xf32> to vector<8x128xf32>
    %75 = arith.subf %73, %74 : vector<8x128xf32>
    %76 = arith.mulf %75, %75 : vector<8x128xf32>
    %cst_59 = arith.constant dense<0.000000e+00> : vector<128xf32>
    %77 = vector.multi_reduction <add>, %76, %cst_59 [0] : vector<8x128xf32> to vector<128xf32>
    %78 = vector.shape_cast %77 : vector<128xf32> to vector<1x128xf32>
    %79 = arith.addf %71, %78 : vector<1x128xf32>
    %c3_60 = arith.constant 3 : index
    %c0_61 = arith.constant 0 : index
    %c0_62 = arith.constant 0 : index
    %80 = vector.load %arg7[%c3_60, %c0_61, %c0_62] : memref<4x8x128xf32, #tpu.memory_space<vmem>>, vector<1x8x128xf32>
    %81 = vector.shape_cast %80 : vector<1x8x128xf32> to vector<8x128xf32>
    %82 = vector.broadcast %56 : vector<1x128xf32> to vector<8x128xf32>
    %83 = arith.subf %81, %82 : vector<8x128xf32>
    %84 = arith.mulf %83, %83 : vector<8x128xf32>
    %cst_63 = arith.constant dense<0.000000e+00> : vector<128xf32>
    %85 = vector.multi_reduction <add>, %84, %cst_63 [0] : vector<8x128xf32> to vector<128xf32>
    %86 = vector.shape_cast %85 : vector<128xf32> to vector<1x128xf32>
    %87 = arith.addf %79, %86 : vector<1x128xf32>
    %cst_64 = arith.constant 3.125000e-02 : f32
    %88 = vector.broadcast %cst_64 : f32 to vector<1x128xf32>
    %89 = arith.mulf %87, %88 : vector<1x128xf32>
    %cst_65 = arith.constant 0.000000e+00 : f32
    %90 = vector.broadcast %cst_65 : f32 to vector<1x128xf32>
    %91 = arith.maximumf %89, %90 : vector<1x128xf32>
    %c0_66 = arith.constant 0 : index
    %c0_67 = arith.constant 0 : index
    %92 = vector.load %arg4[%c0_66, %c0_67] : memref<1x128xf32, #tpu.memory_space<vmem>>, vector<1x128xf32>
    %cst_68 = arith.constant 9.99999974E-6 : f32
    %93 = vector.broadcast %cst_68 : f32 to vector<1x128xf32>
    %94 = arith.addf %91, %93 : vector<1x128xf32>
    %95 = math.rsqrt %94 : vector<1x128xf32>
    %96 = arith.mulf %92, %95 : vector<1x128xf32>
    %c0_69 = arith.constant 0 : index
    %c0_70 = arith.constant 0 : index
    %97 = vector.load %arg5[%c0_69, %c0_70] : memref<1x128xf32, #tpu.memory_space<vmem>>, vector<1x128xf32>
    %98 = arith.mulf %56, %96 : vector<1x128xf32>
    %99 = arith.subf %97, %98 : vector<1x128xf32>
    %c0_71 = arith.constant 0 : index
    %c0_72 = arith.constant 0 : index
    %c0_73 = arith.constant 0 : index
    %100 = vector.load %arg7[%c0_71, %c0_72, %c0_73] : memref<4x8x128xf32, #tpu.memory_space<vmem>>, vector<1x8x128xf32>
    %101 = vector.shape_cast %100 : vector<1x8x128xf32> to vector<8x128xf32>
    %102 = vector.broadcast %96 : vector<1x128xf32> to vector<8x128xf32>
    %103 = arith.mulf %101, %102 : vector<8x128xf32>
    %104 = vector.broadcast %99 : vector<1x128xf32> to vector<8x128xf32>
    %105 = arith.addf %103, %104 : vector<8x128xf32>
    %cst_74 = arith.constant 0.000000e+00 : f32
    %106 = vector.broadcast %cst_74 : f32 to vector<8x128xf32>
    %107 = arith.maximumf %105, %106 : vector<8x128xf32>
    %108 = arith.truncf %107 : vector<8x128xf32> to vector<8x128xbf16>
    %c0_75 = arith.constant 0 : index
    %c0_76 = arith.constant 0 : index
    %c0_77 = arith.constant 0 : index
    %109 = vector.load %arg6[%c0_75, %c0_76, %c0_77] : memref<4x8x128xbf16, #tpu.memory_space<vmem>>, vector<1x8x128xbf16>
    %110 = vector.shape_cast %109 : vector<1x8x128xbf16> to vector<8x128xbf16>
    %111 = vector.shape_cast %108 : vector<8x128xbf16> to vector<1x8x128xbf16>
    tpu.vector_store %arg6[%c0_75, %c0_76, %c0_77], %111 {strides = array<i32>} : memref<4x8x128xbf16, #tpu.memory_space<vmem>>, vector<1x8x128xbf16>,
    %c1_78 = arith.constant 1 : index
    %c0_79 = arith.constant 0 : index
    %c0_80 = arith.constant 0 : index
    %112 = vector.load %arg7[%c1_78, %c0_79, %c0_80] : memref<4x8x128xf32, #tpu.memory_space<vmem>>, vector<1x8x128xf32>
    %113 = vector.shape_cast %112 : vector<1x8x128xf32> to vector<8x128xf32>
    %114 = vector.broadcast %96 : vector<1x128xf32> to vector<8x128xf32>
    %115 = arith.mulf %113, %114 : vector<8x128xf32>
    %116 = vector.broadcast %99 : vector<1x128xf32> to vector<8x128xf32>
    %117 = arith.addf %115, %116 : vector<8x128xf32>
    %cst_81 = arith.constant 0.000000e+00 : f32
    %118 = vector.broadcast %cst_81 : f32 to vector<8x128xf32>
    %119 = arith.maximumf %117, %118 : vector<8x128xf32>
    %120 = arith.truncf %119 : vector<8x128xf32> to vector<8x128xbf16>
    %c1_82 = arith.constant 1 : index
    %c0_83 = arith.constant 0 : index
    %c0_84 = arith.constant 0 : index
    %121 = vector.load %arg6[%c1_82, %c0_83, %c0_84] : memref<4x8x128xbf16, #tpu.memory_space<vmem>>, vector<1x8x128xbf16>
    %122 = vector.shape_cast %121 : vector<1x8x128xbf16> to vector<8x128xbf16>
    %123 = vector.shape_cast %120 : vector<8x128xbf16> to vector<1x8x128xbf16>
    tpu.vector_store %arg6[%c1_82, %c0_83, %c0_84], %123 {strides = array<i32>} : memref<4x8x128xbf16, #tpu.memory_space<vmem>>, vector<1x8x128xbf16>,
    %c2_85 = arith.constant 2 : index
    %c0_86 = arith.constant 0 : index
    %c0_87 = arith.constant 0 : index
    %124 = vector.load %arg7[%c2_85, %c0_86, %c0_87] : memref<4x8x128xf32, #tpu.memory_space<vmem>>, vector<1x8x128xf32>
    %125 = vector.shape_cast %124 : vector<1x8x128xf32> to vector<8x128xf32>
    %126 = vector.broadcast %96 : vector<1x128xf32> to vector<8x128xf32>
    %127 = arith.mulf %125, %126 : vector<8x128xf32>
    %128 = vector.broadcast %99 : vector<1x128xf32> to vector<8x128xf32>
    %129 = arith.addf %127, %128 : vector<8x128xf32>
    %cst_88 = arith.constant 0.000000e+00 : f32
    %130 = vector.broadcast %cst_88 : f32 to vector<8x128xf32>
    %131 = arith.maximumf %129, %130 : vector<8x128xf32>
    %132 = arith.truncf %131 : vector<8x128xf32> to vector<8x128xbf16>
    %c2_89 = arith.constant 2 : index
    %c0_90 = arith.constant 0 : index
    %c0_91 = arith.constant 0 : index
    %133 = vector.load %arg6[%c2_89, %c0_90, %c0_91] : memref<4x8x128xbf16, #tpu.memory_space<vmem>>, vector<1x8x128xbf16>
    %134 = vector.shape_cast %133 : vector<1x8x128xbf16> to vector<8x128xbf16>
    %135 = vector.shape_cast %132 : vector<8x128xbf16> to vector<1x8x128xbf16>
    tpu.vector_store %arg6[%c2_89, %c0_90, %c0_91], %135 {strides = array<i32>} : memref<4x8x128xbf16, #tpu.memory_space<vmem>>, vector<1x8x128xbf16>,
    %c3_92 = arith.constant 3 : index
    %c0_93 = arith.constant 0 : index
    %c0_94 = arith.constant 0 : index
    %136 = vector.load %arg7[%c3_92, %c0_93, %c0_94] : memref<4x8x128xf32, #tpu.memory_space<vmem>>, vector<1x8x128xf32>
    %137 = vector.shape_cast %136 : vector<1x8x128xf32> to vector<8x128xf32>
    %138 = vector.broadcast %96 : vector<1x128xf32> to vector<8x128xf32>
    %139 = arith.mulf %137, %138 : vector<8x128xf32>
    %140 = vector.broadcast %99 : vector<1x128xf32> to vector<8x128xf32>
    %141 = arith.addf %139, %140 : vector<8x128xf32>
    %cst_95 = arith.constant 0.000000e+00 : f32
    %142 = vector.broadcast %cst_95 : f32 to vector<8x128xf32>
    %143 = arith.maximumf %141, %142 : vector<8x128xf32>
    %144 = arith.truncf %143 : vector<8x128xf32> to vector<8x128xbf16>
    %c3_96 = arith.constant 3 : index
    %c0_97 = arith.constant 0 : index
    %c0_98 = arith.constant 0 : index
    %145 = vector.load %arg6[%c3_96, %c0_97, %c0_98] : memref<4x8x128xbf16, #tpu.memory_space<vmem>>, vector<1x8x128xbf16>
    %146 = vector.shape_cast %145 : vector<1x8x128xbf16> to vector<8x128xbf16>
    %147 = vector.shape_cast %144 : vector<8x128xbf16> to vector<1x8x128xbf16>
    tpu.vector_store %arg6[%c3_96, %c0_97, %c0_98], %147 {strides = array<i32>} : memref<4x8x128xbf16, #tpu.memory_space<vmem>>, vector<1x8x128xbf16>,
    return
  }
  func.func @transform_0(%arg0: i32) -> (i32, i32, i32) {
    %c0_i32 = arith.constant 0 : i32
    %c0_i32_0 = arith.constant 0 : i32
    %c0_i32_1 = arith.constant 0 : i32
    %c0_i32_2 = arith.constant 0 : i32
    return %c0_i32, %c0_i32_0, %c0_i32_1 : i32, i32, i32
  }
  func.func @transform_1(%arg0: i32) -> (i32, i32, i32) {
    %c0_i32 = arith.constant 0 : i32
    %c0_i32_0 = arith.constant 0 : i32
    %c0_i32_1 = arith.constant 0 : i32
    %c0_i32_2 = arith.constant 0 : i32
    return %c0_i32, %c0_i32_0, %c0_i32_1 : i32, i32, i32
  }
  func.func @transform_2(%arg0: i32) -> (i32, i32) {
    %c0_i32 = arith.constant 0 : i32
    %c0_i32_0 = arith.constant 0 : i32
    %c0_i32_1 = arith.constant 0 : i32
    return %c0_i32, %c0_i32_0 : i32, i32
  }
  func.func @transform_3(%arg0: i32) -> (i32, i32) {
    %c0_i32 = arith.constant 0 : i32
    %c0_i32_0 = arith.constant 0 : i32
    %c0_i32_1 = arith.constant 0 : i32
    return %c0_i32, %c0_i32_0 : i32, i32
  }
  func.func @transform_4(%arg0: i32) -> (i32, i32) {
    %c0_i32 = arith.constant 0 : i32
    %c0_i32_0 = arith.constant 0 : i32
    %c0_i32_1 = arith.constant 0 : i32
    return %c0_i32, %c0_i32_0 : i32, i32
  }
  func.func @transform_5(%arg0: i32) -> (i32, i32, i32) {
    %c0_i32 = arith.constant 0 : i32
    %c0_i32_0 = arith.constant 0 : i32
    %c0_i32_1 = arith.constant 0 : i32
    %c0_i32_2 = arith.constant 0 : i32
    return %c0_i32, %c0_i32_0, %c0_i32_1 : i32, i32, i32
  }
}

module attributes {stable_mosaic.version = 11 : i64} {
  func.func @_fused_conv_bn_kernel(%arg0: i32, %arg1: memref<4x32x256xbf16, #tpu.memory_space<vmem>>, %arg2: memref<4x256x128xbf16, #tpu.memory_space<vmem>>, %arg3: memref<1x128xf32, #tpu.memory_space<vmem>>, %arg4: memref<1x128xf32, #tpu.memory_space<vmem>>, %arg5: memref<1x128xf32, #tpu.memory_space<vmem>>, %arg6: memref<4x32x128xbf16, #tpu.memory_space<vmem>>, %arg7: memref<4x32x128xf32, #tpu.memory_space<vmem>>) attributes {dimension_semantics = [#tpu.dimension_semantics<arbitrary>], iteration_bounds = array<i64: 1>, scalar_prefetch = 0 : i64, scratch_operands = 1 : i64, tpu.core_type = #tpu.core_type<tc>, window_params = [{pipeline_mode = #tpu.pipeline_mode<synchronous>, transform_indices = @transform_0, window_bounds = array<i64: 4, 32, 256>}, {pipeline_mode = #tpu.pipeline_mode<synchronous>, transform_indices = @transform_1, window_bounds = array<i64: 4, 256, 128>}, {pipeline_mode = #tpu.pipeline_mode<synchronous>, transform_indices = @transform_2, window_bounds = array<i64: 1, 128>}, {pipeline_mode = #tpu.pipeline_mode<synchronous>, transform_indices = @transform_3, window_bounds = array<i64: 1, 128>}, {pipeline_mode = #tpu.pipeline_mode<synchronous>, transform_indices = @transform_4, window_bounds = array<i64: 1, 128>}, {pipeline_mode = #tpu.pipeline_mode<synchronous>, transform_indices = @transform_5, window_bounds = array<i64: 4, 32, 128>}]} {
    %c0 = arith.constant 0 : index
    %c0_0 = arith.constant 0 : index
    %c0_1 = arith.constant 0 : index
    %0 = vector.load %arg1[%c0, %c0_0, %c0_1] : memref<4x32x256xbf16, #tpu.memory_space<vmem>>, vector<1x32x256xbf16>
    %1 = vector.shape_cast %0 : vector<1x32x256xbf16> to vector<32x256xbf16>
    %c0_2 = arith.constant 0 : index
    %c0_3 = arith.constant 0 : index
    %c0_4 = arith.constant 0 : index
    %2 = vector.load %arg2[%c0_2, %c0_3, %c0_4] : memref<4x256x128xbf16, #tpu.memory_space<vmem>>, vector<1x256x128xbf16>
    %3 = vector.shape_cast %2 : vector<1x256x128xbf16> to vector<256x128xbf16>
    %cst = arith.constant dense<0.000000e+00> : vector<32x128xf32>
    %4 = tpu.matmul %1, %3, %cst {dimension_numbers = #tpu.dot_dimension_numbers<[1], [0], [0], [1], [0, 0, 1, 1], [], []>} : vector<32x256xbf16>, vector<256x128xbf16>, vector<32x128xf32> -> vector<32x128xf32>
    %c0_5 = arith.constant 0 : index
    %c0_6 = arith.constant 0 : index
    %5 = vector.load %arg3[%c0_5, %c0_6] : memref<1x128xf32, #tpu.memory_space<vmem>>, vector<1x128xf32>
    %6 = vector.broadcast %5 : vector<1x128xf32> to vector<32x128xf32>
    %7 = arith.addf %4, %6 : vector<32x128xf32>
    %c0_7 = arith.constant 0 : index
    %c0_8 = arith.constant 0 : index
    %c0_9 = arith.constant 0 : index
    %8 = vector.load %arg7[%c0_7, %c0_8, %c0_9] : memref<4x32x128xf32, #tpu.memory_space<vmem>>, vector<1x32x128xf32>
    %9 = vector.shape_cast %8 : vector<1x32x128xf32> to vector<32x128xf32>
    %10 = vector.shape_cast %7 : vector<32x128xf32> to vector<1x32x128xf32>
    tpu.vector_store %arg7[%c0_7, %c0_8, %c0_9], %10 {strides = array<i32>} : memref<4x32x128xf32, #tpu.memory_space<vmem>>, vector<1x32x128xf32>,
    %cst_10 = arith.constant dense<0.000000e+00> : vector<128xf32>
    %11 = vector.multi_reduction <add>, %7, %cst_10 [0] : vector<32x128xf32> to vector<128xf32>
    %12 = vector.shape_cast %11 : vector<128xf32> to vector<1x128xf32>
    %c1 = arith.constant 1 : index
    %c0_11 = arith.constant 0 : index
    %c0_12 = arith.constant 0 : index
    %13 = vector.load %arg1[%c1, %c0_11, %c0_12] : memref<4x32x256xbf16, #tpu.memory_space<vmem>>, vector<1x32x256xbf16>
    %14 = vector.shape_cast %13 : vector<1x32x256xbf16> to vector<32x256xbf16>
    %c1_13 = arith.constant 1 : index
    %c0_14 = arith.constant 0 : index
    %c0_15 = arith.constant 0 : index
    %15 = vector.load %arg2[%c1_13, %c0_14, %c0_15] : memref<4x256x128xbf16, #tpu.memory_space<vmem>>, vector<1x256x128xbf16>
    %16 = vector.shape_cast %15 : vector<1x256x128xbf16> to vector<256x128xbf16>
    %cst_16 = arith.constant dense<0.000000e+00> : vector<32x128xf32>
    %17 = tpu.matmul %14, %16, %cst_16 {dimension_numbers = #tpu.dot_dimension_numbers<[1], [0], [0], [1], [0, 0, 1, 1], [], []>} : vector<32x256xbf16>, vector<256x128xbf16>, vector<32x128xf32> -> vector<32x128xf32>
    %c0_17 = arith.constant 0 : index
    %c0_18 = arith.constant 0 : index
    %18 = vector.load %arg3[%c0_17, %c0_18] : memref<1x128xf32, #tpu.memory_space<vmem>>, vector<1x128xf32>
    %19 = vector.broadcast %18 : vector<1x128xf32> to vector<32x128xf32>
    %20 = arith.addf %17, %19 : vector<32x128xf32>
    %c1_19 = arith.constant 1 : index
    %c0_20 = arith.constant 0 : index
    %c0_21 = arith.constant 0 : index
    %21 = vector.load %arg7[%c1_19, %c0_20, %c0_21] : memref<4x32x128xf32, #tpu.memory_space<vmem>>, vector<1x32x128xf32>
    %22 = vector.shape_cast %21 : vector<1x32x128xf32> to vector<32x128xf32>
    %23 = vector.shape_cast %20 : vector<32x128xf32> to vector<1x32x128xf32>
    tpu.vector_store %arg7[%c1_19, %c0_20, %c0_21], %23 {strides = array<i32>} : memref<4x32x128xf32, #tpu.memory_space<vmem>>, vector<1x32x128xf32>,
    %cst_22 = arith.constant dense<0.000000e+00> : vector<128xf32>
    %24 = vector.multi_reduction <add>, %20, %cst_22 [0] : vector<32x128xf32> to vector<128xf32>
    %25 = vector.shape_cast %24 : vector<128xf32> to vector<1x128xf32>
    %26 = arith.addf %12, %25 : vector<1x128xf32>
    %c2 = arith.constant 2 : index
    %c0_23 = arith.constant 0 : index
    %c0_24 = arith.constant 0 : index
    %27 = vector.load %arg1[%c2, %c0_23, %c0_24] : memref<4x32x256xbf16, #tpu.memory_space<vmem>>, vector<1x32x256xbf16>
    %28 = vector.shape_cast %27 : vector<1x32x256xbf16> to vector<32x256xbf16>
    %c2_25 = arith.constant 2 : index
    %c0_26 = arith.constant 0 : index
    %c0_27 = arith.constant 0 : index
    %29 = vector.load %arg2[%c2_25, %c0_26, %c0_27] : memref<4x256x128xbf16, #tpu.memory_space<vmem>>, vector<1x256x128xbf16>
    %30 = vector.shape_cast %29 : vector<1x256x128xbf16> to vector<256x128xbf16>
    %cst_28 = arith.constant dense<0.000000e+00> : vector<32x128xf32>
    %31 = tpu.matmul %28, %30, %cst_28 {dimension_numbers = #tpu.dot_dimension_numbers<[1], [0], [0], [1], [0, 0, 1, 1], [], []>} : vector<32x256xbf16>, vector<256x128xbf16>, vector<32x128xf32> -> vector<32x128xf32>
    %c0_29 = arith.constant 0 : index
    %c0_30 = arith.constant 0 : index
    %32 = vector.load %arg3[%c0_29, %c0_30] : memref<1x128xf32, #tpu.memory_space<vmem>>, vector<1x128xf32>
    %33 = vector.broadcast %32 : vector<1x128xf32> to vector<32x128xf32>
    %34 = arith.addf %31, %33 : vector<32x128xf32>
    %c2_31 = arith.constant 2 : index
    %c0_32 = arith.constant 0 : index
    %c0_33 = arith.constant 0 : index
    %35 = vector.load %arg7[%c2_31, %c0_32, %c0_33] : memref<4x32x128xf32, #tpu.memory_space<vmem>>, vector<1x32x128xf32>
    %36 = vector.shape_cast %35 : vector<1x32x128xf32> to vector<32x128xf32>
    %37 = vector.shape_cast %34 : vector<32x128xf32> to vector<1x32x128xf32>
    tpu.vector_store %arg7[%c2_31, %c0_32, %c0_33], %37 {strides = array<i32>} : memref<4x32x128xf32, #tpu.memory_space<vmem>>, vector<1x32x128xf32>,
    %cst_34 = arith.constant dense<0.000000e+00> : vector<128xf32>
    %38 = vector.multi_reduction <add>, %34, %cst_34 [0] : vector<32x128xf32> to vector<128xf32>
    %39 = vector.shape_cast %38 : vector<128xf32> to vector<1x128xf32>
    %40 = arith.addf %26, %39 : vector<1x128xf32>
    %c3 = arith.constant 3 : index
    %c0_35 = arith.constant 0 : index
    %c0_36 = arith.constant 0 : index
    %41 = vector.load %arg1[%c3, %c0_35, %c0_36] : memref<4x32x256xbf16, #tpu.memory_space<vmem>>, vector<1x32x256xbf16>
    %42 = vector.shape_cast %41 : vector<1x32x256xbf16> to vector<32x256xbf16>
    %c3_37 = arith.constant 3 : index
    %c0_38 = arith.constant 0 : index
    %c0_39 = arith.constant 0 : index
    %43 = vector.load %arg2[%c3_37, %c0_38, %c0_39] : memref<4x256x128xbf16, #tpu.memory_space<vmem>>, vector<1x256x128xbf16>
    %44 = vector.shape_cast %43 : vector<1x256x128xbf16> to vector<256x128xbf16>
    %cst_40 = arith.constant dense<0.000000e+00> : vector<32x128xf32>
    %45 = tpu.matmul %42, %44, %cst_40 {dimension_numbers = #tpu.dot_dimension_numbers<[1], [0], [0], [1], [0, 0, 1, 1], [], []>} : vector<32x256xbf16>, vector<256x128xbf16>, vector<32x128xf32> -> vector<32x128xf32>
    %c0_41 = arith.constant 0 : index
    %c0_42 = arith.constant 0 : index
    %46 = vector.load %arg3[%c0_41, %c0_42] : memref<1x128xf32, #tpu.memory_space<vmem>>, vector<1x128xf32>
    %47 = vector.broadcast %46 : vector<1x128xf32> to vector<32x128xf32>
    %48 = arith.addf %45, %47 : vector<32x128xf32>
    %c3_43 = arith.constant 3 : index
    %c0_44 = arith.constant 0 : index
    %c0_45 = arith.constant 0 : index
    %49 = vector.load %arg7[%c3_43, %c0_44, %c0_45] : memref<4x32x128xf32, #tpu.memory_space<vmem>>, vector<1x32x128xf32>
    %50 = vector.shape_cast %49 : vector<1x32x128xf32> to vector<32x128xf32>
    %51 = vector.shape_cast %48 : vector<32x128xf32> to vector<1x32x128xf32>
    tpu.vector_store %arg7[%c3_43, %c0_44, %c0_45], %51 {strides = array<i32>} : memref<4x32x128xf32, #tpu.memory_space<vmem>>, vector<1x32x128xf32>,
    %cst_46 = arith.constant dense<0.000000e+00> : vector<128xf32>
    %52 = vector.multi_reduction <add>, %48, %cst_46 [0] : vector<32x128xf32> to vector<128xf32>
    %53 = vector.shape_cast %52 : vector<128xf32> to vector<1x128xf32>
    %54 = arith.addf %40, %53 : vector<1x128xf32>
    %cst_47 = arith.constant 7.812500e-03 : f32
    %55 = vector.broadcast %cst_47 : f32 to vector<1x128xf32>
    %56 = arith.mulf %54, %55 : vector<1x128xf32>
    %c0_48 = arith.constant 0 : index
    %c0_49 = arith.constant 0 : index
    %c0_50 = arith.constant 0 : index
    %57 = vector.load %arg7[%c0_48, %c0_49, %c0_50] : memref<4x32x128xf32, #tpu.memory_space<vmem>>, vector<1x32x128xf32>
    %58 = vector.shape_cast %57 : vector<1x32x128xf32> to vector<32x128xf32>
    %59 = vector.broadcast %56 : vector<1x128xf32> to vector<32x128xf32>
    %60 = arith.subf %58, %59 : vector<32x128xf32>
    %61 = arith.mulf %60, %60 : vector<32x128xf32>
    %cst_51 = arith.constant dense<0.000000e+00> : vector<128xf32>
    %62 = vector.multi_reduction <add>, %61, %cst_51 [0] : vector<32x128xf32> to vector<128xf32>
    %63 = vector.shape_cast %62 : vector<128xf32> to vector<1x128xf32>
    %c1_52 = arith.constant 1 : index
    %c0_53 = arith.constant 0 : index
    %c0_54 = arith.constant 0 : index
    %64 = vector.load %arg7[%c1_52, %c0_53, %c0_54] : memref<4x32x128xf32, #tpu.memory_space<vmem>>, vector<1x32x128xf32>
    %65 = vector.shape_cast %64 : vector<1x32x128xf32> to vector<32x128xf32>
    %66 = vector.broadcast %56 : vector<1x128xf32> to vector<32x128xf32>
    %67 = arith.subf %65, %66 : vector<32x128xf32>
    %68 = arith.mulf %67, %67 : vector<32x128xf32>
    %cst_55 = arith.constant dense<0.000000e+00> : vector<128xf32>
    %69 = vector.multi_reduction <add>, %68, %cst_55 [0] : vector<32x128xf32> to vector<128xf32>
    %70 = vector.shape_cast %69 : vector<128xf32> to vector<1x128xf32>
    %71 = arith.addf %63, %70 : vector<1x128xf32>
    %c2_56 = arith.constant 2 : index
    %c0_57 = arith.constant 0 : index
    %c0_58 = arith.constant 0 : index
    %72 = vector.load %arg7[%c2_56, %c0_57, %c0_58] : memref<4x32x128xf32, #tpu.memory_space<vmem>>, vector<1x32x128xf32>
    %73 = vector.shape_cast %72 : vector<1x32x128xf32> to vector<32x128xf32>
    %74 = vector.broadcast %56 : vector<1x128xf32> to vector<32x128xf32>
    %75 = arith.subf %73, %74 : vector<32x128xf32>
    %76 = arith.mulf %75, %75 : vector<32x128xf32>
    %cst_59 = arith.constant dense<0.000000e+00> : vector<128xf32>
    %77 = vector.multi_reduction <add>, %76, %cst_59 [0] : vector<32x128xf32> to vector<128xf32>
    %78 = vector.shape_cast %77 : vector<128xf32> to vector<1x128xf32>
    %79 = arith.addf %71, %78 : vector<1x128xf32>
    %c3_60 = arith.constant 3 : index
    %c0_61 = arith.constant 0 : index
    %c0_62 = arith.constant 0 : index
    %80 = vector.load %arg7[%c3_60, %c0_61, %c0_62] : memref<4x32x128xf32, #tpu.memory_space<vmem>>, vector<1x32x128xf32>
    %81 = vector.shape_cast %80 : vector<1x32x128xf32> to vector<32x128xf32>
    %82 = vector.broadcast %56 : vector<1x128xf32> to vector<32x128xf32>
    %83 = arith.subf %81, %82 : vector<32x128xf32>
    %84 = arith.mulf %83, %83 : vector<32x128xf32>
    %cst_63 = arith.constant dense<0.000000e+00> : vector<128xf32>
    %85 = vector.multi_reduction <add>, %84, %cst_63 [0] : vector<32x128xf32> to vector<128xf32>
    %86 = vector.shape_cast %85 : vector<128xf32> to vector<1x128xf32>
    %87 = arith.addf %79, %86 : vector<1x128xf32>
    %cst_64 = arith.constant 7.812500e-03 : f32
    %88 = vector.broadcast %cst_64 : f32 to vector<1x128xf32>
    %89 = arith.mulf %87, %88 : vector<1x128xf32>
    %cst_65 = arith.constant 0.000000e+00 : f32
    %90 = vector.broadcast %cst_65 : f32 to vector<1x128xf32>
    %91 = arith.maximumf %89, %90 : vector<1x128xf32>
    %c0_66 = arith.constant 0 : index
    %c0_67 = arith.constant 0 : index
    %92 = vector.load %arg4[%c0_66, %c0_67] : memref<1x128xf32, #tpu.memory_space<vmem>>, vector<1x128xf32>
    %cst_68 = arith.constant 9.99999974E-6 : f32
    %93 = vector.broadcast %cst_68 : f32 to vector<1x128xf32>
    %94 = arith.addf %91, %93 : vector<1x128xf32>
    %95 = math.rsqrt %94 : vector<1x128xf32>
    %96 = arith.mulf %92, %95 : vector<1x128xf32>
    %c0_69 = arith.constant 0 : index
    %c0_70 = arith.constant 0 : index
    %97 = vector.load %arg5[%c0_69, %c0_70] : memref<1x128xf32, #tpu.memory_space<vmem>>, vector<1x128xf32>
    %98 = arith.mulf %56, %96 : vector<1x128xf32>
    %99 = arith.subf %97, %98 : vector<1x128xf32>
    %c0_71 = arith.constant 0 : index
    %c0_72 = arith.constant 0 : index
    %c0_73 = arith.constant 0 : index
    %100 = vector.load %arg7[%c0_71, %c0_72, %c0_73] : memref<4x32x128xf32, #tpu.memory_space<vmem>>, vector<1x32x128xf32>
    %101 = vector.shape_cast %100 : vector<1x32x128xf32> to vector<32x128xf32>
    %102 = vector.broadcast %96 : vector<1x128xf32> to vector<32x128xf32>
    %103 = arith.mulf %101, %102 : vector<32x128xf32>
    %104 = vector.broadcast %99 : vector<1x128xf32> to vector<32x128xf32>
    %105 = arith.addf %103, %104 : vector<32x128xf32>
    %cst_74 = arith.constant 0.000000e+00 : f32
    %106 = vector.broadcast %cst_74 : f32 to vector<32x128xf32>
    %107 = arith.maximumf %105, %106 : vector<32x128xf32>
    %108 = arith.truncf %107 : vector<32x128xf32> to vector<32x128xbf16>
    %c0_75 = arith.constant 0 : index
    %c0_76 = arith.constant 0 : index
    %c0_77 = arith.constant 0 : index
    %109 = vector.load %arg6[%c0_75, %c0_76, %c0_77] : memref<4x32x128xbf16, #tpu.memory_space<vmem>>, vector<1x32x128xbf16>
    %110 = vector.shape_cast %109 : vector<1x32x128xbf16> to vector<32x128xbf16>
    %111 = vector.shape_cast %108 : vector<32x128xbf16> to vector<1x32x128xbf16>
    tpu.vector_store %arg6[%c0_75, %c0_76, %c0_77], %111 {strides = array<i32>} : memref<4x32x128xbf16, #tpu.memory_space<vmem>>, vector<1x32x128xbf16>,
    %c1_78 = arith.constant 1 : index
    %c0_79 = arith.constant 0 : index
    %c0_80 = arith.constant 0 : index
    %112 = vector.load %arg7[%c1_78, %c0_79, %c0_80] : memref<4x32x128xf32, #tpu.memory_space<vmem>>, vector<1x32x128xf32>
    %113 = vector.shape_cast %112 : vector<1x32x128xf32> to vector<32x128xf32>
    %114 = vector.broadcast %96 : vector<1x128xf32> to vector<32x128xf32>
    %115 = arith.mulf %113, %114 : vector<32x128xf32>
    %116 = vector.broadcast %99 : vector<1x128xf32> to vector<32x128xf32>
    %117 = arith.addf %115, %116 : vector<32x128xf32>
    %cst_81 = arith.constant 0.000000e+00 : f32
    %118 = vector.broadcast %cst_81 : f32 to vector<32x128xf32>
    %119 = arith.maximumf %117, %118 : vector<32x128xf32>
    %120 = arith.truncf %119 : vector<32x128xf32> to vector<32x128xbf16>
    %c1_82 = arith.constant 1 : index
    %c0_83 = arith.constant 0 : index
    %c0_84 = arith.constant 0 : index
    %121 = vector.load %arg6[%c1_82, %c0_83, %c0_84] : memref<4x32x128xbf16, #tpu.memory_space<vmem>>, vector<1x32x128xbf16>
    %122 = vector.shape_cast %121 : vector<1x32x128xbf16> to vector<32x128xbf16>
    %123 = vector.shape_cast %120 : vector<32x128xbf16> to vector<1x32x128xbf16>
    tpu.vector_store %arg6[%c1_82, %c0_83, %c0_84], %123 {strides = array<i32>} : memref<4x32x128xbf16, #tpu.memory_space<vmem>>, vector<1x32x128xbf16>,
    %c2_85 = arith.constant 2 : index
    %c0_86 = arith.constant 0 : index
    %c0_87 = arith.constant 0 : index
    %124 = vector.load %arg7[%c2_85, %c0_86, %c0_87] : memref<4x32x128xf32, #tpu.memory_space<vmem>>, vector<1x32x128xf32>
    %125 = vector.shape_cast %124 : vector<1x32x128xf32> to vector<32x128xf32>
    %126 = vector.broadcast %96 : vector<1x128xf32> to vector<32x128xf32>
    %127 = arith.mulf %125, %126 : vector<32x128xf32>
    %128 = vector.broadcast %99 : vector<1x128xf32> to vector<32x128xf32>
    %129 = arith.addf %127, %128 : vector<32x128xf32>
    %cst_88 = arith.constant 0.000000e+00 : f32
    %130 = vector.broadcast %cst_88 : f32 to vector<32x128xf32>
    %131 = arith.maximumf %129, %130 : vector<32x128xf32>
    %132 = arith.truncf %131 : vector<32x128xf32> to vector<32x128xbf16>
    %c2_89 = arith.constant 2 : index
    %c0_90 = arith.constant 0 : index
    %c0_91 = arith.constant 0 : index
    %133 = vector.load %arg6[%c2_89, %c0_90, %c0_91] : memref<4x32x128xbf16, #tpu.memory_space<vmem>>, vector<1x32x128xbf16>
    %134 = vector.shape_cast %133 : vector<1x32x128xbf16> to vector<32x128xbf16>
    %135 = vector.shape_cast %132 : vector<32x128xbf16> to vector<1x32x128xbf16>
    tpu.vector_store %arg6[%c2_89, %c0_90, %c0_91], %135 {strides = array<i32>} : memref<4x32x128xbf16, #tpu.memory_space<vmem>>, vector<1x32x128xbf16>,
    %c3_92 = arith.constant 3 : index
    %c0_93 = arith.constant 0 : index
    %c0_94 = arith.constant 0 : index
    %136 = vector.load %arg7[%c3_92, %c0_93, %c0_94] : memref<4x32x128xf32, #tpu.memory_space<vmem>>, vector<1x32x128xf32>
    %137 = vector.shape_cast %136 : vector<1x32x128xf32> to vector<32x128xf32>
    %138 = vector.broadcast %96 : vector<1x128xf32> to vector<32x128xf32>
    %139 = arith.mulf %137, %138 : vector<32x128xf32>
    %140 = vector.broadcast %99 : vector<1x128xf32> to vector<32x128xf32>
    %141 = arith.addf %139, %140 : vector<32x128xf32>
    %cst_95 = arith.constant 0.000000e+00 : f32
    %142 = vector.broadcast %cst_95 : f32 to vector<32x128xf32>
    %143 = arith.maximumf %141, %142 : vector<32x128xf32>
    %144 = arith.truncf %143 : vector<32x128xf32> to vector<32x128xbf16>
    %c3_96 = arith.constant 3 : index
    %c0_97 = arith.constant 0 : index
    %c0_98 = arith.constant 0 : index
    %145 = vector.load %arg6[%c3_96, %c0_97, %c0_98] : memref<4x32x128xbf16, #tpu.memory_space<vmem>>, vector<1x32x128xbf16>
    %146 = vector.shape_cast %145 : vector<1x32x128xbf16> to vector<32x128xbf16>
    %147 = vector.shape_cast %144 : vector<32x128xbf16> to vector<1x32x128xbf16>
    tpu.vector_store %arg6[%c3_96, %c0_97, %c0_98], %147 {strides = array<i32>} : memref<4x32x128xbf16, #tpu.memory_space<vmem>>, vector<1x32x128xbf16>,
    return
  }
  func.func @transform_0(%arg0: i32) -> (i32, i32, i32) {
    %c0_i32 = arith.constant 0 : i32
    %c0_i32_0 = arith.constant 0 : i32
    %c0_i32_1 = arith.constant 0 : i32
    %c0_i32_2 = arith.constant 0 : i32
    return %c0_i32, %c0_i32_0, %c0_i32_1 : i32, i32, i32
  }
  func.func @transform_1(%arg0: i32) -> (i32, i32, i32) {
    %c0_i32 = arith.constant 0 : i32
    %c0_i32_0 = arith.constant 0 : i32
    %c0_i32_1 = arith.constant 0 : i32
    %c0_i32_2 = arith.constant 0 : i32
    return %c0_i32, %c0_i32_0, %c0_i32_1 : i32, i32, i32
  }
  func.func @transform_2(%arg0: i32) -> (i32, i32) {
    %c0_i32 = arith.constant 0 : i32
    %c0_i32_0 = arith.constant 0 : i32
    %c0_i32_1 = arith.constant 0 : i32
    return %c0_i32, %c0_i32_0 : i32, i32
  }
  func.func @transform_3(%arg0: i32) -> (i32, i32) {
    %c0_i32 = arith.constant 0 : i32
    %c0_i32_0 = arith.constant 0 : i32
    %c0_i32_1 = arith.constant 0 : i32
    return %c0_i32, %c0_i32_0 : i32, i32
  }
  func.func @transform_4(%arg0: i32) -> (i32, i32) {
    %c0_i32 = arith.constant 0 : i32
    %c0_i32_0 = arith.constant 0 : i32
    %c0_i32_1 = arith.constant 0 : i32
    return %c0_i32, %c0_i32_0 : i32, i32
  }
  func.func @transform_5(%arg0: i32) -> (i32, i32, i32) {
    %c0_i32 = arith.constant 0 : i32
    %c0_i32_0 = arith.constant 0 : i32
    %c0_i32_1 = arith.constant 0 : i32
    %c0_i32_2 = arith.constant 0 : i32
    return %c0_i32, %c0_i32_0, %c0_i32_1 : i32, i32, i32
  }
}

module attributes {stable_mosaic.version = 11 : i64} {
  func.func @_fused_conv_bn_kernel(%arg0: i32, %arg1: memref<4x128x128xbf16, #tpu.memory_space<vmem>>, %arg2: memref<4x128x128xbf16, #tpu.memory_space<vmem>>, %arg3: memref<1x128xf32, #tpu.memory_space<vmem>>, %arg4: memref<1x128xf32, #tpu.memory_space<vmem>>, %arg5: memref<1x128xf32, #tpu.memory_space<vmem>>, %arg6: memref<4x128x128xbf16, #tpu.memory_space<vmem>>, %arg7: memref<4x128x128xf32, #tpu.memory_space<vmem>>) attributes {dimension_semantics = [#tpu.dimension_semantics<arbitrary>], iteration_bounds = array<i64: 1>, scalar_prefetch = 0 : i64, scratch_operands = 1 : i64, tpu.core_type = #tpu.core_type<tc>, window_params = [{pipeline_mode = #tpu.pipeline_mode<synchronous>, transform_indices = @transform_0, window_bounds = array<i64: 4, 128, 128>}, {pipeline_mode = #tpu.pipeline_mode<synchronous>, transform_indices = @transform_1, window_bounds = array<i64: 4, 128, 128>}, {pipeline_mode = #tpu.pipeline_mode<synchronous>, transform_indices = @transform_2, window_bounds = array<i64: 1, 128>}, {pipeline_mode = #tpu.pipeline_mode<synchronous>, transform_indices = @transform_3, window_bounds = array<i64: 1, 128>}, {pipeline_mode = #tpu.pipeline_mode<synchronous>, transform_indices = @transform_4, window_bounds = array<i64: 1, 128>}, {pipeline_mode = #tpu.pipeline_mode<synchronous>, transform_indices = @transform_5, window_bounds = array<i64: 4, 128, 128>}]} {
    %c0 = arith.constant 0 : index
    %c0_0 = arith.constant 0 : index
    %c0_1 = arith.constant 0 : index
    %0 = vector.load %arg1[%c0, %c0_0, %c0_1] : memref<4x128x128xbf16, #tpu.memory_space<vmem>>, vector<1x128x128xbf16>
    %1 = vector.shape_cast %0 : vector<1x128x128xbf16> to vector<128x128xbf16>
    %c0_2 = arith.constant 0 : index
    %c0_3 = arith.constant 0 : index
    %c0_4 = arith.constant 0 : index
    %2 = vector.load %arg2[%c0_2, %c0_3, %c0_4] : memref<4x128x128xbf16, #tpu.memory_space<vmem>>, vector<1x128x128xbf16>
    %3 = vector.shape_cast %2 : vector<1x128x128xbf16> to vector<128x128xbf16>
    %cst = arith.constant dense<0.000000e+00> : vector<128x128xf32>
    %4 = tpu.matmul %1, %3, %cst {dimension_numbers = #tpu.dot_dimension_numbers<[1], [0], [0], [1], [0, 0, 1, 1], [], []>} : vector<128x128xbf16>, vector<128x128xbf16>, vector<128x128xf32> -> vector<128x128xf32>
    %c0_5 = arith.constant 0 : index
    %c0_6 = arith.constant 0 : index
    %5 = vector.load %arg3[%c0_5, %c0_6] : memref<1x128xf32, #tpu.memory_space<vmem>>, vector<1x128xf32>
    %6 = vector.broadcast %5 : vector<1x128xf32> to vector<128x128xf32>
    %7 = arith.addf %4, %6 : vector<128x128xf32>
    %c0_7 = arith.constant 0 : index
    %c0_8 = arith.constant 0 : index
    %c0_9 = arith.constant 0 : index
    %8 = vector.load %arg7[%c0_7, %c0_8, %c0_9] : memref<4x128x128xf32, #tpu.memory_space<vmem>>, vector<1x128x128xf32>
    %9 = vector.shape_cast %8 : vector<1x128x128xf32> to vector<128x128xf32>
    %10 = vector.shape_cast %7 : vector<128x128xf32> to vector<1x128x128xf32>
    tpu.vector_store %arg7[%c0_7, %c0_8, %c0_9], %10 {strides = array<i32>} : memref<4x128x128xf32, #tpu.memory_space<vmem>>, vector<1x128x128xf32>,
    %cst_10 = arith.constant dense<0.000000e+00> : vector<128xf32>
    %11 = vector.multi_reduction <add>, %7, %cst_10 [0] : vector<128x128xf32> to vector<128xf32>
    %12 = vector.shape_cast %11 : vector<128xf32> to vector<1x128xf32>
    %c1 = arith.constant 1 : index
    %c0_11 = arith.constant 0 : index
    %c0_12 = arith.constant 0 : index
    %13 = vector.load %arg1[%c1, %c0_11, %c0_12] : memref<4x128x128xbf16, #tpu.memory_space<vmem>>, vector<1x128x128xbf16>
    %14 = vector.shape_cast %13 : vector<1x128x128xbf16> to vector<128x128xbf16>
    %c1_13 = arith.constant 1 : index
    %c0_14 = arith.constant 0 : index
    %c0_15 = arith.constant 0 : index
    %15 = vector.load %arg2[%c1_13, %c0_14, %c0_15] : memref<4x128x128xbf16, #tpu.memory_space<vmem>>, vector<1x128x128xbf16>
    %16 = vector.shape_cast %15 : vector<1x128x128xbf16> to vector<128x128xbf16>
    %cst_16 = arith.constant dense<0.000000e+00> : vector<128x128xf32>
    %17 = tpu.matmul %14, %16, %cst_16 {dimension_numbers = #tpu.dot_dimension_numbers<[1], [0], [0], [1], [0, 0, 1, 1], [], []>} : vector<128x128xbf16>, vector<128x128xbf16>, vector<128x128xf32> -> vector<128x128xf32>
    %c0_17 = arith.constant 0 : index
    %c0_18 = arith.constant 0 : index
    %18 = vector.load %arg3[%c0_17, %c0_18] : memref<1x128xf32, #tpu.memory_space<vmem>>, vector<1x128xf32>
    %19 = vector.broadcast %18 : vector<1x128xf32> to vector<128x128xf32>
    %20 = arith.addf %17, %19 : vector<128x128xf32>
    %c1_19 = arith.constant 1 : index
    %c0_20 = arith.constant 0 : index
    %c0_21 = arith.constant 0 : index
    %21 = vector.load %arg7[%c1_19, %c0_20, %c0_21] : memref<4x128x128xf32, #tpu.memory_space<vmem>>, vector<1x128x128xf32>
    %22 = vector.shape_cast %21 : vector<1x128x128xf32> to vector<128x128xf32>
    %23 = vector.shape_cast %20 : vector<128x128xf32> to vector<1x128x128xf32>
    tpu.vector_store %arg7[%c1_19, %c0_20, %c0_21], %23 {strides = array<i32>} : memref<4x128x128xf32, #tpu.memory_space<vmem>>, vector<1x128x128xf32>,
    %cst_22 = arith.constant dense<0.000000e+00> : vector<128xf32>
    %24 = vector.multi_reduction <add>, %20, %cst_22 [0] : vector<128x128xf32> to vector<128xf32>
    %25 = vector.shape_cast %24 : vector<128xf32> to vector<1x128xf32>
    %26 = arith.addf %12, %25 : vector<1x128xf32>
    %c2 = arith.constant 2 : index
    %c0_23 = arith.constant 0 : index
    %c0_24 = arith.constant 0 : index
    %27 = vector.load %arg1[%c2, %c0_23, %c0_24] : memref<4x128x128xbf16, #tpu.memory_space<vmem>>, vector<1x128x128xbf16>
    %28 = vector.shape_cast %27 : vector<1x128x128xbf16> to vector<128x128xbf16>
    %c2_25 = arith.constant 2 : index
    %c0_26 = arith.constant 0 : index
    %c0_27 = arith.constant 0 : index
    %29 = vector.load %arg2[%c2_25, %c0_26, %c0_27] : memref<4x128x128xbf16, #tpu.memory_space<vmem>>, vector<1x128x128xbf16>
    %30 = vector.shape_cast %29 : vector<1x128x128xbf16> to vector<128x128xbf16>
    %cst_28 = arith.constant dense<0.000000e+00> : vector<128x128xf32>
    %31 = tpu.matmul %28, %30, %cst_28 {dimension_numbers = #tpu.dot_dimension_numbers<[1], [0], [0], [1], [0, 0, 1, 1], [], []>} : vector<128x128xbf16>, vector<128x128xbf16>, vector<128x128xf32> -> vector<128x128xf32>
    %c0_29 = arith.constant 0 : index
    %c0_30 = arith.constant 0 : index
    %32 = vector.load %arg3[%c0_29, %c0_30] : memref<1x128xf32, #tpu.memory_space<vmem>>, vector<1x128xf32>
    %33 = vector.broadcast %32 : vector<1x128xf32> to vector<128x128xf32>
    %34 = arith.addf %31, %33 : vector<128x128xf32>
    %c2_31 = arith.constant 2 : index
    %c0_32 = arith.constant 0 : index
    %c0_33 = arith.constant 0 : index
    %35 = vector.load %arg7[%c2_31, %c0_32, %c0_33] : memref<4x128x128xf32, #tpu.memory_space<vmem>>, vector<1x128x128xf32>
    %36 = vector.shape_cast %35 : vector<1x128x128xf32> to vector<128x128xf32>
    %37 = vector.shape_cast %34 : vector<128x128xf32> to vector<1x128x128xf32>
    tpu.vector_store %arg7[%c2_31, %c0_32, %c0_33], %37 {strides = array<i32>} : memref<4x128x128xf32, #tpu.memory_space<vmem>>, vector<1x128x128xf32>,
    %cst_34 = arith.constant dense<0.000000e+00> : vector<128xf32>
    %38 = vector.multi_reduction <add>, %34, %cst_34 [0] : vector<128x128xf32> to vector<128xf32>
    %39 = vector.shape_cast %38 : vector<128xf32> to vector<1x128xf32>
    %40 = arith.addf %26, %39 : vector<1x128xf32>
    %c3 = arith.constant 3 : index
    %c0_35 = arith.constant 0 : index
    %c0_36 = arith.constant 0 : index
    %41 = vector.load %arg1[%c3, %c0_35, %c0_36] : memref<4x128x128xbf16, #tpu.memory_space<vmem>>, vector<1x128x128xbf16>
    %42 = vector.shape_cast %41 : vector<1x128x128xbf16> to vector<128x128xbf16>
    %c3_37 = arith.constant 3 : index
    %c0_38 = arith.constant 0 : index
    %c0_39 = arith.constant 0 : index
    %43 = vector.load %arg2[%c3_37, %c0_38, %c0_39] : memref<4x128x128xbf16, #tpu.memory_space<vmem>>, vector<1x128x128xbf16>
    %44 = vector.shape_cast %43 : vector<1x128x128xbf16> to vector<128x128xbf16>
    %cst_40 = arith.constant dense<0.000000e+00> : vector<128x128xf32>
    %45 = tpu.matmul %42, %44, %cst_40 {dimension_numbers = #tpu.dot_dimension_numbers<[1], [0], [0], [1], [0, 0, 1, 1], [], []>} : vector<128x128xbf16>, vector<128x128xbf16>, vector<128x128xf32> -> vector<128x128xf32>
    %c0_41 = arith.constant 0 : index
    %c0_42 = arith.constant 0 : index
    %46 = vector.load %arg3[%c0_41, %c0_42] : memref<1x128xf32, #tpu.memory_space<vmem>>, vector<1x128xf32>
    %47 = vector.broadcast %46 : vector<1x128xf32> to vector<128x128xf32>
    %48 = arith.addf %45, %47 : vector<128x128xf32>
    %c3_43 = arith.constant 3 : index
    %c0_44 = arith.constant 0 : index
    %c0_45 = arith.constant 0 : index
    %49 = vector.load %arg7[%c3_43, %c0_44, %c0_45] : memref<4x128x128xf32, #tpu.memory_space<vmem>>, vector<1x128x128xf32>
    %50 = vector.shape_cast %49 : vector<1x128x128xf32> to vector<128x128xf32>
    %51 = vector.shape_cast %48 : vector<128x128xf32> to vector<1x128x128xf32>
    tpu.vector_store %arg7[%c3_43, %c0_44, %c0_45], %51 {strides = array<i32>} : memref<4x128x128xf32, #tpu.memory_space<vmem>>, vector<1x128x128xf32>,
    %cst_46 = arith.constant dense<0.000000e+00> : vector<128xf32>
    %52 = vector.multi_reduction <add>, %48, %cst_46 [0] : vector<128x128xf32> to vector<128xf32>
    %53 = vector.shape_cast %52 : vector<128xf32> to vector<1x128xf32>
    %54 = arith.addf %40, %53 : vector<1x128xf32>
    %cst_47 = arith.constant 0.001953125 : f32
    %55 = vector.broadcast %cst_47 : f32 to vector<1x128xf32>
    %56 = arith.mulf %54, %55 : vector<1x128xf32>
    %c0_48 = arith.constant 0 : index
    %c0_49 = arith.constant 0 : index
    %c0_50 = arith.constant 0 : index
    %57 = vector.load %arg7[%c0_48, %c0_49, %c0_50] : memref<4x128x128xf32, #tpu.memory_space<vmem>>, vector<1x128x128xf32>
    %58 = vector.shape_cast %57 : vector<1x128x128xf32> to vector<128x128xf32>
    %59 = vector.broadcast %56 : vector<1x128xf32> to vector<128x128xf32>
    %60 = arith.subf %58, %59 : vector<128x128xf32>
    %61 = arith.mulf %60, %60 : vector<128x128xf32>
    %cst_51 = arith.constant dense<0.000000e+00> : vector<128xf32>
    %62 = vector.multi_reduction <add>, %61, %cst_51 [0] : vector<128x128xf32> to vector<128xf32>
    %63 = vector.shape_cast %62 : vector<128xf32> to vector<1x128xf32>
    %c1_52 = arith.constant 1 : index
    %c0_53 = arith.constant 0 : index
    %c0_54 = arith.constant 0 : index
    %64 = vector.load %arg7[%c1_52, %c0_53, %c0_54] : memref<4x128x128xf32, #tpu.memory_space<vmem>>, vector<1x128x128xf32>
    %65 = vector.shape_cast %64 : vector<1x128x128xf32> to vector<128x128xf32>
    %66 = vector.broadcast %56 : vector<1x128xf32> to vector<128x128xf32>
    %67 = arith.subf %65, %66 : vector<128x128xf32>
    %68 = arith.mulf %67, %67 : vector<128x128xf32>
    %cst_55 = arith.constant dense<0.000000e+00> : vector<128xf32>
    %69 = vector.multi_reduction <add>, %68, %cst_55 [0] : vector<128x128xf32> to vector<128xf32>
    %70 = vector.shape_cast %69 : vector<128xf32> to vector<1x128xf32>
    %71 = arith.addf %63, %70 : vector<1x128xf32>
    %c2_56 = arith.constant 2 : index
    %c0_57 = arith.constant 0 : index
    %c0_58 = arith.constant 0 : index
    %72 = vector.load %arg7[%c2_56, %c0_57, %c0_58] : memref<4x128x128xf32, #tpu.memory_space<vmem>>, vector<1x128x128xf32>
    %73 = vector.shape_cast %72 : vector<1x128x128xf32> to vector<128x128xf32>
    %74 = vector.broadcast %56 : vector<1x128xf32> to vector<128x128xf32>
    %75 = arith.subf %73, %74 : vector<128x128xf32>
    %76 = arith.mulf %75, %75 : vector<128x128xf32>
    %cst_59 = arith.constant dense<0.000000e+00> : vector<128xf32>
    %77 = vector.multi_reduction <add>, %76, %cst_59 [0] : vector<128x128xf32> to vector<128xf32>
    %78 = vector.shape_cast %77 : vector<128xf32> to vector<1x128xf32>
    %79 = arith.addf %71, %78 : vector<1x128xf32>
    %c3_60 = arith.constant 3 : index
    %c0_61 = arith.constant 0 : index
    %c0_62 = arith.constant 0 : index
    %80 = vector.load %arg7[%c3_60, %c0_61, %c0_62] : memref<4x128x128xf32, #tpu.memory_space<vmem>>, vector<1x128x128xf32>
    %81 = vector.shape_cast %80 : vector<1x128x128xf32> to vector<128x128xf32>
    %82 = vector.broadcast %56 : vector<1x128xf32> to vector<128x128xf32>
    %83 = arith.subf %81, %82 : vector<128x128xf32>
    %84 = arith.mulf %83, %83 : vector<128x128xf32>
    %cst_63 = arith.constant dense<0.000000e+00> : vector<128xf32>
    %85 = vector.multi_reduction <add>, %84, %cst_63 [0] : vector<128x128xf32> to vector<128xf32>
    %86 = vector.shape_cast %85 : vector<128xf32> to vector<1x128xf32>
    %87 = arith.addf %79, %86 : vector<1x128xf32>
    %cst_64 = arith.constant 0.001953125 : f32
    %88 = vector.broadcast %cst_64 : f32 to vector<1x128xf32>
    %89 = arith.mulf %87, %88 : vector<1x128xf32>
    %cst_65 = arith.constant 0.000000e+00 : f32
    %90 = vector.broadcast %cst_65 : f32 to vector<1x128xf32>
    %91 = arith.maximumf %89, %90 : vector<1x128xf32>
    %c0_66 = arith.constant 0 : index
    %c0_67 = arith.constant 0 : index
    %92 = vector.load %arg4[%c0_66, %c0_67] : memref<1x128xf32, #tpu.memory_space<vmem>>, vector<1x128xf32>
    %cst_68 = arith.constant 9.99999974E-6 : f32
    %93 = vector.broadcast %cst_68 : f32 to vector<1x128xf32>
    %94 = arith.addf %91, %93 : vector<1x128xf32>
    %95 = math.rsqrt %94 : vector<1x128xf32>
    %96 = arith.mulf %92, %95 : vector<1x128xf32>
    %c0_69 = arith.constant 0 : index
    %c0_70 = arith.constant 0 : index
    %97 = vector.load %arg5[%c0_69, %c0_70] : memref<1x128xf32, #tpu.memory_space<vmem>>, vector<1x128xf32>
    %98 = arith.mulf %56, %96 : vector<1x128xf32>
    %99 = arith.subf %97, %98 : vector<1x128xf32>
    %c0_71 = arith.constant 0 : index
    %c0_72 = arith.constant 0 : index
    %c0_73 = arith.constant 0 : index
    %100 = vector.load %arg7[%c0_71, %c0_72, %c0_73] : memref<4x128x128xf32, #tpu.memory_space<vmem>>, vector<1x128x128xf32>
    %101 = vector.shape_cast %100 : vector<1x128x128xf32> to vector<128x128xf32>
    %102 = vector.broadcast %96 : vector<1x128xf32> to vector<128x128xf32>
    %103 = arith.mulf %101, %102 : vector<128x128xf32>
    %104 = vector.broadcast %99 : vector<1x128xf32> to vector<128x128xf32>
    %105 = arith.addf %103, %104 : vector<128x128xf32>
    %cst_74 = arith.constant 0.000000e+00 : f32
    %106 = vector.broadcast %cst_74 : f32 to vector<128x128xf32>
    %107 = arith.maximumf %105, %106 : vector<128x128xf32>
    %108 = arith.truncf %107 : vector<128x128xf32> to vector<128x128xbf16>
    %c0_75 = arith.constant 0 : index
    %c0_76 = arith.constant 0 : index
    %c0_77 = arith.constant 0 : index
    %109 = vector.load %arg6[%c0_75, %c0_76, %c0_77] : memref<4x128x128xbf16, #tpu.memory_space<vmem>>, vector<1x128x128xbf16>
    %110 = vector.shape_cast %109 : vector<1x128x128xbf16> to vector<128x128xbf16>
    %111 = vector.shape_cast %108 : vector<128x128xbf16> to vector<1x128x128xbf16>
    tpu.vector_store %arg6[%c0_75, %c0_76, %c0_77], %111 {strides = array<i32>} : memref<4x128x128xbf16, #tpu.memory_space<vmem>>, vector<1x128x128xbf16>,
    %c1_78 = arith.constant 1 : index
    %c0_79 = arith.constant 0 : index
    %c0_80 = arith.constant 0 : index
    %112 = vector.load %arg7[%c1_78, %c0_79, %c0_80] : memref<4x128x128xf32, #tpu.memory_space<vmem>>, vector<1x128x128xf32>
    %113 = vector.shape_cast %112 : vector<1x128x128xf32> to vector<128x128xf32>
    %114 = vector.broadcast %96 : vector<1x128xf32> to vector<128x128xf32>
    %115 = arith.mulf %113, %114 : vector<128x128xf32>
    %116 = vector.broadcast %99 : vector<1x128xf32> to vector<128x128xf32>
    %117 = arith.addf %115, %116 : vector<128x128xf32>
    %cst_81 = arith.constant 0.000000e+00 : f32
    %118 = vector.broadcast %cst_81 : f32 to vector<128x128xf32>
    %119 = arith.maximumf %117, %118 : vector<128x128xf32>
    %120 = arith.truncf %119 : vector<128x128xf32> to vector<128x128xbf16>
    %c1_82 = arith.constant 1 : index
    %c0_83 = arith.constant 0 : index
    %c0_84 = arith.constant 0 : index
    %121 = vector.load %arg6[%c1_82, %c0_83, %c0_84] : memref<4x128x128xbf16, #tpu.memory_space<vmem>>, vector<1x128x128xbf16>
    %122 = vector.shape_cast %121 : vector<1x128x128xbf16> to vector<128x128xbf16>
    %123 = vector.shape_cast %120 : vector<128x128xbf16> to vector<1x128x128xbf16>
    tpu.vector_store %arg6[%c1_82, %c0_83, %c0_84], %123 {strides = array<i32>} : memref<4x128x128xbf16, #tpu.memory_space<vmem>>, vector<1x128x128xbf16>,
    %c2_85 = arith.constant 2 : index
    %c0_86 = arith.constant 0 : index
    %c0_87 = arith.constant 0 : index
    %124 = vector.load %arg7[%c2_85, %c0_86, %c0_87] : memref<4x128x128xf32, #tpu.memory_space<vmem>>, vector<1x128x128xf32>
    %125 = vector.shape_cast %124 : vector<1x128x128xf32> to vector<128x128xf32>
    %126 = vector.broadcast %96 : vector<1x128xf32> to vector<128x128xf32>
    %127 = arith.mulf %125, %126 : vector<128x128xf32>
    %128 = vector.broadcast %99 : vector<1x128xf32> to vector<128x128xf32>
    %129 = arith.addf %127, %128 : vector<128x128xf32>
    %cst_88 = arith.constant 0.000000e+00 : f32
    %130 = vector.broadcast %cst_88 : f32 to vector<128x128xf32>
    %131 = arith.maximumf %129, %130 : vector<128x128xf32>
    %132 = arith.truncf %131 : vector<128x128xf32> to vector<128x128xbf16>
    %c2_89 = arith.constant 2 : index
    %c0_90 = arith.constant 0 : index
    %c0_91 = arith.constant 0 : index
    %133 = vector.load %arg6[%c2_89, %c0_90, %c0_91] : memref<4x128x128xbf16, #tpu.memory_space<vmem>>, vector<1x128x128xbf16>
    %134 = vector.shape_cast %133 : vector<1x128x128xbf16> to vector<128x128xbf16>
    %135 = vector.shape_cast %132 : vector<128x128xbf16> to vector<1x128x128xbf16>
    tpu.vector_store %arg6[%c2_89, %c0_90, %c0_91], %135 {strides = array<i32>} : memref<4x128x128xbf16, #tpu.memory_space<vmem>>, vector<1x128x128xbf16>,
    %c3_92 = arith.constant 3 : index
    %c0_93 = arith.constant 0 : index
    %c0_94 = arith.constant 0 : index
    %136 = vector.load %arg7[%c3_92, %c0_93, %c0_94] : memref<4x128x128xf32, #tpu.memory_space<vmem>>, vector<1x128x128xf32>
    %137 = vector.shape_cast %136 : vector<1x128x128xf32> to vector<128x128xf32>
    %138 = vector.broadcast %96 : vector<1x128xf32> to vector<128x128xf32>
    %139 = arith.mulf %137, %138 : vector<128x128xf32>
    %140 = vector.broadcast %99 : vector<1x128xf32> to vector<128x128xf32>
    %141 = arith.addf %139, %140 : vector<128x128xf32>
    %cst_95 = arith.constant 0.000000e+00 : f32
    %142 = vector.broadcast %cst_95 : f32 to vector<128x128xf32>
    %143 = arith.maximumf %141, %142 : vector<128x128xf32>
    %144 = arith.truncf %143 : vector<128x128xf32> to vector<128x128xbf16>
    %c3_96 = arith.constant 3 : index
    %c0_97 = arith.constant 0 : index
    %c0_98 = arith.constant 0 : index
    %145 = vector.load %arg6[%c3_96, %c0_97, %c0_98] : memref<4x128x128xbf16, #tpu.memory_space<vmem>>, vector<1x128x128xbf16>
    %146 = vector.shape_cast %145 : vector<1x128x128xbf16> to vector<128x128xbf16>
    %147 = vector.shape_cast %144 : vector<128x128xbf16> to vector<1x128x128xbf16>
    tpu.vector_store %arg6[%c3_96, %c0_97, %c0_98], %147 {strides = array<i32>} : memref<4x128x128xbf16, #tpu.memory_space<vmem>>, vector<1x128x128xbf16>,
    return
  }
  func.func @transform_0(%arg0: i32) -> (i32, i32, i32) {
    %c0_i32 = arith.constant 0 : i32
    %c0_i32_0 = arith.constant 0 : i32
    %c0_i32_1 = arith.constant 0 : i32
    %c0_i32_2 = arith.constant 0 : i32
    return %c0_i32, %c0_i32_0, %c0_i32_1 : i32, i32, i32
  }
  func.func @transform_1(%arg0: i32) -> (i32, i32, i32) {
    %c0_i32 = arith.constant 0 : i32
    %c0_i32_0 = arith.constant 0 : i32
    %c0_i32_1 = arith.constant 0 : i32
    %c0_i32_2 = arith.constant 0 : i32
    return %c0_i32, %c0_i32_0, %c0_i32_1 : i32, i32, i32
  }
  func.func @transform_2(%arg0: i32) -> (i32, i32) {
    %c0_i32 = arith.constant 0 : i32
    %c0_i32_0 = arith.constant 0 : i32
    %c0_i32_1 = arith.constant 0 : i32
    return %c0_i32, %c0_i32_0 : i32, i32
  }
  func.func @transform_3(%arg0: i32) -> (i32, i32) {
    %c0_i32 = arith.constant 0 : i32
    %c0_i32_0 = arith.constant 0 : i32
    %c0_i32_1 = arith.constant 0 : i32
    return %c0_i32, %c0_i32_0 : i32, i32
  }
  func.func @transform_4(%arg0: i32) -> (i32, i32) {
    %c0_i32 = arith.constant 0 : i32
    %c0_i32_0 = arith.constant 0 : i32
    %c0_i32_1 = arith.constant 0 : i32
    return %c0_i32, %c0_i32_0 : i32, i32
  }
  func.func @transform_5(%arg0: i32) -> (i32, i32, i32) {
    %c0_i32 = arith.constant 0 : i32
    %c0_i32_0 = arith.constant 0 : i32
    %c0_i32_1 = arith.constant 0 : i32
    %c0_i32_2 = arith.constant 0 : i32
    return %c0_i32, %c0_i32_0, %c0_i32_1 : i32, i32, i32
  }
}

module attributes {stable_mosaic.version = 11 : i64} {
  func.func @_mm_bias_tanh_kernel(%arg0: i32, %arg1: i32, %arg2: memref<1x256x64xbf16, #tpu.memory_space<vmem>>, %arg3: memref<1x64x128xbf16, #tpu.memory_space<vmem>>, %arg4: memref<1x128xf32, #tpu.memory_space<vmem>>, %arg5: memref<1x256x128xbf16, #tpu.memory_space<vmem>>) attributes {dimension_semantics = [#tpu.dimension_semantics<parallel>, #tpu.dimension_semantics<parallel>], iteration_bounds = array<i64: 4, 2>, scalar_prefetch = 0 : i64, scratch_operands = 0 : i64, tpu.core_type = #tpu.core_type<tc>, window_params = [{transform_indices = @transform_0, window_bounds = array<i64: 1, 256, 64>}, {transform_indices = @transform_1, window_bounds = array<i64: 1, 64, 128>}, {pipeline_mode = #tpu.pipeline_mode<synchronous>, transform_indices = @transform_2, window_bounds = array<i64: 1, 128>}, {transform_indices = @transform_3, window_bounds = array<i64: 1, 256, 128>}]} {
    %c0 = arith.constant 0 : index
    %c0_0 = arith.constant 0 : index
    %c0_1 = arith.constant 0 : index
    %0 = vector.load %arg2[%c0, %c0_0, %c0_1] : memref<1x256x64xbf16, #tpu.memory_space<vmem>>, vector<1x256x64xbf16>
    %1 = vector.shape_cast %0 : vector<1x256x64xbf16> to vector<256x64xbf16>
    %c0_2 = arith.constant 0 : index
    %c0_3 = arith.constant 0 : index
    %c0_4 = arith.constant 0 : index
    %2 = vector.load %arg3[%c0_2, %c0_3, %c0_4] : memref<1x64x128xbf16, #tpu.memory_space<vmem>>, vector<1x64x128xbf16>
    %3 = vector.shape_cast %2 : vector<1x64x128xbf16> to vector<64x128xbf16>
    %cst = arith.constant dense<0.000000e+00> : vector<256x128xf32>
    %4 = tpu.matmul %1, %3, %cst {dimension_numbers = #tpu.dot_dimension_numbers<[1], [0], [0], [1], [0, 0, 1, 1], [], []>} : vector<256x64xbf16>, vector<64x128xbf16>, vector<256x128xf32> -> vector<256x128xf32>
    %c0_5 = arith.constant 0 : index
    %c0_6 = arith.constant 0 : index
    %5 = vector.load %arg4[%c0_5, %c0_6] : memref<1x128xf32, #tpu.memory_space<vmem>>, vector<1x128xf32>
    %6 = vector.broadcast %5 : vector<1x128xf32> to vector<256x128xf32>
    %7 = arith.addf %4, %6 : vector<256x128xf32>
    %8 = math.tanh %7 : vector<256x128xf32>
    %9 = arith.truncf %8 : vector<256x128xf32> to vector<256x128xbf16>
    %c0_7 = arith.constant 0 : index
    %c0_8 = arith.constant 0 : index
    %c0_9 = arith.constant 0 : index
    %10 = vector.load %arg5[%c0_7, %c0_8, %c0_9] : memref<1x256x128xbf16, #tpu.memory_space<vmem>>, vector<1x256x128xbf16>
    %11 = vector.shape_cast %10 : vector<1x256x128xbf16> to vector<256x128xbf16>
    %12 = vector.shape_cast %9 : vector<256x128xbf16> to vector<1x256x128xbf16>
    tpu.vector_store %arg5[%c0_7, %c0_8, %c0_9], %12 {strides = array<i32>} : memref<1x256x128xbf16, #tpu.memory_space<vmem>>, vector<1x256x128xbf16>,
    return
  }
  func.func @transform_0(%arg0: i32, %arg1: i32) -> (i32, i32, i32) {
    %c0_i32 = arith.constant 0 : i32
    %c0_i32_0 = arith.constant 0 : i32
    return %arg0, %arg1, %c0_i32 : i32, i32, i32
  }
  func.func @transform_1(%arg0: i32, %arg1: i32) -> (i32, i32, i32) {
    %c0_i32 = arith.constant 0 : i32
    %c0_i32_0 = arith.constant 0 : i32
    %c0_i32_1 = arith.constant 0 : i32
    return %arg0, %c0_i32, %c0_i32_0 : i32, i32, i32
  }
  func.func @transform_2(%arg0: i32, %arg1: i32) -> (i32, i32) {
    %c0_i32 = arith.constant 0 : i32
    %c0_i32_0 = arith.constant 0 : i32
    %c0_i32_1 = arith.constant 0 : i32
    return %c0_i32, %c0_i32_0 : i32, i32
  }
  func.func @transform_3(%arg0: i32, %arg1: i32) -> (i32, i32, i32) {
    %c0_i32 = arith.constant 0 : i32
    %c0_i32_0 = arith.constant 0 : i32
    return %arg0, %arg1, %c0_i32 : i32, i32, i32
  }
}

</mosaic_0001>

<llo_original>
// kernel: vae_forward.8
$region0: #{vae_forward.8}
  #allocation0 [shape = 'u32[]', space=smem, size = 0x4, offset = 0x4, fixed_abs, tag = 'smem constant byte address 0x4 - core index']
  #allocation1 [shape = 'u32[144,128]{1,0:T(1,128)}', space=vmem, size = 0x12000, scoped, tag = 'internal scratch']
  #allocation2 [shape = 'f32[1,512,128]{2,1,0:T(8,128)}', space=vmem, size = 0x40000, scoped, tag = 'scratch operand']
  %s0 = inlined_call_operand.vmem [shape: bf16[1,512,32], index: 0, kind: input, shape index: {}]
  %s1 = inlined_call_operand.vmem [shape: bf16[1,32,128], index: 1, kind: input, shape index: {}]
  %s2 = inlined_call_operand.vmem [shape: f32[1,128], index: 2, kind: input, shape index: {}]
  %s3 = inlined_call_operand.vmem [shape: f32[1,128], index: 3, kind: input, shape index: {}]
  %s4 = inlined_call_operand.vmem [shape: f32[1,128], index: 4, kind: input, shape index: {}]
  %s5 = inlined_call_operand.vmem [shape: bf16[1,512,128], index: 5, kind: output, shape index: {}]
  %s6 = sld [smem:[#allocation0]]
  $region30: #{vae_forward.8} parent=0
    _
  %s8 = ssub.s32 1, %s6
  %s9 = scalar_select 0, %s8, %s6
  // Predicated region
  $region2: #{vae_forward.8} parent=0 // pred_check
    _
  $region3: #{vae_forward.8} parent=0 // pred_check_branch
    %11 = sbr.rel (0) target = $region5
  $region4: #{vae_forward.8} parent=0 // pred_region
    _
  $region5: #{vae_forward.8} parent=0 // pred_fallthru
    _
  // Predicated region
  $region6: #{vae_forward.8} parent=0 // pred_check
    _
  $region7: #{vae_forward.8} parent=0 // pred_check_branch
    %13 = sbr.rel (0) target = $region9
  $region8: #{vae_forward.8} parent=0 // pred_region
    _
  $region9: #{vae_forward.8} parent=0 // pred_fallthru
    _
  // Predicated region
  $region10: #{vae_forward.8} parent=0 // pred_check
    _
  $region11: #{vae_forward.8} parent=0 // pred_check_branch
    %15 = sbr.rel (0) target = $region13
  $region12: #{vae_forward.8} parent=0 // pred_region
    _
  $region13: #{vae_forward.8} parent=0 // pred_fallthru
    _
  // Predicated region
  $region14: #{vae_forward.8} parent=0 // pred_check
    _
  $region15: #{vae_forward.8} parent=0 // pred_check_branch
    %17 = sbr.rel (0) target = $region17
  $region16: #{vae_forward.8} parent=0 // pred_region
    _
  $region17: #{vae_forward.8} parent=0 // pred_fallthru
    _
  // Predicated region
  $region18: #{vae_forward.8} parent=0 // pred_check
    _
  $region19: #{vae_forward.8} parent=0 // pred_check_branch
    %19 = sbr.rel (0) target = $region21
  $region20: #{vae_forward.8} parent=0 // pred_region
    _
  $region21: #{vae_forward.8} parent=0 // pred_fallthru
    _
  %v21 = vld [vmem:[%s0] sm:$0xf]
  %v22 = vld [vmem:[%s0 + $0x4] sm:$0xf]
  %v23 = vld [vmem:[%s0 + $0x8] sm:$0xf]
  %v24 = vld [vmem:[%s0 + $0xc] sm:$0xf]
  %v25 = vld [vmem:[%s0 + $0x10] sm:$0xf]
  %v26 = vld [vmem:[%s0 + $0x14] sm:$0xf]
  %v27 = vld [vmem:[%s0 + $0x18] sm:$0xf]
  %v28 = vld [vmem:[%s0 + $0x1c] sm:$0xf]
  %v29 = vld [vmem:[%s0 + $0x20] sm:$0xf]
  %v30 = vld [vmem:[%s0 + $0x24] sm:$0xf]
  %v31 = vld [vmem:[%s0 + $0x28] sm:$0xf]
  %v32 = vld [vmem:[%s0 + $0x2c] sm:$0xf]
  %v33 = vld [vmem:[%s0 + $0x30] sm:$0xf]
  %v34 = vld [vmem:[%s0 + $0x34] sm:$0xf]
  %v35 = vld [vmem:[%s0 + $0x38] sm:$0xf]
  %v36 = vld [vmem:[%s0 + $0x3c] sm:$0xf]
  %v37 = vld [vmem:[%s0 + $0x40] sm:$0xf]
  %v38 = vld [vmem:[%s0 + $0x44] sm:$0xf]
  %v39 = vld [vmem:[%s0 + $0x48] sm:$0xf]
  %v40 = vld [vmem:[%s0 + $0x4c] sm:$0xf]
  %v41 = vld [vmem:[%s0 + $0x50] sm:$0xf]
  %v42 = vld [vmem:[%s0 + $0x54] sm:$0xf]
  %v43 = vld [vmem:[%s0 + $0x58] sm:$0xf]
  %v44 = vld [vmem:[%s0 + $0x5c] sm:$0xf]
  %v45 = vld [vmem:[%s0 + $0x60] sm:$0xf]
  %v46 = vld [vmem:[%s0 + $0x64] sm:$0xf]
  %v47 = vld [vmem:[%s0 + $0x68] sm:$0xf]
  %v48 = vld [vmem:[%s0 + $0x6c] sm:$0xf]
  %v49 = vld [vmem:[%s0 + $0x70] sm:$0xf]
  %v50 = vld [vmem:[%s0 + $0x74] sm:$0xf]
  %v51 = vld [vmem:[%s0 + $0x78] sm:$0xf]
  %v52 = vld [vmem:[%s0 + $0x7c] sm:$0xf]
  %v53 = vld [vmem:[%s0 + $0x80] sm:$0xf]
  %v54 = vld [vmem:[%s0 + $0x84] sm:$0xf]
  %v55 = vld [vmem:[%s0 + $0x88] sm:$0xf]
  %v56 = vld [vmem:[%s0 + $0x8c] sm:$0xf]
  %v57 = vld [vmem:[%s0 + $0x90] sm:$0xf]
  %v58 = vld [vmem:[%s0 + $0x94] sm:$0xf]
  %v59 = vld [vmem:[%s0 + $0x98] sm:$0xf]
  %v60 = vld [vmem:[%s0 + $0x9c] sm:$0xf]
  %v61 = vld [vmem:[%s0 + $0xa0] sm:$0xf]
  %v62 = vld [vmem:[%s0 + $0xa4] sm:$0xf]
  %v63 = vld [vmem:[%s0 + $0xa8] sm:$0xf]
  %v64 = vld [vmem:[%s0 + $0xac] sm:$0xf]
  %v65 = vld [vmem:[%s0 + $0xb0] sm:$0xf]
  %v66 = vld [vmem:[%s0 + $0xb4] sm:$0xf]
  %v67 = vld [vmem:[%s0 + $0xb8] sm:$0xf]
  %v68 = vld [vmem:[%s0 + $0xbc] sm:$0xf]
  %v69 = vld [vmem:[%s0 + $0xc0] sm:$0xf]
  %v70 = vld [vmem:[%s0 + $0xc4] sm:$0xf]
  %v71 = vld [vmem:[%s0 + $0xc8] sm:$0xf]
  %v72 = vld [vmem:[%s0 + $0xcc] sm:$0xf]
  %v73 = vld [vmem:[%s0 + $0xd0] sm:$0xf]
  %v74 = vld [vmem:[%s0 + $0xd4] sm:$0xf]
  %v75 = vld [vmem:[%s0 + $0xd8] sm:$0xf]
  %v76 = vld [vmem:[%s0 + $0xdc] sm:$0xf]
  %v77 = vld [vmem:[%s0 + $0xe0] sm:$0xf]
  %v78 = vld [vmem:[%s0 + $0xe4] sm:$0xf]
  %v79 = vld [vmem:[%s0 + $0xe8] sm:$0xf]
  %v80 = vld [vmem:[%s0 + $0xec] sm:$0xf]
  %v81 = vld [vmem:[%s0 + $0xf0] sm:$0xf]
  %v82 = vld [vmem:[%s0 + $0xf4] sm:$0xf]
  %v83 = vld [vmem:[%s0 + $0xf8] sm:$0xf]
  %v84 = vld [vmem:[%s0 + $0xfc] sm:$0xf]
  %v85 = vld [vmem:[%s1] sm:$0xf]
  %v86 = vld [vmem:[%s1 + $0x4] sm:$0xf]
  %v87 = vld [vmem:[%s1 + $0x8] sm:$0xf]
  %v88 = vld [vmem:[%s1 + $0xc] sm:$0xf]
  %v89 = vld [vmem:[%s2] sm:$0x1]
  %v91 = vlaneseq
  %v92 = vshrl.u32 %v91, 7
  %v93 = vsub.s32 0, %v92
  %v94 = vrot.slane %v89, %v93
  %v160 = vunpack.c.l.b16 %v21
  %v161 = vunpack.c.l.b16 %v22
  %v162 = vunpack.c.l.b16 %v23
  %v163 = vunpack.c.l.b16 %v24
  %v164 = vunpack.c.l.b16 %v25
  %v165 = vunpack.c.l.b16 %v26
  %v166 = vunpack.c.l.b16 %v27
  %v167 = vunpack.c.l.b16 %v28
  %v168 = vunpack.c.l.b16 %v29
  %v169 = vunpack.c.l.b16 %v30
  %v170 = vunpack.c.l.b16 %v31
  %v171 = vunpack.c.l.b16 %v32
  %v172 = vunpack.c.l.b16 %v33
  %v173 = vunpack.c.l.b16 %v34
  %v174 = vunpack.c.l.b16 %v35
  %v175 = vunpack.c.l.b16 %v36
  %v176 = vunpack.c.l.b16 %v37
  %v177 = vunpack.c.l.b16 %v38
  %v178 = vunpack.c.l.b16 %v39
  %v179 = vunpack.c.l.b16 %v40
  %v180 = vunpack.c.l.b16 %v41
  %v181 = vunpack.c.l.b16 %v42
  %v182 = vunpack.c.l.b16 %v43
  %v183 = vunpack.c.l.b16 %v44
  %v184 = vunpack.c.l.b16 %v45
  %v185 = vunpack.c.l.b16 %v46
  %v186 = vunpack.c.l.b16 %v47
  %v187 = vunpack.c.l.b16 %v48
  %v188 = vunpack.c.l.b16 %v49
  %v189 = vunpack.c.l.b16 %v50
  %v190 = vunpack.c.l.b16 %v51
  %v191 = vunpack.c.l.b16 %v52
  %v192 = vunpack.c.l.b16 %v53
  %v193 = vunpack.c.l.b16 %v54
  %v194 = vunpack.c.l.b16 %v55
  %v195 = vunpack.c.l.b16 %v56
  %v196 = vunpack.c.l.b16 %v57
  %v197 = vunpack.c.l.b16 %v58
  %v198 = vunpack.c.l.b16 %v59
  %v199 = vunpack.c.l.b16 %v60
  %v200 = vunpack.c.l.b16 %v61
  %v201 = vunpack.c.l.b16 %v62
  %v202 = vunpack.c.l.b16 %v63
  %v203 = vunpack.c.l.b16 %v64
  %v204 = vunpack.c.l.b16 %v65
  %v205 = vunpack.c.l.b16 %v66
  %v206 = vunpack.c.l.b16 %v67
  %v207 = vunpack.c.l.b16 %v68
  %v208 = vunpack.c.l.b16 %v69
  %v209 = vunpack.c.l.b16 %v70
  %v210 = vunpack.c.l.b16 %v71
  %v211 = vunpack.c.l.b16 %v72
  %v212 = vunpack.c.l.b16 %v73
  %v213 = vunpack.c.l.b16 %v74
  %v214 = vunpack.c.l.b16 %v75
  %v215 = vunpack.c.l.b16 %v76
  %v216 = vunpack.c.l.b16 %v77
  %v217 = vunpack.c.l.b16 %v78
  %v218 = vunpack.c.l.b16 %v79
  %v219 = vunpack.c.l.b16 %v80
  %v220 = vunpack.c.l.b16 %v81
  %v221 = vunpack.c.l.b16 %v82
  %v222 = vunpack.c.l.b16 %v83
  %v223 = vunpack.c.l.b16 %v84
  %v224 = vpack.c.b16 %v161, %v160
  %v225 = vpack.c.b16 %v163, %v162
  %v226 = vpack.c.b16 %v165, %v164
  %v227 = vpack.c.b16 %v167, %v166
  %v228 = vpack.c.b16 %v169, %v168
  %v229 = vpack.c.b16 %v171, %v170
  %v230 = vpack.c.b16 %v173, %v172
  %v231 = vpack.c.b16 %v175, %v174
  %v232 = vpack.c.b16 %v177, %v176
  %v233 = vpack.c.b16 %v179, %v178
  %v234 = vpack.c.b16 %v181, %v180
  %v235 = vpack.c.b16 %v183, %v182
  %v236 = vpack.c.b16 %v185, %v184
  %v237 = vpack.c.b16 %v187, %v186
  %v238 = vpack.c.b16 %v189, %v188
  %v239 = vpack.c.b16 %v191, %v190
  %v240 = vpack.c.b16 %v193, %v192
  %v241 = vpack.c.b16 %v195, %v194
  %v242 = vpack.c.b16 %v197, %v196
  %v243 = vpack.c.b16 %v199, %v198
  %v244 = vpack.c.b16 %v201, %v200
  %v245 = vpack.c.b16 %v203, %v202
  %v246 = vpack.c.b16 %v205, %v204
  %v247 = vpack.c.b16 %v207, %v206
  %v248 = vpack.c.b16 %v209, %v208
  %v249 = vpack.c.b16 %v211, %v210
  %v250 = vpack.c.b16 %v213, %v212
  %v251 = vpack.c.b16 %v215, %v214
  %v252 = vpack.c.b16 %v217, %v216
  %v253 = vpack.c.b16 %v219, %v218
  %v254 = vpack.c.b16 %v221, %v220
  %v255 = vpack.c.b16 %v223, %v222
  %v260 = vunpack.c.l.b16 %v85
  %v261 = vunpack.c.l.b16 %v86
  %v262 = vunpack.c.l.b16 %v87
  %v263 = vunpack.c.l.b16 %v88
  %v264 = vpack.c.b16 %v261, %v260
  %v265 = vpack.c.b16 %v263, %v262
  %vm268 = vcmask 261120
  %v270 = vsel %vm268, %v224, 0
  %v273 = vsel %vm268, %v225, 0
  %v276 = vsel %vm268, %v226, 0
  %v279 = vsel %vm268, %v227, 0
  %v282 = vsel %vm268, %v228, 0
  %v285 = vsel %vm268, %v229, 0
  %v288 = vsel %vm268, %v230, 0
  %v291 = vsel %vm268, %v231, 0
  %v294 = vsel %vm268, %v232, 0
  %v297 = vsel %vm268, %v233, 0
  %v300 = vsel %vm268, %v234, 0
  %v303 = vsel %vm268, %v235, 0
  %v306 = vsel %vm268, %v236, 0
  %v309 = vsel %vm268, %v237, 0
  %v312 = vsel %vm268, %v238, 0
  %v315 = vsel %vm268, %v239, 0
  %v318 = vsel %vm268, %v240, 0
  %v321 = vsel %vm268, %v241, 0
  %v324 = vsel %vm268, %v242, 0
  %v327 = vsel %vm268, %v243, 0
  %v330 = vsel %vm268, %v244, 0
  %v333 = vsel %vm268, %v245, 0
  %v336 = vsel %vm268, %v246, 0
  %v339 = vsel %vm268, %v247, 0
  %v342 = vsel %vm268, %v248, 0
  %v345 = vsel %vm268, %v249, 0
  %v348 = vsel %vm268, %v250, 0
  %v351 = vsel %vm268, %v251, 0
  %v354 = vsel %vm268, %v252, 0
  %v357 = vsel %vm268, %v253, 0
  %v360 = vsel %vm268, %v254, 0
  %v363 = vsel %vm268, %v255, 0
  %365 = vmatprep.subr.bf16.mxu0 0
  %366 = vmatpush1.bf16.msra.mxu0 0
  %367 = vmatprep.subr.bf16.mxu0 0
  %368 = vmatpush1.bf16.msra.mxu0 0
  %369 = vmatprep.subr.bf16.mxu0 0
  %370 = vmatpush1.bf16.msra.mxu0 0
  %371 = vmatprep.subr.bf16.mxu0 0
  %372 = vmatpush1.bf16.msra.mxu0 0
  %373 = vmatprep.subr.bf16.mxu0 0
  %374 = vmatpush1.bf16.msra.mxu0 0
  %375 = vmatprep.subr.bf16.mxu0 0
  %376 = vmatpush1.bf16.msra.mxu0 0
  %377 = vmatprep.subr.bf16.mxu0 0
  %378 = vmatpush1.bf16.msra.mxu0 %v265
  %379 = vmatprep.subr.bf16.mxu0 0
  %380 = vmatpush1.bf16.msra.mxu0 %v264
  %381 = vmatprep.subr.bf16.mxu0 0
  %382 = vmatpush2.bf16.msra.mxu0 0
  %383 = vmatprep.subr.bf16.mxu0 0
  %384 = vmatpush2.bf16.msra.mxu0 0
  %385 = vmatprep.subr.bf16.mxu0 0
  %386 = vmatpush2.bf16.msra.mxu0 0
  %387 = vmatprep.subr.bf16.mxu0 0
  %388 = vmatpush2.bf16.msra.mxu0 0
  %389 = vmatprep.subr.bf16.mxu0 0
  %390 = vmatpush2.bf16.msra.mxu0 0
  %391 = vmatprep.subr.bf16.mxu0 0
  %392 = vmatpush2.bf16.msra.mxu0 0
  %393 = vmatprep.subr.bf16.mxu0 0
  %394 = vmatpush2.bf16.msra.mxu0 0
  %395 = vmatprep.subr.bf16.mxu0 0
  %396 = vmatpush2.bf16.msra.mxu0 0
  %397 = vmatprep.mubr.bf16.mxu0 0
  %398 = vmatmul.mubr.bf16.gmra.mxu0 %v270
  %v399 = vpop.f32.mrf.mxu0
  %v400 = vadd.f32 %v94, %v399
  %v401 = vpop.f32.mrf.mxu0
  %v402 = vpop.f32.mrf.mxu0
  %v403 = vadd.f32 %v94, %v402
  %v404 = vpop.f32.mrf.mxu0
  %405 = vmatprep.mubr.bf16.mxu0 0
  %406 = vmatmul.mubr.bf16.gmra.mxu0 %v273
  %v407 = vpop.f32.mrf.mxu0
  %v408 = vadd.f32 %v94, %v407
  %v409 = vpop.f32.mrf.mxu0
  %v410 = vpop.f32.mrf.mxu0
  %v411 = vadd.f32 %v94, %v410
  %v412 = vpop.f32.mrf.mxu0
  %413 = vmatprep.mubr.bf16.mxu0 0
  %414 = vmatmul.mubr.bf16.gmra.mxu0 %v276
  %v415 = vpop.f32.mrf.mxu0
  %v416 = vadd.f32 %v94, %v415
  %v417 = vpop.f32.mrf.mxu0
  %v418 = vpop.f32.mrf.mxu0
  %v419 = vadd.f32 %v94, %v418
  %v420 = vpop.f32.mrf.mxu0
  %421 = vmatprep.mubr.bf16.mxu0 0
  %422 = vmatmul.mubr.bf16.gmra.mxu0 %v279
  %v423 = vpop.f32.mrf.mxu0
  %v424 = vadd.f32 %v94, %v423
  %v425 = vpop.f32.mrf.mxu0
  %v426 = vpop.f32.mrf.mxu0
  %v427 = vadd.f32 %v94, %v426
  %v428 = vpop.f32.mrf.mxu0
  %429 = vmatprep.mubr.bf16.mxu0 0
  %430 = vmatmul.mubr.bf16.gmra.mxu0 %v282
  %v431 = vpop.f32.mrf.mxu0
  %v432 = vadd.f32 %v94, %v431
  %v433 = vpop.f32.mrf.mxu0
  %v434 = vpop.f32.mrf.mxu0
  %v435 = vadd.f32 %v94, %v434
  %v436 = vpop.f32.mrf.mxu0
  %437 = vmatprep.mubr.bf16.mxu0 0
  %438 = vmatmul.mubr.bf16.gmra.mxu0 %v285
  %v439 = vpop.f32.mrf.mxu0
  %v440 = vadd.f32 %v94, %v439
  %v441 = vpop.f32.mrf.mxu0
  %v442 = vpop.f32.mrf.mxu0
  %v443 = vadd.f32 %v94, %v442
  %v444 = vpop.f32.mrf.mxu0
  %445 = vmatprep.mubr.bf16.mxu0 0
  %446 = vmatmul.mubr.bf16.gmra.mxu0 %v288
  %v447 = vpop.f32.mrf.mxu0
  %v448 = vadd.f32 %v94, %v447
  %v449 = vpop.f32.mrf.mxu0
  %v450 = vpop.f32.mrf.mxu0
  %v451 = vadd.f32 %v94, %v450
  %v452 = vpop.f32.mrf.mxu0
  %453 = vmatprep.mubr.bf16.mxu0 0
  %454 = vmatmul.mubr.bf16.gmra.mxu0 %v291
  %v455 = vpop.f32.mrf.mxu0
  %v456 = vadd.f32 %v94, %v455
  %v457 = vpop.f32.mrf.mxu0
  %v458 = vpop.f32.mrf.mxu0
  %v459 = vadd.f32 %v94, %v458
  %v460 = vpop.f32.mrf.mxu0
  %461 = vmatprep.mubr.bf16.mxu0 0
  %462 = vmatmul.mubr.bf16.gmra.mxu0 %v294
  %v463 = vpop.f32.mrf.mxu0
  %v464 = vadd.f32 %v94, %v463
  %v465 = vpop.f32.mrf.mxu0
  %v466 = vpop.f32.mrf.mxu0
  %v467 = vadd.f32 %v94, %v466
  %v468 = vpop.f32.mrf.mxu0
  %469 = vmatprep.mubr.bf16.mxu0 0
  %470 = vmatmul.mubr.bf16.gmra.mxu0 %v297
  %v471 = vpop.f32.mrf.mxu0
  %v472 = vadd.f32 %v94, %v471
  %v473 = vpop.f32.mrf.mxu0
  %v474 = vpop.f32.mrf.mxu0
  %v475 = vadd.f32 %v94, %v474
  %v476 = vpop.f32.mrf.mxu0
  %477 = vmatprep.mubr.bf16.mxu0 0
  %478 = vmatmul.mubr.bf16.gmra.mxu0 %v300
  %v479 = vpop.f32.mrf.mxu0
  %v480 = vadd.f32 %v94, %v479
  %v481 = vpop.f32.mrf.mxu0
  %v482 = vpop.f32.mrf.mxu0
  %v483 = vadd.f32 %v94, %v482
  %v484 = vpop.f32.mrf.mxu0
  %485 = vmatprep.mubr.bf16.mxu0 0
  %486 = vmatmul.mubr.bf16.gmra.mxu0 %v303
  %v487 = vpop.f32.mrf.mxu0
  %v488 = vadd.f32 %v94, %v487
  %v489 = vpop.f32.mrf.mxu0
  %v490 = vpop.f32.mrf.mxu0
  %v491 = vadd.f32 %v94, %v490
  %v492 = vpop.f32.mrf.mxu0
  %493 = vmatprep.mubr.bf16.mxu0 0
  %494 = vmatmul.mubr.bf16.gmra.mxu0 %v306
  %v495 = vpop.f32.mrf.mxu0
  %v496 = vadd.f32 %v94, %v495
  %v497 = vpop.f32.mrf.mxu0
  %v498 = vpop.f32.mrf.mxu0
  %v499 = vadd.f32 %v94, %v498
  %v500 = vpop.f32.mrf.mxu0
  %501 = vmatprep.mubr.bf16.mxu0 0
  %502 = vmatmul.mubr.bf16.gmra.mxu0 %v309
  %v503 = vpop.f32.mrf.mxu0
  %v504 = vadd.f32 %v94, %v503
  %v505 = vpop.f32.mrf.mxu0
  %v506 = vpop.f32.mrf.mxu0
  %v507 = vadd.f32 %v94, %v506
  %v508 = vpop.f32.mrf.mxu0
  %509 = vmatprep.mubr.bf16.mxu0 0
  %510 = vmatmul.mubr.bf16.gmra.mxu0 %v312
  %v511 = vpop.f32.mrf.mxu0
  %v512 = vadd.f32 %v94, %v511
  %v513 = vpop.f32.mrf.mxu0
  %v514 = vpop.f32.mrf.mxu0
  %v515 = vadd.f32 %v94, %v514
  %v516 = vpop.f32.mrf.mxu0
  %517 = vmatprep.mubr.bf16.mxu0 0
  %518 = vmatmul.mubr.bf16.gmra.mxu0 %v315
  %v519 = vpop.f32.mrf.mxu0
  %v520 = vadd.f32 %v94, %v519
  %v521 = vpop.f32.mrf.mxu0
  %v522 = vpop.f32.mrf.mxu0
  %v523 = vadd.f32 %v94, %v522
  %v524 = vpop.f32.mrf.mxu0
  %525 = vmatprep.mubr.bf16.mxu0 0
  %526 = vmatmul.mubr.bf16.gmra.mxu0 %v318
  %v527 = vpop.f32.mrf.mxu0
  %v528 = vadd.f32 %v94, %v527
  %v529 = vpop.f32.mrf.mxu0
  %v530 = vpop.f32.mrf.mxu0
  %v531 = vadd.f32 %v94, %v530
  %v532 = vpop.f32.mrf.mxu0
  %533 = vmatprep.mubr.bf16.mxu0 0
  %534 = vmatmul.mubr.bf16.gmra.mxu0 %v321
  %v535 = vpop.f32.mrf.mxu0
  %v536 = vadd.f32 %v94, %v535
  %v537 = vpop.f32.mrf.mxu0
  %v538 = vpop.f32.mrf.mxu0
  %v539 = vadd.f32 %v94, %v538
  %v540 = vpop.f32.mrf.mxu0
  %541 = vmatprep.mubr.bf16.mxu0 0
  %542 = vmatmul.mubr.bf16.gmra.mxu0 %v324
  %v543 = vpop.f32.mrf.mxu0
  %v544 = vadd.f32 %v94, %v543
  %v545 = vpop.f32.mrf.mxu0
  %v546 = vpop.f32.mrf.mxu0
  %v547 = vadd.f32 %v94, %v546
  %v548 = vpop.f32.mrf.mxu0
  %549 = vmatprep.mubr.bf16.mxu0 0
  %550 = vmatmul.mubr.bf16.gmra.mxu0 %v327
  %v551 = vpop.f32.mrf.mxu0
  %v552 = vadd.f32 %v94, %v551
  %v553 = vpop.f32.mrf.mxu0
  %v554 = vpop.f32.mrf.mxu0
  %v555 = vadd.f32 %v94, %v554
  %v556 = vpop.f32.mrf.mxu0
  %557 = vmatprep.mubr.bf16.mxu0 0
  %558 = vmatmul.mubr.bf16.gmra.mxu0 %v330
  %v559 = vpop.f32.mrf.mxu0
  %v560 = vadd.f32 %v94, %v559
  %v561 = vpop.f32.mrf.mxu0
  %v562 = vpop.f32.mrf.mxu0
  %v563 = vadd.f32 %v94, %v562
  %v564 = vpop.f32.mrf.mxu0
  %565 = vmatprep.mubr.bf16.mxu0 0
  %566 = vmatmul.mubr.bf16.gmra.mxu0 %v333
  %v567 = vpop.f32.mrf.mxu0
  %v568 = vadd.f32 %v94, %v567
  %v569 = vpop.f32.mrf.mxu0
  %v570 = vpop.f32.mrf.mxu0
  %v571 = vadd.f32 %v94, %v570
  %v572 = vpop.f32.mrf.mxu0
  %573 = vmatprep.mubr.bf16.mxu0 0
  %574 = vmatmul.mubr.bf16.gmra.mxu0 %v336
  %v575 = vpop.f32.mrf.mxu0
  %v576 = vadd.f32 %v94, %v575
  %v577 = vpop.f32.mrf.mxu0
  %v578 = vpop.f32.mrf.mxu0
  %v579 = vadd.f32 %v94, %v578
  %v580 = vpop.f32.mrf.mxu0
  %581 = vmatprep.mubr.bf16.mxu0 0
  %582 = vmatmul.mubr.bf16.gmra.mxu0 %v339
  %v583 = vpop.f32.mrf.mxu0
  %v584 = vadd.f32 %v94, %v583
  %v585 = vpop.f32.mrf.mxu0
  %v586 = vpop.f32.mrf.mxu0
  %v587 = vadd.f32 %v94, %v586
  %v588 = vpop.f32.mrf.mxu0
  %589 = vmatprep.mubr.bf16.mxu0 0
  %590 = vmatmul.mubr.bf16.gmra.mxu0 %v342
  %v591 = vpop.f32.mrf.mxu0
  %v592 = vadd.f32 %v94, %v591
  %v593 = vpop.f32.mrf.mxu0
  %v594 = vpop.f32.mrf.mxu0
  %v595 = vadd.f32 %v94, %v594
  %v596 = vpop.f32.mrf.mxu0
  %597 = vmatprep.mubr.bf16.mxu0 0
  %598 = vmatmul.mubr.bf16.gmra.mxu0 %v345
  %v599 = vpop.f32.mrf.mxu0
  %v600 = vadd.f32 %v94, %v599
  %v601 = vpop.f32.mrf.mxu0
  %v602 = vpop.f32.mrf.mxu0
  %v603 = vadd.f32 %v94, %v602
  %v604 = vpop.f32.mrf.mxu0
  %605 = vmatprep.mubr.bf16.mxu0 0
  %606 = vmatmul.mubr.bf16.gmra.mxu0 %v348
  %v607 = vpop.f32.mrf.mxu0
  %v608 = vadd.f32 %v94, %v607
  %v609 = vpop.f32.mrf.mxu0
  %v610 = vpop.f32.mrf.mxu0
  %v611 = vadd.f32 %v94, %v610
  %v612 = vpop.f32.mrf.mxu0
  %613 = vmatprep.mubr.bf16.mxu0 0
  %614 = vmatmul.mubr.bf16.gmra.mxu0 %v351
  %v615 = vpop.f32.mrf.mxu0
  %v616 = vadd.f32 %v94, %v615
  %v617 = vpop.f32.mrf.mxu0
  %v618 = vpop.f32.mrf.mxu0
  %v619 = vadd.f32 %v94, %v618
  %v620 = vpop.f32.mrf.mxu0
  %621 = vmatprep.mubr.bf16.mxu0 0
  %622 = vmatmul.mubr.bf16.gmra.mxu0 %v354
  %v623 = vpop.f32.mrf.mxu0
  %v624 = vadd.f32 %v94, %v623
  %v625 = vpop.f32.mrf.mxu0
  %v626 = vpop.f32.mrf.mxu0
  %v627 = vadd.f32 %v94, %v626
  %v628 = vpop.f32.mrf.mxu0
  %629 = vmatprep.mubr.bf16.mxu0 0
  %630 = vmatmul.mubr.bf16.gmra.mxu0 %v357
  %v631 = vpop.f32.mrf.mxu0
  %v632 = vadd.f32 %v94, %v631
  %v633 = vpop.f32.mrf.mxu0
  %v634 = vpop.f32.mrf.mxu0
  %v635 = vadd.f32 %v94, %v634
  %v636 = vpop.f32.mrf.mxu0
  %637 = vmatprep.mubr.bf16.mxu0 0
  %638 = vmatmul.mubr.bf16.gmra.mxu0 %v360
  %v639 = vpop.f32.mrf.mxu0
  %v640 = vadd.f32 %v94, %v639
  %v641 = vpop.f32.mrf.mxu0
  %v642 = vpop.f32.mrf.mxu0
  %v643 = vadd.f32 %v94, %v642
  %v644 = vpop.f32.mrf.mxu0
  %645 = vmatprep.mubr.bf16.mxu0 0
  %646 = vmatmul.mubr.bf16.gmra.mxu0 %v363
  %v647 = vpop.f32.mrf.mxu0
  %v648 = vadd.f32 %v94, %v647
  %v649 = vpop.f32.mrf.mxu0
  %v650 = vpop.f32.mrf.mxu0
  %v651 = vadd.f32 %v94, %v650
  %v652 = vpop.f32.mrf.mxu0
  %653 = vdwg.mxu0
  %654 = vst [vmem:[#allocation2] sm:$0xff] %v400
  %655 = vst [vmem:[#allocation2 + $0x8] sm:$0xff] %v403
  %656 = vst [vmem:[#allocation2 + $0x10] sm:$0xff] %v408
  %657 = vst [vmem:[#allocation2 + $0x18] sm:$0xff] %v411
  %658 = vst [vmem:[#allocation2 + $0x20] sm:$0xff] %v416
  %659 = vst [vmem:[#allocation2 + $0x28] sm:$0xff] %v419
  %660 = vst [vmem:[#allocation2 + $0x30] sm:$0xff] %v424
  %661 = vst [vmem:[#allocation2 + $0x38] sm:$0xff] %v427
  %662 = vst [vmem:[#allocation2 + $0x40] sm:$0xff] %v432
  %663 = vst [vmem:[#allocation2 + $0x48] sm:$0xff] %v435
  %664 = vst [vmem:[#allocation2 + $0x50] sm:$0xff] %v440
  %665 = vst [vmem:[#allocation2 + $0x58] sm:$0xff] %v443
  %666 = vst [vmem:[#allocation2 + $0x60] sm:$0xff] %v448
  %667 = vst [vmem:[#allocation2 + $0x68] sm:$0xff] %v451
  %668 = vst [vmem:[#allocation2 + $0x70] sm:$0xff] %v456
  %669 = vst [vmem:[#allocation2 + $0x78] sm:$0xff] %v459
  %670 = vst [vmem:[#allocation2 + $0x80] sm:$0xff] %v464
  %671 = vst [vmem:[#allocation2 + $0x88] sm:$0xff] %v467
  %672 = vst [vmem:[#allocation2 + $0x90] sm:$0xff] %v472
  %673 = vst [vmem:[#allocation2 + $0x98] sm:$0xff] %v475
  %674 = vst [vmem:[#allocation2 + $0xa0] sm:$0xff] %v480
  %675 = vst [vmem:[#allocation2 + $0xa8] sm:$0xff] %v483
  %676 = vst [vmem:[#allocation2 + $0xb0] sm:$0xff] %v488
  %677 = vst [vmem:[#allocation2 + $0xb8] sm:$0xff] %v491
  %678 = vst [vmem:[#allocation2 + $0xc0] sm:$0xff] %v496
  %679 = vst [vmem:[#allocation2 + $0xc8] sm:$0xff] %v499
  %680 = vst [vmem:[#allocation2 + $0xd0] sm:$0xff] %v504
  %681 = vst [vmem:[#allocation2 + $0xd8] sm:$0xff] %v507
  %682 = vst [vmem:[#allocation2 + $0xe0] sm:$0xff] %v512
  %683 = vst [vmem:[#allocation2 + $0xe8] sm:$0xff] %v515
  %684 = vst [vmem:[#allocation2 + $0xf0] sm:$0xff] %v520
  %685 = vst [vmem:[#allocation2 + $0xf8] sm:$0xff] %v523
  %686 = vst [vmem:[#allocation2 + $0x100] sm:$0xff] %v528
  %687 = vst [vmem:[#allocation2 + $0x108] sm:$0xff] %v531
  %688 = vst [vmem:[#allocation2 + $0x110] sm:$0xff] %v536
  %689 = vst [vmem:[#allocation2 + $0x118] sm:$0xff] %v539
  %690 = vst [vmem:[#allocation2 + $0x120] sm:$0xff] %v544
  %691 = vst [vmem:[#allocation2 + $0x128] sm:$0xff] %v547
  %692 = vst [vmem:[#allocation2 + $0x130] sm:$0xff] %v552
  %693 = vst [vmem:[#allocation2 + $0x138] sm:$0xff] %v555
  %694 = vst [vmem:[#allocation2 + $0x140] sm:$0xff] %v560
  %695 = vst [vmem:[#allocation2 + $0x148] sm:$0xff] %v563
  %696 = vst [vmem:[#allocation2 + $0x150] sm:$0xff] %v568
  %697 = vst [vmem:[#allocation2 + $0x158] sm:$0xff] %v571
  %698 = vst [vmem:[#allocation2 + $0x160] sm:$0xff] %v576
  %699 = vst [vmem:[#allocation2 + $0x168] sm:$0xff] %v579
  %700 = vst [vmem:[#allocation2 + $0x170] sm:$0xff] %v584
  %701 = vst [vmem:[#allocation2 + $0x178] sm:$0xff] %v587
  %702 = vst [vmem:[#allocation2 + $0x180] sm:$0xff] %v592
  %703 = vst [vmem:[#allocation2 + $0x188] sm:$0xff] %v595
  %704 = vst [vmem:[#allocation2 + $0x190] sm:$0xff] %v600
  %705 = vst [vmem:[#allocation2 + $0x198] sm:$0xff] %v603
  %706 = vst [vmem:[#allocation2 + $0x1a0] sm:$0xff] %v608
  %707 = vst [vmem:[#allocation2 + $0x1a8] sm:$0xff] %v611
  %708 = vst [vmem:[#allocation2 + $0x1b0] sm:$0xff] %v616
  %709 = vst [vmem:[#allocation2 + $0x1b8] sm:$0xff] %v619
  %710 = vst [vmem:[#allocation2 + $0x1c0] sm:$0xff] %v624
  %711 = vst [vmem:[#allocation2 + $0x1c8] sm:$0xff] %v627
  %712 = vst [vmem:[#allocation2 + $0x1d0] sm:$0xff] %v632
  %713 = vst [vmem:[#allocation2 + $0x1d8] sm:$0xff] %v635
  %714 = vst [vmem:[#allocation2 + $0x1e0] sm:$0xff] %v640
  %715 = vst [vmem:[#allocation2 + $0x1e8] sm:$0xff] %v643
  %716 = vst [vmem:[#allocation2 + $0x1f0] sm:$0xff] %v648
  %717 = vst [vmem:[#allocation2 + $0x1f8] sm:$0xff] %v651
  %v718 = vadd.f32 %v400, %v403
  %v719 = vadd.f32 %v718, %v408
  %v720 = vadd.f32 %v719, %v411
  %v721 = vadd.f32 %v720, %v416
  %v722 = vadd.f32 %v721, %v419
  %v723 = vadd.f32 %v722, %v424
  %v724 = vadd.f32 %v723, %v427
  %v725 = vadd.f32 %v724, %v432
  %v726 = vadd.f32 %v725, %v435
  %v727 = vadd.f32 %v726, %v440
  %v728 = vadd.f32 %v727, %v443
  %v729 = vadd.f32 %v728, %v448
  %v730 = vadd.f32 %v729, %v451
  %v731 = vadd.f32 %v730, %v456
  %v732 = vadd.f32 %v731, %v459
  %v733 = vadd.f32 %v732, %v464
  %v734 = vadd.f32 %v733, %v467
  %v735 = vadd.f32 %v734, %v472
  %v736 = vadd.f32 %v735, %v475
  %v737 = vadd.f32 %v736, %v480
  %v738 = vadd.f32 %v737, %v483
  %v739 = vadd.f32 %v738, %v488
  %v740 = vadd.f32 %v739, %v491
  %v741 = vadd.f32 %v740, %v496
  %v742 = vadd.f32 %v741, %v499
  %v743 = vadd.f32 %v742, %v504
  %v744 = vadd.f32 %v743, %v507
  %v745 = vadd.f32 %v744, %v512
  %v746 = vadd.f32 %v745, %v515
  %v747 = vadd.f32 %v746, %v520
  %v748 = vadd.f32 %v747, %v523
  %v749 = vadd.f32 %v748, %v528
  %v750 = vadd.f32 %v749, %v531
  %v751 = vadd.f32 %v750, %v536
  %v752 = vadd.f32 %v751, %v539
  %v753 = vadd.f32 %v752, %v544
  %v754 = vadd.f32 %v753, %v547
  %v755 = vadd.f32 %v754, %v552
  %v756 = vadd.f32 %v755, %v555
  %v757 = vadd.f32 %v756, %v560
  %v758 = vadd.f32 %v757, %v563
  %v759 = vadd.f32 %v758, %v568
  %v760 = vadd.f32 %v759, %v571
  %v761 = vadd.f32 %v760, %v576
  %v762 = vadd.f32 %v761, %v579
  %v763 = vadd.f32 %v762, %v584
  %v764 = vadd.f32 %v763, %v587
  %v765 = vadd.f32 %v764, %v592
  %v766 = vadd.f32 %v765, %v595
  %v767 = vadd.f32 %v766, %v600
  %v768 = vadd.f32 %v767, %v603
  %v769 = vadd.f32 %v768, %v608
  %v770 = vadd.f32 %v769, %v611
  %v771 = vadd.f32 %v770, %v616
  %v772 = vadd.f32 %v771, %v619
  %v773 = vadd.f32 %v772, %v624
  %v774 = vadd.f32 %v773, %v627
  %v775 = vadd.f32 %v774, %v632
  %v776 = vadd.f32 %v775, %v635
  %v777 = vadd.f32 %v776, %v640
  %v778 = vadd.f32 %v777, %v643
  %v779 = vadd.f32 %v778, %v648
  %v780 = vadd.f32 %v779, %v651
  %v781 = vrot.slane %v780, 4
  %v782 = vadd.f32 %v780, %v781
  %v783 = vrot.slane %v782, 2
  %v784 = vadd.f32 %v782, %v783
  %v785 = vrot.slane %v784, 1
  %v786 = vadd.f32 %v784, %v785
  %v787 = vmul.f32 %v786, 0.001953125
  %v788 = vld [vmem:[#allocation2] sm:$0xff]
  %v789 = vld [vmem:[#allocation2 + $0x8] sm:$0xff]
  %v790 = vld [vmem:[#allocation2 + $0x10] sm:$0xff]
  %v791 = vld [vmem:[#allocation2 + $0x18] sm:$0xff]
  %v792 = vld [vmem:[#allocation2 + $0x20] sm:$0xff]
  %v793 = vld [vmem:[#allocation2 + $0x28] sm:$0xff]
  %v794 = vld [vmem:[#allocation2 + $0x30] sm:$0xff]
  %v795 = vld [vmem:[#allocation2 + $0x38] sm:$0xff]
  %v796 = vld [vmem:[#allocation2 + $0x40] sm:$0xff]
  %v797 = vld [vmem:[#allocation2 + $0x48] sm:$0xff]
  %v798 = vld [vmem:[#allocation2 + $0x50] sm:$0xff]
  %v799 = vld [vmem:[#allocation2 + $0x58] sm:$0xff]
  %v800 = vld [vmem:[#allocation2 + $0x60] sm:$0xff]
  %v801 = vld [vmem:[#allocation2 + $0x68] sm:$0xff]
  %v802 = vld [vmem:[#allocation2 + $0x70] sm:$0xff]
  %v803 = vld [vmem:[#allocation2 + $0x78] sm:$0xff]
  %v804 = vld [vmem:[#allocation2 + $0x80] sm:$0xff]
  %v805 = vld [vmem:[#allocation2 + $0x88] sm:$0xff]
  %v806 = vld [vmem:[#allocation2 + $0x90] sm:$0xff]
  %v807 = vld [vmem:[#allocation2 + $0x98] sm:$0xff]
  %v808 = vld [vmem:[#allocation2 + $0xa0] sm:$0xff]
  %v809 = vld [vmem:[#allocation2 + $0xa8] sm:$0xff]
  %v810 = vld [vmem:[#allocation2 + $0xb0] sm:$0xff]
  %v811 = vld [vmem:[#allocation2 + $0xb8] sm:$0xff]
  %v812 = vld [vmem:[#allocation2 + $0xc0] sm:$0xff]
  %v813 = vld [vmem:[#allocation2 + $0xc8] sm:$0xff]
  %v814 = vld [vmem:[#allocation2 + $0xd0] sm:$0xff]
  %v815 = vld [vmem:[#allocation2 + $0xd8] sm:$0xff]
  %v816 = vld [vmem:[#allocation2 + $0xe0] sm:$0xff]
  %v817 = vld [vmem:[#allocation2 + $0xe8] sm:$0xff]
  %v818 = vld [vmem:[#allocation2 + $0xf0] sm:$0xff]
  %v819 = vld [vmem:[#allocation2 + $0xf8] sm:$0xff]
  %v820 = vld [vmem:[#allocation2 + $0x100] sm:$0xff]
  %v821 = vld [vmem:[#allocation2 + $0x108] sm:$0xff]
  %v822 = vld [vmem:[#allocation2 + $0x110] sm:$0xff]
  %v823 = vld [vmem:[#allocation2 + $0x118] sm:$0xff]
  %v824 = vld [vmem:[#allocation2 + $0x120] sm:$0xff]
  %v825 = vld [vmem:[#allocation2 + $0x128] sm:$0xff]
  %v826 = vld [vmem:[#allocation2 + $0x130] sm:$0xff]
  %v827 = vld [vmem:[#allocation2 + $0x138] sm:$0xff]
  %v828 = vld [vmem:[#allocation2 + $0x140] sm:$0xff]
  %v829 = vld [vmem:[#allocation2 + $0x148] sm:$0xff]
  %v830 = vld [vmem:[#allocation2 + $0x150] sm:$0xff]
  %v831 = vld [vmem:[#allocation2 + $0x158] sm:$0xff]
  %v832 = vld [vmem:[#allocation2 + $0x160] sm:$0xff]
  %v833 = vld [vmem:[#allocation2 + $0x168] sm:$0xff]
  %v834 = vld [vmem:[#allocation2 + $0x170] sm:$0xff]
  %v835 = vld [vmem:[#allocation2 + $0x178] sm:$0xff]
  %v836 = vld [vmem:[#allocation2 + $0x180] sm:$0xff]
  %v837 = vld [vmem:[#allocation2 + $0x188] sm:$0xff]
  %v838 = vld [vmem:[#allocation2 + $0x190] sm:$0xff]
  %v839 = vld [vmem:[#allocation2 + $0x198] sm:$0xff]
  %v840 = vld [vmem:[#allocation2 + $0x1a0] sm:$0xff]
  %v841 = vld [vmem:[#allocation2 + $0x1a8] sm:$0xff]
  %v842 = vld [vmem:[#allocation2 + $0x1b0] sm:$0xff]
  %v843 = vld [vmem:[#allocation2 + $0x1b8] sm:$0xff]
  %v844 = vld [vmem:[#allocation2 + $0x1c0] sm:$0xff]
  %v845 = vld [vmem:[#allocation2 + $0x1c8] sm:$0xff]
  %v846 = vld [vmem:[#allocation2 + $0x1d0] sm:$0xff]
  %v847 = vld [vmem:[#allocation2 + $0x1d8] sm:$0xff]
  %v848 = vld [vmem:[#allocation2 + $0x1e0] sm:$0xff]
  %v849 = vld [vmem:[#allocation2 + $0x1e8] sm:$0xff]
  %v850 = vld [vmem:[#allocation2 + $0x1f0] sm:$0xff]
  %v851 = vld [vmem:[#allocation2 + $0x1f8] sm:$0xff]
  %v852 = vsub.f32 %v788, %v787
  %v853 = vsub.f32 %v789, %v787
  %v854 = vsub.f32 %v790, %v787
  %v855 = vsub.f32 %v791, %v787
  %v856 = vsub.f32 %v792, %v787
  %v857 = vsub.f32 %v793, %v787
  %v858 = vsub.f32 %v794, %v787
  %v859 = vsub.f32 %v795, %v787
  %v860 = vsub.f32 %v796, %v787
  %v861 = vsub.f32 %v797, %v787
  %v862 = vsub.f32 %v798, %v787
  %v863 = vsub.f32 %v799, %v787
  %v864 = vsub.f32 %v800, %v787
  %v865 = vsub.f32 %v801, %v787
  %v866 = vsub.f32 %v802, %v787
  %v867 = vsub.f32 %v803, %v787
  %v868 = vsub.f32 %v804, %v787
  %v869 = vsub.f32 %v805, %v787
  %v870 = vsub.f32 %v806, %v787
  %v871 = vsub.f32 %v807, %v787
  %v872 = vsub.f32 %v808, %v787
  %v873 = vsub.f32 %v809, %v787
  %v874 = vsub.f32 %v810, %v787
  %v875 = vsub.f32 %v811, %v787
  %v876 = vsub.f32 %v812, %v787
  %v877 = vsub.f32 %v813, %v787
  %v878 = vsub.f32 %v814, %v787
  %v879 = vsub.f32 %v815, %v787
  %v880 = vsub.f32 %v816, %v787
  %v881 = vsub.f32 %v817, %v787
  %v882 = vsub.f32 %v818, %v787
  %v883 = vsub.f32 %v819, %v787
  %v884 = vsub.f32 %v820, %v787
  %v885 = vsub.f32 %v821, %v787
  %v886 = vsub.f32 %v822, %v787
  %v887 = vsub.f32 %v823, %v787
  %v888 = vsub.f32 %v824, %v787
  %v889 = vsub.f32 %v825, %v787
  %v890 = vsub.f32 %v826, %v787
  %v891 = vsub.f32 %v827, %v787
  %v892 = vsub.f32 %v828, %v787
  %v893 = vsub.f32 %v829, %v787
  %v894 = vsub.f32 %v830, %v787
  %v895 = vsub.f32 %v831, %v787
  %v896 = vsub.f32 %v832, %v787
  %v897 = vsub.f32 %v833, %v787
  %v898 = vsub.f32 %v834, %v787
  %v899 = vsub.f32 %v835, %v787
  %v900 = vsub.f32 %v836, %v787
  %v901 = vsub.f32 %v837, %v787
  %v902 = vsub.f32 %v838, %v787
  %v903 = vsub.f32 %v839, %v787
  %v904 = vsub.f32 %v840, %v787
  %v905 = vsub.f32 %v841, %v787
  %v906 = vsub.f32 %v842, %v787
  %v907 = vsub.f32 %v843, %v787
  %v908 = vsub.f32 %v844, %v787
  %v909 = vsub.f32 %v845, %v787
  %v910 = vsub.f32 %v846, %v787
  %v911 = vsub.f32 %v847, %v787
  %v912 = vsub.f32 %v848, %v787
  %v913 = vsub.f32 %v849, %v787
  %v914 = vsub.f32 %v850, %v787
  %v915 = vsub.f32 %v851, %v787
  %v916 = vmul.f32 %v852, %v852
  %v917 = vmul.f32 %v853, %v853
  %v918 = vmul.f32 %v854, %v854
  %v919 = vmul.f32 %v855, %v855
  %v920 = vmul.f32 %v856, %v856
  %v921 = vmul.f32 %v857, %v857
  %v922 = vmul.f32 %v858, %v858
  %v923 = vmul.f32 %v859, %v859
  %v924 = vmul.f32 %v860, %v860
  %v925 = vmul.f32 %v861, %v861
  %v926 = vmul.f32 %v862, %v862
  %v927 = vmul.f32 %v863, %v863
  %v928 = vmul.f32 %v864, %v864
  %v929 = vmul.f32 %v865, %v865
  %v930 = vmul.f32 %v866, %v866
  %v931 = vmul.f32 %v867, %v867
  %v932 = vmul.f32 %v868, %v868
  %v933 = vmul.f32 %v869, %v869
  %v934 = vmul.f32 %v870, %v870
  %v935 = vmul.f32 %v871, %v871
  %v936 = vmul.f32 %v872, %v872
  %v937 = vmul.f32 %v873, %v873
  %v938 = vmul.f32 %v874, %v874
  %v939 = vmul.f32 %v875, %v875
  %v940 = vmul.f32 %v876, %v876
  %v941 = vmul.f32 %v877, %v877
  %v942 = vmul.f32 %v878, %v878
  %v943 = vmul.f32 %v879, %v879
  %v944 = vmul.f32 %v880, %v880
  %v945 = vmul.f32 %v881, %v881
  %v946 = vmul.f32 %v882, %v882
  %v947 = vmul.f32 %v883, %v883
  %v948 = vmul.f32 %v884, %v884
  %v949 = vmul.f32 %v885, %v885
  %v950 = vmul.f32 %v886, %v886
  %v951 = vmul.f32 %v887, %v887
  %v952 = vmul.f32 %v888, %v888
  %v953 = vmul.f32 %v889, %v889
  %v954 = vmul.f32 %v890, %v890
  %v955 = vmul.f32 %v891, %v891
  %v956 = vmul.f32 %v892, %v892
  %v957 = vmul.f32 %v893, %v893
  %v958 = vmul.f32 %v894, %v894
  %v959 = vmul.f32 %v895, %v895
  %v960 = vmul.f32 %v896, %v896
  %v961 = vmul.f32 %v897, %v897
  %v962 = vmul.f32 %v898, %v898
  %v963 = vmul.f32 %v899, %v899
  %v964 = vmul.f32 %v900, %v900
  %v965 = vmul.f32 %v901, %v901
  %v966 = vmul.f32 %v902, %v902
  %v967 = vmul.f32 %v903, %v903
  %v968 = vmul.f32 %v904, %v904
  %v969 = vmul.f32 %v905, %v905
  %v970 = vmul.f32 %v906, %v906
  %v971 = vmul.f32 %v907, %v907
  %v972 = vmul.f32 %v908, %v908
  %v973 = vmul.f32 %v909, %v909
  %v974 = vmul.f32 %v910, %v910
  %v975 = vmul.f32 %v911, %v911
  %v976 = vmul.f32 %v912, %v912
  %v977 = vmul.f32 %v913, %v913
  %v978 = vmul.f32 %v914, %v914
  %v979 = vmul.f32 %v915, %v915
  %v980 = vadd.f32 %v916, %v917
  %v981 = vadd.f32 %v980, %v918
  %v982 = vadd.f32 %v981, %v919
  %v983 = vadd.f32 %v982, %v920
  %v984 = vadd.f32 %v983, %v921
  %v985 = vadd.f32 %v984, %v922
  %v986 = vadd.f32 %v985, %v923
  %v987 = vadd.f32 %v986, %v924
  %v988 = vadd.f32 %v987, %v925
  %v989 = vadd.f32 %v988, %v926
  %v990 = vadd.f32 %v989, %v927
  %v991 = vadd.f32 %v990, %v928
  %v992 = vadd.f32 %v991, %v929
  %v993 = vadd.f32 %v992, %v930
  %v994 = vadd.f32 %v993, %v931
  %v995 = vadd.f32 %v994, %v932
  %v996 = vadd.f32 %v995, %v933
  %v997 = vadd.f32 %v996, %v934
  %v998 = vadd.f32 %v997, %v935
  %v999 = vadd.f32 %v998, %v936
  %v1000 = vadd.f32 %v999, %v937
  %v1001 = vadd.f32 %v1000, %v938
  %v1002 = vadd.f32 %v1001, %v939
  %v1003 = vadd.f32 %v1002, %v940
  %v1004 = vadd.f32 %v1003, %v941
  %v1005 = vadd.f32 %v1004, %v942
  %v1006 = vadd.f32 %v1005, %v943
  %v1007 = vadd.f32 %v1006, %v944
  %v1008 = vadd.f32 %v1007, %v945
  %v1009 = vadd.f32 %v1008, %v946
  %v1010 = vadd.f32 %v1009, %v947
  %v1011 = vadd.f32 %v1010, %v948
  %v1012 = vadd.f32 %v1011, %v949
  %v1013 = vadd.f32 %v1012, %v950
  %v1014 = vadd.f32 %v1013, %v951
  %v1015 = vadd.f32 %v1014, %v952
  %v1016 = vadd.f32 %v1015, %v953
  %v1017 = vadd.f32 %v1016, %v954
  %v1018 = vadd.f32 %v1017, %v955
  %v1019 = vadd.f32 %v1018, %v956
  %v1020 = vadd.f32 %v1019, %v957
  %v1021 = vadd.f32 %v1020, %v958
  %v1022 = vadd.f32 %v1021, %v959
  %v1023 = vadd.f32 %v1022, %v960
  %v1024 = vadd.f32 %v1023, %v961
  %v1025 = vadd.f32 %v1024, %v962
  %v1026 = vadd.f32 %v1025, %v963
  %v1027 = vadd.f32 %v1026, %v964
  %v1028 = vadd.f32 %v1027, %v965
  %v1029 = vadd.f32 %v1028, %v966
  %v1030 = vadd.f32 %v1029, %v967
  %v1031 = vadd.f32 %v1030, %v968
  %v1032 = vadd.f32 %v1031, %v969
  %v1033 = vadd.f32 %v1032, %v970
  %v1034 = vadd.f32 %v1033, %v971
  %v1035 = vadd.f32 %v1034, %v972
  %v1036 = vadd.f32 %v1035, %v973
  %v1037 = vadd.f32 %v1036, %v974
  %v1038 = vadd.f32 %v1037, %v975
  %v1039 = vadd.f32 %v1038, %v976
  %v1040 = vadd.f32 %v1039, %v977
  %v1041 = vadd.f32 %v1040, %v978
  %v1042 = vadd.f32 %v1041, %v979
  %v1043 = vrot.slane %v1042, 4
  %v1044 = vadd.f32 %v1042, %v1043
  %v1045 = vrot.slane %v1044, 2
  %v1046 = vadd.f32 %v1044, %v1045
  %v1047 = vrot.slane %v1046, 1
  %v1048 = vadd.f32 %v1046, %v1047
  %v1049 = vmul.f32 %v1048, 0.001953125
  %v1050 = vmax.f32 %v1049, 0.0
  %v1051 = vld [vmem:[%s3] sm:$0x1]
  %v1052 = vadd.f32 %v1050, 1e-05
  %v1053 = vrsqrt.pop %v1052
  %v1054 = vmul.f32 %v1051, %v1053
  %v1055 = vld [vmem:[%s4] sm:$0x1]
  %v1056 = vmul.f32 %v787, %v1054
  %v1057 = vsub.f32 %v1055, %v1056
  %v1059 = vlaneseq
  %v1060 = vshrl.u32 %v1059, 7
  %v1061 = vsub.s32 0, %v1060
  %v1062 = vrot.slane %v1054, %v1061
  %v1064 = vmul.f32 %v788, %v1062
  %v1065 = vmul.f32 %v789, %v1062
  %v1066 = vmul.f32 %v790, %v1062
  %v1067 = vmul.f32 %v791, %v1062
  %v1068 = vmul.f32 %v792, %v1062
  %v1069 = vmul.f32 %v793, %v1062
  %v1070 = vmul.f32 %v794, %v1062
  %v1071 = vmul.f32 %v795, %v1062
  %v1072 = vmul.f32 %v796, %v1062
  %v1073 = vmul.f32 %v797, %v1062
  %v1074 = vmul.f32 %v798, %v1062
  %v1075 = vmul.f32 %v799, %v1062
  %v1076 = vmul.f32 %v800, %v1062
  %v1077 = vmul.f32 %v801, %v1062
  %v1078 = vmul.f32 %v802, %v1062
  %v1079 = vmul.f32 %v803, %v1062
  %v1080 = vmul.f32 %v804, %v1062
  %v1081 = vmul.f32 %v805, %v1062
  %v1082 = vmul.f32 %v806, %v1062
  %v1083 = vmul.f32 %v807, %v1062
  %v1084 = vmul.f32 %v808, %v1062
  %v1085 = vmul.f32 %v809, %v1062
  %v1086 = vmul.f32 %v810, %v1062
  %v1087 = vmul.f32 %v811, %v1062
  %v1088 = vmul.f32 %v812, %v1062
  %v1089 = vmul.f32 %v813, %v1062
  %v1090 = vmul.f32 %v814, %v1062
  %v1091 = vmul.f32 %v815, %v1062
  %v1092 = vmul.f32 %v816, %v1062
  %v1093 = vmul.f32 %v817, %v1062
  %v1094 = vmul.f32 %v818, %v1062
  %v1095 = vmul.f32 %v819, %v1062
  %v1096 = vmul.f32 %v820, %v1062
  %v1097 = vmul.f32 %v821, %v1062
  %v1098 = vmul.f32 %v822, %v1062
  %v1099 = vmul.f32 %v823, %v1062
  %v1100 = vmul.f32 %v824, %v1062
  %v1101 = vmul.f32 %v825, %v1062
  %v1102 = vmul.f32 %v826, %v1062
  %v1103 = vmul.f32 %v827, %v1062
  %v1104 = vmul.f32 %v828, %v1062
  %v1105 = vmul.f32 %v829, %v1062
  %v1106 = vmul.f32 %v830, %v1062
  %v1107 = vmul.f32 %v831, %v1062
  %v1108 = vmul.f32 %v832, %v1062
  %v1109 = vmul.f32 %v833, %v1062
  %v1110 = vmul.f32 %v834, %v1062
  %v1111 = vmul.f32 %v835, %v1062
  %v1112 = vmul.f32 %v836, %v1062
  %v1113 = vmul.f32 %v837, %v1062
  %v1114 = vmul.f32 %v838, %v1062
  %v1115 = vmul.f32 %v839, %v1062
  %v1116 = vmul.f32 %v840, %v1062
  %v1117 = vmul.f32 %v841, %v1062
  %v1118 = vmul.f32 %v842, %v1062
  %v1119 = vmul.f32 %v843, %v1062
  %v1120 = vmul.f32 %v844, %v1062
  %v1121 = vmul.f32 %v845, %v1062
  %v1122 = vmul.f32 %v846, %v1062
  %v1123 = vmul.f32 %v847, %v1062
  %v1124 = vmul.f32 %v848, %v1062
  %v1125 = vmul.f32 %v849, %v1062
  %v1126 = vmul.f32 %v850, %v1062
  %v1127 = vmul.f32 %v851, %v1062
  %v1129 = vlaneseq
  %v1130 = vshrl.u32 %v1129, 7
  %v1131 = vsub.s32 0, %v1130
  %v1132 = vrot.slane %v1057, %v1131
  %v1134 = vadd.f32 %v1064, %v1132
  %v1135 = vadd.f32 %v1065, %v1132
  %v1136 = vadd.f32 %v1066, %v1132
  %v1137 = vadd.f32 %v1067, %v1132
  %v1138 = vadd.f32 %v1068, %v1132
  %v1139 = vadd.f32 %v1069, %v1132
  %v1140 = vadd.f32 %v1070, %v1132
  %v1141 = vadd.f32 %v1071, %v1132
  %v1142 = vadd.f32 %v1072, %v1132
  %v1143 = vadd.f32 %v1073, %v1132
  %v1144 = vadd.f32 %v1074, %v1132
  %v1145 = vadd.f32 %v1075, %v1132
  %v1146 = vadd.f32 %v1076, %v1132
  %v1147 = vadd.f32 %v1077, %v1132
  %v1148 = vadd.f32 %v1078, %v1132
  %v1149 = vadd.f32 %v1079, %v1132
  %v1150 = vadd.f32 %v1080, %v1132
  %v1151 = vadd.f32 %v1081, %v1132
  %v1152 = vadd.f32 %v1082, %v1132
  %v1153 = vadd.f32 %v1083, %v1132
  %v1154 = vadd.f32 %v1084, %v1132
  %v1155 = vadd.f32 %v1085, %v1132
  %v1156 = vadd.f32 %v1086, %v1132
  %v1157 = vadd.f32 %v1087, %v1132
  %v1158 = vadd.f32 %v1088, %v1132
  %v1159 = vadd.f32 %v1089, %v1132
  %v1160 = vadd.f32 %v1090, %v1132
  %v1161 = vadd.f32 %v1091, %v1132
  %v1162 = vadd.f32 %v1092, %v1132
  %v1163 = vadd.f32 %v1093, %v1132
  %v1164 = vadd.f32 %v1094, %v1132
  %v1165 = vadd.f32 %v1095, %v1132
  %v1166 = vadd.f32 %v1096, %v1132
  %v1167 = vadd.f32 %v1097, %v1132
  %v1168 = vadd.f32 %v1098, %v1132
  %v1169 = vadd.f32 %v1099, %v1132
  %v1170 = vadd.f32 %v1100, %v1132
  %v1171 = vadd.f32 %v1101, %v1132
  %v1172 = vadd.f32 %v1102, %v1132
  %v1173 = vadd.f32 %v1103, %v1132
  %v1174 = vadd.f32 %v1104, %v1132
  %v1175 = vadd.f32 %v1105, %v1132
  %v1176 = vadd.f32 %v1106, %v1132
  %v1177 = vadd.f32 %v1107, %v1132
  %v1178 = vadd.f32 %v1108, %v1132
  %v1179 = vadd.f32 %v1109, %v1132
  %v1180 = vadd.f32 %v1110, %v1132
  %v1181 = vadd.f32 %v1111, %v1132
  %v1182 = vadd.f32 %v1112, %v1132
  %v1183 = vadd.f32 %v1113, %v1132
  %v1184 = vadd.f32 %v1114, %v1132
  %v1185 = vadd.f32 %v1115, %v1132
  %v1186 = vadd.f32 %v1116, %v1132
  %v1187 = vadd.f32 %v1117, %v1132
  %v1188 = vadd.f32 %v1118, %v1132
  %v1189 = vadd.f32 %v1119, %v1132
  %v1190 = vadd.f32 %v1120, %v1132
  %v1191 = vadd.f32 %v1121, %v1132
  %v1192 = vadd.f32 %v1122, %v1132
  %v1193 = vadd.f32 %v1123, %v1132
  %v1194 = vadd.f32 %v1124, %v1132
  %v1195 = vadd.f32 %v1125, %v1132
  %v1196 = vadd.f32 %v1126, %v1132
  %v1197 = vadd.f32 %v1127, %v1132
  %vm1198 = vcmp.ge.f32.partialorder %v1134, 0.0
  %vm1199 = vcmp.ge.f32.partialorder %v1135, 0.0
  %vm1200 = vcmp.ge.f32.partialorder %v1136, 0.0
  %vm1201 = vcmp.ge.f32.partialorder %v1137, 0.0
  %vm1202 = vcmp.ge.f32.partialorder %v1138, 0.0
  %vm1203 = vcmp.ge.f32.partialorder %v1139, 0.0
  %vm1204 = vcmp.ge.f32.partialorder %v1140, 0.0
  %vm1205 = vcmp.ge.f32.partialorder %v1141, 0.0
  %vm1206 = vcmp.ge.f32.partialorder %v1142, 0.0
  %vm1207 = vcmp.ge.f32.partialorder %v1143, 0.0
  %vm1208 = vcmp.ge.f32.partialorder %v1144, 0.0
  %vm1209 = vcmp.ge.f32.partialorder %v1145, 0.0
  %vm1210 = vcmp.ge.f32.partialorder %v1146, 0.0
  %vm1211 = vcmp.ge.f32.partialorder %v1147, 0.0
  %vm1212 = vcmp.ge.f32.partialorder %v1148, 0.0
  %vm1213 = vcmp.ge.f32.partialorder %v1149, 0.0
  %vm1214 = vcmp.ge.f32.partialorder %v1150, 0.0
  %vm1215 = vcmp.ge.f32.partialorder %v1151, 0.0
  %vm1216 = vcmp.ge.f32.partialorder %v1152, 0.0
  %vm1217 = vcmp.ge.f32.partialorder %v1153, 0.0
  %vm1218 = vcmp.ge.f32.partialorder %v1154, 0.0
  %vm1219 = vcmp.ge.f32.partialorder %v1155, 0.0
  %vm1220 = vcmp.ge.f32.partialorder %v1156, 0.0
  %vm1221 = vcmp.ge.f32.partialorder %v1157, 0.0
  %vm1222 = vcmp.ge.f32.partialorder %v1158, 0.0
  %vm1223 = vcmp.ge.f32.partialorder %v1159, 0.0
  %vm1224 = vcmp.ge.f32.partialorder %v1160, 0.0
  %vm1225 = vcmp.ge.f32.partialorder %v1161, 0.0
  %vm1226 = vcmp.ge.f32.partialorder %v1162, 0.0
  %vm1227 = vcmp.ge.f32.partialorder %v1163, 0.0
  %vm1228 = vcmp.ge.f32.partialorder %v1164, 0.0
  %vm1229 = vcmp.ge.f32.partialorder %v1165, 0.0
  %vm1230 = vcmp.ge.f32.partialorder %v1166, 0.0
  %vm1231 = vcmp.ge.f32.partialorder %v1167, 0.0
  %vm1232 = vcmp.ge.f32.partialorder %v1168, 0.0
  %vm1233 = vcmp.ge.f32.partialorder %v1169, 0.0
  %vm1234 = vcmp.ge.f32.partialorder %v1170, 0.0
  %vm1235 = vcmp.ge.f32.partialorder %v1171, 0.0
  %vm1236 = vcmp.ge.f32.partialorder %v1172, 0.0
  %vm1237 = vcmp.ge.f32.partialorder %v1173, 0.0
  %vm1238 = vcmp.ge.f32.partialorder %v1174, 0.0
  %vm1239 = vcmp.ge.f32.partialorder %v1175, 0.0
  %vm1240 = vcmp.ge.f32.partialorder %v1176, 0.0
  %vm1241 = vcmp.ge.f32.partialorder %v1177, 0.0
  %vm1242 = vcmp.ge.f32.partialorder %v1178, 0.0
  %vm1243 = vcmp.ge.f32.partialorder %v1179, 0.0
  %vm1244 = vcmp.ge.f32.partialorder %v1180, 0.0
  %vm1245 = vcmp.ge.f32.partialorder %v1181, 0.0
  %vm1246 = vcmp.ge.f32.partialorder %v1182, 0.0
  %vm1247 = vcmp.ge.f32.partialorder %v1183, 0.0
  %vm1248 = vcmp.ge.f32.partialorder %v1184, 0.0
  %vm1249 = vcmp.ge.f32.partialorder %v1185, 0.0
  %vm1250 = vcmp.ge.f32.partialorder %v1186, 0.0
  %vm1251 = vcmp.ge.f32.partialorder %v1187, 0.0
  %vm1252 = vcmp.ge.f32.partialorder %v1188, 0.0
  %vm1253 = vcmp.ge.f32.partialorder %v1189, 0.0
  %vm1254 = vcmp.ge.f32.partialorder %v1190, 0.0
  %vm1255 = vcmp.ge.f32.partialorder %v1191, 0.0
  %vm1256 = vcmp.ge.f32.partialorder %v1192, 0.0
  %vm1257 = vcmp.ge.f32.partialorder %v1193, 0.0
  %vm1258 = vcmp.ge.f32.partialorder %v1194, 0.0
  %vm1259 = vcmp.ge.f32.partialorder %v1195, 0.0
  %vm1260 = vcmp.ge.f32.partialorder %v1196, 0.0
  %vm1261 = vcmp.ge.f32.partialorder %v1197, 0.0
  %v1262 = vmul.f32 %v1134, 0.2
  %v1263 = vmul.f32 %v1135, 0.2
  %v1264 = vmul.f32 %v1136, 0.2
  %v1265 = vmul.f32 %v1137, 0.2
  %v1266 = vmul.f32 %v1138, 0.2
  %v1267 = vmul.f32 %v1139, 0.2
  %v1268 = vmul.f32 %v1140, 0.2
  %v1269 = vmul.f32 %v1141, 0.2
  %v1270 = vmul.f32 %v1142, 0.2
  %v1271 = vmul.f32 %v1143, 0.2
  %v1272 = vmul.f32 %v1144, 0.2
  %v1273 = vmul.f32 %v1145, 0.2
  %v1274 = vmul.f32 %v1146, 0.2
  %v1275 = vmul.f32 %v1147, 0.2
  %v1276 = vmul.f32 %v1148, 0.2
  %v1277 = vmul.f32 %v1149, 0.2
  %v1278 = vmul.f32 %v1150, 0.2
  %v1279 = vmul.f32 %v1151, 0.2
  %v1280 = vmul.f32 %v1152, 0.2
  %v1281 = vmul.f32 %v1153, 0.2
  %v1282 = vmul.f32 %v1154, 0.2
  %v1283 = vmul.f32 %v1155, 0.2
  %v1284 = vmul.f32 %v1156, 0.2
  %v1285 = vmul.f32 %v1157, 0.2
  %v1286 = vmul.f32 %v1158, 0.2
  %v1287 = vmul.f32 %v1159, 0.2
  %v1288 = vmul.f32 %v1160, 0.2
  %v1289 = vmul.f32 %v1161, 0.2
  %v1290 = vmul.f32 %v1162, 0.2
  %v1291 = vmul.f32 %v1163, 0.2
  %v1292 = vmul.f32 %v1164, 0.2
  %v1293 = vmul.f32 %v1165, 0.2
  %v1294 = vmul.f32 %v1166, 0.2
  %v1295 = vmul.f32 %v1167, 0.2
  %v1296 = vmul.f32 %v1168, 0.2
  %v1297 = vmul.f32 %v1169, 0.2
  %v1298 = vmul.f32 %v1170, 0.2
  %v1299 = vmul.f32 %v1171, 0.2
  %v1300 = vmul.f32 %v1172, 0.2
  %v1301 = vmul.f32 %v1173, 0.2
  %v1302 = vmul.f32 %v1174, 0.2
  %v1303 = vmul.f32 %v1175, 0.2
  %v1304 = vmul.f32 %v1176, 0.2
  %v1305 = vmul.f32 %v1177, 0.2
  %v1306 = vmul.f32 %v1178, 0.2
  %v1307 = vmul.f32 %v1179, 0.2
  %v1308 = vmul.f32 %v1180, 0.2
  %v1309 = vmul.f32 %v1181, 0.2
  %v1310 = vmul.f32 %v1182, 0.2
  %v1311 = vmul.f32 %v1183, 0.2
  %v1312 = vmul.f32 %v1184, 0.2
  %v1313 = vmul.f32 %v1185, 0.2
  %v1314 = vmul.f32 %v1186, 0.2
  %v1315 = vmul.f32 %v1187, 0.2
  %v1316 = vmul.f32 %v1188, 0.2
  %v1317 = vmul.f32 %v1189, 0.2
  %v1318 = vmul.f32 %v1190, 0.2
  %v1319 = vmul.f32 %v1191, 0.2
  %v1320 = vmul.f32 %v1192, 0.2
  %v1321 = vmul.f32 %v1193, 0.2
  %v1322 = vmul.f32 %v1194, 0.2
  %v1323 = vmul.f32 %v1195, 0.2
  %v1324 = vmul.f32 %v1196, 0.2
  %v1325 = vmul.f32 %v1197, 0.2
  %v1326 = vsel %vm1198, %v1134, %v1262
  %v1327 = vsel %vm1199, %v1135, %v1263
  %v1328 = vsel %vm1200, %v1136, %v1264
  %v1329 = vsel %vm1201, %v1137, %v1265
  %v1330 = vsel %vm1202, %v1138, %v1266
  %v1331 = vsel %vm1203, %v1139, %v1267
  %v1332 = vsel %vm1204, %v1140, %v1268
  %v1333 = vsel %vm1205, %v1141, %v1269
  %v1334 = vsel %vm1206, %v1142, %v1270
  %v1335 = vsel %vm1207, %v1143, %v1271
  %v1336 = vsel %vm1208, %v1144, %v1272
  %v1337 = vsel %vm1209, %v1145, %v1273
  %v1338 = vsel %vm1210, %v1146, %v1274
  %v1339 = vsel %vm1211, %v1147, %v1275
  %v1340 = vsel %vm1212, %v1148, %v1276
  %v1341 = vsel %vm1213, %v1149, %v1277
  %v1342 = vsel %vm1214, %v1150, %v1278
  %v1343 = vsel %vm1215, %v1151, %v1279
  %v1344 = vsel %vm1216, %v1152, %v1280
  %v1345 = vsel %vm1217, %v1153, %v1281
  %v1346 = vsel %vm1218, %v1154, %v1282
  %v1347 = vsel %vm1219, %v1155, %v1283
  %v1348 = vsel %vm1220, %v1156, %v1284
  %v1349 = vsel %vm1221, %v1157, %v1285
  %v1350 = vsel %vm1222, %v1158, %v1286
  %v1351 = vsel %vm1223, %v1159, %v1287
  %v1352 = vsel %vm1224, %v1160, %v1288
  %v1353 = vsel %vm1225, %v1161, %v1289
  %v1354 = vsel %vm1226, %v1162, %v1290
  %v1355 = vsel %vm1227, %v1163, %v1291
  %v1356 = vsel %vm1228, %v1164, %v1292
  %v1357 = vsel %vm1229, %v1165, %v1293
  %v1358 = vsel %vm1230, %v1166, %v1294
  %v1359 = vsel %vm1231, %v1167, %v1295
  %v1360 = vsel %vm1232, %v1168, %v1296
  %v1361 = vsel %vm1233, %v1169, %v1297
  %v1362 = vsel %vm1234, %v1170, %v1298
  %v1363 = vsel %vm1235, %v1171, %v1299
  %v1364 = vsel %vm1236, %v1172, %v1300
  %v1365 = vsel %vm1237, %v1173, %v1301
  %v1366 = vsel %vm1238, %v1174, %v1302
  %v1367 = vsel %vm1239, %v1175, %v1303
  %v1368 = vsel %vm1240, %v1176, %v1304
  %v1369 = vsel %vm1241, %v1177, %v1305
  %v1370 = vsel %vm1242, %v1178, %v1306
  %v1371 = vsel %vm1243, %v1179, %v1307
  %v1372 = vsel %vm1244, %v1180, %v1308
  %v1373 = vsel %vm1245, %v1181, %v1309
  %v1374 = vsel %vm1246, %v1182, %v1310
  %v1375 = vsel %vm1247, %v1183, %v1311
  %v1376 = vsel %vm1248, %v1184, %v1312
  %v1377 = vsel %vm1249, %v1185, %v1313
  %v1378 = vsel %vm1250, %v1186, %v1314
  %v1379 = vsel %vm1251, %v1187, %v1315
  %v1380 = vsel %vm1252, %v1188, %v1316
  %v1381 = vsel %vm1253, %v1189, %v1317
  %v1382 = vsel %vm1254, %v1190, %v1318
  %v1383 = vsel %vm1255, %v1191, %v1319
  %v1384 = vsel %vm1256, %v1192, %v1320
  %v1385 = vsel %vm1257, %v1193, %v1321
  %v1386 = vsel %vm1258, %v1194, %v1322
  %v1387 = vsel %vm1259, %v1195, %v1323
  %v1388 = vsel %vm1260, %v1196, %v1324
  %v1389 = vsel %vm1261, %v1197, %v1325
  %v1390 = vpack.c.bf16 %v1327, %v1326
  %v1391 = vpack.c.bf16 %v1329, %v1328
  %v1392 = vpack.c.bf16 %v1331, %v1330
  %v1393 = vpack.c.bf16 %v1333, %v1332
  %v1394 = vpack.c.bf16 %v1335, %v1334
  %v1395 = vpack.c.bf16 %v1337, %v1336
  %v1396 = vpack.c.bf16 %v1339, %v1338
  %v1397 = vpack.c.bf16 %v1341, %v1340
  %v1398 = vpack.c.bf16 %v1343, %v1342
  %v1399 = vpack.c.bf16 %v1345, %v1344
  %v1400 = vpack.c.bf16 %v1347, %v1346
  %v1401 = vpack.c.bf16 %v1349, %v1348
  %v1402 = vpack.c.bf16 %v1351, %v1350
  %v1403 = vpack.c.bf16 %v1353, %v1352
  %v1404 = vpack.c.bf16 %v1355, %v1354
  %v1405 = vpack.c.bf16 %v1357, %v1356
  %v1406 = vpack.c.bf16 %v1359, %v1358
  %v1407 = vpack.c.bf16 %v1361, %v1360
  %v1408 = vpack.c.bf16 %v1363, %v1362
  %v1409 = vpack.c.bf16 %v1365, %v1364
  %v1410 = vpack.c.bf16 %v1367, %v1366
  %v1411 = vpack.c.bf16 %v1369, %v1368
  %v1412 = vpack.c.bf16 %v1371, %v1370
  %v1413 = vpack.c.bf16 %v1373, %v1372
  %v1414 = vpack.c.bf16 %v1375, %v1374
  %v1415 = vpack.c.bf16 %v1377, %v1376
  %v1416 = vpack.c.bf16 %v1379, %v1378
  %v1417 = vpack.c.bf16 %v1381, %v1380
  %v1418 = vpack.c.bf16 %v1383, %v1382
  %v1419 = vpack.c.bf16 %v1385, %v1384
  %v1420 = vpack.c.bf16 %v1387, %v1386
  %v1421 = vpack.c.bf16 %v1389, %v1388
  %v1454 = vunpack.c.l.b16 %v1390
  %v1455 = vunpack.c.h.b16 %v1390
  %v1456 = vunpack.c.l.b16 %v1391
  %v1457 = vunpack.c.h.b16 %v1391
  %v1458 = vunpack.c.l.b16 %v1392
  %v1459 = vunpack.c.h.b16 %v1392
  %v1460 = vunpack.c.l.b16 %v1393
  %v1461 = vunpack.c.h.b16 %v1393
  %v1462 = vunpack.c.l.b16 %v1394
  %v1463 = vunpack.c.h.b16 %v1394
  %v1464 = vunpack.c.l.b16 %v1395
  %v1465 = vunpack.c.h.b16 %v1395
  %v1466 = vunpack.c.l.b16 %v1396
  %v1467 = vunpack.c.h.b16 %v1396
  %v1468 = vunpack.c.l.b16 %v1397
  %v1469 = vunpack.c.h.b16 %v1397
  %v1470 = vunpack.c.l.b16 %v1398
  %v1471 = vunpack.c.h.b16 %v1398
  %v1472 = vunpack.c.l.b16 %v1399
  %v1473 = vunpack.c.h.b16 %v1399
  %v1474 = vunpack.c.l.b16 %v1400
  %v1475 = vunpack.c.h.b16 %v1400
  %v1476 = vunpack.c.l.b16 %v1401
  %v1477 = vunpack.c.h.b16 %v1401
  %v1478 = vunpack.c.l.b16 %v1402
  %v1479 = vunpack.c.h.b16 %v1402
  %v1480 = vunpack.c.l.b16 %v1403
  %v1481 = vunpack.c.h.b16 %v1403
  %v1482 = vunpack.c.l.b16 %v1404
  %v1483 = vunpack.c.h.b16 %v1404
  %v1484 = vunpack.c.l.b16 %v1405
  %v1485 = vunpack.c.h.b16 %v1405
  %v1486 = vunpack.c.l.b16 %v1406
  %v1487 = vunpack.c.h.b16 %v1406
  %v1488 = vunpack.c.l.b16 %v1407
  %v1489 = vunpack.c.h.b16 %v1407
  %v1490 = vunpack.c.l.b16 %v1408
  %v1491 = vunpack.c.h.b16 %v1408
  %v1492 = vunpack.c.l.b16 %v1409
  %v1493 = vunpack.c.h.b16 %v1409
  %v1494 = vunpack.c.l.b16 %v1410
  %v1495 = vunpack.c.h.b16 %v1410
  %v1496 = vunpack.c.l.b16 %v1411
  %v1497 = vunpack.c.h.b16 %v1411
  %v1498 = vunpack.c.l.b16 %v1412
  %v1499 = vunpack.c.h.b16 %v1412
  %v1500 = vunpack.c.l.b16 %v1413
  %v1501 = vunpack.c.h.b16 %v1413
  %v1502 = vunpack.c.l.b16 %v1414
  %v1503 = vunpack.c.h.b16 %v1414
  %v1504 = vunpack.c.l.b16 %v1415
  %v1505 = vunpack.c.h.b16 %v1415
  %v1506 = vunpack.c.l.b16 %v1416
  %v1507 = vunpack.c.h.b16 %v1416
  %v1508 = vunpack.c.l.b16 %v1417
  %v1509 = vunpack.c.h.b16 %v1417
  %v1510 = vunpack.c.l.b16 %v1418
  %v1511 = vunpack.c.h.b16 %v1418
  %v1512 = vunpack.c.l.b16 %v1419
  %v1513 = vunpack.c.h.b16 %v1419
  %v1514 = vunpack.c.l.b16 %v1420
  %v1515 = vunpack.c.h.b16 %v1420
  %v1516 = vunpack.c.l.b16 %v1421
  %v1517 = vunpack.c.h.b16 %v1421
  %v1518 = vpack.c.b16 %v1454, %v1454
  %v1519 = vpack.c.b16 %v1455, %v1455
  %v1520 = vpack.c.b16 %v1456, %v1456
  %v1521 = vpack.c.b16 %v1457, %v1457
  %v1522 = vpack.c.b16 %v1458, %v1458
  %v1523 = vpack.c.b16 %v1459, %v1459
  %v1524 = vpack.c.b16 %v1460, %v1460
  %v1525 = vpack.c.b16 %v1461, %v1461
  %v1526 = vpack.c.b16 %v1462, %v1462
  %v1527 = vpack.c.b16 %v1463, %v1463
  %v1528 = vpack.c.b16 %v1464, %v1464
  %v1529 = vpack.c.b16 %v1465, %v1465
  %v1530 = vpack.c.b16 %v1466, %v1466
  %v1531 = vpack.c.b16 %v1467, %v1467
  %v1532 = vpack.c.b16 %v1468, %v1468
  %v1533 = vpack.c.b16 %v1469, %v1469
  %v1534 = vpack.c.b16 %v1470, %v1470
  %v1535 = vpack.c.b16 %v1471, %v1471
  %v1536 = vpack.c.b16 %v1472, %v1472
  %v1537 = vpack.c.b16 %v1473, %v1473
  %v1538 = vpack.c.b16 %v1474, %v1474
  %v1539 = vpack.c.b16 %v1475, %v1475
  %v1540 = vpack.c.b16 %v1476, %v1476
  %v1541 = vpack.c.b16 %v1477, %v1477
  %v1542 = vpack.c.b16 %v1478, %v1478
  %v1543 = vpack.c.b16 %v1479, %v1479
  %v1544 = vpack.c.b16 %v1480, %v1480
  %v1545 = vpack.c.b16 %v1481, %v1481
  %v1546 = vpack.c.b16 %v1482, %v1482
  %v1547 = vpack.c.b16 %v1483, %v1483
  %v1548 = vpack.c.b16 %v1484, %v1484
  %v1549 = vpack.c.b16 %v1485, %v1485
  %v1550 = vpack.c.b16 %v1486, %v1486
  %v1551 = vpack.c.b16 %v1487, %v1487
  %v1552 = vpack.c.b16 %v1488, %v1488
  %v1553 = vpack.c.b16 %v1489, %v1489
  %v1554 = vpack.c.b16 %v1490, %v1490
  %v1555 = vpack.c.b16 %v1491, %v1491
  %v1556 = vpack.c.b16 %v1492, %v1492
  %v1557 = vpack.c.b16 %v1493, %v1493
  %v1558 = vpack.c.b16 %v1494, %v1494
  %v1559 = vpack.c.b16 %v1495, %v1495
  %v1560 = vpack.c.b16 %v1496, %v1496
  %v1561 = vpack.c.b16 %v1497, %v1497
  %v1562 = vpack.c.b16 %v1498, %v1498
  %v1563 = vpack.c.b16 %v1499, %v1499
  %v1564 = vpack.c.b16 %v1500, %v1500
  %v1565 = vpack.c.b16 %v1501, %v1501
  %v1566 = vpack.c.b16 %v1502, %v1502
  %v1567 = vpack.c.b16 %v1503, %v1503
  %v1568 = vpack.c.b16 %v1504, %v1504
  %v1569 = vpack.c.b16 %v1505, %v1505
  %v1570 = vpack.c.b16 %v1506, %v1506
  %v1571 = vpack.c.b16 %v1507, %v1507
  %v1572 = vpack.c.b16 %v1508, %v1508
  %v1573 = vpack.c.b16 %v1509, %v1509
  %v1574 = vpack.c.b16 %v1510, %v1510
  %v1575 = vpack.c.b16 %v1511, %v1511
  %v1576 = vpack.c.b16 %v1512, %v1512
  %v1577 = vpack.c.b16 %v1513, %v1513
  %v1578 = vpack.c.b16 %v1514, %v1514
  %v1579 = vpack.c.b16 %v1515, %v1515
  %v1580 = vpack.c.b16 %v1516, %v1516
  %v1581 = vpack.c.b16 %v1517, %v1517
  %1646 = vst [vmem:[%s5] sm:$0xf] %v1518
  %1647 = vst [vmem:[%s5 + $0x4] sm:$0xf] %v1519
  %1648 = vst [vmem:[%s5 + $0x8] sm:$0xf] %v1520
  %1649 = vst [vmem:[%s5 + $0xc] sm:$0xf] %v1521
  %1650 = vst [vmem:[%s5 + $0x10] sm:$0xf] %v1522
  %1651 = vst [vmem:[%s5 + $0x14] sm:$0xf] %v1523
  %1652 = vst [vmem:[%s5 + $0x18] sm:$0xf] %v1524
  %1653 = vst [vmem:[%s5 + $0x1c] sm:$0xf] %v1525
  %1654 = vst [vmem:[%s5 + $0x20] sm:$0xf] %v1526
  %1655 = vst [vmem:[%s5 + $0x24] sm:$0xf] %v1527
  %1656 = vst [vmem:[%s5 + $0x28] sm:$0xf] %v1528
  %1657 = vst [vmem:[%s5 + $0x2c] sm:$0xf] %v1529
  %1658 = vst [vmem:[%s5 + $0x30] sm:$0xf] %v1530
  %1659 = vst [vmem:[%s5 + $0x34] sm:$0xf] %v1531
  %1660 = vst [vmem:[%s5 + $0x38] sm:$0xf] %v1532
  %1661 = vst [vmem:[%s5 + $0x3c] sm:$0xf] %v1533
  %1662 = vst [vmem:[%s5 + $0x40] sm:$0xf] %v1534
  %1663 = vst [vmem:[%s5 + $0x44] sm:$0xf] %v1535
  %1664 = vst [vmem:[%s5 + $0x48] sm:$0xf] %v1536
  %1665 = vst [vmem:[%s5 + $0x4c] sm:$0xf] %v1537
  %1666 = vst [vmem:[%s5 + $0x50] sm:$0xf] %v1538
  %1667 = vst [vmem:[%s5 + $0x54] sm:$0xf] %v1539
  %1668 = vst [vmem:[%s5 + $0x58] sm:$0xf] %v1540
  %1669 = vst [vmem:[%s5 + $0x5c] sm:$0xf] %v1541
  %1670 = vst [vmem:[%s5 + $0x60] sm:$0xf] %v1542
  %1671 = vst [vmem:[%s5 + $0x64] sm:$0xf] %v1543
  %1672 = vst [vmem:[%s5 + $0x68] sm:$0xf] %v1544
  %1673 = vst [vmem:[%s5 + $0x6c] sm:$0xf] %v1545
  %1674 = vst [vmem:[%s5 + $0x70] sm:$0xf] %v1546
  %1675 = vst [vmem:[%s5 + $0x74] sm:$0xf] %v1547
  %1676 = vst [vmem:[%s5 + $0x78] sm:$0xf] %v1548
  %1677 = vst [vmem:[%s5 + $0x7c] sm:$0xf] %v1549
  %1678 = vst [vmem:[%s5 + $0x80] sm:$0xf] %v1550
  %1679 = vst [vmem:[%s5 + $0x84] sm:$0xf] %v1551
  %1680 = vst [vmem:[%s5 + $0x88] sm:$0xf] %v1552
  %1681 = vst [vmem:[%s5 + $0x8c] sm:$0xf] %v1553
  %1682 = vst [vmem:[%s5 + $0x90] sm:$0xf] %v1554
  %1683 = vst [vmem:[%s5 + $0x94] sm:$0xf] %v1555
  %1684 = vst [vmem:[%s5 + $0x98] sm:$0xf] %v1556
  %1685 = vst [vmem:[%s5 + $0x9c] sm:$0xf] %v1557
  %1686 = vst [vmem:[%s5 + $0xa0] sm:$0xf] %v1558
  %1687 = vst [vmem:[%s5 + $0xa4] sm:$0xf] %v1559
  %1688 = vst [vmem:[%s5 + $0xa8] sm:$0xf] %v1560
  %1689 = vst [vmem:[%s5 + $0xac] sm:$0xf] %v1561
  %1690 = vst [vmem:[%s5 + $0xb0] sm:$0xf] %v1562
  %1691 = vst [vmem:[%s5 + $0xb4] sm:$0xf] %v1563
  %1692 = vst [vmem:[%s5 + $0xb8] sm:$0xf] %v1564
  %1693 = vst [vmem:[%s5 + $0xbc] sm:$0xf] %v1565
  %1694 = vst [vmem:[%s5 + $0xc0] sm:$0xf] %v1566
  %1695 = vst [vmem:[%s5 + $0xc4] sm:$0xf] %v1567
  %1696 = vst [vmem:[%s5 + $0xc8] sm:$0xf] %v1568
  %1697 = vst [vmem:[%s5 + $0xcc] sm:$0xf] %v1569
  %1698 = vst [vmem:[%s5 + $0xd0] sm:$0xf] %v1570
  %1699 = vst [vmem:[%s5 + $0xd4] sm:$0xf] %v1571
  %1700 = vst [vmem:[%s5 + $0xd8] sm:$0xf] %v1572
  %1701 = vst [vmem:[%s5 + $0xdc] sm:$0xf] %v1573
  %1702 = vst [vmem:[%s5 + $0xe0] sm:$0xf] %v1574
  %1703 = vst [vmem:[%s5 + $0xe4] sm:$0xf] %v1575
  %1704 = vst [vmem:[%s5 + $0xe8] sm:$0xf] %v1576
  %1705 = vst [vmem:[%s5 + $0xec] sm:$0xf] %v1577
  %1706 = vst [vmem:[%s5 + $0xf0] sm:$0xf] %v1578
  %1707 = vst [vmem:[%s5 + $0xf4] sm:$0xf] %v1579
  %1708 = vst [vmem:[%s5 + $0xf8] sm:$0xf] %v1580
  %1709 = vst [vmem:[%s5 + $0xfc] sm:$0xf] %v1581
  // Predicated region
  $region22: #{vae_forward.8} parent=0 // pred_check
    _
  $region23: #{vae_forward.8} parent=0 // pred_check_branch
    %1711 = sbr.rel (0) target = $region25
  $region24: #{vae_forward.8} parent=0 // pred_region
    _
  $region25: #{vae_forward.8} parent=0 // pred_fallthru
    _
  // Predicated region
  $region26: #{vae_forward.8} parent=0 // pred_check
    _
  $region27: #{vae_forward.8} parent=0 // pred_check_branch
    %1713 = sbr.rel (0) target = $region29
  $region28: #{vae_forward.8} parent=0 // pred_region
    _
  $region29: #{vae_forward.8} parent=0 // pred_fallthru
    _

// kernel: vae_forward.9
$region0: #{vae_forward.9}
  #allocation0 [shape = 'u32[]', space=smem, size = 0x4, offset = 0x4, fixed_abs, tag = 'smem constant byte address 0x4 - core index']
  #allocation1 [shape = 'u32[144,128]{1,0:T(1,128)}', space=vmem, size = 0x12000, scoped, tag = 'internal scratch']
  #allocation2 [shape = 'f32[1,128,128]{2,1,0:T(8,128)}', space=vmem, size = 0x10000, scoped, tag = 'scratch operand']
  %s0 = inlined_call_operand.vmem [shape: bf16[1,128,256], index: 0, kind: input, shape index: {}]
  %s1 = inlined_call_operand.vmem [shape: bf16[1,256,128], index: 1, kind: input, shape index: {}]
  %s2 = inlined_call_operand.vmem [shape: f32[1,128], index: 2, kind: input, shape index: {}]
  %s3 = inlined_call_operand.vmem [shape: f32[1,128], index: 3, kind: input, shape index: {}]
  %s4 = inlined_call_operand.vmem [shape: f32[1,128], index: 4, kind: input, shape index: {}]
  %s5 = inlined_call_operand.vmem [shape: bf16[1,128,128], index: 5, kind: output, shape index: {}]
  %s6 = sld [smem:[#allocation0]]
  $region30: #{vae_forward.9} parent=0
    _
  %s8 = ssub.s32 1, %s6
  %s9 = scalar_select 0, %s8, %s6
  // Predicated region
  $region2: #{vae_forward.9} parent=0 // pred_check
    _
  $region3: #{vae_forward.9} parent=0 // pred_check_branch
    %11 = sbr.rel (0) target = $region5
  $region4: #{vae_forward.9} parent=0 // pred_region
    _
  $region5: #{vae_forward.9} parent=0 // pred_fallthru
    _
  // Predicated region
  $region6: #{vae_forward.9} parent=0 // pred_check
    _
  $region7: #{vae_forward.9} parent=0 // pred_check_branch
    %13 = sbr.rel (0) target = $region9
  $region8: #{vae_forward.9} parent=0 // pred_region
    _
  $region9: #{vae_forward.9} parent=0 // pred_fallthru
    _
  // Predicated region
  $region10: #{vae_forward.9} parent=0 // pred_check
    _
  $region11: #{vae_forward.9} parent=0 // pred_check_branch
    %15 = sbr.rel (0) target = $region13
  $region12: #{vae_forward.9} parent=0 // pred_region
    _
  $region13: #{vae_forward.9} parent=0 // pred_fallthru
    _
  // Predicated region
  $region14: #{vae_forward.9} parent=0 // pred_check
    _
  $region15: #{vae_forward.9} parent=0 // pred_check_branch
    %17 = sbr.rel (0) target = $region17
  $region16: #{vae_forward.9} parent=0 // pred_region
    _
  $region17: #{vae_forward.9} parent=0 // pred_fallthru
    _
  // Predicated region
  $region18: #{vae_forward.9} parent=0 // pred_check
    _
  $region19: #{vae_forward.9} parent=0 // pred_check_branch
    %19 = sbr.rel (0) target = $region21
  $region20: #{vae_forward.9} parent=0 // pred_region
    _
  $region21: #{vae_forward.9} parent=0 // pred_fallthru
    _
  %v21 = vld [vmem:[%s0] sm:$0xff]
  %v22 = vld [vmem:[%s0 + $0x8] sm:$0xff]
  %v23 = vld [vmem:[%s0 + $0x10] sm:$0xff]
  %v24 = vld [vmem:[%s0 + $0x18] sm:$0xff]
  %v25 = vld [vmem:[%s0 + $0x20] sm:$0xff]
  %v26 = vld [vmem:[%s0 + $0x28] sm:$0xff]
  %v27 = vld [vmem:[%s0 + $0x30] sm:$0xff]
  %v28 = vld [vmem:[%s0 + $0x38] sm:$0xff]
  %v29 = vld [vmem:[%s0 + $0x40] sm:$0xff]
  %v30 = vld [vmem:[%s0 + $0x48] sm:$0xff]
  %v31 = vld [vmem:[%s0 + $0x50] sm:$0xff]
  %v32 = vld [vmem:[%s0 + $0x58] sm:$0xff]
  %v33 = vld [vmem:[%s0 + $0x60] sm:$0xff]
  %v34 = vld [vmem:[%s0 + $0x68] sm:$0xff]
  %v35 = vld [vmem:[%s0 + $0x70] sm:$0xff]
  %v36 = vld [vmem:[%s0 + $0x78] sm:$0xff]
  %v37 = vld [vmem:[%s1] sm:$0xf]
  %v38 = vld [vmem:[%s1 + $0x4] sm:$0xf]
  %v39 = vld [vmem:[%s1 + $0x8] sm:$0xf]
  %v40 = vld [vmem:[%s1 + $0xc] sm:$0xf]
  %v41 = vld [vmem:[%s1 + $0x10] sm:$0xf]
  %v42 = vld [vmem:[%s1 + $0x14] sm:$0xf]
  %v43 = vld [vmem:[%s1 + $0x18] sm:$0xf]
  %v44 = vld [vmem:[%s1 + $0x1c] sm:$0xf]
  %v45 = vld [vmem:[%s1 + $0x20] sm:$0xf]
  %v46 = vld [vmem:[%s1 + $0x24] sm:$0xf]
  %v47 = vld [vmem:[%s1 + $0x28] sm:$0xf]
  %v48 = vld [vmem:[%s1 + $0x2c] sm:$0xf]
  %v49 = vld [vmem:[%s1 + $0x30] sm:$0xf]
  %v50 = vld [vmem:[%s1 + $0x34] sm:$0xf]
  %v51 = vld [vmem:[%s1 + $0x38] sm:$0xf]
  %v52 = vld [vmem:[%s1 + $0x3c] sm:$0xf]
  %v53 = vld [vmem:[%s1 + $0x40] sm:$0xf]
  %v54 = vld [vmem:[%s1 + $0x44] sm:$0xf]
  %v55 = vld [vmem:[%s1 + $0x48] sm:$0xf]
  %v56 = vld [vmem:[%s1 + $0x4c] sm:$0xf]
  %v57 = vld [vmem:[%s1 + $0x50] sm:$0xf]
  %v58 = vld [vmem:[%s1 + $0x54] sm:$0xf]
  %v59 = vld [vmem:[%s1 + $0x58] sm:$0xf]
  %v60 = vld [vmem:[%s1 + $0x5c] sm:$0xf]
  %v61 = vld [vmem:[%s1 + $0x60] sm:$0xf]
  %v62 = vld [vmem:[%s1 + $0x64] sm:$0xf]
  %v63 = vld [vmem:[%s1 + $0x68] sm:$0xf]
  %v64 = vld [vmem:[%s1 + $0x6c] sm:$0xf]
  %v65 = vld [vmem:[%s1 + $0x70] sm:$0xf]
  %v66 = vld [vmem:[%s1 + $0x74] sm:$0xf]
  %v67 = vld [vmem:[%s1 + $0x78] sm:$0xf]
  %v68 = vld [vmem:[%s1 + $0x7c] sm:$0xf]
  %v69 = vld [vmem:[%s2] sm:$0x1]
  %v71 = vlaneseq
  %v72 = vshrl.u32 %v71, 7
  %v73 = vsub.s32 0, %v72
  %v74 = vrot.slane %v69, %v73
  %v92 = vunpack.c.l.b16 %v21
  %v93 = vunpack.c.h.b16 %v21
  %v94 = vunpack.c.l.b16 %v22
  %v95 = vunpack.c.h.b16 %v22
  %v96 = vunpack.c.l.b16 %v23
  %v97 = vunpack.c.h.b16 %v23
  %v98 = vunpack.c.l.b16 %v24
  %v99 = vunpack.c.h.b16 %v24
  %v100 = vunpack.c.l.b16 %v25
  %v101 = vunpack.c.h.b16 %v25
  %v102 = vunpack.c.l.b16 %v26
  %v103 = vunpack.c.h.b16 %v26
  %v104 = vunpack.c.l.b16 %v27
  %v105 = vunpack.c.h.b16 %v27
  %v106 = vunpack.c.l.b16 %v28
  %v107 = vunpack.c.h.b16 %v28
  %v108 = vunpack.c.l.b16 %v29
  %v109 = vunpack.c.h.b16 %v29
  %v110 = vunpack.c.l.b16 %v30
  %v111 = vunpack.c.h.b16 %v30
  %v112 = vunpack.c.l.b16 %v31
  %v113 = vunpack.c.h.b16 %v31
  %v114 = vunpack.c.l.b16 %v32
  %v115 = vunpack.c.h.b16 %v32
  %v116 = vunpack.c.l.b16 %v33
  %v117 = vunpack.c.h.b16 %v33
  %v118 = vunpack.c.l.b16 %v34
  %v119 = vunpack.c.h.b16 %v34
  %v120 = vunpack.c.l.b16 %v35
  %v121 = vunpack.c.h.b16 %v35
  %v122 = vunpack.c.l.b16 %v36
  %v123 = vunpack.c.h.b16 %v36
  %v124 = vpack.c.b16 %v94, %v92
  %v125 = vpack.c.b16 %v95, %v93
  %v126 = vpack.c.b16 %v98, %v96
  %v127 = vpack.c.b16 %v99, %v97
  %v128 = vpack.c.b16 %v102, %v100
  %v129 = vpack.c.b16 %v103, %v101
  %v130 = vpack.c.b16 %v106, %v104
  %v131 = vpack.c.b16 %v107, %v105
  %v132 = vpack.c.b16 %v110, %v108
  %v133 = vpack.c.b16 %v111, %v109
  %v134 = vpack.c.b16 %v114, %v112
  %v135 = vpack.c.b16 %v115, %v113
  %v136 = vpack.c.b16 %v118, %v116
  %v137 = vpack.c.b16 %v119, %v117
  %v138 = vpack.c.b16 %v122, %v120
  %v139 = vpack.c.b16 %v123, %v121
  %v188 = vunpack.c.l.b16 %v37
  %v189 = vunpack.c.l.b16 %v38
  %v190 = vunpack.c.l.b16 %v39
  %v191 = vunpack.c.l.b16 %v40
  %v192 = vunpack.c.l.b16 %v41
  %v193 = vunpack.c.l.b16 %v42
  %v194 = vunpack.c.l.b16 %v43
  %v195 = vunpack.c.l.b16 %v44
  %v196 = vunpack.c.l.b16 %v45
  %v197 = vunpack.c.l.b16 %v46
  %v198 = vunpack.c.l.b16 %v47
  %v199 = vunpack.c.l.b16 %v48
  %v200 = vunpack.c.l.b16 %v49
  %v201 = vunpack.c.l.b16 %v50
  %v202 = vunpack.c.l.b16 %v51
  %v203 = vunpack.c.l.b16 %v52
  %v204 = vunpack.c.l.b16 %v53
  %v205 = vunpack.c.l.b16 %v54
  %v206 = vunpack.c.l.b16 %v55
  %v207 = vunpack.c.l.b16 %v56
  %v208 = vunpack.c.l.b16 %v57
  %v209 = vunpack.c.l.b16 %v58
  %v210 = vunpack.c.l.b16 %v59
  %v211 = vunpack.c.l.b16 %v60
  %v212 = vunpack.c.l.b16 %v61
  %v213 = vunpack.c.l.b16 %v62
  %v214 = vunpack.c.l.b16 %v63
  %v215 = vunpack.c.l.b16 %v64
  %v216 = vunpack.c.l.b16 %v65
  %v217 = vunpack.c.l.b16 %v66
  %v218 = vunpack.c.l.b16 %v67
  %v219 = vunpack.c.l.b16 %v68
  %v220 = vpack.c.b16 %v189, %v188
  %v221 = vpack.c.b16 %v191, %v190
  %v222 = vpack.c.b16 %v193, %v192
  %v223 = vpack.c.b16 %v195, %v194
  %v224 = vpack.c.b16 %v197, %v196
  %v225 = vpack.c.b16 %v199, %v198
  %v226 = vpack.c.b16 %v201, %v200
  %v227 = vpack.c.b16 %v203, %v202
  %v228 = vpack.c.b16 %v205, %v204
  %v229 = vpack.c.b16 %v207, %v206
  %v230 = vpack.c.b16 %v209, %v208
  %v231 = vpack.c.b16 %v211, %v210
  %v232 = vpack.c.b16 %v213, %v212
  %v233 = vpack.c.b16 %v215, %v214
  %v234 = vpack.c.b16 %v217, %v216
  %v235 = vpack.c.b16 %v219, %v218
  %252 = vmatprep.subr.bf16.mxu0 0
  %253 = vmatpush1.bf16.msra.mxu0 %v227
  %254 = vmatprep.subr.bf16.mxu0 0
  %255 = vmatpush1.bf16.msra.mxu0 %v226
  %256 = vmatprep.subr.bf16.mxu0 0
  %257 = vmatpush1.bf16.msra.mxu0 %v225
  %258 = vmatprep.subr.bf16.mxu0 0
  %259 = vmatpush1.bf16.msra.mxu0 %v224
  %260 = vmatprep.subr.bf16.mxu0 0
  %261 = vmatpush1.bf16.msra.mxu0 %v223
  %262 = vmatprep.subr.bf16.mxu0 0
  %263 = vmatpush1.bf16.msra.mxu0 %v222
  %264 = vmatprep.subr.bf16.mxu0 0
  %265 = vmatpush1.bf16.msra.mxu0 %v221
  %266 = vmatprep.subr.bf16.mxu0 0
  %267 = vmatpush1.bf16.msra.mxu0 %v220
  %268 = vmatprep.subr.bf16.mxu0 0
  %269 = vmatpush2.bf16.msra.mxu0 %v235
  %270 = vmatprep.subr.bf16.mxu0 0
  %271 = vmatpush2.bf16.msra.mxu0 %v234
  %272 = vmatprep.subr.bf16.mxu0 0
  %273 = vmatpush2.bf16.msra.mxu0 %v233
  %274 = vmatprep.subr.bf16.mxu0 0
  %275 = vmatpush2.bf16.msra.mxu0 %v232
  %276 = vmatprep.subr.bf16.mxu0 0
  %277 = vmatpush2.bf16.msra.mxu0 %v231
  %278 = vmatprep.subr.bf16.mxu0 0
  %279 = vmatpush2.bf16.msra.mxu0 %v230
  %280 = vmatprep.subr.bf16.mxu0 0
  %281 = vmatpush2.bf16.msra.mxu0 %v229
  %282 = vmatprep.subr.bf16.mxu0 0
  %283 = vmatpush2.bf16.msra.mxu0 %v228
  %284 = vmatprep.mubr.bf16.mxu0 %v125
  %285 = vmatmul.mubr.bf16.gmra.mxu0 %v124
  %v286 = vpop.f32.mrf.mxu0
  %v287 = vadd.f32 %v74, %v286
  %v288 = vpop.f32.mrf.mxu0
  %v289 = vpop.f32.mrf.mxu0
  %v290 = vadd.f32 %v74, %v289
  %v291 = vpop.f32.mrf.mxu0
  %292 = vmatprep.mubr.bf16.mxu0 %v127
  %293 = vmatmul.mubr.bf16.gmra.mxu0 %v126
  %v294 = vpop.f32.mrf.mxu0
  %v295 = vadd.f32 %v74, %v294
  %v296 = vpop.f32.mrf.mxu0
  %v297 = vpop.f32.mrf.mxu0
  %v298 = vadd.f32 %v74, %v297
  %v299 = vpop.f32.mrf.mxu0
  %300 = vmatprep.mubr.bf16.mxu0 %v129
  %301 = vmatmul.mubr.bf16.gmra.mxu0 %v128
  %v302 = vpop.f32.mrf.mxu0
  %v303 = vadd.f32 %v74, %v302
  %v304 = vpop.f32.mrf.mxu0
  %v305 = vpop.f32.mrf.mxu0
  %v306 = vadd.f32 %v74, %v305
  %v307 = vpop.f32.mrf.mxu0
  %308 = vmatprep.mubr.bf16.mxu0 %v131
  %309 = vmatmul.mubr.bf16.gmra.mxu0 %v130
  %v310 = vpop.f32.mrf.mxu0
  %v311 = vadd.f32 %v74, %v310
  %v312 = vpop.f32.mrf.mxu0
  %v313 = vpop.f32.mrf.mxu0
  %v314 = vadd.f32 %v74, %v313
  %v315 = vpop.f32.mrf.mxu0
  %316 = vmatprep.mubr.bf16.mxu0 %v133
  %317 = vmatmul.mubr.bf16.gmra.mxu0 %v132
  %v318 = vpop.f32.mrf.mxu0
  %v319 = vadd.f32 %v74, %v318
  %v320 = vpop.f32.mrf.mxu0
  %v321 = vpop.f32.mrf.mxu0
  %v322 = vadd.f32 %v74, %v321
  %v323 = vpop.f32.mrf.mxu0
  %324 = vmatprep.mubr.bf16.mxu0 %v135
  %325 = vmatmul.mubr.bf16.gmra.mxu0 %v134
  %v326 = vpop.f32.mrf.mxu0
  %v327 = vadd.f32 %v74, %v326
  %v328 = vpop.f32.mrf.mxu0
  %v329 = vpop.f32.mrf.mxu0
  %v330 = vadd.f32 %v74, %v329
  %v331 = vpop.f32.mrf.mxu0
  %332 = vmatprep.mubr.bf16.mxu0 %v137
  %333 = vmatmul.mubr.bf16.gmra.mxu0 %v136
  %v334 = vpop.f32.mrf.mxu0
  %v335 = vadd.f32 %v74, %v334
  %v336 = vpop.f32.mrf.mxu0
  %v337 = vpop.f32.mrf.mxu0
  %v338 = vadd.f32 %v74, %v337
  %v339 = vpop.f32.mrf.mxu0
  %340 = vmatprep.mubr.bf16.mxu0 %v139
  %341 = vmatmul.mubr.bf16.gmra.mxu0 %v138
  %v342 = vpop.f32.mrf.mxu0
  %v343 = vadd.f32 %v74, %v342
  %v344 = vpop.f32.mrf.mxu0
  %v345 = vpop.f32.mrf.mxu0
  %v346 = vadd.f32 %v74, %v345
  %v347 = vpop.f32.mrf.mxu0
  %348 = vdwg.mxu0
  %349 = vst [vmem:[#allocation2] sm:$0xff] %v287
  %350 = vst [vmem:[#allocation2 + $0x8] sm:$0xff] %v290
  %351 = vst [vmem:[#allocation2 + $0x10] sm:$0xff] %v295
  %352 = vst [vmem:[#allocation2 + $0x18] sm:$0xff] %v298
  %353 = vst [vmem:[#allocation2 + $0x20] sm:$0xff] %v303
  %354 = vst [vmem:[#allocation2 + $0x28] sm:$0xff] %v306
  %355 = vst [vmem:[#allocation2 + $0x30] sm:$0xff] %v311
  %356 = vst [vmem:[#allocation2 + $0x38] sm:$0xff] %v314
  %357 = vst [vmem:[#allocation2 + $0x40] sm:$0xff] %v319
  %358 = vst [vmem:[#allocation2 + $0x48] sm:$0xff] %v322
  %359 = vst [vmem:[#allocation2 + $0x50] sm:$0xff] %v327
  %360 = vst [vmem:[#allocation2 + $0x58] sm:$0xff] %v330
  %361 = vst [vmem:[#allocation2 + $0x60] sm:$0xff] %v335
  %362 = vst [vmem:[#allocation2 + $0x68] sm:$0xff] %v338
  %363 = vst [vmem:[#allocation2 + $0x70] sm:$0xff] %v343
  %364 = vst [vmem:[#allocation2 + $0x78] sm:$0xff] %v346
  %v365 = vadd.f32 %v287, %v290
  %v366 = vadd.f32 %v365, %v295
  %v367 = vadd.f32 %v366, %v298
  %v368 = vadd.f32 %v367, %v303
  %v369 = vadd.f32 %v368, %v306
  %v370 = vadd.f32 %v369, %v311
  %v371 = vadd.f32 %v370, %v314
  %v372 = vadd.f32 %v371, %v319
  %v373 = vadd.f32 %v372, %v322
  %v374 = vadd.f32 %v373, %v327
  %v375 = vadd.f32 %v374, %v330
  %v376 = vadd.f32 %v375, %v335
  %v377 = vadd.f32 %v376, %v338
  %v378 = vadd.f32 %v377, %v343
  %v379 = vadd.f32 %v378, %v346
  %v380 = vrot.slane %v379, 4
  %v381 = vadd.f32 %v379, %v380
  %v382 = vrot.slane %v381, 2
  %v383 = vadd.f32 %v381, %v382
  %v384 = vrot.slane %v383, 1
  %v385 = vadd.f32 %v383, %v384
  %v386 = vmul.f32 %v385, 0.0078125
  %v387 = vld [vmem:[#allocation2] sm:$0xff]
  %v388 = vld [vmem:[#allocation2 + $0x8] sm:$0xff]
  %v389 = vld [vmem:[#allocation2 + $0x10] sm:$0xff]
  %v390 = vld [vmem:[#allocation2 + $0x18] sm:$0xff]
  %v391 = vld [vmem:[#allocation2 + $0x20] sm:$0xff]
  %v392 = vld [vmem:[#allocation2 + $0x28] sm:$0xff]
  %v393 = vld [vmem:[#allocation2 + $0x30] sm:$0xff]
  %v394 = vld [vmem:[#allocation2 + $0x38] sm:$0xff]
  %v395 = vld [vmem:[#allocation2 + $0x40] sm:$0xff]
  %v396 = vld [vmem:[#allocation2 + $0x48] sm:$0xff]
  %v397 = vld [vmem:[#allocation2 + $0x50] sm:$0xff]
  %v398 = vld [vmem:[#allocation2 + $0x58] sm:$0xff]
  %v399 = vld [vmem:[#allocation2 + $0x60] sm:$0xff]
  %v400 = vld [vmem:[#allocation2 + $0x68] sm:$0xff]
  %v401 = vld [vmem:[#allocation2 + $0x70] sm:$0xff]
  %v402 = vld [vmem:[#allocation2 + $0x78] sm:$0xff]
  %v403 = vsub.f32 %v387, %v386
  %v404 = vsub.f32 %v388, %v386
  %v405 = vsub.f32 %v389, %v386
  %v406 = vsub.f32 %v390, %v386
  %v407 = vsub.f32 %v391, %v386
  %v408 = vsub.f32 %v392, %v386
  %v409 = vsub.f32 %v393, %v386
  %v410 = vsub.f32 %v394, %v386
  %v411 = vsub.f32 %v395, %v386
  %v412 = vsub.f32 %v396, %v386
  %v413 = vsub.f32 %v397, %v386
  %v414 = vsub.f32 %v398, %v386
  %v415 = vsub.f32 %v399, %v386
  %v416 = vsub.f32 %v400, %v386
  %v417 = vsub.f32 %v401, %v386
  %v418 = vsub.f32 %v402, %v386
  %v419 = vmul.f32 %v403, %v403
  %v420 = vmul.f32 %v404, %v404
  %v421 = vmul.f32 %v405, %v405
  %v422 = vmul.f32 %v406, %v406
  %v423 = vmul.f32 %v407, %v407
  %v424 = vmul.f32 %v408, %v408
  %v425 = vmul.f32 %v409, %v409
  %v426 = vmul.f32 %v410, %v410
  %v427 = vmul.f32 %v411, %v411
  %v428 = vmul.f32 %v412, %v412
  %v429 = vmul.f32 %v413, %v413
  %v430 = vmul.f32 %v414, %v414
  %v431 = vmul.f32 %v415, %v415
  %v432 = vmul.f32 %v416, %v416
  %v433 = vmul.f32 %v417, %v417
  %v434 = vmul.f32 %v418, %v418
  %v435 = vadd.f32 %v419, %v420
  %v436 = vadd.f32 %v435, %v421
  %v437 = vadd.f32 %v436, %v422
  %v438 = vadd.f32 %v437, %v423
  %v439 = vadd.f32 %v438, %v424
  %v440 = vadd.f32 %v439, %v425
  %v441 = vadd.f32 %v440, %v426
  %v442 = vadd.f32 %v441, %v427
  %v443 = vadd.f32 %v442, %v428
  %v444 = vadd.f32 %v443, %v429
  %v445 = vadd.f32 %v444, %v430
  %v446 = vadd.f32 %v445, %v431
  %v447 = vadd.f32 %v446, %v432
  %v448 = vadd.f32 %v447, %v433
  %v449 = vadd.f32 %v448, %v434
  %v450 = vrot.slane %v449, 4
  %v451 = vadd.f32 %v449, %v450
  %v452 = vrot.slane %v451, 2
  %v453 = vadd.f32 %v451, %v452
  %v454 = vrot.slane %v453, 1
  %v455 = vadd.f32 %v453, %v454
  %v456 = vmul.f32 %v455, 0.0078125
  %v457 = vmax.f32 %v456, 0.0
  %v458 = vld [vmem:[%s3] sm:$0x1]
  %v459 = vadd.f32 %v457, 1e-05
  %v460 = vrsqrt.pop %v459
  %v461 = vmul.f32 %v458, %v460
  %v462 = vld [vmem:[%s4] sm:$0x1]
  %v463 = vmul.f32 %v386, %v461
  %v464 = vsub.f32 %v462, %v463
  %v466 = vlaneseq
  %v467 = vshrl.u32 %v466, 7
  %v468 = vsub.s32 0, %v467
  %v469 = vrot.slane %v461, %v468
  %v471 = vmul.f32 %v387, %v469
  %v472 = vmul.f32 %v388, %v469
  %v473 = vmul.f32 %v389, %v469
  %v474 = vmul.f32 %v390, %v469
  %v475 = vmul.f32 %v391, %v469
  %v476 = vmul.f32 %v392, %v469
  %v477 = vmul.f32 %v393, %v469
  %v478 = vmul.f32 %v394, %v469
  %v479 = vmul.f32 %v395, %v469
  %v480 = vmul.f32 %v396, %v469
  %v481 = vmul.f32 %v397, %v469
  %v482 = vmul.f32 %v398, %v469
  %v483 = vmul.f32 %v399, %v469
  %v484 = vmul.f32 %v400, %v469
  %v485 = vmul.f32 %v401, %v469
  %v486 = vmul.f32 %v402, %v469
  %v488 = vlaneseq
  %v489 = vshrl.u32 %v488, 7
  %v490 = vsub.s32 0, %v489
  %v491 = vrot.slane %v464, %v490
  %v493 = vadd.f32 %v471, %v491
  %v494 = vadd.f32 %v472, %v491
  %v495 = vadd.f32 %v473, %v491
  %v496 = vadd.f32 %v474, %v491
  %v497 = vadd.f32 %v475, %v491
  %v498 = vadd.f32 %v476, %v491
  %v499 = vadd.f32 %v477, %v491
  %v500 = vadd.f32 %v478, %v491
  %v501 = vadd.f32 %v479, %v491
  %v502 = vadd.f32 %v480, %v491
  %v503 = vadd.f32 %v481, %v491
  %v504 = vadd.f32 %v482, %v491
  %v505 = vadd.f32 %v483, %v491
  %v506 = vadd.f32 %v484, %v491
  %v507 = vadd.f32 %v485, %v491
  %v508 = vadd.f32 %v486, %v491
  %vm509 = vcmp.ge.f32.partialorder %v493, 0.0
  %vm510 = vcmp.ge.f32.partialorder %v494, 0.0
  %vm511 = vcmp.ge.f32.partialorder %v495, 0.0
  %vm512 = vcmp.ge.f32.partialorder %v496, 0.0
  %vm513 = vcmp.ge.f32.partialorder %v497, 0.0
  %vm514 = vcmp.ge.f32.partialorder %v498, 0.0
  %vm515 = vcmp.ge.f32.partialorder %v499, 0.0
  %vm516 = vcmp.ge.f32.partialorder %v500, 0.0
  %vm517 = vcmp.ge.f32.partialorder %v501, 0.0
  %vm518 = vcmp.ge.f32.partialorder %v502, 0.0
  %vm519 = vcmp.ge.f32.partialorder %v503, 0.0
  %vm520 = vcmp.ge.f32.partialorder %v504, 0.0
  %vm521 = vcmp.ge.f32.partialorder %v505, 0.0
  %vm522 = vcmp.ge.f32.partialorder %v506, 0.0
  %vm523 = vcmp.ge.f32.partialorder %v507, 0.0
  %vm524 = vcmp.ge.f32.partialorder %v508, 0.0
  %v525 = vmul.f32 %v493, 0.2
  %v526 = vmul.f32 %v494, 0.2
  %v527 = vmul.f32 %v495, 0.2
  %v528 = vmul.f32 %v496, 0.2
  %v529 = vmul.f32 %v497, 0.2
  %v530 = vmul.f32 %v498, 0.2
  %v531 = vmul.f32 %v499, 0.2
  %v532 = vmul.f32 %v500, 0.2
  %v533 = vmul.f32 %v501, 0.2
  %v534 = vmul.f32 %v502, 0.2
  %v535 = vmul.f32 %v503, 0.2
  %v536 = vmul.f32 %v504, 0.2
  %v537 = vmul.f32 %v505, 0.2
  %v538 = vmul.f32 %v506, 0.2
  %v539 = vmul.f32 %v507, 0.2
  %v540 = vmul.f32 %v508, 0.2
  %v541 = vsel %vm509, %v493, %v525
  %v542 = vsel %vm510, %v494, %v526
  %v543 = vsel %vm511, %v495, %v527
  %v544 = vsel %vm512, %v496, %v528
  %v545 = vsel %vm513, %v497, %v529
  %v546 = vsel %vm514, %v498, %v530
  %v547 = vsel %vm515, %v499, %v531
  %v548 = vsel %vm516, %v500, %v532
  %v549 = vsel %vm517, %v501, %v533
  %v550 = vsel %vm518, %v502, %v534
  %v551 = vsel %vm519, %v503, %v535
  %v552 = vsel %vm520, %v504, %v536
  %v553 = vsel %vm521, %v505, %v537
  %v554 = vsel %vm522, %v506, %v538
  %v555 = vsel %vm523, %v507, %v539
  %v556 = vsel %vm524, %v508, %v540
  %v557 = vpack.c.bf16 %v542, %v541
  %v558 = vpack.c.bf16 %v544, %v543
  %v559 = vpack.c.bf16 %v546, %v545
  %v560 = vpack.c.bf16 %v548, %v547
  %v561 = vpack.c.bf16 %v550, %v549
  %v562 = vpack.c.bf16 %v552, %v551
  %v563 = vpack.c.bf16 %v554, %v553
  %v564 = vpack.c.bf16 %v556, %v555
  %v573 = vunpack.c.l.b16 %v557
  %v574 = vunpack.c.h.b16 %v557
  %v575 = vunpack.c.l.b16 %v558
  %v576 = vunpack.c.h.b16 %v558
  %v577 = vunpack.c.l.b16 %v559
  %v578 = vunpack.c.h.b16 %v559
  %v579 = vunpack.c.l.b16 %v560
  %v580 = vunpack.c.h.b16 %v560
  %v581 = vunpack.c.l.b16 %v561
  %v582 = vunpack.c.h.b16 %v561
  %v583 = vunpack.c.l.b16 %v562
  %v584 = vunpack.c.h.b16 %v562
  %v585 = vunpack.c.l.b16 %v563
  %v586 = vunpack.c.h.b16 %v563
  %v587 = vunpack.c.l.b16 %v564
  %v588 = vunpack.c.h.b16 %v564
  %v589 = vpack.c.b16 %v573, %v573
  %v590 = vpack.c.b16 %v574, %v574
  %v591 = vpack.c.b16 %v575, %v575
  %v592 = vpack.c.b16 %v576, %v576
  %v593 = vpack.c.b16 %v577, %v577
  %v594 = vpack.c.b16 %v578, %v578
  %v595 = vpack.c.b16 %v579, %v579
  %v596 = vpack.c.b16 %v580, %v580
  %v597 = vpack.c.b16 %v581, %v581
  %v598 = vpack.c.b16 %v582, %v582
  %v599 = vpack.c.b16 %v583, %v583
  %v600 = vpack.c.b16 %v584, %v584
  %v601 = vpack.c.b16 %v585, %v585
  %v602 = vpack.c.b16 %v586, %v586
  %v603 = vpack.c.b16 %v587, %v587
  %v604 = vpack.c.b16 %v588, %v588
  %621 = vst [vmem:[%s5] sm:$0xf] %v589
  %622 = vst [vmem:[%s5 + $0x4] sm:$0xf] %v590
  %623 = vst [vmem:[%s5 + $0x8] sm:$0xf] %v591
  %624 = vst [vmem:[%s5 + $0xc] sm:$0xf] %v592
  %625 = vst [vmem:[%s5 + $0x10] sm:$0xf] %v593
  %626 = vst [vmem:[%s5 + $0x14] sm:$0xf] %v594
  %627 = vst [vmem:[%s5 + $0x18] sm:$0xf] %v595
  %628 = vst [vmem:[%s5 + $0x1c] sm:$0xf] %v596
  %629 = vst [vmem:[%s5 + $0x20] sm:$0xf] %v597
  %630 = vst [vmem:[%s5 + $0x24] sm:$0xf] %v598
  %631 = vst [vmem:[%s5 + $0x28] sm:$0xf] %v599
  %632 = vst [vmem:[%s5 + $0x2c] sm:$0xf] %v600
  %633 = vst [vmem:[%s5 + $0x30] sm:$0xf] %v601
  %634 = vst [vmem:[%s5 + $0x34] sm:$0xf] %v602
  %635 = vst [vmem:[%s5 + $0x38] sm:$0xf] %v603
  %636 = vst [vmem:[%s5 + $0x3c] sm:$0xf] %v604
  // Predicated region
  $region22: #{vae_forward.9} parent=0 // pred_check
    _
  $region23: #{vae_forward.9} parent=0 // pred_check_branch
    %638 = sbr.rel (0) target = $region25
  $region24: #{vae_forward.9} parent=0 // pred_region
    _
  $region25: #{vae_forward.9} parent=0 // pred_fallthru
    _
  // Predicated region
  $region26: #{vae_forward.9} parent=0 // pred_check
    _
  $region27: #{vae_forward.9} parent=0 // pred_check_branch
    %640 = sbr.rel (0) target = $region29
  $region28: #{vae_forward.9} parent=0 // pred_region
    _
  $region29: #{vae_forward.9} parent=0 // pred_fallthru
    _

// kernel: vae_forward.10
$region0: #{vae_forward.10}
  #allocation0 [shape = 'u32[]', space=smem, size = 0x4, offset = 0x4, fixed_abs, tag = 'smem constant byte address 0x4 - core index']
  #allocation1 [shape = 'u32[144,128]{1,0:T(1,128)}', space=vmem, size = 0x12000, scoped, tag = 'internal scratch']
  #allocation2 [shape = 'f32[1,32,128]{2,1,0:T(8,128)}', space=vmem, size = 0x4000, scoped, tag = 'scratch operand']
  %s0 = inlined_call_operand.vmem [shape: bf16[1,32,512], index: 0, kind: input, shape index: {}]
  %s1 = inlined_call_operand.vmem [shape: bf16[1,512,128], index: 1, kind: input, shape index: {}]
  %s2 = inlined_call_operand.vmem [shape: f32[1,128], index: 2, kind: input, shape index: {}]
  %s3 = inlined_call_operand.vmem [shape: f32[1,128], index: 3, kind: input, shape index: {}]
  %s4 = inlined_call_operand.vmem [shape: f32[1,128], index: 4, kind: input, shape index: {}]
  %s5 = inlined_call_operand.vmem [shape: bf16[1,32,128], index: 5, kind: output, shape index: {}]
  %s6 = sld [smem:[#allocation0]]
  $region30: #{vae_forward.10} parent=0
    _
  %s8 = ssub.s32 1, %s6
  %s9 = scalar_select 0, %s8, %s6
  // Predicated region
  $region2: #{vae_forward.10} parent=0 // pred_check
    _
  $region3: #{vae_forward.10} parent=0 // pred_check_branch
    %11 = sbr.rel (0) target = $region5
  $region4: #{vae_forward.10} parent=0 // pred_region
    _
  $region5: #{vae_forward.10} parent=0 // pred_fallthru
    _
  // Predicated region
  $region6: #{vae_forward.10} parent=0 // pred_check
    _
  $region7: #{vae_forward.10} parent=0 // pred_check_branch
    %13 = sbr.rel (0) target = $region9
  $region8: #{vae_forward.10} parent=0 // pred_region
    _
  $region9: #{vae_forward.10} parent=0 // pred_fallthru
    _
  // Predicated region
  $region10: #{vae_forward.10} parent=0 // pred_check
    _
  $region11: #{vae_forward.10} parent=0 // pred_check_branch
    %15 = sbr.rel (0) target = $region13
  $region12: #{vae_forward.10} parent=0 // pred_region
    _
  $region13: #{vae_forward.10} parent=0 // pred_fallthru
    _
  // Predicated region
  $region14: #{vae_forward.10} parent=0 // pred_check
    _
  $region15: #{vae_forward.10} parent=0 // pred_check_branch
    %17 = sbr.rel (0) target = $region17
  $region16: #{vae_forward.10} parent=0 // pred_region
    _
  $region17: #{vae_forward.10} parent=0 // pred_fallthru
    _
  // Predicated region
  $region18: #{vae_forward.10} parent=0 // pred_check
    _
  $region19: #{vae_forward.10} parent=0 // pred_check_branch
    %19 = sbr.rel (0) target = $region21
  $region20: #{vae_forward.10} parent=0 // pred_region
    _
  $region21: #{vae_forward.10} parent=0 // pred_fallthru
    _
  %v21 = vld [vmem:[%s0] sm:$0xff]
  %v22 = vld [vmem:[%s0 + $0x8] sm:$0xff]
  %v23 = vld [vmem:[%s0 + $0x10] sm:$0xff]
  %v24 = vld [vmem:[%s0 + $0x18] sm:$0xff]
  %v25 = vld [vmem:[%s0 + $0x20] sm:$0xff]
  %v26 = vld [vmem:[%s0 + $0x28] sm:$0xff]
  %v27 = vld [vmem:[%s0 + $0x30] sm:$0xff]
  %v28 = vld [vmem:[%s0 + $0x38] sm:$0xff]
  %v29 = vld [vmem:[%s1] sm:$0xf]
  %v30 = vld [vmem:[%s1 + $0x4] sm:$0xf]
  %v31 = vld [vmem:[%s1 + $0x8] sm:$0xf]
  %v32 = vld [vmem:[%s1 + $0xc] sm:$0xf]
  %v33 = vld [vmem:[%s1 + $0x10] sm:$0xf]
  %v34 = vld [vmem:[%s1 + $0x14] sm:$0xf]
  %v35 = vld [vmem:[%s1 + $0x18] sm:$0xf]
  %v36 = vld [vmem:[%s1 + $0x1c] sm:$0xf]
  %v37 = vld [vmem:[%s1 + $0x20] sm:$0xf]
  %v38 = vld [vmem:[%s1 + $0x24] sm:$0xf]
  %v39 = vld [vmem:[%s1 + $0x28] sm:$0xf]
  %v40 = vld [vmem:[%s1 + $0x2c] sm:$0xf]
  %v41 = vld [vmem:[%s1 + $0x30] sm:$0xf]
  %v42 = vld [vmem:[%s1 + $0x34] sm:$0xf]
  %v43 = vld [vmem:[%s1 + $0x38] sm:$0xf]
  %v44 = vld [vmem:[%s1 + $0x3c] sm:$0xf]
  %v45 = vld [vmem:[%s1 + $0x40] sm:$0xf]
  %v46 = vld [vmem:[%s1 + $0x44] sm:$0xf]
  %v47 = vld [vmem:[%s1 + $0x48] sm:$0xf]
  %v48 = vld [vmem:[%s1 + $0x4c] sm:$0xf]
  %v49 = vld [vmem:[%s1 + $0x50] sm:$0xf]
  %v50 = vld [vmem:[%s1 + $0x54] sm:$0xf]
  %v51 = vld [vmem:[%s1 + $0x58] sm:$0xf]
  %v52 = vld [vmem:[%s1 + $0x5c] sm:$0xf]
  %v53 = vld [vmem:[%s1 + $0x60] sm:$0xf]
  %v54 = vld [vmem:[%s1 + $0x64] sm:$0xf]
  %v55 = vld [vmem:[%s1 + $0x68] sm:$0xf]
  %v56 = vld [vmem:[%s1 + $0x6c] sm:$0xf]
  %v57 = vld [vmem:[%s1 + $0x70] sm:$0xf]
  %v58 = vld [vmem:[%s1 + $0x74] sm:$0xf]
  %v59 = vld [vmem:[%s1 + $0x78] sm:$0xf]
  %v60 = vld [vmem:[%s1 + $0x7c] sm:$0xf]
  %v61 = vld [vmem:[%s1 + $0x80] sm:$0xf]
  %v62 = vld [vmem:[%s1 + $0x84] sm:$0xf]
  %v63 = vld [vmem:[%s1 + $0x88] sm:$0xf]
  %v64 = vld [vmem:[%s1 + $0x8c] sm:$0xf]
  %v65 = vld [vmem:[%s1 + $0x90] sm:$0xf]
  %v66 = vld [vmem:[%s1 + $0x94] sm:$0xf]
  %v67 = vld [vmem:[%s1 + $0x98] sm:$0xf]
  %v68 = vld [vmem:[%s1 + $0x9c] sm:$0xf]
  %v69 = vld [vmem:[%s1 + $0xa0] sm:$0xf]
  %v70 = vld [vmem:[%s1 + $0xa4] sm:$0xf]
  %v71 = vld [vmem:[%s1 + $0xa8] sm:$0xf]
  %v72 = vld [vmem:[%s1 + $0xac] sm:$0xf]
  %v73 = vld [vmem:[%s1 + $0xb0] sm:$0xf]
  %v74 = vld [vmem:[%s1 + $0xb4] sm:$0xf]
  %v75 = vld [vmem:[%s1 + $0xb8] sm:$0xf]
  %v76 = vld [vmem:[%s1 + $0xbc] sm:$0xf]
  %v77 = vld [vmem:[%s1 + $0xc0] sm:$0xf]
  %v78 = vld [vmem:[%s1 + $0xc4] sm:$0xf]
  %v79 = vld [vmem:[%s1 + $0xc8] sm:$0xf]
  %v80 = vld [vmem:[%s1 + $0xcc] sm:$0xf]
  %v81 = vld [vmem:[%s1 + $0xd0] sm:$0xf]
  %v82 = vld [vmem:[%s1 + $0xd4] sm:$0xf]
  %v83 = vld [vmem:[%s1 + $0xd8] sm:$0xf]
  %v84 = vld [vmem:[%s1 + $0xdc] sm:$0xf]
  %v85 = vld [vmem:[%s1 + $0xe0] sm:$0xf]
  %v86 = vld [vmem:[%s1 + $0xe4] sm:$0xf]
  %v87 = vld [vmem:[%s1 + $0xe8] sm:$0xf]
  %v88 = vld [vmem:[%s1 + $0xec] sm:$0xf]
  %v89 = vld [vmem:[%s1 + $0xf0] sm:$0xf]
  %v90 = vld [vmem:[%s1 + $0xf4] sm:$0xf]
  %v91 = vld [vmem:[%s1 + $0xf8] sm:$0xf]
  %v92 = vld [vmem:[%s1 + $0xfc] sm:$0xf]
  %v93 = vld [vmem:[%s2] sm:$0x1]
  %v95 = vlaneseq
  %v96 = vshrl.u32 %v95, 7
  %v97 = vsub.s32 0, %v96
  %v98 = vrot.slane %v93, %v97
  %v108 = vunpack.c.l.b16 %v21
  %v109 = vunpack.c.h.b16 %v21
  %v110 = vunpack.c.l.b16 %v22
  %v111 = vunpack.c.h.b16 %v22
  %v112 = vunpack.c.l.b16 %v23
  %v113 = vunpack.c.h.b16 %v23
  %v114 = vunpack.c.l.b16 %v24
  %v115 = vunpack.c.h.b16 %v24
  %v116 = vunpack.c.l.b16 %v25
  %v117 = vunpack.c.h.b16 %v25
  %v118 = vunpack.c.l.b16 %v26
  %v119 = vunpack.c.h.b16 %v26
  %v120 = vunpack.c.l.b16 %v27
  %v121 = vunpack.c.h.b16 %v27
  %v122 = vunpack.c.l.b16 %v28
  %v123 = vunpack.c.h.b16 %v28
  %v124 = vpack.c.b16 %v112, %v108
  %v125 = vpack.c.b16 %v113, %v109
  %v126 = vpack.c.b16 %v114, %v110
  %v127 = vpack.c.b16 %v115, %v111
  %v128 = vpack.c.b16 %v120, %v116
  %v129 = vpack.c.b16 %v121, %v117
  %v130 = vpack.c.b16 %v122, %v118
  %v131 = vpack.c.b16 %v123, %v119
  %v204 = vunpack.c.l.b16 %v29
  %v205 = vunpack.c.l.b16 %v30
  %v206 = vunpack.c.l.b16 %v31
  %v207 = vunpack.c.l.b16 %v32
  %v208 = vunpack.c.l.b16 %v33
  %v209 = vunpack.c.l.b16 %v34
  %v210 = vunpack.c.l.b16 %v35
  %v211 = vunpack.c.l.b16 %v36
  %v212 = vunpack.c.l.b16 %v37
  %v213 = vunpack.c.l.b16 %v38
  %v214 = vunpack.c.l.b16 %v39
  %v215 = vunpack.c.l.b16 %v40
  %v216 = vunpack.c.l.b16 %v41
  %v217 = vunpack.c.l.b16 %v42
  %v218 = vunpack.c.l.b16 %v43
  %v219 = vunpack.c.l.b16 %v44
  %v220 = vunpack.c.l.b16 %v45
  %v221 = vunpack.c.l.b16 %v46
  %v222 = vunpack.c.l.b16 %v47
  %v223 = vunpack.c.l.b16 %v48
  %v224 = vunpack.c.l.b16 %v49
  %v225 = vunpack.c.l.b16 %v50
  %v226 = vunpack.c.l.b16 %v51
  %v227 = vunpack.c.l.b16 %v52
  %v228 = vunpack.c.l.b16 %v53
  %v229 = vunpack.c.l.b16 %v54
  %v230 = vunpack.c.l.b16 %v55
  %v231 = vunpack.c.l.b16 %v56
  %v232 = vunpack.c.l.b16 %v57
  %v233 = vunpack.c.l.b16 %v58
  %v234 = vunpack.c.l.b16 %v59
  %v235 = vunpack.c.l.b16 %v60
  %v236 = vunpack.c.l.b16 %v61
  %v237 = vunpack.c.l.b16 %v62
  %v238 = vunpack.c.l.b16 %v63
  %v239 = vunpack.c.l.b16 %v64
  %v240 = vunpack.c.l.b16 %v65
  %v241 = vunpack.c.l.b16 %v66
  %v242 = vunpack.c.l.b16 %v67
  %v243 = vunpack.c.l.b16 %v68
  %v244 = vunpack.c.l.b16 %v69
  %v245 = vunpack.c.l.b16 %v70
  %v246 = vunpack.c.l.b16 %v71
  %v247 = vunpack.c.l.b16 %v72
  %v248 = vunpack.c.l.b16 %v73
  %v249 = vunpack.c.l.b16 %v74
  %v250 = vunpack.c.l.b16 %v75
  %v251 = vunpack.c.l.b16 %v76
  %v252 = vunpack.c.l.b16 %v77
  %v253 = vunpack.c.l.b16 %v78
  %v254 = vunpack.c.l.b16 %v79
  %v255 = vunpack.c.l.b16 %v80
  %v256 = vunpack.c.l.b16 %v81
  %v257 = vunpack.c.l.b16 %v82
  %v258 = vunpack.c.l.b16 %v83
  %v259 = vunpack.c.l.b16 %v84
  %v260 = vunpack.c.l.b16 %v85
  %v261 = vunpack.c.l.b16 %v86
  %v262 = vunpack.c.l.b16 %v87
  %v263 = vunpack.c.l.b16 %v88
  %v264 = vunpack.c.l.b16 %v89
  %v265 = vunpack.c.l.b16 %v90
  %v266 = vunpack.c.l.b16 %v91
  %v267 = vunpack.c.l.b16 %v92
  %v268 = vpack.c.b16 %v205, %v204
  %v269 = vpack.c.b16 %v207, %v206
  %v270 = vpack.c.b16 %v209, %v208
  %v271 = vpack.c.b16 %v211, %v210
  %v272 = vpack.c.b16 %v213, %v212
  %v273 = vpack.c.b16 %v215, %v214
  %v274 = vpack.c.b16 %v217, %v216
  %v275 = vpack.c.b16 %v219, %v218
  %v276 = vpack.c.b16 %v221, %v220
  %v277 = vpack.c.b16 %v223, %v222
  %v278 = vpack.c.b16 %v225, %v224
  %v279 = vpack.c.b16 %v227, %v226
  %v280 = vpack.c.b16 %v229, %v228
  %v281 = vpack.c.b16 %v231, %v230
  %v282 = vpack.c.b16 %v233, %v232
  %v283 = vpack.c.b16 %v235, %v234
  %v284 = vpack.c.b16 %v237, %v236
  %v285 = vpack.c.b16 %v239, %v238
  %v286 = vpack.c.b16 %v241, %v240
  %v287 = vpack.c.b16 %v243, %v242
  %v288 = vpack.c.b16 %v245, %v244
  %v289 = vpack.c.b16 %v247, %v246
  %v290 = vpack.c.b16 %v249, %v248
  %v291 = vpack.c.b16 %v251, %v250
  %v292 = vpack.c.b16 %v253, %v252
  %v293 = vpack.c.b16 %v255, %v254
  %v294 = vpack.c.b16 %v257, %v256
  %v295 = vpack.c.b16 %v259, %v258
  %v296 = vpack.c.b16 %v261, %v260
  %v297 = vpack.c.b16 %v263, %v262
  %v298 = vpack.c.b16 %v265, %v264
  %v299 = vpack.c.b16 %v267, %v266
  %332 = vmatprep.subr.bf16.mxu0 0
  %333 = vmatpush1.bf16.msra.mxu0 %v275
  %334 = vmatprep.subr.bf16.mxu0 0
  %335 = vmatpush1.bf16.msra.mxu0 %v274
  %336 = vmatprep.subr.bf16.mxu0 0
  %337 = vmatpush1.bf16.msra.mxu0 %v273
  %338 = vmatprep.subr.bf16.mxu0 0
  %339 = vmatpush1.bf16.msra.mxu0 %v272
  %340 = vmatprep.subr.bf16.mxu0 0
  %341 = vmatpush1.bf16.msra.mxu0 %v271
  %342 = vmatprep.subr.bf16.mxu0 0
  %343 = vmatpush1.bf16.msra.mxu0 %v270
  %344 = vmatprep.subr.bf16.mxu0 0
  %345 = vmatpush1.bf16.msra.mxu0 %v269
  %346 = vmatprep.subr.bf16.mxu0 0
  %347 = vmatpush1.bf16.msra.mxu0 %v268
  %348 = vmatprep.subr.bf16.mxu0 0
  %349 = vmatpush2.bf16.msra.mxu0 %v283
  %350 = vmatprep.subr.bf16.mxu0 0
  %351 = vmatpush2.bf16.msra.mxu0 %v282
  %352 = vmatprep.subr.bf16.mxu0 0
  %353 = vmatpush2.bf16.msra.mxu0 %v281
  %354 = vmatprep.subr.bf16.mxu0 0
  %355 = vmatpush2.bf16.msra.mxu0 %v280
  %356 = vmatprep.subr.bf16.mxu0 0
  %357 = vmatpush2.bf16.msra.mxu0 %v279
  %358 = vmatprep.subr.bf16.mxu0 0
  %359 = vmatpush2.bf16.msra.mxu0 %v278
  %360 = vmatprep.subr.bf16.mxu0 0
  %361 = vmatpush2.bf16.msra.mxu0 %v277
  %362 = vmatprep.subr.bf16.mxu0 0
  %363 = vmatpush2.bf16.msra.mxu0 %v276
  %364 = vmatprep.mubr.bf16.mxu0 %v125
  %365 = vmatmul.mubr.bf16.gmra.mxu0 %v124
  %v366 = vpop.f32.mrf.mxu0
  %v367 = vadd.f32 %v98, %v366
  %v368 = vpop.f32.mrf.mxu0
  %v369 = vpop.f32.mrf.mxu0
  %v370 = vadd.f32 %v98, %v369
  %v371 = vpop.f32.mrf.mxu0
  %372 = vmatprep.mubr.bf16.mxu0 %v129
  %373 = vmatmul.mubr.bf16.gmra.mxu0 %v128
  %v374 = vpop.f32.mrf.mxu0
  %v375 = vadd.f32 %v98, %v374
  %v376 = vpop.f32.mrf.mxu0
  %v377 = vpop.f32.mrf.mxu0
  %v378 = vadd.f32 %v98, %v377
  %v379 = vpop.f32.mrf.mxu0
  %380 = vdwg.mxu0
  %381 = vmatprep.subr.bf16.mxu0 0
  %382 = vmatpush1.bf16.msra.mxu0 %v291
  %383 = vmatprep.subr.bf16.mxu0 0
  %384 = vmatpush1.bf16.msra.mxu0 %v290
  %385 = vmatprep.subr.bf16.mxu0 0
  %386 = vmatpush1.bf16.msra.mxu0 %v289
  %387 = vmatprep.subr.bf16.mxu0 0
  %388 = vmatpush1.bf16.msra.mxu0 %v288
  %389 = vmatprep.subr.bf16.mxu0 0
  %390 = vmatpush1.bf16.msra.mxu0 %v287
  %391 = vmatprep.subr.bf16.mxu0 0
  %392 = vmatpush1.bf16.msra.mxu0 %v286
  %393 = vmatprep.subr.bf16.mxu0 0
  %394 = vmatpush1.bf16.msra.mxu0 %v285
  %395 = vmatprep.subr.bf16.mxu0 0
  %396 = vmatpush1.bf16.msra.mxu0 %v284
  %397 = vmatprep.subr.bf16.mxu0 0
  %398 = vmatpush2.bf16.msra.mxu0 %v299
  %399 = vmatprep.subr.bf16.mxu0 0
  %400 = vmatpush2.bf16.msra.mxu0 %v298
  %401 = vmatprep.subr.bf16.mxu0 0
  %402 = vmatpush2.bf16.msra.mxu0 %v297
  %403 = vmatprep.subr.bf16.mxu0 0
  %404 = vmatpush2.bf16.msra.mxu0 %v296
  %405 = vmatprep.subr.bf16.mxu0 0
  %406 = vmatpush2.bf16.msra.mxu0 %v295
  %407 = vmatprep.subr.bf16.mxu0 0
  %408 = vmatpush2.bf16.msra.mxu0 %v294
  %409 = vmatprep.subr.bf16.mxu0 0
  %410 = vmatpush2.bf16.msra.mxu0 %v293
  %411 = vmatprep.subr.bf16.mxu0 0
  %412 = vmatpush2.bf16.msra.mxu0 %v292
  %413 = vmatprep.mubr.bf16.mxu0 %v127
  %414 = vmatmul.mubr.bf16.gmra.mxu0 %v126
  %v415 = vpop.f32.mrf.mxu0
  %v416 = vadd.f32 %v367, %v415
  %v417 = vpop.f32.mrf.mxu0
  %v418 = vpop.f32.mrf.mxu0
  %v419 = vadd.f32 %v370, %v418
  %v420 = vpop.f32.mrf.mxu0
  %421 = vmatprep.mubr.bf16.mxu0 %v131
  %422 = vmatmul.mubr.bf16.gmra.mxu0 %v130
  %v423 = vpop.f32.mrf.mxu0
  %v424 = vadd.f32 %v375, %v423
  %v425 = vpop.f32.mrf.mxu0
  %v426 = vpop.f32.mrf.mxu0
  %v427 = vadd.f32 %v378, %v426
  %v428 = vpop.f32.mrf.mxu0
  %429 = vdwg.mxu0
  %430 = vst [vmem:[#allocation2] sm:$0xff] %v416
  %431 = vst [vmem:[#allocation2 + $0x8] sm:$0xff] %v419
  %432 = vst [vmem:[#allocation2 + $0x10] sm:$0xff] %v424
  %433 = vst [vmem:[#allocation2 + $0x18] sm:$0xff] %v427
  %v434 = vadd.f32 %v416, %v419
  %v435 = vadd.f32 %v434, %v424
  %v436 = vadd.f32 %v435, %v427
  %v437 = vrot.slane %v436, 4
  %v438 = vadd.f32 %v436, %v437
  %v439 = vrot.slane %v438, 2
  %v440 = vadd.f32 %v438, %v439
  %v441 = vrot.slane %v440, 1
  %v442 = vadd.f32 %v440, %v441
  %v443 = vmul.f32 %v442, 0.03125
  %v444 = vld [vmem:[#allocation2] sm:$0xff]
  %v445 = vld [vmem:[#allocation2 + $0x8] sm:$0xff]
  %v446 = vld [vmem:[#allocation2 + $0x10] sm:$0xff]
  %v447 = vld [vmem:[#allocation2 + $0x18] sm:$0xff]
  %v448 = vsub.f32 %v444, %v443
  %v449 = vsub.f32 %v445, %v443
  %v450 = vsub.f32 %v446, %v443
  %v451 = vsub.f32 %v447, %v443
  %v452 = vmul.f32 %v448, %v448
  %v453 = vmul.f32 %v449, %v449
  %v454 = vmul.f32 %v450, %v450
  %v455 = vmul.f32 %v451, %v451
  %v456 = vadd.f32 %v452, %v453
  %v457 = vadd.f32 %v456, %v454
  %v458 = vadd.f32 %v457, %v455
  %v459 = vrot.slane %v458, 4
  %v460 = vadd.f32 %v458, %v459
  %v461 = vrot.slane %v460, 2
  %v462 = vadd.f32 %v460, %v461
  %v463 = vrot.slane %v462, 1
  %v464 = vadd.f32 %v462, %v463
  %v465 = vmul.f32 %v464, 0.03125
  %v466 = vmax.f32 %v465, 0.0
  %v467 = vld [vmem:[%s3] sm:$0x1]
  %v468 = vadd.f32 %v466, 1e-05
  %v469 = vrsqrt.pop %v468
  %v470 = vmul.f32 %v467, %v469
  %v471 = vld [vmem:[%s4] sm:$0x1]
  %v472 = vmul.f32 %v443, %v470
  %v473 = vsub.f32 %v471, %v472
  %v475 = vlaneseq
  %v476 = vshrl.u32 %v475, 7
  %v477 = vsub.s32 0, %v476
  %v478 = vrot.slane %v470, %v477
  %v480 = vmul.f32 %v444, %v478
  %v481 = vmul.f32 %v445, %v478
  %v482 = vmul.f32 %v446, %v478
  %v483 = vmul.f32 %v447, %v478
  %v485 = vlaneseq
  %v486 = vshrl.u32 %v485, 7
  %v487 = vsub.s32 0, %v486
  %v488 = vrot.slane %v473, %v487
  %v490 = vadd.f32 %v480, %v488
  %v491 = vadd.f32 %v481, %v488
  %v492 = vadd.f32 %v482, %v488
  %v493 = vadd.f32 %v483, %v488
  %vm494 = vcmp.ge.f32.partialorder %v490, 0.0
  %vm495 = vcmp.ge.f32.partialorder %v491, 0.0
  %vm496 = vcmp.ge.f32.partialorder %v492, 0.0
  %vm497 = vcmp.ge.f32.partialorder %v493, 0.0
  %v498 = vmul.f32 %v490, 0.2
  %v499 = vmul.f32 %v491, 0.2
  %v500 = vmul.f32 %v492, 0.2
  %v501 = vmul.f32 %v493, 0.2
  %v502 = vsel %vm494, %v490, %v498
  %v503 = vsel %vm495, %v491, %v499
  %v504 = vsel %vm496, %v492, %v500
  %v505 = vsel %vm497, %v493, %v501
  %v506 = vpack.c.bf16 %v503, %v502
  %v507 = vpack.c.bf16 %v505, %v504
  %v510 = vunpack.c.l.b16 %v506
  %v511 = vunpack.c.h.b16 %v506
  %v512 = vunpack.c.l.b16 %v507
  %v513 = vunpack.c.h.b16 %v507
  %v514 = vpack.c.b16 %v510, %v510
  %v515 = vpack.c.b16 %v511, %v511
  %v516 = vpack.c.b16 %v512, %v512
  %v517 = vpack.c.b16 %v513, %v513
  %522 = vst [vmem:[%s5] sm:$0xf] %v514
  %523 = vst [vmem:[%s5 + $0x4] sm:$0xf] %v515
  %524 = vst [vmem:[%s5 + $0x8] sm:$0xf] %v516
  %525 = vst [vmem:[%s5 + $0xc] sm:$0xf] %v517
  // Predicated region
  $region22: #{vae_forward.10} parent=0 // pred_check
    _
  $region23: #{vae_forward.10} parent=0 // pred_check_branch
    %527 = sbr.rel (0) target = $region25
  $region24: #{vae_forward.10} parent=0 // pred_region
    _
  $region25: #{vae_forward.10} parent=0 // pred_fallthru
    _
  // Predicated region
  $region26: #{vae_forward.10} parent=0 // pred_check
    _
  $region27: #{vae_forward.10} parent=0 // pred_check_branch
    %529 = sbr.rel (0) target = $region29
  $region28: #{vae_forward.10} parent=0 // pred_region
    _
  $region29: #{vae_forward.10} parent=0 // pred_fallthru
    _

// kernel: vae_forward.11
$region0: #{vae_forward.11}
  #allocation0 [shape = 'u32[]', space=smem, size = 0x4, offset = 0x4, fixed_abs, tag = 'smem constant byte address 0x4 - core index']
  #allocation1 [shape = 'u32[144,128]{1,0:T(1,128)}', space=vmem, size = 0x12000, scoped, tag = 'internal scratch']
  #allocation2 [shape = 'f32[1,8,128]{2,1,0:T(8,128)}', space=vmem, size = 0x1000, scoped, tag = 'scratch operand']
  %s0 = inlined_call_operand.vmem [shape: bf16[1,8,1024], index: 0, kind: input, shape index: {}]
  %s1 = inlined_call_operand.vmem [shape: bf16[1,1024,128], index: 1, kind: input, shape index: {}]
  %s2 = inlined_call_operand.vmem [shape: f32[1,128], index: 2, kind: input, shape index: {}]
  %s3 = inlined_call_operand.vmem [shape: f32[1,128], index: 3, kind: input, shape index: {}]
  %s4 = inlined_call_operand.vmem [shape: f32[1,128], index: 4, kind: input, shape index: {}]
  %s5 = inlined_call_operand.vmem [shape: bf16[1,8,128], index: 5, kind: output, shape index: {}]
  %s6 = sld [smem:[#allocation0]]
  $region30: #{vae_forward.11} parent=0
    _
  %s8 = ssub.s32 1, %s6
  %s9 = scalar_select 0, %s8, %s6
  // Predicated region
  $region2: #{vae_forward.11} parent=0 // pred_check
    _
  $region3: #{vae_forward.11} parent=0 // pred_check_branch
    %11 = sbr.rel (0) target = $region5
  $region4: #{vae_forward.11} parent=0 // pred_region
    _
  $region5: #{vae_forward.11} parent=0 // pred_fallthru
    _
  // Predicated region
  $region6: #{vae_forward.11} parent=0 // pred_check
    _
  $region7: #{vae_forward.11} parent=0 // pred_check_branch
    %13 = sbr.rel (0) target = $region9
  $region8: #{vae_forward.11} parent=0 // pred_region
    _
  $region9: #{vae_forward.11} parent=0 // pred_fallthru
    _
  // Predicated region
  $region10: #{vae_forward.11} parent=0 // pred_check
    _
  $region11: #{vae_forward.11} parent=0 // pred_check_branch
    %15 = sbr.rel (0) target = $region13
  $region12: #{vae_forward.11} parent=0 // pred_region
    _
  $region13: #{vae_forward.11} parent=0 // pred_fallthru
    _
  // Predicated region
  $region14: #{vae_forward.11} parent=0 // pred_check
    _
  $region15: #{vae_forward.11} parent=0 // pred_check_branch
    %17 = sbr.rel (0) target = $region17
  $region16: #{vae_forward.11} parent=0 // pred_region
    _
  $region17: #{vae_forward.11} parent=0 // pred_fallthru
    _
  // Predicated region
  $region18: #{vae_forward.11} parent=0 // pred_check
    _
  $region19: #{vae_forward.11} parent=0 // pred_check_branch
    %19 = sbr.rel (0) target = $region21
  $region20: #{vae_forward.11} parent=0 // pred_region
    _
  $region21: #{vae_forward.11} parent=0 // pred_fallthru
    _
  %v21 = vld [vmem:[%s0] sm:$0xff]
  %v22 = vld [vmem:[%s0 + $0x8] sm:$0xff]
  %v23 = vld [vmem:[%s0 + $0x10] sm:$0xff]
  %v24 = vld [vmem:[%s0 + $0x18] sm:$0xff]
  %v25 = vld [vmem:[%s1] sm:$0xf]
  %v26 = vld [vmem:[%s1 + $0x4] sm:$0xf]
  %v27 = vld [vmem:[%s1 + $0x8] sm:$0xf]
  %v28 = vld [vmem:[%s1 + $0xc] sm:$0xf]
  %v29 = vld [vmem:[%s1 + $0x10] sm:$0xf]
  %v30 = vld [vmem:[%s1 + $0x14] sm:$0xf]
  %v31 = vld [vmem:[%s1 + $0x18] sm:$0xf]
  %v32 = vld [vmem:[%s1 + $0x1c] sm:$0xf]
  %v33 = vld [vmem:[%s1 + $0x20] sm:$0xf]
  %v34 = vld [vmem:[%s1 + $0x24] sm:$0xf]
  %v35 = vld [vmem:[%s1 + $0x28] sm:$0xf]
  %v36 = vld [vmem:[%s1 + $0x2c] sm:$0xf]
  %v37 = vld [vmem:[%s1 + $0x30] sm:$0xf]
  %v38 = vld [vmem:[%s1 + $0x34] sm:$0xf]
  %v39 = vld [vmem:[%s1 + $0x38] sm:$0xf]
  %v40 = vld [vmem:[%s1 + $0x3c] sm:$0xf]
  %v41 = vld [vmem:[%s1 + $0x40] sm:$0xf]
  %v42 = vld [vmem:[%s1 + $0x44] sm:$0xf]
  %v43 = vld [vmem:[%s1 + $0x48] sm:$0xf]
  %v44 = vld [vmem:[%s1 + $0x4c] sm:$0xf]
  %v45 = vld [vmem:[%s1 + $0x50] sm:$0xf]
  %v46 = vld [vmem:[%s1 + $0x54] sm:$0xf]
  %v47 = vld [vmem:[%s1 + $0x58] sm:$0xf]
  %v48 = vld [vmem:[%s1 + $0x5c] sm:$0xf]
  %v49 = vld [vmem:[%s1 + $0x60] sm:$0xf]
  %v50 = vld [vmem:[%s1 + $0x64] sm:$0xf]
  %v51 = vld [vmem:[%s1 + $0x68] sm:$0xf]
  %v52 = vld [vmem:[%s1 + $0x6c] sm:$0xf]
  %v53 = vld [vmem:[%s1 + $0x70] sm:$0xf]
  %v54 = vld [vmem:[%s1 + $0x74] sm:$0xf]
  %v55 = vld [vmem:[%s1 + $0x78] sm:$0xf]
  %v56 = vld [vmem:[%s1 + $0x7c] sm:$0xf]
  %v57 = vld [vmem:[%s1 + $0x80] sm:$0xf]
  %v58 = vld [vmem:[%s1 + $0x84] sm:$0xf]
  %v59 = vld [vmem:[%s1 + $0x88] sm:$0xf]
  %v60 = vld [vmem:[%s1 + $0x8c] sm:$0xf]
  %v61 = vld [vmem:[%s1 + $0x90] sm:$0xf]
  %v62 = vld [vmem:[%s1 + $0x94] sm:$0xf]
  %v63 = vld [vmem:[%s1 + $0x98] sm:$0xf]
  %v64 = vld [vmem:[%s1 + $0x9c] sm:$0xf]
  %v65 = vld [vmem:[%s1 + $0xa0] sm:$0xf]
  %v66 = vld [vmem:[%s1 + $0xa4] sm:$0xf]
  %v67 = vld [vmem:[%s1 + $0xa8] sm:$0xf]
  %v68 = vld [vmem:[%s1 + $0xac] sm:$0xf]
  %v69 = vld [vmem:[%s1 + $0xb0] sm:$0xf]
  %v70 = vld [vmem:[%s1 + $0xb4] sm:$0xf]
  %v71 = vld [vmem:[%s1 + $0xb8] sm:$0xf]
  %v72 = vld [vmem:[%s1 + $0xbc] sm:$0xf]
  %v73 = vld [vmem:[%s1 + $0xc0] sm:$0xf]
  %v74 = vld [vmem:[%s1 + $0xc4] sm:$0xf]
  %v75 = vld [vmem:[%s1 + $0xc8] sm:$0xf]
  %v76 = vld [vmem:[%s1 + $0xcc] sm:$0xf]
  %v77 = vld [vmem:[%s1 + $0xd0] sm:$0xf]
  %v78 = vld [vmem:[%s1 + $0xd4] sm:$0xf]
  %v79 = vld [vmem:[%s1 + $0xd8] sm:$0xf]
  %v80 = vld [vmem:[%s1 + $0xdc] sm:$0xf]
  %v81 = vld [vmem:[%s1 + $0xe0] sm:$0xf]
  %v82 = vld [vmem:[%s1 + $0xe4] sm:$0xf]
  %v83 = vld [vmem:[%s1 + $0xe8] sm:$0xf]
  %v84 = vld [vmem:[%s1 + $0xec] sm:$0xf]
  %v85 = vld [vmem:[%s1 + $0xf0] sm:$0xf]
  %v86 = vld [vmem:[%s1 + $0xf4] sm:$0xf]
  %v87 = vld [vmem:[%s1 + $0xf8] sm:$0xf]
  %v88 = vld [vmem:[%s1 + $0xfc] sm:$0xf]
  %v89 = vld [vmem:[%s1 + $0x100] sm:$0xf]
  %v90 = vld [vmem:[%s1 + $0x104] sm:$0xf]
  %v91 = vld [vmem:[%s1 + $0x108] sm:$0xf]
  %v92 = vld [vmem:[%s1 + $0x10c] sm:$0xf]
  %v93 = vld [vmem:[%s1 + $0x110] sm:$0xf]
  %v94 = vld [vmem:[%s1 + $0x114] sm:$0xf]
  %v95 = vld [vmem:[%s1 + $0x118] sm:$0xf]
  %v96 = vld [vmem:[%s1 + $0x11c] sm:$0xf]
  %v97 = vld [vmem:[%s1 + $0x120] sm:$0xf]
  %v98 = vld [vmem:[%s1 + $0x124] sm:$0xf]
  %v99 = vld [vmem:[%s1 + $0x128] sm:$0xf]
  %v100 = vld [vmem:[%s1 + $0x12c] sm:$0xf]
  %v101 = vld [vmem:[%s1 + $0x130] sm:$0xf]
  %v102 = vld [vmem:[%s1 + $0x134] sm:$0xf]
  %v103 = vld [vmem:[%s1 + $0x138] sm:$0xf]
  %v104 = vld [vmem:[%s1 + $0x13c] sm:$0xf]
  %v105 = vld [vmem:[%s1 + $0x140] sm:$0xf]
  %v106 = vld [vmem:[%s1 + $0x144] sm:$0xf]
  %v107 = vld [vmem:[%s1 + $0x148] sm:$0xf]
  %v108 = vld [vmem:[%s1 + $0x14c] sm:$0xf]
  %v109 = vld [vmem:[%s1 + $0x150] sm:$0xf]
  %v110 = vld [vmem:[%s1 + $0x154] sm:$0xf]
  %v111 = vld [vmem:[%s1 + $0x158] sm:$0xf]
  %v112 = vld [vmem:[%s1 + $0x15c] sm:$0xf]
  %v113 = vld [vmem:[%s1 + $0x160] sm:$0xf]
  %v114 = vld [vmem:[%s1 + $0x164] sm:$0xf]
  %v115 = vld [vmem:[%s1 + $0x168] sm:$0xf]
  %v116 = vld [vmem:[%s1 + $0x16c] sm:$0xf]
  %v117 = vld [vmem:[%s1 + $0x170] sm:$0xf]
  %v118 = vld [vmem:[%s1 + $0x174] sm:$0xf]
  %v119 = vld [vmem:[%s1 + $0x178] sm:$0xf]
  %v120 = vld [vmem:[%s1 + $0x17c] sm:$0xf]
  %v121 = vld [vmem:[%s1 + $0x180] sm:$0xf]
  %v122 = vld [vmem:[%s1 + $0x184] sm:$0xf]
  %v123 = vld [vmem:[%s1 + $0x188] sm:$0xf]
  %v124 = vld [vmem:[%s1 + $0x18c] sm:$0xf]
  %v125 = vld [vmem:[%s1 + $0x190] sm:$0xf]
  %v126 = vld [vmem:[%s1 + $0x194] sm:$0xf]
  %v127 = vld [vmem:[%s1 + $0x198] sm:$0xf]
  %v128 = vld [vmem:[%s1 + $0x19c] sm:$0xf]
  %v129 = vld [vmem:[%s1 + $0x1a0] sm:$0xf]
  %v130 = vld [vmem:[%s1 + $0x1a4] sm:$0xf]
  %v131 = vld [vmem:[%s1 + $0x1a8] sm:$0xf]
  %v132 = vld [vmem:[%s1 + $0x1ac] sm:$0xf]
  %v133 = vld [vmem:[%s1 + $0x1b0] sm:$0xf]
  %v134 = vld [vmem:[%s1 + $0x1b4] sm:$0xf]
  %v135 = vld [vmem:[%s1 + $0x1b8] sm:$0xf]
  %v136 = vld [vmem:[%s1 + $0x1bc] sm:$0xf]
  %v137 = vld [vmem:[%s1 + $0x1c0] sm:$0xf]
  %v138 = vld [vmem:[%s1 + $0x1c4] sm:$0xf]
  %v139 = vld [vmem:[%s1 + $0x1c8] sm:$0xf]
  %v140 = vld [vmem:[%s1 + $0x1cc] sm:$0xf]
  %v141 = vld [vmem:[%s1 + $0x1d0] sm:$0xf]
  %v142 = vld [vmem:[%s1 + $0x1d4] sm:$0xf]
  %v143 = vld [vmem:[%s1 + $0x1d8] sm:$0xf]
  %v144 = vld [vmem:[%s1 + $0x1dc] sm:$0xf]
  %v145 = vld [vmem:[%s1 + $0x1e0] sm:$0xf]
  %v146 = vld [vmem:[%s1 + $0x1e4] sm:$0xf]
  %v147 = vld [vmem:[%s1 + $0x1e8] sm:$0xf]
  %v148 = vld [vmem:[%s1 + $0x1ec] sm:$0xf]
  %v149 = vld [vmem:[%s1 + $0x1f0] sm:$0xf]
  %v150 = vld [vmem:[%s1 + $0x1f4] sm:$0xf]
  %v151 = vld [vmem:[%s1 + $0x1f8] sm:$0xf]
  %v152 = vld [vmem:[%s1 + $0x1fc] sm:$0xf]
  %v153 = vld [vmem:[%s2] sm:$0x1]
  %v155 = vlaneseq
  %v156 = vshrl.u32 %v155, 7
  %v157 = vsub.s32 0, %v156
  %v158 = vrot.slane %v153, %v157
  %v164 = vunpack.c.l.b16 %v21
  %v165 = vunpack.c.h.b16 %v21
  %v166 = vunpack.c.l.b16 %v22
  %v167 = vunpack.c.h.b16 %v22
  %v168 = vunpack.c.l.b16 %v23
  %v169 = vunpack.c.h.b16 %v23
  %v170 = vunpack.c.l.b16 %v24
  %v171 = vunpack.c.h.b16 %v24
  %v172 = vpack.c.b16 %v164, %v164
  %v173 = vpack.c.b16 %v165, %v165
  %v174 = vpack.c.b16 %v166, %v166
  %v175 = vpack.c.b16 %v167, %v167
  %v176 = vpack.c.b16 %v168, %v168
  %v177 = vpack.c.b16 %v169, %v169
  %v178 = vpack.c.b16 %v170, %v170
  %v179 = vpack.c.b16 %v171, %v171
  %v316 = vunpack.c.l.b16 %v25
  %v317 = vunpack.c.l.b16 %v26
  %v318 = vunpack.c.l.b16 %v27
  %v319 = vunpack.c.l.b16 %v28
  %v320 = vunpack.c.l.b16 %v29
  %v321 = vunpack.c.l.b16 %v30
  %v322 = vunpack.c.l.b16 %v31
  %v323 = vunpack.c.l.b16 %v32
  %v324 = vunpack.c.l.b16 %v33
  %v325 = vunpack.c.l.b16 %v34
  %v326 = vunpack.c.l.b16 %v35
  %v327 = vunpack.c.l.b16 %v36
  %v328 = vunpack.c.l.b16 %v37
  %v329 = vunpack.c.l.b16 %v38
  %v330 = vunpack.c.l.b16 %v39
  %v331 = vunpack.c.l.b16 %v40
  %v332 = vunpack.c.l.b16 %v41
  %v333 = vunpack.c.l.b16 %v42
  %v334 = vunpack.c.l.b16 %v43
  %v335 = vunpack.c.l.b16 %v44
  %v336 = vunpack.c.l.b16 %v45
  %v337 = vunpack.c.l.b16 %v46
  %v338 = vunpack.c.l.b16 %v47
  %v339 = vunpack.c.l.b16 %v48
  %v340 = vunpack.c.l.b16 %v49
  %v341 = vunpack.c.l.b16 %v50
  %v342 = vunpack.c.l.b16 %v51
  %v343 = vunpack.c.l.b16 %v52
  %v344 = vunpack.c.l.b16 %v53
  %v345 = vunpack.c.l.b16 %v54
  %v346 = vunpack.c.l.b16 %v55
  %v347 = vunpack.c.l.b16 %v56
  %v348 = vunpack.c.l.b16 %v57
  %v349 = vunpack.c.l.b16 %v58
  %v350 = vunpack.c.l.b16 %v59
  %v351 = vunpack.c.l.b16 %v60
  %v352 = vunpack.c.l.b16 %v61
  %v353 = vunpack.c.l.b16 %v62
  %v354 = vunpack.c.l.b16 %v63
  %v355 = vunpack.c.l.b16 %v64
  %v356 = vunpack.c.l.b16 %v65
  %v357 = vunpack.c.l.b16 %v66
  %v358 = vunpack.c.l.b16 %v67
  %v359 = vunpack.c.l.b16 %v68
  %v360 = vunpack.c.l.b16 %v69
  %v361 = vunpack.c.l.b16 %v70
  %v362 = vunpack.c.l.b16 %v71
  %v363 = vunpack.c.l.b16 %v72
  %v364 = vunpack.c.l.b16 %v73
  %v365 = vunpack.c.l.b16 %v74
  %v366 = vunpack.c.l.b16 %v75
  %v367 = vunpack.c.l.b16 %v76
  %v368 = vunpack.c.l.b16 %v77
  %v369 = vunpack.c.l.b16 %v78
  %v370 = vunpack.c.l.b16 %v79
  %v371 = vunpack.c.l.b16 %v80
  %v372 = vunpack.c.l.b16 %v81
  %v373 = vunpack.c.l.b16 %v82
  %v374 = vunpack.c.l.b16 %v83
  %v375 = vunpack.c.l.b16 %v84
  %v376 = vunpack.c.l.b16 %v85
  %v377 = vunpack.c.l.b16 %v86
  %v378 = vunpack.c.l.b16 %v87
  %v379 = vunpack.c.l.b16 %v88
  %v380 = vunpack.c.l.b16 %v89
  %v381 = vunpack.c.l.b16 %v90
  %v382 = vunpack.c.l.b16 %v91
  %v383 = vunpack.c.l.b16 %v92
  %v384 = vunpack.c.l.b16 %v93
  %v385 = vunpack.c.l.b16 %v94
  %v386 = vunpack.c.l.b16 %v95
  %v387 = vunpack.c.l.b16 %v96
  %v388 = vunpack.c.l.b16 %v97
  %v389 = vunpack.c.l.b16 %v98
  %v390 = vunpack.c.l.b16 %v99
  %v391 = vunpack.c.l.b16 %v100
  %v392 = vunpack.c.l.b16 %v101
  %v393 = vunpack.c.l.b16 %v102
  %v394 = vunpack.c.l.b16 %v103
  %v395 = vunpack.c.l.b16 %v104
  %v396 = vunpack.c.l.b16 %v105
  %v397 = vunpack.c.l.b16 %v106
  %v398 = vunpack.c.l.b16 %v107
  %v399 = vunpack.c.l.b16 %v108
  %v400 = vunpack.c.l.b16 %v109
  %v401 = vunpack.c.l.b16 %v110
  %v402 = vunpack.c.l.b16 %v111
  %v403 = vunpack.c.l.b16 %v112
  %v404 = vunpack.c.l.b16 %v113
  %v405 = vunpack.c.l.b16 %v114
  %v406 = vunpack.c.l.b16 %v115
  %v407 = vunpack.c.l.b16 %v116
  %v408 = vunpack.c.l.b16 %v117
  %v409 = vunpack.c.l.b16 %v118
  %v410 = vunpack.c.l.b16 %v119
  %v411 = vunpack.c.l.b16 %v120
  %v412 = vunpack.c.l.b16 %v121
  %v413 = vunpack.c.l.b16 %v122
  %v414 = vunpack.c.l.b16 %v123
  %v415 = vunpack.c.l.b16 %v124
  %v416 = vunpack.c.l.b16 %v125
  %v417 = vunpack.c.l.b16 %v126
  %v418 = vunpack.c.l.b16 %v127
  %v419 = vunpack.c.l.b16 %v128
  %v420 = vunpack.c.l.b16 %v129
  %v421 = vunpack.c.l.b16 %v130
  %v422 = vunpack.c.l.b16 %v131
  %v423 = vunpack.c.l.b16 %v132
  %v424 = vunpack.c.l.b16 %v133
  %v425 = vunpack.c.l.b16 %v134
  %v426 = vunpack.c.l.b16 %v135
  %v427 = vunpack.c.l.b16 %v136
  %v428 = vunpack.c.l.b16 %v137
  %v429 = vunpack.c.l.b16 %v138
  %v430 = vunpack.c.l.b16 %v139
  %v431 = vunpack.c.l.b16 %v140
  %v432 = vunpack.c.l.b16 %v141
  %v433 = vunpack.c.l.b16 %v142
  %v434 = vunpack.c.l.b16 %v143
  %v435 = vunpack.c.l.b16 %v144
  %v436 = vunpack.c.l.b16 %v145
  %v437 = vunpack.c.l.b16 %v146
  %v438 = vunpack.c.l.b16 %v147
  %v439 = vunpack.c.l.b16 %v148
  %v440 = vunpack.c.l.b16 %v149
  %v441 = vunpack.c.l.b16 %v150
  %v442 = vunpack.c.l.b16 %v151
  %v443 = vunpack.c.l.b16 %v152
  %v444 = vpack.c.b16 %v317, %v316
  %v445 = vpack.c.b16 %v319, %v318
  %v446 = vpack.c.b16 %v321, %v320
  %v447 = vpack.c.b16 %v323, %v322
  %v448 = vpack.c.b16 %v325, %v324
  %v449 = vpack.c.b16 %v327, %v326
  %v450 = vpack.c.b16 %v329, %v328
  %v451 = vpack.c.b16 %v331, %v330
  %v452 = vpack.c.b16 %v333, %v332
  %v453 = vpack.c.b16 %v335, %v334
  %v454 = vpack.c.b16 %v337, %v336
  %v455 = vpack.c.b16 %v339, %v338
  %v456 = vpack.c.b16 %v341, %v340
  %v457 = vpack.c.b16 %v343, %v342
  %v458 = vpack.c.b16 %v345, %v344
  %v459 = vpack.c.b16 %v347, %v346
  %v460 = vpack.c.b16 %v349, %v348
  %v461 = vpack.c.b16 %v351, %v350
  %v462 = vpack.c.b16 %v353, %v352
  %v463 = vpack.c.b16 %v355, %v354
  %v464 = vpack.c.b16 %v357, %v356
  %v465 = vpack.c.b16 %v359, %v358
  %v466 = vpack.c.b16 %v361, %v360
  %v467 = vpack.c.b16 %v363, %v362
  %v468 = vpack.c.b16 %v365, %v364
  %v469 = vpack.c.b16 %v367, %v366
  %v470 = vpack.c.b16 %v369, %v368
  %v471 = vpack.c.b16 %v371, %v370
  %v472 = vpack.c.b16 %v373, %v372
  %v473 = vpack.c.b16 %v375, %v374
  %v474 = vpack.c.b16 %v377, %v376
  %v475 = vpack.c.b16 %v379, %v378
  %v476 = vpack.c.b16 %v381, %v380
  %v477 = vpack.c.b16 %v383, %v382
  %v478 = vpack.c.b16 %v385, %v384
  %v479 = vpack.c.b16 %v387, %v386
  %v480 = vpack.c.b16 %v389, %v388
  %v481 = vpack.c.b16 %v391, %v390
  %v482 = vpack.c.b16 %v393, %v392
  %v483 = vpack.c.b16 %v395, %v394
  %v484 = vpack.c.b16 %v397, %v396
  %v485 = vpack.c.b16 %v399, %v398
  %v486 = vpack.c.b16 %v401, %v400
  %v487 = vpack.c.b16 %v403, %v402
  %v488 = vpack.c.b16 %v405, %v404
  %v489 = vpack.c.b16 %v407, %v406
  %v490 = vpack.c.b16 %v409, %v408
  %v491 = vpack.c.b16 %v411, %v410
  %v492 = vpack.c.b16 %v413, %v412
  %v493 = vpack.c.b16 %v415, %v414
  %v494 = vpack.c.b16 %v417, %v416
  %v495 = vpack.c.b16 %v419, %v418
  %v496 = vpack.c.b16 %v421, %v420
  %v497 = vpack.c.b16 %v423, %v422
  %v498 = vpack.c.b16 %v425, %v424
  %v499 = vpack.c.b16 %v427, %v426
  %v500 = vpack.c.b16 %v429, %v428
  %v501 = vpack.c.b16 %v431, %v430
  %v502 = vpack.c.b16 %v433, %v432
  %v503 = vpack.c.b16 %v435, %v434
  %v504 = vpack.c.b16 %v437, %v436
  %v505 = vpack.c.b16 %v439, %v438
  %v506 = vpack.c.b16 %v441, %v440
  %v507 = vpack.c.b16 %v443, %v442
  %572 = vmatprep.subr.bf16.mxu0 0
  %573 = vmatpush1.bf16.msra.mxu0 %v451
  %574 = vmatprep.subr.bf16.mxu0 0
  %575 = vmatpush1.bf16.msra.mxu0 %v450
  %576 = vmatprep.subr.bf16.mxu0 0
  %577 = vmatpush1.bf16.msra.mxu0 %v449
  %578 = vmatprep.subr.bf16.mxu0 0
  %579 = vmatpush1.bf16.msra.mxu0 %v448
  %580 = vmatprep.subr.bf16.mxu0 0
  %581 = vmatpush1.bf16.msra.mxu0 %v447
  %582 = vmatprep.subr.bf16.mxu0 0
  %583 = vmatpush1.bf16.msra.mxu0 %v446
  %584 = vmatprep.subr.bf16.mxu0 0
  %585 = vmatpush1.bf16.msra.mxu0 %v445
  %586 = vmatprep.subr.bf16.mxu0 0
  %587 = vmatpush1.bf16.msra.mxu0 %v444
  %588 = vmatprep.subr.bf16.mxu0 0
  %589 = vmatpush2.bf16.msra.mxu0 %v459
  %590 = vmatprep.subr.bf16.mxu0 0
  %591 = vmatpush2.bf16.msra.mxu0 %v458
  %592 = vmatprep.subr.bf16.mxu0 0
  %593 = vmatpush2.bf16.msra.mxu0 %v457
  %594 = vmatprep.subr.bf16.mxu0 0
  %595 = vmatpush2.bf16.msra.mxu0 %v456
  %596 = vmatprep.subr.bf16.mxu0 0
  %597 = vmatpush2.bf16.msra.mxu0 %v455
  %598 = vmatprep.subr.bf16.mxu0 0
  %599 = vmatpush2.bf16.msra.mxu0 %v454
  %600 = vmatprep.subr.bf16.mxu0 0
  %601 = vmatpush2.bf16.msra.mxu0 %v453
  %602 = vmatprep.subr.bf16.mxu0 0
  %603 = vmatpush2.bf16.msra.mxu0 %v452
  %604 = vmatprep.mubr.bf16.mxu0 %v173
  %605 = vmatmul.mubr.bf16.gmra.mxu0 %v172
  %v606 = vpop.f32.mrf.mxu0
  %v607 = vadd.f32 %v158, %v606
  %v608 = vpop.f32.mrf.mxu0
  %v609 = vpop.f32.mrf.mxu0
  %v610 = vpop.f32.mrf.mxu0
  %611 = vdwg.mxu0
  %612 = vmatprep.subr.bf16.mxu0 0
  %613 = vmatpush1.bf16.msra.mxu0 %v467
  %614 = vmatprep.subr.bf16.mxu0 0
  %615 = vmatpush1.bf16.msra.mxu0 %v466
  %616 = vmatprep.subr.bf16.mxu0 0
  %617 = vmatpush1.bf16.msra.mxu0 %v465
  %618 = vmatprep.subr.bf16.mxu0 0
  %619 = vmatpush1.bf16.msra.mxu0 %v464
  %620 = vmatprep.subr.bf16.mxu0 0
  %621 = vmatpush1.bf16.msra.mxu0 %v463
  %622 = vmatprep.subr.bf16.mxu0 0
  %623 = vmatpush1.bf16.msra.mxu0 %v462
  %624 = vmatprep.subr.bf16.mxu0 0
  %625 = vmatpush1.bf16.msra.mxu0 %v461
  %626 = vmatprep.subr.bf16.mxu0 0
  %627 = vmatpush1.bf16.msra.mxu0 %v460
  %628 = vmatprep.subr.bf16.mxu0 0
  %629 = vmatpush2.bf16.msra.mxu0 %v475
  %630 = vmatprep.subr.bf16.mxu0 0
  %631 = vmatpush2.bf16.msra.mxu0 %v474
  %632 = vmatprep.subr.bf16.mxu0 0
  %633 = vmatpush2.bf16.msra.mxu0 %v473
  %634 = vmatprep.subr.bf16.mxu0 0
  %635 = vmatpush2.bf16.msra.mxu0 %v472
  %636 = vmatprep.subr.bf16.mxu0 0
  %637 = vmatpush2.bf16.msra.mxu0 %v471
  %638 = vmatprep.subr.bf16.mxu0 0
  %639 = vmatpush2.bf16.msra.mxu0 %v470
  %640 = vmatprep.subr.bf16.mxu0 0
  %641 = vmatpush2.bf16.msra.mxu0 %v469
  %642 = vmatprep.subr.bf16.mxu0 0
  %643 = vmatpush2.bf16.msra.mxu0 %v468
  %644 = vmatprep.mubr.bf16.mxu0 %v175
  %645 = vmatmul.mubr.bf16.gmra.mxu0 %v174
  %v646 = vpop.f32.mrf.mxu0
  %v647 = vadd.f32 %v607, %v646
  %v648 = vpop.f32.mrf.mxu0
  %v649 = vpop.f32.mrf.mxu0
  %v650 = vpop.f32.mrf.mxu0
  %651 = vdwg.mxu0
  %652 = vmatprep.subr.bf16.mxu0 0
  %653 = vmatpush1.bf16.msra.mxu0 %v483
  %654 = vmatprep.subr.bf16.mxu0 0
  %655 = vmatpush1.bf16.msra.mxu0 %v482
  %656 = vmatprep.subr.bf16.mxu0 0
  %657 = vmatpush1.bf16.msra.mxu0 %v481
  %658 = vmatprep.subr.bf16.mxu0 0
  %659 = vmatpush1.bf16.msra.mxu0 %v480
  %660 = vmatprep.subr.bf16.mxu0 0
  %661 = vmatpush1.bf16.msra.mxu0 %v479
  %662 = vmatprep.subr.bf16.mxu0 0
  %663 = vmatpush1.bf16.msra.mxu0 %v478
  %664 = vmatprep.subr.bf16.mxu0 0
  %665 = vmatpush1.bf16.msra.mxu0 %v477
  %666 = vmatprep.subr.bf16.mxu0 0
  %667 = vmatpush1.bf16.msra.mxu0 %v476
  %668 = vmatprep.subr.bf16.mxu0 0
  %669 = vmatpush2.bf16.msra.mxu0 %v491
  %670 = vmatprep.subr.bf16.mxu0 0
  %671 = vmatpush2.bf16.msra.mxu0 %v490
  %672 = vmatprep.subr.bf16.mxu0 0
  %673 = vmatpush2.bf16.msra.mxu0 %v489
  %674 = vmatprep.subr.bf16.mxu0 0
  %675 = vmatpush2.bf16.msra.mxu0 %v488
  %676 = vmatprep.subr.bf16.mxu0 0
  %677 = vmatpush2.bf16.msra.mxu0 %v487
  %678 = vmatprep.subr.bf16.mxu0 0
  %679 = vmatpush2.bf16.msra.mxu0 %v486
  %680 = vmatprep.subr.bf16.mxu0 0
  %681 = vmatpush2.bf16.msra.mxu0 %v485
  %682 = vmatprep.subr.bf16.mxu0 0
  %683 = vmatpush2.bf16.msra.mxu0 %v484
  %684 = vmatprep.mubr.bf16.mxu0 %v177
  %685 = vmatmul.mubr.bf16.gmra.mxu0 %v176
  %v686 = vpop.f32.mrf.mxu0
  %v687 = vadd.f32 %v647, %v686
  %v688 = vpop.f32.mrf.mxu0
  %v689 = vpop.f32.mrf.mxu0
  %v690 = vpop.f32.mrf.mxu0
  %691 = vdwg.mxu0
  %692 = vmatprep.subr.bf16.mxu0 0
  %693 = vmatpush1.bf16.msra.mxu0 %v499
  %694 = vmatprep.subr.bf16.mxu0 0
  %695 = vmatpush1.bf16.msra.mxu0 %v498
  %696 = vmatprep.subr.bf16.mxu0 0
  %697 = vmatpush1.bf16.msra.mxu0 %v497
  %698 = vmatprep.subr.bf16.mxu0 0
  %699 = vmatpush1.bf16.msra.mxu0 %v496
  %700 = vmatprep.subr.bf16.mxu0 0
  %701 = vmatpush1.bf16.msra.mxu0 %v495
  %702 = vmatprep.subr.bf16.mxu0 0
  %703 = vmatpush1.bf16.msra.mxu0 %v494
  %704 = vmatprep.subr.bf16.mxu0 0
  %705 = vmatpush1.bf16.msra.mxu0 %v493
  %706 = vmatprep.subr.bf16.mxu0 0
  %707 = vmatpush1.bf16.msra.mxu0 %v492
  %708 = vmatprep.subr.bf16.mxu0 0
  %709 = vmatpush2.bf16.msra.mxu0 %v507
  %710 = vmatprep.subr.bf16.mxu0 0
  %711 = vmatpush2.bf16.msra.mxu0 %v506
  %712 = vmatprep.subr.bf16.mxu0 0
  %713 = vmatpush2.bf16.msra.mxu0 %v505
  %714 = vmatprep.subr.bf16.mxu0 0
  %715 = vmatpush2.bf16.msra.mxu0 %v504
  %716 = vmatprep.subr.bf16.mxu0 0
  %717 = vmatpush2.bf16.msra.mxu0 %v503
  %718 = vmatprep.subr.bf16.mxu0 0
  %719 = vmatpush2.bf16.msra.mxu0 %v502
  %720 = vmatprep.subr.bf16.mxu0 0
  %721 = vmatpush2.bf16.msra.mxu0 %v501
  %722 = vmatprep.subr.bf16.mxu0 0
  %723 = vmatpush2.bf16.msra.mxu0 %v500
  %724 = vmatprep.mubr.bf16.mxu0 %v179
  %725 = vmatmul.mubr.bf16.gmra.mxu0 %v178
  %v726 = vpop.f32.mrf.mxu0
  %v727 = vadd.f32 %v687, %v726
  %v728 = vpop.f32.mrf.mxu0
  %v729 = vpop.f32.mrf.mxu0
  %v730 = vpop.f32.mrf.mxu0
  %731 = vdwg.mxu0
  %732 = vst [vmem:[#allocation2] sm:$0xff] %v727
  %v733 = vrot.slane %v727, 4
  %v734 = vadd.f32 %v727, %v733
  %v735 = vrot.slane %v734, 2
  %v736 = vadd.f32 %v734, %v735
  %v737 = vrot.slane %v736, 1
  %v738 = vadd.f32 %v736, %v737
  %v739 = vmul.f32 %v738, 0.125
  %v740 = vld [vmem:[#allocation2] sm:$0xff]
  %v741 = vsub.f32 %v740, %v739
  %v742 = vmul.f32 %v741, %v741
  %v743 = vrot.slane %v742, 4
  %v744 = vadd.f32 %v742, %v743
  %v745 = vrot.slane %v744, 2
  %v746 = vadd.f32 %v744, %v745
  %v747 = vrot.slane %v746, 1
  %v748 = vadd.f32 %v746, %v747
  %v749 = vmul.f32 %v748, 0.125
  %v750 = vmax.f32 %v749, 0.0
  %v751 = vld [vmem:[%s3] sm:$0x1]
  %v752 = vadd.f32 %v750, 1e-05
  %v753 = vrsqrt.pop %v752
  %v754 = vmul.f32 %v751, %v753
  %v755 = vld [vmem:[%s4] sm:$0x1]
  %v756 = vmul.f32 %v739, %v754
  %v757 = vsub.f32 %v755, %v756
  %v759 = vlaneseq
  %v760 = vshrl.u32 %v759, 7
  %v761 = vsub.s32 0, %v760
  %v762 = vrot.slane %v754, %v761
  %v764 = vmul.f32 %v740, %v762
  %v766 = vlaneseq
  %v767 = vshrl.u32 %v766, 7
  %v768 = vsub.s32 0, %v767
  %v769 = vrot.slane %v757, %v768
  %v771 = vadd.f32 %v764, %v769
  %vm772 = vcmp.ge.f32.partialorder %v771, 0.0
  %v773 = vmul.f32 %v771, 0.2
  %v774 = vsel %vm772, %v771, %v773
  %v775 = vpack.c.bf16 %v774, %v774
  %776 = vst [vmem:[%s5] sm:$0xf] %v775
  // Predicated region
  $region22: #{vae_forward.11} parent=0 // pred_check
    _
  $region23: #{vae_forward.11} parent=0 // pred_check_branch
    %778 = sbr.rel (0) target = $region25
  $region24: #{vae_forward.11} parent=0 // pred_region
    _
  $region25: #{vae_forward.11} parent=0 // pred_fallthru
    _
  // Predicated region
  $region26: #{vae_forward.11} parent=0 // pred_check
    _
  $region27: #{vae_forward.11} parent=0 // pred_check_branch
    %780 = sbr.rel (0) target = $region29
  $region28: #{vae_forward.11} parent=0 // pred_region
    _
  $region29: #{vae_forward.11} parent=0 // pred_fallthru
    _

// kernel: vae_forward.12
$region0: #{vae_forward.12}
  #allocation0 [shape = 'u32[]', space=smem, size = 0x4, offset = 0x4, fixed_abs, tag = 'smem constant byte address 0x4 - core index']
  #allocation1 [shape = 'u32[144,128]{1,0:T(1,128)}', space=vmem, size = 0x12000, scoped, tag = 'internal scratch']
  #allocation2 [shape = 'f32[4,8,128]{2,1,0:T(8,128)}', space=vmem, size = 0x4000, scoped, tag = 'scratch operand']
  %s0 = inlined_call_operand.vmem [shape: bf16[4,8,512], index: 0, kind: input, shape index: {}]
  %s1 = inlined_call_operand.vmem [shape: bf16[4,512,128], index: 1, kind: input, shape index: {}]
  %s2 = inlined_call_operand.vmem [shape: f32[1,128], index: 2, kind: input, shape index: {}]
  %s3 = inlined_call_operand.vmem [shape: f32[1,128], index: 3, kind: input, shape index: {}]
  %s4 = inlined_call_operand.vmem [shape: f32[1,128], index: 4, kind: input, shape index: {}]
  %s5 = inlined_call_operand.vmem [shape: bf16[4,8,128], index: 5, kind: output, shape index: {}]
  %s6 = sld [smem:[#allocation0]]
  $region30: #{vae_forward.12} parent=0
    _
  %s8 = ssub.s32 1, %s6
  %s9 = scalar_select 0, %s8, %s6
  // Predicated region
  $region2: #{vae_forward.12} parent=0 // pred_check
    _
  $region3: #{vae_forward.12} parent=0 // pred_check_branch
    %11 = sbr.rel (0) target = $region5
  $region4: #{vae_forward.12} parent=0 // pred_region
    _
  $region5: #{vae_forward.12} parent=0 // pred_fallthru
    _
  // Predicated region
  $region6: #{vae_forward.12} parent=0 // pred_check
    _
  $region7: #{vae_forward.12} parent=0 // pred_check_branch
    %13 = sbr.rel (0) target = $region9
  $region8: #{vae_forward.12} parent=0 // pred_region
    _
  $region9: #{vae_forward.12} parent=0 // pred_fallthru
    _
  // Predicated region
  $region10: #{vae_forward.12} parent=0 // pred_check
    _
  $region11: #{vae_forward.12} parent=0 // pred_check_branch
    %15 = sbr.rel (0) target = $region13
  $region12: #{vae_forward.12} parent=0 // pred_region
    _
  $region13: #{vae_forward.12} parent=0 // pred_fallthru
    _
  // Predicated region
  $region14: #{vae_forward.12} parent=0 // pred_check
    _
  $region15: #{vae_forward.12} parent=0 // pred_check_branch
    %17 = sbr.rel (0) target = $region17
  $region16: #{vae_forward.12} parent=0 // pred_region
    _
  $region17: #{vae_forward.12} parent=0 // pred_fallthru
    _
  // Predicated region
  $region18: #{vae_forward.12} parent=0 // pred_check
    _
  $region19: #{vae_forward.12} parent=0 // pred_check_branch
    %19 = sbr.rel (0) target = $region21
  $region20: #{vae_forward.12} parent=0 // pred_region
    _
  $region21: #{vae_forward.12} parent=0 // pred_fallthru
    _
  %v21 = vld [vmem:[%s0] sm:$0xff]
  %v22 = vld [vmem:[%s0 + $0x8] sm:$0xff]
  %v23 = vld [vmem:[%s1] sm:$0xf]
  %v24 = vld [vmem:[%s1 + $0x4] sm:$0xf]
  %v25 = vld [vmem:[%s1 + $0x8] sm:$0xf]
  %v26 = vld [vmem:[%s1 + $0xc] sm:$0xf]
  %v27 = vld [vmem:[%s1 + $0x10] sm:$0xf]
  %v28 = vld [vmem:[%s1 + $0x14] sm:$0xf]
  %v29 = vld [vmem:[%s1 + $0x18] sm:$0xf]
  %v30 = vld [vmem:[%s1 + $0x1c] sm:$0xf]
  %v31 = vld [vmem:[%s1 + $0x20] sm:$0xf]
  %v32 = vld [vmem:[%s1 + $0x24] sm:$0xf]
  %v33 = vld [vmem:[%s1 + $0x28] sm:$0xf]
  %v34 = vld [vmem:[%s1 + $0x2c] sm:$0xf]
  %v35 = vld [vmem:[%s1 + $0x30] sm:$0xf]
  %v36 = vld [vmem:[%s1 + $0x34] sm:$0xf]
  %v37 = vld [vmem:[%s1 + $0x38] sm:$0xf]
  %v38 = vld [vmem:[%s1 + $0x3c] sm:$0xf]
  %v39 = vld [vmem:[%s1 + $0x40] sm:$0xf]
  %v40 = vld [vmem:[%s1 + $0x44] sm:$0xf]
  %v41 = vld [vmem:[%s1 + $0x48] sm:$0xf]
  %v42 = vld [vmem:[%s1 + $0x4c] sm:$0xf]
  %v43 = vld [vmem:[%s1 + $0x50] sm:$0xf]
  %v44 = vld [vmem:[%s1 + $0x54] sm:$0xf]
  %v45 = vld [vmem:[%s1 + $0x58] sm:$0xf]
  %v46 = vld [vmem:[%s1 + $0x5c] sm:$0xf]
  %v47 = vld [vmem:[%s1 + $0x60] sm:$0xf]
  %v48 = vld [vmem:[%s1 + $0x64] sm:$0xf]
  %v49 = vld [vmem:[%s1 + $0x68] sm:$0xf]
  %v50 = vld [vmem:[%s1 + $0x6c] sm:$0xf]
  %v51 = vld [vmem:[%s1 + $0x70] sm:$0xf]
  %v52 = vld [vmem:[%s1 + $0x74] sm:$0xf]
  %v53 = vld [vmem:[%s1 + $0x78] sm:$0xf]
  %v54 = vld [vmem:[%s1 + $0x7c] sm:$0xf]
  %v55 = vld [vmem:[%s1 + $0x80] sm:$0xf]
  %v56 = vld [vmem:[%s1 + $0x84] sm:$0xf]
  %v57 = vld [vmem:[%s1 + $0x88] sm:$0xf]
  %v58 = vld [vmem:[%s1 + $0x8c] sm:$0xf]
  %v59 = vld [vmem:[%s1 + $0x90] sm:$0xf]
  %v60 = vld [vmem:[%s1 + $0x94] sm:$0xf]
  %v61 = vld [vmem:[%s1 + $0x98] sm:$0xf]
  %v62 = vld [vmem:[%s1 + $0x9c] sm:$0xf]
  %v63 = vld [vmem:[%s1 + $0xa0] sm:$0xf]
  %v64 = vld [vmem:[%s1 + $0xa4] sm:$0xf]
  %v65 = vld [vmem:[%s1 + $0xa8] sm:$0xf]
  %v66 = vld [vmem:[%s1 + $0xac] sm:$0xf]
  %v67 = vld [vmem:[%s1 + $0xb0] sm:$0xf]
  %v68 = vld [vmem:[%s1 + $0xb4] sm:$0xf]
  %v69 = vld [vmem:[%s1 + $0xb8] sm:$0xf]
  %v70 = vld [vmem:[%s1 + $0xbc] sm:$0xf]
  %v71 = vld [vmem:[%s1 + $0xc0] sm:$0xf]
  %v72 = vld [vmem:[%s1 + $0xc4] sm:$0xf]
  %v73 = vld [vmem:[%s1 + $0xc8] sm:$0xf]
  %v74 = vld [vmem:[%s1 + $0xcc] sm:$0xf]
  %v75 = vld [vmem:[%s1 + $0xd0] sm:$0xf]
  %v76 = vld [vmem:[%s1 + $0xd4] sm:$0xf]
  %v77 = vld [vmem:[%s1 + $0xd8] sm:$0xf]
  %v78 = vld [vmem:[%s1 + $0xdc] sm:$0xf]
  %v79 = vld [vmem:[%s1 + $0xe0] sm:$0xf]
  %v80 = vld [vmem:[%s1 + $0xe4] sm:$0xf]
  %v81 = vld [vmem:[%s1 + $0xe8] sm:$0xf]
  %v82 = vld [vmem:[%s1 + $0xec] sm:$0xf]
  %v83 = vld [vmem:[%s1 + $0xf0] sm:$0xf]
  %v84 = vld [vmem:[%s1 + $0xf4] sm:$0xf]
  %v85 = vld [vmem:[%s1 + $0xf8] sm:$0xf]
  %v86 = vld [vmem:[%s1 + $0xfc] sm:$0xf]
  %v87 = vld [vmem:[%s2] sm:$0x1]
  %v89 = vlaneseq
  %v90 = vshrl.u32 %v89, 7
  %v91 = vsub.s32 0, %v90
  %v92 = vrot.slane %v87, %v91
  %v96 = vunpack.c.l.b16 %v21
  %v97 = vunpack.c.h.b16 %v21
  %v98 = vunpack.c.l.b16 %v22
  %v99 = vunpack.c.h.b16 %v22
  %v100 = vpack.c.b16 %v96, %v96
  %v101 = vpack.c.b16 %v97, %v97
  %v102 = vpack.c.b16 %v98, %v98
  %v103 = vpack.c.b16 %v99, %v99
  %v172 = vunpack.c.l.b16 %v23
  %v173 = vunpack.c.l.b16 %v24
  %v174 = vunpack.c.l.b16 %v25
  %v175 = vunpack.c.l.b16 %v26
  %v176 = vunpack.c.l.b16 %v27
  %v177 = vunpack.c.l.b16 %v28
  %v178 = vunpack.c.l.b16 %v29
  %v179 = vunpack.c.l.b16 %v30
  %v180 = vunpack.c.l.b16 %v31
  %v181 = vunpack.c.l.b16 %v32
  %v182 = vunpack.c.l.b16 %v33
  %v183 = vunpack.c.l.b16 %v34
  %v184 = vunpack.c.l.b16 %v35
  %v185 = vunpack.c.l.b16 %v36
  %v186 = vunpack.c.l.b16 %v37
  %v187 = vunpack.c.l.b16 %v38
  %v188 = vunpack.c.l.b16 %v39
  %v189 = vunpack.c.l.b16 %v40
  %v190 = vunpack.c.l.b16 %v41
  %v191 = vunpack.c.l.b16 %v42
  %v192 = vunpack.c.l.b16 %v43
  %v193 = vunpack.c.l.b16 %v44
  %v194 = vunpack.c.l.b16 %v45
  %v195 = vunpack.c.l.b16 %v46
  %v196 = vunpack.c.l.b16 %v47
  %v197 = vunpack.c.l.b16 %v48
  %v198 = vunpack.c.l.b16 %v49
  %v199 = vunpack.c.l.b16 %v50
  %v200 = vunpack.c.l.b16 %v51
  %v201 = vunpack.c.l.b16 %v52
  %v202 = vunpack.c.l.b16 %v53
  %v203 = vunpack.c.l.b16 %v54
  %v204 = vunpack.c.l.b16 %v55
  %v205 = vunpack.c.l.b16 %v56
  %v206 = vunpack.c.l.b16 %v57
  %v207 = vunpack.c.l.b16 %v58
  %v208 = vunpack.c.l.b16 %v59
  %v209 = vunpack.c.l.b16 %v60
  %v210 = vunpack.c.l.b16 %v61
  %v211 = vunpack.c.l.b16 %v62
  %v212 = vunpack.c.l.b16 %v63
  %v213 = vunpack.c.l.b16 %v64
  %v214 = vunpack.c.l.b16 %v65
  %v215 = vunpack.c.l.b16 %v66
  %v216 = vunpack.c.l.b16 %v67
  %v217 = vunpack.c.l.b16 %v68
  %v218 = vunpack.c.l.b16 %v69
  %v219 = vunpack.c.l.b16 %v70
  %v220 = vunpack.c.l.b16 %v71
  %v221 = vunpack.c.l.b16 %v72
  %v222 = vunpack.c.l.b16 %v73
  %v223 = vunpack.c.l.b16 %v74
  %v224 = vunpack.c.l.b16 %v75
  %v225 = vunpack.c.l.b16 %v76
  %v226 = vunpack.c.l.b16 %v77
  %v227 = vunpack.c.l.b16 %v78
  %v228 = vunpack.c.l.b16 %v79
  %v229 = vunpack.c.l.b16 %v80
  %v230 = vunpack.c.l.b16 %v81
  %v231 = vunpack.c.l.b16 %v82
  %v232 = vunpack.c.l.b16 %v83
  %v233 = vunpack.c.l.b16 %v84
  %v234 = vunpack.c.l.b16 %v85
  %v235 = vunpack.c.l.b16 %v86
  %v236 = vpack.c.b16 %v173, %v172
  %v237 = vpack.c.b16 %v175, %v174
  %v238 = vpack.c.b16 %v177, %v176
  %v239 = vpack.c.b16 %v179, %v178
  %v240 = vpack.c.b16 %v181, %v180
  %v241 = vpack.c.b16 %v183, %v182
  %v242 = vpack.c.b16 %v185, %v184
  %v243 = vpack.c.b16 %v187, %v186
  %v244 = vpack.c.b16 %v189, %v188
  %v245 = vpack.c.b16 %v191, %v190
  %v246 = vpack.c.b16 %v193, %v192
  %v247 = vpack.c.b16 %v195, %v194
  %v248 = vpack.c.b16 %v197, %v196
  %v249 = vpack.c.b16 %v199, %v198
  %v250 = vpack.c.b16 %v201, %v200
  %v251 = vpack.c.b16 %v203, %v202
  %v252 = vpack.c.b16 %v205, %v204
  %v253 = vpack.c.b16 %v207, %v206
  %v254 = vpack.c.b16 %v209, %v208
  %v255 = vpack.c.b16 %v211, %v210
  %v256 = vpack.c.b16 %v213, %v212
  %v257 = vpack.c.b16 %v215, %v214
  %v258 = vpack.c.b16 %v217, %v216
  %v259 = vpack.c.b16 %v219, %v218
  %v260 = vpack.c.b16 %v221, %v220
  %v261 = vpack.c.b16 %v223, %v222
  %v262 = vpack.c.b16 %v225, %v224
  %v263 = vpack.c.b16 %v227, %v226
  %v264 = vpack.c.b16 %v229, %v228
  %v265 = vpack.c.b16 %v231, %v230
  %v266 = vpack.c.b16 %v233, %v232
  %v267 = vpack.c.b16 %v235, %v234
  %300 = vmatprep.subr.bf16.mxu0 0
  %301 = vmatpush1.bf16.msra.mxu0 %v243
  %302 = vmatprep.subr.bf16.mxu0 0
  %303 = vmatpush1.bf16.msra.mxu0 %v242
  %304 = vmatprep.subr.bf16.mxu0 0
  %305 = vmatpush1.bf16.msra.mxu0 %v241
  %306 = vmatprep.subr.bf16.mxu0 0
  %307 = vmatpush1.bf16.msra.mxu0 %v240
  %308 = vmatprep.subr.bf16.mxu0 0
  %309 = vmatpush1.bf16.msra.mxu0 %v239
  %310 = vmatprep.subr.bf16.mxu0 0
  %311 = vmatpush1.bf16.msra.mxu0 %v238
  %312 = vmatprep.subr.bf16.mxu0 0
  %313 = vmatpush1.bf16.msra.mxu0 %v237
  %314 = vmatprep.subr.bf16.mxu0 0
  %315 = vmatpush1.bf16.msra.mxu0 %v236
  %316 = vmatprep.subr.bf16.mxu0 0
  %317 = vmatpush2.bf16.msra.mxu0 %v251
  %318 = vmatprep.subr.bf16.mxu0 0
  %319 = vmatpush2.bf16.msra.mxu0 %v250
  %320 = vmatprep.subr.bf16.mxu0 0
  %321 = vmatpush2.bf16.msra.mxu0 %v249
  %322 = vmatprep.subr.bf16.mxu0 0
  %323 = vmatpush2.bf16.msra.mxu0 %v248
  %324 = vmatprep.subr.bf16.mxu0 0
  %325 = vmatpush2.bf16.msra.mxu0 %v247
  %326 = vmatprep.subr.bf16.mxu0 0
  %327 = vmatpush2.bf16.msra.mxu0 %v246
  %328 = vmatprep.subr.bf16.mxu0 0
  %329 = vmatpush2.bf16.msra.mxu0 %v245
  %330 = vmatprep.subr.bf16.mxu0 0
  %331 = vmatpush2.bf16.msra.mxu0 %v244
  %332 = vmatprep.mubr.bf16.mxu0 %v101
  %333 = vmatmul.mubr.bf16.gmra.mxu0 %v100
  %v334 = vpop.f32.mrf.mxu0
  %v335 = vadd.f32 %v92, %v334
  %v336 = vpop.f32.mrf.mxu0
  %v337 = vpop.f32.mrf.mxu0
  %v338 = vpop.f32.mrf.mxu0
  %339 = vdwg.mxu0
  %340 = vmatprep.subr.bf16.mxu0 0
  %341 = vmatpush1.bf16.msra.mxu0 %v259
  %342 = vmatprep.subr.bf16.mxu0 0
  %343 = vmatpush1.bf16.msra.mxu0 %v258
  %344 = vmatprep.subr.bf16.mxu0 0
  %345 = vmatpush1.bf16.msra.mxu0 %v257
  %346 = vmatprep.subr.bf16.mxu0 0
  %347 = vmatpush1.bf16.msra.mxu0 %v256
  %348 = vmatprep.subr.bf16.mxu0 0
  %349 = vmatpush1.bf16.msra.mxu0 %v255
  %350 = vmatprep.subr.bf16.mxu0 0
  %351 = vmatpush1.bf16.msra.mxu0 %v254
  %352 = vmatprep.subr.bf16.mxu0 0
  %353 = vmatpush1.bf16.msra.mxu0 %v253
  %354 = vmatprep.subr.bf16.mxu0 0
  %355 = vmatpush1.bf16.msra.mxu0 %v252
  %356 = vmatprep.subr.bf16.mxu0 0
  %357 = vmatpush2.bf16.msra.mxu0 %v267
  %358 = vmatprep.subr.bf16.mxu0 0
  %359 = vmatpush2.bf16.msra.mxu0 %v266
  %360 = vmatprep.subr.bf16.mxu0 0
  %361 = vmatpush2.bf16.msra.mxu0 %v265
  %362 = vmatprep.subr.bf16.mxu0 0
  %363 = vmatpush2.bf16.msra.mxu0 %v264
  %364 = vmatprep.subr.bf16.mxu0 0
  %365 = vmatpush2.bf16.msra.mxu0 %v263
  %366 = vmatprep.subr.bf16.mxu0 0
  %367 = vmatpush2.bf16.msra.mxu0 %v262
  %368 = vmatprep.subr.bf16.mxu0 0
  %369 = vmatpush2.bf16.msra.mxu0 %v261
  %370 = vmatprep.subr.bf16.mxu0 0
  %371 = vmatpush2.bf16.msra.mxu0 %v260
  %372 = vmatprep.mubr.bf16.mxu0 %v103
  %373 = vmatmul.mubr.bf16.gmra.mxu0 %v102
  %v374 = vpop.f32.mrf.mxu0
  %v375 = vadd.f32 %v335, %v374
  %v376 = vpop.f32.mrf.mxu0
  %v377 = vpop.f32.mrf.mxu0
  %v378 = vpop.f32.mrf.mxu0
  %379 = vdwg.mxu0
  %380 = vst [vmem:[#allocation2] sm:$0xff] %v375
  %v381 = vrot.slane %v375, 4
  %v382 = vadd.f32 %v375, %v381
  %v383 = vrot.slane %v382, 2
  %v384 = vadd.f32 %v382, %v383
  %v385 = vrot.slane %v384, 1
  %v386 = vadd.f32 %v384, %v385
  %s387 = scalar_lea.vmem %s0, 16
  %v388 = vld [vmem:[%s387] sm:$0xff]
  %v389 = vld [vmem:[%s387 + $0x8] sm:$0xff]
  %s390 = scalar_lea.vmem %s1, 256
  %v391 = vld [vmem:[%s390] sm:$0xf]
  %v392 = vld [vmem:[%s390 + $0x4] sm:$0xf]
  %v393 = vld [vmem:[%s390 + $0x8] sm:$0xf]
  %v394 = vld [vmem:[%s390 + $0xc] sm:$0xf]
  %v395 = vld [vmem:[%s390 + $0x10] sm:$0xf]
  %v396 = vld [vmem:[%s390 + $0x14] sm:$0xf]
  %v397 = vld [vmem:[%s390 + $0x18] sm:$0xf]
  %v398 = vld [vmem:[%s390 + $0x1c] sm:$0xf]
  %v399 = vld [vmem:[%s390 + $0x20] sm:$0xf]
  %v400 = vld [vmem:[%s390 + $0x24] sm:$0xf]
  %v401 = vld [vmem:[%s390 + $0x28] sm:$0xf]
  %v402 = vld [vmem:[%s390 + $0x2c] sm:$0xf]
  %v403 = vld [vmem:[%s390 + $0x30] sm:$0xf]
  %v404 = vld [vmem:[%s390 + $0x34] sm:$0xf]
  %v405 = vld [vmem:[%s390 + $0x38] sm:$0xf]
  %v406 = vld [vmem:[%s390 + $0x3c] sm:$0xf]
  %v407 = vld [vmem:[%s390 + $0x40] sm:$0xf]
  %v408 = vld [vmem:[%s390 + $0x44] sm:$0xf]
  %v409 = vld [vmem:[%s390 + $0x48] sm:$0xf]
  %v410 = vld [vmem:[%s390 + $0x4c] sm:$0xf]
  %v411 = vld [vmem:[%s390 + $0x50] sm:$0xf]
  %v412 = vld [vmem:[%s390 + $0x54] sm:$0xf]
  %v413 = vld [vmem:[%s390 + $0x58] sm:$0xf]
  %v414 = vld [vmem:[%s390 + $0x5c] sm:$0xf]
  %v415 = vld [vmem:[%s390 + $0x60] sm:$0xf]
  %v416 = vld [vmem:[%s390 + $0x64] sm:$0xf]
  %v417 = vld [vmem:[%s390 + $0x68] sm:$0xf]
  %v418 = vld [vmem:[%s390 + $0x6c] sm:$0xf]
  %v419 = vld [vmem:[%s390 + $0x70] sm:$0xf]
  %v420 = vld [vmem:[%s390 + $0x74] sm:$0xf]
  %v421 = vld [vmem:[%s390 + $0x78] sm:$0xf]
  %v422 = vld [vmem:[%s390 + $0x7c] sm:$0xf]
  %v423 = vld [vmem:[%s390 + $0x80] sm:$0xf]
  %v424 = vld [vmem:[%s390 + $0x84] sm:$0xf]
  %v425 = vld [vmem:[%s390 + $0x88] sm:$0xf]
  %v426 = vld [vmem:[%s390 + $0x8c] sm:$0xf]
  %v427 = vld [vmem:[%s390 + $0x90] sm:$0xf]
  %v428 = vld [vmem:[%s390 + $0x94] sm:$0xf]
  %v429 = vld [vmem:[%s390 + $0x98] sm:$0xf]
  %v430 = vld [vmem:[%s390 + $0x9c] sm:$0xf]
  %v431 = vld [vmem:[%s390 + $0xa0] sm:$0xf]
  %v432 = vld [vmem:[%s390 + $0xa4] sm:$0xf]
  %v433 = vld [vmem:[%s390 + $0xa8] sm:$0xf]
  %v434 = vld [vmem:[%s390 + $0xac] sm:$0xf]
  %v435 = vld [vmem:[%s390 + $0xb0] sm:$0xf]
  %v436 = vld [vmem:[%s390 + $0xb4] sm:$0xf]
  %v437 = vld [vmem:[%s390 + $0xb8] sm:$0xf]
  %v438 = vld [vmem:[%s390 + $0xbc] sm:$0xf]
  %v439 = vld [vmem:[%s390 + $0xc0] sm:$0xf]
  %v440 = vld [vmem:[%s390 + $0xc4] sm:$0xf]
  %v441 = vld [vmem:[%s390 + $0xc8] sm:$0xf]
  %v442 = vld [vmem:[%s390 + $0xcc] sm:$0xf]
  %v443 = vld [vmem:[%s390 + $0xd0] sm:$0xf]
  %v444 = vld [vmem:[%s390 + $0xd4] sm:$0xf]
  %v445 = vld [vmem:[%s390 + $0xd8] sm:$0xf]
  %v446 = vld [vmem:[%s390 + $0xdc] sm:$0xf]
  %v447 = vld [vmem:[%s390 + $0xe0] sm:$0xf]
  %v448 = vld [vmem:[%s390 + $0xe4] sm:$0xf]
  %v449 = vld [vmem:[%s390 + $0xe8] sm:$0xf]
  %v450 = vld [vmem:[%s390 + $0xec] sm:$0xf]
  %v451 = vld [vmem:[%s390 + $0xf0] sm:$0xf]
  %v452 = vld [vmem:[%s390 + $0xf4] sm:$0xf]
  %v453 = vld [vmem:[%s390 + $0xf8] sm:$0xf]
  %v454 = vld [vmem:[%s390 + $0xfc] sm:$0xf]
  %v455 = vld [vmem:[%s2] sm:$0x1]
  %v457 = vlaneseq
  %v458 = vshrl.u32 %v457, 7
  %v459 = vsub.s32 0, %v458
  %v460 = vrot.slane %v455, %v459
  %v464 = vunpack.c.l.b16 %v388
  %v465 = vunpack.c.h.b16 %v388
  %v466 = vunpack.c.l.b16 %v389
  %v467 = vunpack.c.h.b16 %v389
  %v468 = vpack.c.b16 %v464, %v464
  %v469 = vpack.c.b16 %v465, %v465
  %v470 = vpack.c.b16 %v466, %v466
  %v471 = vpack.c.b16 %v467, %v467
  %v540 = vunpack.c.l.b16 %v391
  %v541 = vunpack.c.l.b16 %v392
  %v542 = vunpack.c.l.b16 %v393
  %v543 = vunpack.c.l.b16 %v394
  %v544 = vunpack.c.l.b16 %v395
  %v545 = vunpack.c.l.b16 %v396
  %v546 = vunpack.c.l.b16 %v397
  %v547 = vunpack.c.l.b16 %v398
  %v548 = vunpack.c.l.b16 %v399
  %v549 = vunpack.c.l.b16 %v400
  %v550 = vunpack.c.l.b16 %v401
  %v551 = vunpack.c.l.b16 %v402
  %v552 = vunpack.c.l.b16 %v403
  %v553 = vunpack.c.l.b16 %v404
  %v554 = vunpack.c.l.b16 %v405
  %v555 = vunpack.c.l.b16 %v406
  %v556 = vunpack.c.l.b16 %v407
  %v557 = vunpack.c.l.b16 %v408
  %v558 = vunpack.c.l.b16 %v409
  %v559 = vunpack.c.l.b16 %v410
  %v560 = vunpack.c.l.b16 %v411
  %v561 = vunpack.c.l.b16 %v412
  %v562 = vunpack.c.l.b16 %v413
  %v563 = vunpack.c.l.b16 %v414
  %v564 = vunpack.c.l.b16 %v415
  %v565 = vunpack.c.l.b16 %v416
  %v566 = vunpack.c.l.b16 %v417
  %v567 = vunpack.c.l.b16 %v418
  %v568 = vunpack.c.l.b16 %v419
  %v569 = vunpack.c.l.b16 %v420
  %v570 = vunpack.c.l.b16 %v421
  %v571 = vunpack.c.l.b16 %v422
  %v572 = vunpack.c.l.b16 %v423
  %v573 = vunpack.c.l.b16 %v424
  %v574 = vunpack.c.l.b16 %v425
  %v575 = vunpack.c.l.b16 %v426
  %v576 = vunpack.c.l.b16 %v427
  %v577 = vunpack.c.l.b16 %v428
  %v578 = vunpack.c.l.b16 %v429
  %v579 = vunpack.c.l.b16 %v430
  %v580 = vunpack.c.l.b16 %v431
  %v581 = vunpack.c.l.b16 %v432
  %v582 = vunpack.c.l.b16 %v433
  %v583 = vunpack.c.l.b16 %v434
  %v584 = vunpack.c.l.b16 %v435
  %v585 = vunpack.c.l.b16 %v436
  %v586 = vunpack.c.l.b16 %v437
  %v587 = vunpack.c.l.b16 %v438
  %v588 = vunpack.c.l.b16 %v439
  %v589 = vunpack.c.l.b16 %v440
  %v590 = vunpack.c.l.b16 %v441
  %v591 = vunpack.c.l.b16 %v442
  %v592 = vunpack.c.l.b16 %v443
  %v593 = vunpack.c.l.b16 %v444
  %v594 = vunpack.c.l.b16 %v445
  %v595 = vunpack.c.l.b16 %v446
  %v596 = vunpack.c.l.b16 %v447
  %v597 = vunpack.c.l.b16 %v448
  %v598 = vunpack.c.l.b16 %v449
  %v599 = vunpack.c.l.b16 %v450
  %v600 = vunpack.c.l.b16 %v451
  %v601 = vunpack.c.l.b16 %v452
  %v602 = vunpack.c.l.b16 %v453
  %v603 = vunpack.c.l.b16 %v454
  %v604 = vpack.c.b16 %v541, %v540
  %v605 = vpack.c.b16 %v543, %v542
  %v606 = vpack.c.b16 %v545, %v544
  %v607 = vpack.c.b16 %v547, %v546
  %v608 = vpack.c.b16 %v549, %v548
  %v609 = vpack.c.b16 %v551, %v550
  %v610 = vpack.c.b16 %v553, %v552
  %v611 = vpack.c.b16 %v555, %v554
  %v612 = vpack.c.b16 %v557, %v556
  %v613 = vpack.c.b16 %v559, %v558
  %v614 = vpack.c.b16 %v561, %v560
  %v615 = vpack.c.b16 %v563, %v562
  %v616 = vpack.c.b16 %v565, %v564
  %v617 = vpack.c.b16 %v567, %v566
  %v618 = vpack.c.b16 %v569, %v568
  %v619 = vpack.c.b16 %v571, %v570
  %v620 = vpack.c.b16 %v573, %v572
  %v621 = vpack.c.b16 %v575, %v574
  %v622 = vpack.c.b16 %v577, %v576
  %v623 = vpack.c.b16 %v579, %v578
  %v624 = vpack.c.b16 %v581, %v580
  %v625 = vpack.c.b16 %v583, %v582
  %v626 = vpack.c.b16 %v585, %v584
  %v627 = vpack.c.b16 %v587, %v586
  %v628 = vpack.c.b16 %v589, %v588
  %v629 = vpack.c.b16 %v591, %v590
  %v630 = vpack.c.b16 %v593, %v592
  %v631 = vpack.c.b16 %v595, %v594
  %v632 = vpack.c.b16 %v597, %v596
  %v633 = vpack.c.b16 %v599, %v598
  %v634 = vpack.c.b16 %v601, %v600
  %v635 = vpack.c.b16 %v603, %v602
  %668 = vmatprep.subr.bf16.mxu0 0
  %669 = vmatpush1.bf16.msra.mxu0 %v611
  %670 = vmatprep.subr.bf16.mxu0 0
  %671 = vmatpush1.bf16.msra.mxu0 %v610
  %672 = vmatprep.subr.bf16.mxu0 0
  %673 = vmatpush1.bf16.msra.mxu0 %v609
  %674 = vmatprep.subr.bf16.mxu0 0
  %675 = vmatpush1.bf16.msra.mxu0 %v608
  %676 = vmatprep.subr.bf16.mxu0 0
  %677 = vmatpush1.bf16.msra.mxu0 %v607
  %678 = vmatprep.subr.bf16.mxu0 0
  %679 = vmatpush1.bf16.msra.mxu0 %v606
  %680 = vmatprep.subr.bf16.mxu0 0
  %681 = vmatpush1.bf16.msra.mxu0 %v605
  %682 = vmatprep.subr.bf16.mxu0 0
  %683 = vmatpush1.bf16.msra.mxu0 %v604
  %684 = vmatprep.subr.bf16.mxu0 0
  %685 = vmatpush2.bf16.msra.mxu0 %v619
  %686 = vmatprep.subr.bf16.mxu0 0
  %687 = vmatpush2.bf16.msra.mxu0 %v618
  %688 = vmatprep.subr.bf16.mxu0 0
  %689 = vmatpush2.bf16.msra.mxu0 %v617
  %690 = vmatprep.subr.bf16.mxu0 0
  %691 = vmatpush2.bf16.msra.mxu0 %v616
  %692 = vmatprep.subr.bf16.mxu0 0
  %693 = vmatpush2.bf16.msra.mxu0 %v615
  %694 = vmatprep.subr.bf16.mxu0 0
  %695 = vmatpush2.bf16.msra.mxu0 %v614
  %696 = vmatprep.subr.bf16.mxu0 0
  %697 = vmatpush2.bf16.msra.mxu0 %v613
  %698 = vmatprep.subr.bf16.mxu0 0
  %699 = vmatpush2.bf16.msra.mxu0 %v612
  %700 = vmatprep.mubr.bf16.mxu0 %v469
  %701 = vmatmul.mubr.bf16.gmra.mxu0 %v468
  %v702 = vpop.f32.mrf.mxu0
  %v703 = vadd.f32 %v460, %v702
  %v704 = vpop.f32.mrf.mxu0
  %v705 = vpop.f32.mrf.mxu0
  %v706 = vpop.f32.mrf.mxu0
  %707 = vdwg.mxu0
  %708 = vmatprep.subr.bf16.mxu0 0
  %709 = vmatpush1.bf16.msra.mxu0 %v627
  %710 = vmatprep.subr.bf16.mxu0 0
  %711 = vmatpush1.bf16.msra.mxu0 %v626
  %712 = vmatprep.subr.bf16.mxu0 0
  %713 = vmatpush1.bf16.msra.mxu0 %v625
  %714 = vmatprep.subr.bf16.mxu0 0
  %715 = vmatpush1.bf16.msra.mxu0 %v624
  %716 = vmatprep.subr.bf16.mxu0 0
  %717 = vmatpush1.bf16.msra.mxu0 %v623
  %718 = vmatprep.subr.bf16.mxu0 0
  %719 = vmatpush1.bf16.msra.mxu0 %v622
  %720 = vmatprep.subr.bf16.mxu0 0
  %721 = vmatpush1.bf16.msra.mxu0 %v621
  %722 = vmatprep.subr.bf16.mxu0 0
  %723 = vmatpush1.bf16.msra.mxu0 %v620
  %724 = vmatprep.subr.bf16.mxu0 0
  %725 = vmatpush2.bf16.msra.mxu0 %v635
  %726 = vmatprep.subr.bf16.mxu0 0
  %727 = vmatpush2.bf16.msra.mxu0 %v634
  %728 = vmatprep.subr.bf16.mxu0 0
  %729 = vmatpush2.bf16.msra.mxu0 %v633
  %730 = vmatprep.subr.bf16.mxu0 0
  %731 = vmatpush2.bf16.msra.mxu0 %v632
  %732 = vmatprep.subr.bf16.mxu0 0
  %733 = vmatpush2.bf16.msra.mxu0 %v631
  %734 = vmatprep.subr.bf16.mxu0 0
  %735 = vmatpush2.bf16.msra.mxu0 %v630
  %736 = vmatprep.subr.bf16.mxu0 0
  %737 = vmatpush2.bf16.msra.mxu0 %v629
  %738 = vmatprep.subr.bf16.mxu0 0
  %739 = vmatpush2.bf16.msra.mxu0 %v628
  %740 = vmatprep.mubr.bf16.mxu0 %v471
  %741 = vmatmul.mubr.bf16.gmra.mxu0 %v470
  %v742 = vpop.f32.mrf.mxu0
  %v743 = vadd.f32 %v703, %v742
  %v744 = vpop.f32.mrf.mxu0
  %v745 = vpop.f32.mrf.mxu0
  %v746 = vpop.f32.mrf.mxu0
  %747 = vdwg.mxu0
  %s748 = scalar_lea.vmem [#allocation2], 8
  %749 = vst [vmem:[%s748] sm:$0xff] %v743
  %v750 = vrot.slane %v743, 4
  %v751 = vadd.f32 %v743, %v750
  %v752 = vrot.slane %v751, 2
  %v753 = vadd.f32 %v751, %v752
  %v754 = vrot.slane %v753, 1
  %v755 = vadd.f32 %v753, %v754
  %v756 = vadd.f32 %v386, %v755
  %s757 = scalar_lea.vmem %s0, 32
  %v758 = vld [vmem:[%s757] sm:$0xff]
  %v759 = vld [vmem:[%s757 + $0x8] sm:$0xff]
  %s760 = scalar_lea.vmem %s1, 512
  %v761 = vld [vmem:[%s760] sm:$0xf]
  %v762 = vld [vmem:[%s760 + $0x4] sm:$0xf]
  %v763 = vld [vmem:[%s760 + $0x8] sm:$0xf]
  %v764 = vld [vmem:[%s760 + $0xc] sm:$0xf]
  %v765 = vld [vmem:[%s760 + $0x10] sm:$0xf]
  %v766 = vld [vmem:[%s760 + $0x14] sm:$0xf]
  %v767 = vld [vmem:[%s760 + $0x18] sm:$0xf]
  %v768 = vld [vmem:[%s760 + $0x1c] sm:$0xf]
  %v769 = vld [vmem:[%s760 + $0x20] sm:$0xf]
  %v770 = vld [vmem:[%s760 + $0x24] sm:$0xf]
  %v771 = vld [vmem:[%s760 + $0x28] sm:$0xf]
  %v772 = vld [vmem:[%s760 + $0x2c] sm:$0xf]
  %v773 = vld [vmem:[%s760 + $0x30] sm:$0xf]
  %v774 = vld [vmem:[%s760 + $0x34] sm:$0xf]
  %v775 = vld [vmem:[%s760 + $0x38] sm:$0xf]
  %v776 = vld [vmem:[%s760 + $0x3c] sm:$0xf]
  %v777 = vld [vmem:[%s760 + $0x40] sm:$0xf]
  %v778 = vld [vmem:[%s760 + $0x44] sm:$0xf]
  %v779 = vld [vmem:[%s760 + $0x48] sm:$0xf]
  %v780 = vld [vmem:[%s760 + $0x4c] sm:$0xf]
  %v781 = vld [vmem:[%s760 + $0x50] sm:$0xf]
  %v782 = vld [vmem:[%s760 + $0x54] sm:$0xf]
  %v783 = vld [vmem:[%s760 + $0x58] sm:$0xf]
  %v784 = vld [vmem:[%s760 + $0x5c] sm:$0xf]
  %v785 = vld [vmem:[%s760 + $0x60] sm:$0xf]
  %v786 = vld [vmem:[%s760 + $0x64] sm:$0xf]
  %v787 = vld [vmem:[%s760 + $0x68] sm:$0xf]
  %v788 = vld [vmem:[%s760 + $0x6c] sm:$0xf]
  %v789 = vld [vmem:[%s760 + $0x70] sm:$0xf]
  %v790 = vld [vmem:[%s760 + $0x74] sm:$0xf]
  %v791 = vld [vmem:[%s760 + $0x78] sm:$0xf]
  %v792 = vld [vmem:[%s760 + $0x7c] sm:$0xf]
  %v793 = vld [vmem:[%s760 + $0x80] sm:$0xf]
  %v794 = vld [vmem:[%s760 + $0x84] sm:$0xf]
  %v795 = vld [vmem:[%s760 + $0x88] sm:$0xf]
  %v796 = vld [vmem:[%s760 + $0x8c] sm:$0xf]
  %v797 = vld [vmem:[%s760 + $0x90] sm:$0xf]
  %v798 = vld [vmem:[%s760 + $0x94] sm:$0xf]
  %v799 = vld [vmem:[%s760 + $0x98] sm:$0xf]
  %v800 = vld [vmem:[%s760 + $0x9c] sm:$0xf]
  %v801 = vld [vmem:[%s760 + $0xa0] sm:$0xf]
  %v802 = vld [vmem:[%s760 + $0xa4] sm:$0xf]
  %v803 = vld [vmem:[%s760 + $0xa8] sm:$0xf]
  %v804 = vld [vmem:[%s760 + $0xac] sm:$0xf]
  %v805 = vld [vmem:[%s760 + $0xb0] sm:$0xf]
  %v806 = vld [vmem:[%s760 + $0xb4] sm:$0xf]
  %v807 = vld [vmem:[%s760 + $0xb8] sm:$0xf]
  %v808 = vld [vmem:[%s760 + $0xbc] sm:$0xf]
  %v809 = vld [vmem:[%s760 + $0xc0] sm:$0xf]
  %v810 = vld [vmem:[%s760 + $0xc4] sm:$0xf]
  %v811 = vld [vmem:[%s760 + $0xc8] sm:$0xf]
  %v812 = vld [vmem:[%s760 + $0xcc] sm:$0xf]
  %v813 = vld [vmem:[%s760 + $0xd0] sm:$0xf]
  %v814 = vld [vmem:[%s760 + $0xd4] sm:$0xf]
  %v815 = vld [vmem:[%s760 + $0xd8] sm:$0xf]
  %v816 = vld [vmem:[%s760 + $0xdc] sm:$0xf]
  %v817 = vld [vmem:[%s760 + $0xe0] sm:$0xf]
  %v818 = vld [vmem:[%s760 + $0xe4] sm:$0xf]
  %v819 = vld [vmem:[%s760 + $0xe8] sm:$0xf]
  %v820 = vld [vmem:[%s760 + $0xec] sm:$0xf]
  %v821 = vld [vmem:[%s760 + $0xf0] sm:$0xf]
  %v822 = vld [vmem:[%s760 + $0xf4] sm:$0xf]
  %v823 = vld [vmem:[%s760 + $0xf8] sm:$0xf]
  %v824 = vld [vmem:[%s760 + $0xfc] sm:$0xf]
  %v825 = vld [vmem:[%s2] sm:$0x1]
  %v827 = vlaneseq
  %v828 = vshrl.u32 %v827, 7
  %v829 = vsub.s32 0, %v828
  %v830 = vrot.slane %v825, %v829
  %v834 = vunpack.c.l.b16 %v758
  %v835 = vunpack.c.h.b16 %v758
  %v836 = vunpack.c.l.b16 %v759
  %v837 = vunpack.c.h.b16 %v759
  %v838 = vpack.c.b16 %v834, %v834
  %v839 = vpack.c.b16 %v835, %v835
  %v840 = vpack.c.b16 %v836, %v836
  %v841 = vpack.c.b16 %v837, %v837
  %v910 = vunpack.c.l.b16 %v761
  %v911 = vunpack.c.l.b16 %v762
  %v912 = vunpack.c.l.b16 %v763
  %v913 = vunpack.c.l.b16 %v764
  %v914 = vunpack.c.l.b16 %v765
  %v915 = vunpack.c.l.b16 %v766
  %v916 = vunpack.c.l.b16 %v767
  %v917 = vunpack.c.l.b16 %v768
  %v918 = vunpack.c.l.b16 %v769
  %v919 = vunpack.c.l.b16 %v770
  %v920 = vunpack.c.l.b16 %v771
  %v921 = vunpack.c.l.b16 %v772
  %v922 = vunpack.c.l.b16 %v773
  %v923 = vunpack.c.l.b16 %v774
  %v924 = vunpack.c.l.b16 %v775
  %v925 = vunpack.c.l.b16 %v776
  %v926 = vunpack.c.l.b16 %v777
  %v927 = vunpack.c.l.b16 %v778
  %v928 = vunpack.c.l.b16 %v779
  %v929 = vunpack.c.l.b16 %v780
  %v930 = vunpack.c.l.b16 %v781
  %v931 = vunpack.c.l.b16 %v782
  %v932 = vunpack.c.l.b16 %v783
  %v933 = vunpack.c.l.b16 %v784
  %v934 = vunpack.c.l.b16 %v785
  %v935 = vunpack.c.l.b16 %v786
  %v936 = vunpack.c.l.b16 %v787
  %v937 = vunpack.c.l.b16 %v788
  %v938 = vunpack.c.l.b16 %v789
  %v939 = vunpack.c.l.b16 %v790
  %v940 = vunpack.c.l.b16 %v791
  %v941 = vunpack.c.l.b16 %v792
  %v942 = vunpack.c.l.b16 %v793
  %v943 = vunpack.c.l.b16 %v794
  %v944 = vunpack.c.l.b16 %v795
  %v945 = vunpack.c.l.b16 %v796
  %v946 = vunpack.c.l.b16 %v797
  %v947 = vunpack.c.l.b16 %v798
  %v948 = vunpack.c.l.b16 %v799
  %v949 = vunpack.c.l.b16 %v800
  %v950 = vunpack.c.l.b16 %v801
  %v951 = vunpack.c.l.b16 %v802
  %v952 = vunpack.c.l.b16 %v803
  %v953 = vunpack.c.l.b16 %v804
  %v954 = vunpack.c.l.b16 %v805
  %v955 = vunpack.c.l.b16 %v806
  %v956 = vunpack.c.l.b16 %v807
  %v957 = vunpack.c.l.b16 %v808
  %v958 = vunpack.c.l.b16 %v809
  %v959 = vunpack.c.l.b16 %v810
  %v960 = vunpack.c.l.b16 %v811
  %v961 = vunpack.c.l.b16 %v812
  %v962 = vunpack.c.l.b16 %v813
  %v963 = vunpack.c.l.b16 %v814
  %v964 = vunpack.c.l.b16 %v815
  %v965 = vunpack.c.l.b16 %v816
  %v966 = vunpack.c.l.b16 %v817
  %v967 = vunpack.c.l.b16 %v818
  %v968 = vunpack.c.l.b16 %v819
  %v969 = vunpack.c.l.b16 %v820
  %v970 = vunpack.c.l.b16 %v821
  %v971 = vunpack.c.l.b16 %v822
  %v972 = vunpack.c.l.b16 %v823
  %v973 = vunpack.c.l.b16 %v824
  %v974 = vpack.c.b16 %v911, %v910
  %v975 = vpack.c.b16 %v913, %v912
  %v976 = vpack.c.b16 %v915, %v914
  %v977 = vpack.c.b16 %v917, %v916
  %v978 = vpack.c.b16 %v919, %v918
  %v979 = vpack.c.b16 %v921, %v920
  %v980 = vpack.c.b16 %v923, %v922
  %v981 = vpack.c.b16 %v925, %v924
  %v982 = vpack.c.b16 %v927, %v926
  %v983 = vpack.c.b16 %v929, %v928
  %v984 = vpack.c.b16 %v931, %v930
  %v985 = vpack.c.b16 %v933, %v932
  %v986 = vpack.c.b16 %v935, %v934
  %v987 = vpack.c.b16 %v937, %v936
  %v988 = vpack.c.b16 %v939, %v938
  %v989 = vpack.c.b16 %v941, %v940
  %v990 = vpack.c.b16 %v943, %v942
  %v991 = vpack.c.b16 %v945, %v944
  %v992 = vpack.c.b16 %v947, %v946
  %v993 = vpack.c.b16 %v949, %v948
  %v994 = vpack.c.b16 %v951, %v950
  %v995 = vpack.c.b16 %v953, %v952
  %v996 = vpack.c.b16 %v955, %v954
  %v997 = vpack.c.b16 %v957, %v956
  %v998 = vpack.c.b16 %v959, %v958
  %v999 = vpack.c.b16 %v961, %v960
  %v1000 = vpack.c.b16 %v963, %v962
  %v1001 = vpack.c.b16 %v965, %v964
  %v1002 = vpack.c.b16 %v967, %v966
  %v1003 = vpack.c.b16 %v969, %v968
  %v1004 = vpack.c.b16 %v971, %v970
  %v1005 = vpack.c.b16 %v973, %v972
  %1038 = vmatprep.subr.bf16.mxu0 0
  %1039 = vmatpush1.bf16.msra.mxu0 %v981
  %1040 = vmatprep.subr.bf16.mxu0 0
  %1041 = vmatpush1.bf16.msra.mxu0 %v980
  %1042 = vmatprep.subr.bf16.mxu0 0
  %1043 = vmatpush1.bf16.msra.mxu0 %v979
  %1044 = vmatprep.subr.bf16.mxu0 0
  %1045 = vmatpush1.bf16.msra.mxu0 %v978
  %1046 = vmatprep.subr.bf16.mxu0 0
  %1047 = vmatpush1.bf16.msra.mxu0 %v977
  %1048 = vmatprep.subr.bf16.mxu0 0
  %1049 = vmatpush1.bf16.msra.mxu0 %v976
  %1050 = vmatprep.subr.bf16.mxu0 0
  %1051 = vmatpush1.bf16.msra.mxu0 %v975
  %1052 = vmatprep.subr.bf16.mxu0 0
  %1053 = vmatpush1.bf16.msra.mxu0 %v974
  %1054 = vmatprep.subr.bf16.mxu0 0
  %1055 = vmatpush2.bf16.msra.mxu0 %v989
  %1056 = vmatprep.subr.bf16.mxu0 0
  %1057 = vmatpush2.bf16.msra.mxu0 %v988
  %1058 = vmatprep.subr.bf16.mxu0 0
  %1059 = vmatpush2.bf16.msra.mxu0 %v987
  %1060 = vmatprep.subr.bf16.mxu0 0
  %1061 = vmatpush2.bf16.msra.mxu0 %v986
  %1062 = vmatprep.subr.bf16.mxu0 0
  %1063 = vmatpush2.bf16.msra.mxu0 %v985
  %1064 = vmatprep.subr.bf16.mxu0 0
  %1065 = vmatpush2.bf16.msra.mxu0 %v984
  %1066 = vmatprep.subr.bf16.mxu0 0
  %1067 = vmatpush2.bf16.msra.mxu0 %v983
  %1068 = vmatprep.subr.bf16.mxu0 0
  %1069 = vmatpush2.bf16.msra.mxu0 %v982
  %1070 = vmatprep.mubr.bf16.mxu0 %v839
  %1071 = vmatmul.mubr.bf16.gmra.mxu0 %v838
  %v1072 = vpop.f32.mrf.mxu0
  %v1073 = vadd.f32 %v830, %v1072
  %v1074 = vpop.f32.mrf.mxu0
  %v1075 = vpop.f32.mrf.mxu0
  %v1076 = vpop.f32.mrf.mxu0
  %1077 = vdwg.mxu0
  %1078 = vmatprep.subr.bf16.mxu0 0
  %1079 = vmatpush1.bf16.msra.mxu0 %v997
  %1080 = vmatprep.subr.bf16.mxu0 0
  %1081 = vmatpush1.bf16.msra.mxu0 %v996
  %1082 = vmatprep.subr.bf16.mxu0 0
  %1083 = vmatpush1.bf16.msra.mxu0 %v995
  %1084 = vmatprep.subr.bf16.mxu0 0
  %1085 = vmatpush1.bf16.msra.mxu0 %v994
  %1086 = vmatprep.subr.bf16.mxu0 0
  %1087 = vmatpush1.bf16.msra.mxu0 %v993
  %1088 = vmatprep.subr.bf16.mxu0 0
  %1089 = vmatpush1.bf16.msra.mxu0 %v992
  %1090 = vmatprep.subr.bf16.mxu0 0
  %1091 = vmatpush1.bf16.msra.mxu0 %v991
  %1092 = vmatprep.subr.bf16.mxu0 0
  %1093 = vmatpush1.bf16.msra.mxu0 %v990
  %1094 = vmatprep.subr.bf16.mxu0 0
  %1095 = vmatpush2.bf16.msra.mxu0 %v1005
  %1096 = vmatprep.subr.bf16.mxu0 0
  %1097 = vmatpush2.bf16.msra.mxu0 %v1004
  %1098 = vmatprep.subr.bf16.mxu0 0
  %1099 = vmatpush2.bf16.msra.mxu0 %v1003
  %1100 = vmatprep.subr.bf16.mxu0 0
  %1101 = vmatpush2.bf16.msra.mxu0 %v1002
  %1102 = vmatprep.subr.bf16.mxu0 0
  %1103 = vmatpush2.bf16.msra.mxu0 %v1001
  %1104 = vmatprep.subr.bf16.mxu0 0
  %1105 = vmatpush2.bf16.msra.mxu0 %v1000
  %1106 = vmatprep.subr.bf16.mxu0 0
  %1107 = vmatpush2.bf16.msra.mxu0 %v999
  %1108 = vmatprep.subr.bf16.mxu0 0
  %1109 = vmatpush2.bf16.msra.mxu0 %v998
  %1110 = vmatprep.mubr.bf16.mxu0 %v841
  %1111 = vmatmul.mubr.bf16.gmra.mxu0 %v840
  %v1112 = vpop.f32.mrf.mxu0
  %v1113 = vadd.f32 %v1073, %v1112
  %v1114 = vpop.f32.mrf.mxu0
  %v1115 = vpop.f32.mrf.mxu0
  %v1116 = vpop.f32.mrf.mxu0
  %1117 = vdwg.mxu0
  %s1118 = scalar_lea.vmem [#allocation2], 16
  %1119 = vst [vmem:[%s1118] sm:$0xff] %v1113
  %v1120 = vrot.slane %v1113, 4
  %v1121 = vadd.f32 %v1113, %v1120
  %v1122 = vrot.slane %v1121, 2
  %v1123 = vadd.f32 %v1121, %v1122
  %v1124 = vrot.slane %v1123, 1
  %v1125 = vadd.f32 %v1123, %v1124
  %v1126 = vadd.f32 %v756, %v1125
  %s1127 = scalar_lea.vmem %s0, 48
  %v1128 = vld [vmem:[%s1127] sm:$0xff]
  %v1129 = vld [vmem:[%s1127 + $0x8] sm:$0xff]
  %s1130 = scalar_lea.vmem %s1, 768
  %v1131 = vld [vmem:[%s1130] sm:$0xf]
  %v1132 = vld [vmem:[%s1130 + $0x4] sm:$0xf]
  %v1133 = vld [vmem:[%s1130 + $0x8] sm:$0xf]
  %v1134 = vld [vmem:[%s1130 + $0xc] sm:$0xf]
  %v1135 = vld [vmem:[%s1130 + $0x10] sm:$0xf]
  %v1136 = vld [vmem:[%s1130 + $0x14] sm:$0xf]
  %v1137 = vld [vmem:[%s1130 + $0x18] sm:$0xf]
  %v1138 = vld [vmem:[%s1130 + $0x1c] sm:$0xf]
  %v1139 = vld [vmem:[%s1130 + $0x20] sm:$0xf]
  %v1140 = vld [vmem:[%s1130 + $0x24] sm:$0xf]
  %v1141 = vld [vmem:[%s1130 + $0x28] sm:$0xf]
  %v1142 = vld [vmem:[%s1130 + $0x2c] sm:$0xf]
  %v1143 = vld [vmem:[%s1130 + $0x30] sm:$0xf]
  %v1144 = vld [vmem:[%s1130 + $0x34] sm:$0xf]
  %v1145 = vld [vmem:[%s1130 + $0x38] sm:$0xf]
  %v1146 = vld [vmem:[%s1130 + $0x3c] sm:$0xf]
  %v1147 = vld [vmem:[%s1130 + $0x40] sm:$0xf]
  %v1148 = vld [vmem:[%s1130 + $0x44] sm:$0xf]
  %v1149 = vld [vmem:[%s1130 + $0x48] sm:$0xf]
  %v1150 = vld [vmem:[%s1130 + $0x4c] sm:$0xf]
  %v1151 = vld [vmem:[%s1130 + $0x50] sm:$0xf]
  %v1152 = vld [vmem:[%s1130 + $0x54] sm:$0xf]
  %v1153 = vld [vmem:[%s1130 + $0x58] sm:$0xf]
  %v1154 = vld [vmem:[%s1130 + $0x5c] sm:$0xf]
  %v1155 = vld [vmem:[%s1130 + $0x60] sm:$0xf]
  %v1156 = vld [vmem:[%s1130 + $0x64] sm:$0xf]
  %v1157 = vld [vmem:[%s1130 + $0x68] sm:$0xf]
  %v1158 = vld [vmem:[%s1130 + $0x6c] sm:$0xf]
  %v1159 = vld [vmem:[%s1130 + $0x70] sm:$0xf]
  %v1160 = vld [vmem:[%s1130 + $0x74] sm:$0xf]
  %v1161 = vld [vmem:[%s1130 + $0x78] sm:$0xf]
  %v1162 = vld [vmem:[%s1130 + $0x7c] sm:$0xf]
  %v1163 = vld [vmem:[%s1130 + $0x80] sm:$0xf]
  %v1164 = vld [vmem:[%s1130 + $0x84] sm:$0xf]
  %v1165 = vld [vmem:[%s1130 + $0x88] sm:$0xf]
  %v1166 = vld [vmem:[%s1130 + $0x8c] sm:$0xf]
  %v1167 = vld [vmem:[%s1130 + $0x90] sm:$0xf]
  %v1168 = vld [vmem:[%s1130 + $0x94] sm:$0xf]
  %v1169 = vld [vmem:[%s1130 + $0x98] sm:$0xf]
  %v1170 = vld [vmem:[%s1130 + $0x9c] sm:$0xf]
  %v1171 = vld [vmem:[%s1130 + $0xa0] sm:$0xf]
  %v1172 = vld [vmem:[%s1130 + $0xa4] sm:$0xf]
  %v1173 = vld [vmem:[%s1130 + $0xa8] sm:$0xf]
  %v1174 = vld [vmem:[%s1130 + $0xac] sm:$0xf]
  %v1175 = vld [vmem:[%s1130 + $0xb0] sm:$0xf]
  %v1176 = vld [vmem:[%s1130 + $0xb4] sm:$0xf]
  %v1177 = vld [vmem:[%s1130 + $0xb8] sm:$0xf]
  %v1178 = vld [vmem:[%s1130 + $0xbc] sm:$0xf]
  %v1179 = vld [vmem:[%s1130 + $0xc0] sm:$0xf]
  %v1180 = vld [vmem:[%s1130 + $0xc4] sm:$0xf]
  %v1181 = vld [vmem:[%s1130 + $0xc8] sm:$0xf]
  %v1182 = vld [vmem:[%s1130 + $0xcc] sm:$0xf]
  %v1183 = vld [vmem:[%s1130 + $0xd0] sm:$0xf]
  %v1184 = vld [vmem:[%s1130 + $0xd4] sm:$0xf]
  %v1185 = vld [vmem:[%s1130 + $0xd8] sm:$0xf]
  %v1186 = vld [vmem:[%s1130 + $0xdc] sm:$0xf]
  %v1187 = vld [vmem:[%s1130 + $0xe0] sm:$0xf]
  %v1188 = vld [vmem:[%s1130 + $0xe4] sm:$0xf]
  %v1189 = vld [vmem:[%s1130 + $0xe8] sm:$0xf]
  %v1190 = vld [vmem:[%s1130 + $0xec] sm:$0xf]
  %v1191 = vld [vmem:[%s1130 + $0xf0] sm:$0xf]
  %v1192 = vld [vmem:[%s1130 + $0xf4] sm:$0xf]
  %v1193 = vld [vmem:[%s1130 + $0xf8] sm:$0xf]
  %v1194 = vld [vmem:[%s1130 + $0xfc] sm:$0xf]
  %v1195 = vld [vmem:[%s2] sm:$0x1]
  %v1197 = vlaneseq
  %v1198 = vshrl.u32 %v1197, 7
  %v1199 = vsub.s32 0, %v1198
  %v1200 = vrot.slane %v1195, %v1199
  %v1204 = vunpack.c.l.b16 %v1128
  %v1205 = vunpack.c.h.b16 %v1128
  %v1206 = vunpack.c.l.b16 %v1129
  %v1207 = vunpack.c.h.b16 %v1129
  %v1208 = vpack.c.b16 %v1204, %v1204
  %v1209 = vpack.c.b16 %v1205, %v1205
  %v1210 = vpack.c.b16 %v1206, %v1206
  %v1211 = vpack.c.b16 %v1207, %v1207
  %v1280 = vunpack.c.l.b16 %v1131
  %v1281 = vunpack.c.l.b16 %v1132
  %v1282 = vunpack.c.l.b16 %v1133
  %v1283 = vunpack.c.l.b16 %v1134
  %v1284 = vunpack.c.l.b16 %v1135
  %v1285 = vunpack.c.l.b16 %v1136
  %v1286 = vunpack.c.l.b16 %v1137
  %v1287 = vunpack.c.l.b16 %v1138
  %v1288 = vunpack.c.l.b16 %v1139
  %v1289 = vunpack.c.l.b16 %v1140
  %v1290 = vunpack.c.l.b16 %v1141
  %v1291 = vunpack.c.l.b16 %v1142
  %v1292 = vunpack.c.l.b16 %v1143
  %v1293 = vunpack.c.l.b16 %v1144
  %v1294 = vunpack.c.l.b16 %v1145
  %v1295 = vunpack.c.l.b16 %v1146
  %v1296 = vunpack.c.l.b16 %v1147
  %v1297 = vunpack.c.l.b16 %v1148
  %v1298 = vunpack.c.l.b16 %v1149
  %v1299 = vunpack.c.l.b16 %v1150
  %v1300 = vunpack.c.l.b16 %v1151
  %v1301 = vunpack.c.l.b16 %v1152
  %v1302 = vunpack.c.l.b16 %v1153
  %v1303 = vunpack.c.l.b16 %v1154
  %v1304 = vunpack.c.l.b16 %v1155
  %v1305 = vunpack.c.l.b16 %v1156
  %v1306 = vunpack.c.l.b16 %v1157
  %v1307 = vunpack.c.l.b16 %v1158
  %v1308 = vunpack.c.l.b16 %v1159
  %v1309 = vunpack.c.l.b16 %v1160
  %v1310 = vunpack.c.l.b16 %v1161
  %v1311 = vunpack.c.l.b16 %v1162
  %v1312 = vunpack.c.l.b16 %v1163
  %v1313 = vunpack.c.l.b16 %v1164
  %v1314 = vunpack.c.l.b16 %v1165
  %v1315 = vunpack.c.l.b16 %v1166
  %v1316 = vunpack.c.l.b16 %v1167
  %v1317 = vunpack.c.l.b16 %v1168
  %v1318 = vunpack.c.l.b16 %v1169
  %v1319 = vunpack.c.l.b16 %v1170
  %v1320 = vunpack.c.l.b16 %v1171
  %v1321 = vunpack.c.l.b16 %v1172
  %v1322 = vunpack.c.l.b16 %v1173
  %v1323 = vunpack.c.l.b16 %v1174
  %v1324 = vunpack.c.l.b16 %v1175
  %v1325 = vunpack.c.l.b16 %v1176
  %v1326 = vunpack.c.l.b16 %v1177
  %v1327 = vunpack.c.l.b16 %v1178
  %v1328 = vunpack.c.l.b16 %v1179
  %v1329 = vunpack.c.l.b16 %v1180
  %v1330 = vunpack.c.l.b16 %v1181
  %v1331 = vunpack.c.l.b16 %v1182
  %v1332 = vunpack.c.l.b16 %v1183
  %v1333 = vunpack.c.l.b16 %v1184
  %v1334 = vunpack.c.l.b16 %v1185
  %v1335 = vunpack.c.l.b16 %v1186
  %v1336 = vunpack.c.l.b16 %v1187
  %v1337 = vunpack.c.l.b16 %v1188
  %v1338 = vunpack.c.l.b16 %v1189
  %v1339 = vunpack.c.l.b16 %v1190
  %v1340 = vunpack.c.l.b16 %v1191
  %v1341 = vunpack.c.l.b16 %v1192
  %v1342 = vunpack.c.l.b16 %v1193
  %v1343 = vunpack.c.l.b16 %v1194
  %v1344 = vpack.c.b16 %v1281, %v1280
  %v1345 = vpack.c.b16 %v1283, %v1282
  %v1346 = vpack.c.b16 %v1285, %v1284
  %v1347 = vpack.c.b16 %v1287, %v1286
  %v1348 = vpack.c.b16 %v1289, %v1288
  %v1349 = vpack.c.b16 %v1291, %v1290
  %v1350 = vpack.c.b16 %v1293, %v1292
  %v1351 = vpack.c.b16 %v1295, %v1294
  %v1352 = vpack.c.b16 %v1297, %v1296
  %v1353 = vpack.c.b16 %v1299, %v1298
  %v1354 = vpack.c.b16 %v1301, %v1300
  %v1355 = vpack.c.b16 %v1303, %v1302
  %v1356 = vpack.c.b16 %v1305, %v1304
  %v1357 = vpack.c.b16 %v1307, %v1306
  %v1358 = vpack.c.b16 %v1309, %v1308
  %v1359 = vpack.c.b16 %v1311, %v1310
  %v1360 = vpack.c.b16 %v1313, %v1312
  %v1361 = vpack.c.b16 %v1315, %v1314
  %v1362 = vpack.c.b16 %v1317, %v1316
  %v1363 = vpack.c.b16 %v1319, %v1318
  %v1364 = vpack.c.b16 %v1321, %v1320
  %v1365 = vpack.c.b16 %v1323, %v1322
  %v1366 = vpack.c.b16 %v1325, %v1324
  %v1367 = vpack.c.b16 %v1327, %v1326
  %v1368 = vpack.c.b16 %v1329, %v1328
  %v1369 = vpack.c.b16 %v1331, %v1330
  %v1370 = vpack.c.b16 %v1333, %v1332
  %v1371 = vpack.c.b16 %v1335, %v1334
  %v1372 = vpack.c.b16 %v1337, %v1336
  %v1373 = vpack.c.b16 %v1339, %v1338
  %v1374 = vpack.c.b16 %v1341, %v1340
  %v1375 = vpack.c.b16 %v1343, %v1342
  %1408 = vmatprep.subr.bf16.mxu0 0
  %1409 = vmatpush1.bf16.msra.mxu0 %v1351
  %1410 = vmatprep.subr.bf16.mxu0 0
  %1411 = vmatpush1.bf16.msra.mxu0 %v1350
  %1412 = vmatprep.subr.bf16.mxu0 0
  %1413 = vmatpush1.bf16.msra.mxu0 %v1349
  %1414 = vmatprep.subr.bf16.mxu0 0
  %1415 = vmatpush1.bf16.msra.mxu0 %v1348
  %1416 = vmatprep.subr.bf16.mxu0 0
  %1417 = vmatpush1.bf16.msra.mxu0 %v1347
  %1418 = vmatprep.subr.bf16.mxu0 0
  %1419 = vmatpush1.bf16.msra.mxu0 %v1346
  %1420 = vmatprep.subr.bf16.mxu0 0
  %1421 = vmatpush1.bf16.msra.mxu0 %v1345
  %1422 = vmatprep.subr.bf16.mxu0 0
  %1423 = vmatpush1.bf16.msra.mxu0 %v1344
  %1424 = vmatprep.subr.bf16.mxu0 0
  %1425 = vmatpush2.bf16.msra.mxu0 %v1359
  %1426 = vmatprep.subr.bf16.mxu0 0
  %1427 = vmatpush2.bf16.msra.mxu0 %v1358
  %1428 = vmatprep.subr.bf16.mxu0 0
  %1429 = vmatpush2.bf16.msra.mxu0 %v1357
  %1430 = vmatprep.subr.bf16.mxu0 0
  %1431 = vmatpush2.bf16.msra.mxu0 %v1356
  %1432 = vmatprep.subr.bf16.mxu0 0
  %1433 = vmatpush2.bf16.msra.mxu0 %v1355
  %1434 = vmatprep.subr.bf16.mxu0 0
  %1435 = vmatpush2.bf16.msra.mxu0 %v1354
  %1436 = vmatprep.subr.bf16.mxu0 0
  %1437 = vmatpush2.bf16.msra.mxu0 %v1353
  %1438 = vmatprep.subr.bf16.mxu0 0
  %1439 = vmatpush2.bf16.msra.mxu0 %v1352
  %1440 = vmatprep.mubr.bf16.mxu0 %v1209
  %1441 = vmatmul.mubr.bf16.gmra.mxu0 %v1208
  %v1442 = vpop.f32.mrf.mxu0
  %v1443 = vadd.f32 %v1200, %v1442
  %v1444 = vpop.f32.mrf.mxu0
  %v1445 = vpop.f32.mrf.mxu0
  %v1446 = vpop.f32.mrf.mxu0
  %1447 = vdwg.mxu0
  %1448 = vmatprep.subr.bf16.mxu0 0
  %1449 = vmatpush1.bf16.msra.mxu0 %v1367
  %1450 = vmatprep.subr.bf16.mxu0 0
  %1451 = vmatpush1.bf16.msra.mxu0 %v1366
  %1452 = vmatprep.subr.bf16.mxu0 0
  %1453 = vmatpush1.bf16.msra.mxu0 %v1365
  %1454 = vmatprep.subr.bf16.mxu0 0
  %1455 = vmatpush1.bf16.msra.mxu0 %v1364
  %1456 = vmatprep.subr.bf16.mxu0 0
  %1457 = vmatpush1.bf16.msra.mxu0 %v1363
  %1458 = vmatprep.subr.bf16.mxu0 0
  %1459 = vmatpush1.bf16.msra.mxu0 %v1362
  %1460 = vmatprep.subr.bf16.mxu0 0
  %1461 = vmatpush1.bf16.msra.mxu0 %v1361
  %1462 = vmatprep.subr.bf16.mxu0 0
  %1463 = vmatpush1.bf16.msra.mxu0 %v1360
  %1464 = vmatprep.subr.bf16.mxu0 0
  %1465 = vmatpush2.bf16.msra.mxu0 %v1375
  %1466 = vmatprep.subr.bf16.mxu0 0
  %1467 = vmatpush2.bf16.msra.mxu0 %v1374
  %1468 = vmatprep.subr.bf16.mxu0 0
  %1469 = vmatpush2.bf16.msra.mxu0 %v1373
  %1470 = vmatprep.subr.bf16.mxu0 0
  %1471 = vmatpush2.bf16.msra.mxu0 %v1372
  %1472 = vmatprep.subr.bf16.mxu0 0
  %1473 = vmatpush2.bf16.msra.mxu0 %v1371
  %1474 = vmatprep.subr.bf16.mxu0 0
  %1475 = vmatpush2.bf16.msra.mxu0 %v1370
  %1476 = vmatprep.subr.bf16.mxu0 0
  %1477 = vmatpush2.bf16.msra.mxu0 %v1369
  %1478 = vmatprep.subr.bf16.mxu0 0
  %1479 = vmatpush2.bf16.msra.mxu0 %v1368
  %1480 = vmatprep.mubr.bf16.mxu0 %v1211
  %1481 = vmatmul.mubr.bf16.gmra.mxu0 %v1210
  %v1482 = vpop.f32.mrf.mxu0
  %v1483 = vadd.f32 %v1443, %v1482
  %v1484 = vpop.f32.mrf.mxu0
  %v1485 = vpop.f32.mrf.mxu0
  %v1486 = vpop.f32.mrf.mxu0
  %1487 = vdwg.mxu0
  %s1488 = scalar_lea.vmem [#allocation2], 24
  %1489 = vst [vmem:[%s1488] sm:$0xff] %v1483
  %v1490 = vrot.slane %v1483, 4
  %v1491 = vadd.f32 %v1483, %v1490
  %v1492 = vrot.slane %v1491, 2
  %v1493 = vadd.f32 %v1491, %v1492
  %v1494 = vrot.slane %v1493, 1
  %v1495 = vadd.f32 %v1493, %v1494
  %v1496 = vadd.f32 %v1126, %v1495
  %v1497 = vmul.f32 %v1496, 0.03125
  %v1498 = vld [vmem:[#allocation2] sm:$0xff]
  %v1499 = vsub.f32 %v1498, %v1497
  %v1500 = vmul.f32 %v1499, %v1499
  %v1501 = vrot.slane %v1500, 4
  %v1502 = vadd.f32 %v1500, %v1501
  %v1503 = vrot.slane %v1502, 2
  %v1504 = vadd.f32 %v1502, %v1503
  %v1505 = vrot.slane %v1504, 1
  %v1506 = vadd.f32 %v1504, %v1505
  %v1507 = vld [vmem:[%s748] sm:$0xff]
  %v1508 = vsub.f32 %v1507, %v1497
  %v1509 = vmul.f32 %v1508, %v1508
  %v1510 = vrot.slane %v1509, 4
  %v1511 = vadd.f32 %v1509, %v1510
  %v1512 = vrot.slane %v1511, 2
  %v1513 = vadd.f32 %v1511, %v1512
  %v1514 = vrot.slane %v1513, 1
  %v1515 = vadd.f32 %v1513, %v1514
  %v1516 = vadd.f32 %v1506, %v1515
  %v1517 = vld [vmem:[%s1118] sm:$0xff]
  %v1518 = vsub.f32 %v1517, %v1497
  %v1519 = vmul.f32 %v1518, %v1518
  %v1520 = vrot.slane %v1519, 4
  %v1521 = vadd.f32 %v1519, %v1520
  %v1522 = vrot.slane %v1521, 2
  %v1523 = vadd.f32 %v1521, %v1522
  %v1524 = vrot.slane %v1523, 1
  %v1525 = vadd.f32 %v1523, %v1524
  %v1526 = vadd.f32 %v1516, %v1525
  %v1527 = vld [vmem:[%s1488] sm:$0xff]
  %v1528 = vsub.f32 %v1527, %v1497
  %v1529 = vmul.f32 %v1528, %v1528
  %v1530 = vrot.slane %v1529, 4
  %v1531 = vadd.f32 %v1529, %v1530
  %v1532 = vrot.slane %v1531, 2
  %v1533 = vadd.f32 %v1531, %v1532
  %v1534 = vrot.slane %v1533, 1
  %v1535 = vadd.f32 %v1533, %v1534
  %v1536 = vadd.f32 %v1526, %v1535
  %v1537 = vmul.f32 %v1536, 0.03125
  %v1538 = vmax.f32 %v1537, 0.0
  %v1539 = vld [vmem:[%s3] sm:$0x1]
  %v1540 = vadd.f32 %v1538, 1e-05
  %v1541 = vrsqrt.pop %v1540
  %v1542 = vmul.f32 %v1539, %v1541
  %v1543 = vld [vmem:[%s4] sm:$0x1]
  %v1544 = vmul.f32 %v1497, %v1542
  %v1545 = vsub.f32 %v1543, %v1544
  %v1547 = vlaneseq
  %v1548 = vshrl.u32 %v1547, 7
  %v1549 = vsub.s32 0, %v1548
  %v1550 = vrot.slane %v1542, %v1549
  %v1552 = vmul.f32 %v1498, %v1550
  %v1554 = vlaneseq
  %v1555 = vshrl.u32 %v1554, 7
  %v1556 = vsub.s32 0, %v1555
  %v1557 = vrot.slane %v1545, %v1556
  %v1559 = vadd.f32 %v1552, %v1557
  %v1560 = vmax.f32 %v1559, 0.0
  %v1561 = vpack.c.bf16 %v1560, %v1560
  %1562 = vst [vmem:[%s5] sm:$0xf] %v1561
  %v1563 = vld [vmem:[%s748] sm:$0xff]
  %v1564 = vmul.f32 %v1563, %v1550
  %v1565 = vadd.f32 %v1564, %v1557
  %v1566 = vmax.f32 %v1565, 0.0
  %v1567 = vpack.c.bf16 %v1566, %v1566
  %s1568 = scalar_lea.vmem %s5, 4
  %1569 = vst [vmem:[%s1568] sm:$0xf] %v1567
  %v1570 = vld [vmem:[%s1118] sm:$0xff]
  %v1571 = vmul.f32 %v1570, %v1550
  %v1572 = vadd.f32 %v1571, %v1557
  %v1573 = vmax.f32 %v1572, 0.0
  %v1574 = vpack.c.bf16 %v1573, %v1573
  %s1575 = scalar_lea.vmem %s5, 8
  %1576 = vst [vmem:[%s1575] sm:$0xf] %v1574
  %v1577 = vld [vmem:[%s1488] sm:$0xff]
  %v1578 = vmul.f32 %v1577, %v1550
  %v1579 = vadd.f32 %v1578, %v1557
  %v1580 = vmax.f32 %v1579, 0.0
  %v1581 = vpack.c.bf16 %v1580, %v1580
  %s1582 = scalar_lea.vmem %s5, 12
  %1583 = vst [vmem:[%s1582] sm:$0xf] %v1581
  // Predicated region
  $region22: #{vae_forward.12} parent=0 // pred_check
    _
  $region23: #{vae_forward.12} parent=0 // pred_check_branch
    %1585 = sbr.rel (0) target = $region25
  $region24: #{vae_forward.12} parent=0 // pred_region
    _
  $region25: #{vae_forward.12} parent=0 // pred_fallthru
    _
  // Predicated region
  $region26: #{vae_forward.12} parent=0 // pred_check
    _
  $region27: #{vae_forward.12} parent=0 // pred_check_branch
    %1587 = sbr.rel (0) target = $region29
  $region28: #{vae_forward.12} parent=0 // pred_region
    _
  $region29: #{vae_forward.12} parent=0 // pred_fallthru
    _

// kernel: vae_forward.13
$region0: #{vae_forward.13}
  #allocation0 [shape = 'u32[]', space=smem, size = 0x4, offset = 0x4, fixed_abs, tag = 'smem constant byte address 0x4 - core index']
  #allocation1 [shape = 'u32[144,128]{1,0:T(1,128)}', space=vmem, size = 0x12000, scoped, tag = 'internal scratch']
  #allocation2 [shape = 'f32[4,32,128]{2,1,0:T(8,128)}', space=vmem, size = 0x10000, scoped, tag = 'scratch operand']
  %s0 = inlined_call_operand.vmem [shape: bf16[4,32,256], index: 0, kind: input, shape index: {}]
  %s1 = inlined_call_operand.vmem [shape: bf16[4,256,128], index: 1, kind: input, shape index: {}]
  %s2 = inlined_call_operand.vmem [shape: f32[1,128], index: 2, kind: input, shape index: {}]
  %s3 = inlined_call_operand.vmem [shape: f32[1,128], index: 3, kind: input, shape index: {}]
  %s4 = inlined_call_operand.vmem [shape: f32[1,128], index: 4, kind: input, shape index: {}]
  %s5 = inlined_call_operand.vmem [shape: bf16[4,32,128], index: 5, kind: output, shape index: {}]
  %s6 = sld [smem:[#allocation0]]
  $region30: #{vae_forward.13} parent=0
    _
  %s8 = ssub.s32 1, %s6
  %s9 = scalar_select 0, %s8, %s6
  // Predicated region
  $region2: #{vae_forward.13} parent=0 // pred_check
    _
  $region3: #{vae_forward.13} parent=0 // pred_check_branch
    %11 = sbr.rel (0) target = $region5
  $region4: #{vae_forward.13} parent=0 // pred_region
    _
  $region5: #{vae_forward.13} parent=0 // pred_fallthru
    _
  // Predicated region
  $region6: #{vae_forward.13} parent=0 // pred_check
    _
  $region7: #{vae_forward.13} parent=0 // pred_check_branch
    %13 = sbr.rel (0) target = $region9
  $region8: #{vae_forward.13} parent=0 // pred_region
    _
  $region9: #{vae_forward.13} parent=0 // pred_fallthru
    _
  // Predicated region
  $region10: #{vae_forward.13} parent=0 // pred_check
    _
  $region11: #{vae_forward.13} parent=0 // pred_check_branch
    %15 = sbr.rel (0) target = $region13
  $region12: #{vae_forward.13} parent=0 // pred_region
    _
  $region13: #{vae_forward.13} parent=0 // pred_fallthru
    _
  // Predicated region
  $region14: #{vae_forward.13} parent=0 // pred_check
    _
  $region15: #{vae_forward.13} parent=0 // pred_check_branch
    %17 = sbr.rel (0) target = $region17
  $region16: #{vae_forward.13} parent=0 // pred_region
    _
  $region17: #{vae_forward.13} parent=0 // pred_fallthru
    _
  // Predicated region
  $region18: #{vae_forward.13} parent=0 // pred_check
    _
  $region19: #{vae_forward.13} parent=0 // pred_check_branch
    %19 = sbr.rel (0) target = $region21
  $region20: #{vae_forward.13} parent=0 // pred_region
    _
  $region21: #{vae_forward.13} parent=0 // pred_fallthru
    _
  %v21 = vld [vmem:[%s0] sm:$0xff]
  %v22 = vld [vmem:[%s0 + $0x8] sm:$0xff]
  %v23 = vld [vmem:[%s0 + $0x10] sm:$0xff]
  %v24 = vld [vmem:[%s0 + $0x18] sm:$0xff]
  %v25 = vld [vmem:[%s1] sm:$0xf]
  %v26 = vld [vmem:[%s1 + $0x4] sm:$0xf]
  %v27 = vld [vmem:[%s1 + $0x8] sm:$0xf]
  %v28 = vld [vmem:[%s1 + $0xc] sm:$0xf]
  %v29 = vld [vmem:[%s1 + $0x10] sm:$0xf]
  %v30 = vld [vmem:[%s1 + $0x14] sm:$0xf]
  %v31 = vld [vmem:[%s1 + $0x18] sm:$0xf]
  %v32 = vld [vmem:[%s1 + $0x1c] sm:$0xf]
  %v33 = vld [vmem:[%s1 + $0x20] sm:$0xf]
  %v34 = vld [vmem:[%s1 + $0x24] sm:$0xf]
  %v35 = vld [vmem:[%s1 + $0x28] sm:$0xf]
  %v36 = vld [vmem:[%s1 + $0x2c] sm:$0xf]
  %v37 = vld [vmem:[%s1 + $0x30] sm:$0xf]
  %v38 = vld [vmem:[%s1 + $0x34] sm:$0xf]
  %v39 = vld [vmem:[%s1 + $0x38] sm:$0xf]
  %v40 = vld [vmem:[%s1 + $0x3c] sm:$0xf]
  %v41 = vld [vmem:[%s1 + $0x40] sm:$0xf]
  %v42 = vld [vmem:[%s1 + $0x44] sm:$0xf]
  %v43 = vld [vmem:[%s1 + $0x48] sm:$0xf]
  %v44 = vld [vmem:[%s1 + $0x4c] sm:$0xf]
  %v45 = vld [vmem:[%s1 + $0x50] sm:$0xf]
  %v46 = vld [vmem:[%s1 + $0x54] sm:$0xf]
  %v47 = vld [vmem:[%s1 + $0x58] sm:$0xf]
  %v48 = vld [vmem:[%s1 + $0x5c] sm:$0xf]
  %v49 = vld [vmem:[%s1 + $0x60] sm:$0xf]
  %v50 = vld [vmem:[%s1 + $0x64] sm:$0xf]
  %v51 = vld [vmem:[%s1 + $0x68] sm:$0xf]
  %v52 = vld [vmem:[%s1 + $0x6c] sm:$0xf]
  %v53 = vld [vmem:[%s1 + $0x70] sm:$0xf]
  %v54 = vld [vmem:[%s1 + $0x74] sm:$0xf]
  %v55 = vld [vmem:[%s1 + $0x78] sm:$0xf]
  %v56 = vld [vmem:[%s1 + $0x7c] sm:$0xf]
  %v57 = vld [vmem:[%s2] sm:$0x1]
  %v59 = vlaneseq
  %v60 = vshrl.u32 %v59, 7
  %v61 = vsub.s32 0, %v60
  %v62 = vrot.slane %v57, %v61
  %v68 = vunpack.c.l.b16 %v21
  %v69 = vunpack.c.h.b16 %v21
  %v70 = vunpack.c.l.b16 %v22
  %v71 = vunpack.c.h.b16 %v22
  %v72 = vunpack.c.l.b16 %v23
  %v73 = vunpack.c.h.b16 %v23
  %v74 = vunpack.c.l.b16 %v24
  %v75 = vunpack.c.h.b16 %v24
  %v76 = vpack.c.b16 %v70, %v68
  %v77 = vpack.c.b16 %v71, %v69
  %v78 = vpack.c.b16 %v74, %v72
  %v79 = vpack.c.b16 %v75, %v73
  %v116 = vunpack.c.l.b16 %v25
  %v117 = vunpack.c.l.b16 %v26
  %v118 = vunpack.c.l.b16 %v27
  %v119 = vunpack.c.l.b16 %v28
  %v120 = vunpack.c.l.b16 %v29
  %v121 = vunpack.c.l.b16 %v30
  %v122 = vunpack.c.l.b16 %v31
  %v123 = vunpack.c.l.b16 %v32
  %v124 = vunpack.c.l.b16 %v33
  %v125 = vunpack.c.l.b16 %v34
  %v126 = vunpack.c.l.b16 %v35
  %v127 = vunpack.c.l.b16 %v36
  %v128 = vunpack.c.l.b16 %v37
  %v129 = vunpack.c.l.b16 %v38
  %v130 = vunpack.c.l.b16 %v39
  %v131 = vunpack.c.l.b16 %v40
  %v132 = vunpack.c.l.b16 %v41
  %v133 = vunpack.c.l.b16 %v42
  %v134 = vunpack.c.l.b16 %v43
  %v135 = vunpack.c.l.b16 %v44
  %v136 = vunpack.c.l.b16 %v45
  %v137 = vunpack.c.l.b16 %v46
  %v138 = vunpack.c.l.b16 %v47
  %v139 = vunpack.c.l.b16 %v48
  %v140 = vunpack.c.l.b16 %v49
  %v141 = vunpack.c.l.b16 %v50
  %v142 = vunpack.c.l.b16 %v51
  %v143 = vunpack.c.l.b16 %v52
  %v144 = vunpack.c.l.b16 %v53
  %v145 = vunpack.c.l.b16 %v54
  %v146 = vunpack.c.l.b16 %v55
  %v147 = vunpack.c.l.b16 %v56
  %v148 = vpack.c.b16 %v117, %v116
  %v149 = vpack.c.b16 %v119, %v118
  %v150 = vpack.c.b16 %v121, %v120
  %v151 = vpack.c.b16 %v123, %v122
  %v152 = vpack.c.b16 %v125, %v124
  %v153 = vpack.c.b16 %v127, %v126
  %v154 = vpack.c.b16 %v129, %v128
  %v155 = vpack.c.b16 %v131, %v130
  %v156 = vpack.c.b16 %v133, %v132
  %v157 = vpack.c.b16 %v135, %v134
  %v158 = vpack.c.b16 %v137, %v136
  %v159 = vpack.c.b16 %v139, %v138
  %v160 = vpack.c.b16 %v141, %v140
  %v161 = vpack.c.b16 %v143, %v142
  %v162 = vpack.c.b16 %v145, %v144
  %v163 = vpack.c.b16 %v147, %v146
  %180 = vmatprep.subr.bf16.mxu0 0
  %181 = vmatpush1.bf16.msra.mxu0 %v155
  %182 = vmatprep.subr.bf16.mxu0 0
  %183 = vmatpush1.bf16.msra.mxu0 %v154
  %184 = vmatprep.subr.bf16.mxu0 0
  %185 = vmatpush1.bf16.msra.mxu0 %v153
  %186 = vmatprep.subr.bf16.mxu0 0
  %187 = vmatpush1.bf16.msra.mxu0 %v152
  %188 = vmatprep.subr.bf16.mxu0 0
  %189 = vmatpush1.bf16.msra.mxu0 %v151
  %190 = vmatprep.subr.bf16.mxu0 0
  %191 = vmatpush1.bf16.msra.mxu0 %v150
  %192 = vmatprep.subr.bf16.mxu0 0
  %193 = vmatpush1.bf16.msra.mxu0 %v149
  %194 = vmatprep.subr.bf16.mxu0 0
  %195 = vmatpush1.bf16.msra.mxu0 %v148
  %196 = vmatprep.subr.bf16.mxu0 0
  %197 = vmatpush2.bf16.msra.mxu0 %v163
  %198 = vmatprep.subr.bf16.mxu0 0
  %199 = vmatpush2.bf16.msra.mxu0 %v162
  %200 = vmatprep.subr.bf16.mxu0 0
  %201 = vmatpush2.bf16.msra.mxu0 %v161
  %202 = vmatprep.subr.bf16.mxu0 0
  %203 = vmatpush2.bf16.msra.mxu0 %v160
  %204 = vmatprep.subr.bf16.mxu0 0
  %205 = vmatpush2.bf16.msra.mxu0 %v159
  %206 = vmatprep.subr.bf16.mxu0 0
  %207 = vmatpush2.bf16.msra.mxu0 %v158
  %208 = vmatprep.subr.bf16.mxu0 0
  %209 = vmatpush2.bf16.msra.mxu0 %v157
  %210 = vmatprep.subr.bf16.mxu0 0
  %211 = vmatpush2.bf16.msra.mxu0 %v156
  %212 = vmatprep.mubr.bf16.mxu0 %v77
  %213 = vmatmul.mubr.bf16.gmra.mxu0 %v76
  %v214 = vpop.f32.mrf.mxu0
  %v215 = vadd.f32 %v62, %v214
  %v216 = vpop.f32.mrf.mxu0
  %v217 = vpop.f32.mrf.mxu0
  %v218 = vadd.f32 %v62, %v217
  %v219 = vpop.f32.mrf.mxu0
  %220 = vmatprep.mubr.bf16.mxu0 %v79
  %221 = vmatmul.mubr.bf16.gmra.mxu0 %v78
  %v222 = vpop.f32.mrf.mxu0
  %v223 = vadd.f32 %v62, %v222
  %v224 = vpop.f32.mrf.mxu0
  %v225 = vpop.f32.mrf.mxu0
  %v226 = vadd.f32 %v62, %v225
  %v227 = vpop.f32.mrf.mxu0
  %228 = vdwg.mxu0
  %229 = vst [vmem:[#allocation2] sm:$0xff] %v215
  %230 = vst [vmem:[#allocation2 + $0x8] sm:$0xff] %v218
  %231 = vst [vmem:[#allocation2 + $0x10] sm:$0xff] %v223
  %232 = vst [vmem:[#allocation2 + $0x18] sm:$0xff] %v226
  %v233 = vadd.f32 %v215, %v218
  %v234 = vadd.f32 %v233, %v223
  %v235 = vadd.f32 %v234, %v226
  %v236 = vrot.slane %v235, 4
  %v237 = vadd.f32 %v235, %v236
  %v238 = vrot.slane %v237, 2
  %v239 = vadd.f32 %v237, %v238
  %v240 = vrot.slane %v239, 1
  %v241 = vadd.f32 %v239, %v240
  %s242 = scalar_lea.vmem %s0, 32
  %v243 = vld [vmem:[%s242] sm:$0xff]
  %v244 = vld [vmem:[%s242 + $0x8] sm:$0xff]
  %v245 = vld [vmem:[%s242 + $0x10] sm:$0xff]
  %v246 = vld [vmem:[%s242 + $0x18] sm:$0xff]
  %s247 = scalar_lea.vmem %s1, 128
  %v248 = vld [vmem:[%s247] sm:$0xf]
  %v249 = vld [vmem:[%s247 + $0x4] sm:$0xf]
  %v250 = vld [vmem:[%s247 + $0x8] sm:$0xf]
  %v251 = vld [vmem:[%s247 + $0xc] sm:$0xf]
  %v252 = vld [vmem:[%s247 + $0x10] sm:$0xf]
  %v253 = vld [vmem:[%s247 + $0x14] sm:$0xf]
  %v254 = vld [vmem:[%s247 + $0x18] sm:$0xf]
  %v255 = vld [vmem:[%s247 + $0x1c] sm:$0xf]
  %v256 = vld [vmem:[%s247 + $0x20] sm:$0xf]
  %v257 = vld [vmem:[%s247 + $0x24] sm:$0xf]
  %v258 = vld [vmem:[%s247 + $0x28] sm:$0xf]
  %v259 = vld [vmem:[%s247 + $0x2c] sm:$0xf]
  %v260 = vld [vmem:[%s247 + $0x30] sm:$0xf]
  %v261 = vld [vmem:[%s247 + $0x34] sm:$0xf]
  %v262 = vld [vmem:[%s247 + $0x38] sm:$0xf]
  %v263 = vld [vmem:[%s247 + $0x3c] sm:$0xf]
  %v264 = vld [vmem:[%s247 + $0x40] sm:$0xf]
  %v265 = vld [vmem:[%s247 + $0x44] sm:$0xf]
  %v266 = vld [vmem:[%s247 + $0x48] sm:$0xf]
  %v267 = vld [vmem:[%s247 + $0x4c] sm:$0xf]
  %v268 = vld [vmem:[%s247 + $0x50] sm:$0xf]
  %v269 = vld [vmem:[%s247 + $0x54] sm:$0xf]
  %v270 = vld [vmem:[%s247 + $0x58] sm:$0xf]
  %v271 = vld [vmem:[%s247 + $0x5c] sm:$0xf]
  %v272 = vld [vmem:[%s247 + $0x60] sm:$0xf]
  %v273 = vld [vmem:[%s247 + $0x64] sm:$0xf]
  %v274 = vld [vmem:[%s247 + $0x68] sm:$0xf]
  %v275 = vld [vmem:[%s247 + $0x6c] sm:$0xf]
  %v276 = vld [vmem:[%s247 + $0x70] sm:$0xf]
  %v277 = vld [vmem:[%s247 + $0x74] sm:$0xf]
  %v278 = vld [vmem:[%s247 + $0x78] sm:$0xf]
  %v279 = vld [vmem:[%s247 + $0x7c] sm:$0xf]
  %v280 = vld [vmem:[%s2] sm:$0x1]
  %v282 = vlaneseq
  %v283 = vshrl.u32 %v282, 7
  %v284 = vsub.s32 0, %v283
  %v285 = vrot.slane %v280, %v284
  %v291 = vunpack.c.l.b16 %v243
  %v292 = vunpack.c.h.b16 %v243
  %v293 = vunpack.c.l.b16 %v244
  %v294 = vunpack.c.h.b16 %v244
  %v295 = vunpack.c.l.b16 %v245
  %v296 = vunpack.c.h.b16 %v245
  %v297 = vunpack.c.l.b16 %v246
  %v298 = vunpack.c.h.b16 %v246
  %v299 = vpack.c.b16 %v293, %v291
  %v300 = vpack.c.b16 %v294, %v292
  %v301 = vpack.c.b16 %v297, %v295
  %v302 = vpack.c.b16 %v298, %v296
  %v339 = vunpack.c.l.b16 %v248
  %v340 = vunpack.c.l.b16 %v249
  %v341 = vunpack.c.l.b16 %v250
  %v342 = vunpack.c.l.b16 %v251
  %v343 = vunpack.c.l.b16 %v252
  %v344 = vunpack.c.l.b16 %v253
  %v345 = vunpack.c.l.b16 %v254
  %v346 = vunpack.c.l.b16 %v255
  %v347 = vunpack.c.l.b16 %v256
  %v348 = vunpack.c.l.b16 %v257
  %v349 = vunpack.c.l.b16 %v258
  %v350 = vunpack.c.l.b16 %v259
  %v351 = vunpack.c.l.b16 %v260
  %v352 = vunpack.c.l.b16 %v261
  %v353 = vunpack.c.l.b16 %v262
  %v354 = vunpack.c.l.b16 %v263
  %v355 = vunpack.c.l.b16 %v264
  %v356 = vunpack.c.l.b16 %v265
  %v357 = vunpack.c.l.b16 %v266
  %v358 = vunpack.c.l.b16 %v267
  %v359 = vunpack.c.l.b16 %v268
  %v360 = vunpack.c.l.b16 %v269
  %v361 = vunpack.c.l.b16 %v270
  %v362 = vunpack.c.l.b16 %v271
  %v363 = vunpack.c.l.b16 %v272
  %v364 = vunpack.c.l.b16 %v273
  %v365 = vunpack.c.l.b16 %v274
  %v366 = vunpack.c.l.b16 %v275
  %v367 = vunpack.c.l.b16 %v276
  %v368 = vunpack.c.l.b16 %v277
  %v369 = vunpack.c.l.b16 %v278
  %v370 = vunpack.c.l.b16 %v279
  %v371 = vpack.c.b16 %v340, %v339
  %v372 = vpack.c.b16 %v342, %v341
  %v373 = vpack.c.b16 %v344, %v343
  %v374 = vpack.c.b16 %v346, %v345
  %v375 = vpack.c.b16 %v348, %v347
  %v376 = vpack.c.b16 %v350, %v349
  %v377 = vpack.c.b16 %v352, %v351
  %v378 = vpack.c.b16 %v354, %v353
  %v379 = vpack.c.b16 %v356, %v355
  %v380 = vpack.c.b16 %v358, %v357
  %v381 = vpack.c.b16 %v360, %v359
  %v382 = vpack.c.b16 %v362, %v361
  %v383 = vpack.c.b16 %v364, %v363
  %v384 = vpack.c.b16 %v366, %v365
  %v385 = vpack.c.b16 %v368, %v367
  %v386 = vpack.c.b16 %v370, %v369
  %403 = vmatprep.subr.bf16.mxu0 0
  %404 = vmatpush1.bf16.msra.mxu0 %v378
  %405 = vmatprep.subr.bf16.mxu0 0
  %406 = vmatpush1.bf16.msra.mxu0 %v377
  %407 = vmatprep.subr.bf16.mxu0 0
  %408 = vmatpush1.bf16.msra.mxu0 %v376
  %409 = vmatprep.subr.bf16.mxu0 0
  %410 = vmatpush1.bf16.msra.mxu0 %v375
  %411 = vmatprep.subr.bf16.mxu0 0
  %412 = vmatpush1.bf16.msra.mxu0 %v374
  %413 = vmatprep.subr.bf16.mxu0 0
  %414 = vmatpush1.bf16.msra.mxu0 %v373
  %415 = vmatprep.subr.bf16.mxu0 0
  %416 = vmatpush1.bf16.msra.mxu0 %v372
  %417 = vmatprep.subr.bf16.mxu0 0
  %418 = vmatpush1.bf16.msra.mxu0 %v371
  %419 = vmatprep.subr.bf16.mxu0 0
  %420 = vmatpush2.bf16.msra.mxu0 %v386
  %421 = vmatprep.subr.bf16.mxu0 0
  %422 = vmatpush2.bf16.msra.mxu0 %v385
  %423 = vmatprep.subr.bf16.mxu0 0
  %424 = vmatpush2.bf16.msra.mxu0 %v384
  %425 = vmatprep.subr.bf16.mxu0 0
  %426 = vmatpush2.bf16.msra.mxu0 %v383
  %427 = vmatprep.subr.bf16.mxu0 0
  %428 = vmatpush2.bf16.msra.mxu0 %v382
  %429 = vmatprep.subr.bf16.mxu0 0
  %430 = vmatpush2.bf16.msra.mxu0 %v381
  %431 = vmatprep.subr.bf16.mxu0 0
  %432 = vmatpush2.bf16.msra.mxu0 %v380
  %433 = vmatprep.subr.bf16.mxu0 0
  %434 = vmatpush2.bf16.msra.mxu0 %v379
  %435 = vmatprep.mubr.bf16.mxu0 %v300
  %436 = vmatmul.mubr.bf16.gmra.mxu0 %v299
  %v437 = vpop.f32.mrf.mxu0
  %v438 = vadd.f32 %v285, %v437
  %v439 = vpop.f32.mrf.mxu0
  %v440 = vpop.f32.mrf.mxu0
  %v441 = vadd.f32 %v285, %v440
  %v442 = vpop.f32.mrf.mxu0
  %443 = vmatprep.mubr.bf16.mxu0 %v302
  %444 = vmatmul.mubr.bf16.gmra.mxu0 %v301
  %v445 = vpop.f32.mrf.mxu0
  %v446 = vadd.f32 %v285, %v445
  %v447 = vpop.f32.mrf.mxu0
  %v448 = vpop.f32.mrf.mxu0
  %v449 = vadd.f32 %v285, %v448
  %v450 = vpop.f32.mrf.mxu0
  %451 = vdwg.mxu0
  %s452 = scalar_lea.vmem [#allocation2], 32
  %453 = vst [vmem:[%s452] sm:$0xff] %v438
  %454 = vst [vmem:[%s452 + $0x8] sm:$0xff] %v441
  %455 = vst [vmem:[%s452 + $0x10] sm:$0xff] %v446
  %456 = vst [vmem:[%s452 + $0x18] sm:$0xff] %v449
  %v457 = vadd.f32 %v438, %v441
  %v458 = vadd.f32 %v457, %v446
  %v459 = vadd.f32 %v458, %v449
  %v460 = vrot.slane %v459, 4
  %v461 = vadd.f32 %v459, %v460
  %v462 = vrot.slane %v461, 2
  %v463 = vadd.f32 %v461, %v462
  %v464 = vrot.slane %v463, 1
  %v465 = vadd.f32 %v463, %v464
  %v466 = vadd.f32 %v241, %v465
  %s467 = scalar_lea.vmem %s0, 64
  %v468 = vld [vmem:[%s467] sm:$0xff]
  %v469 = vld [vmem:[%s467 + $0x8] sm:$0xff]
  %v470 = vld [vmem:[%s467 + $0x10] sm:$0xff]
  %v471 = vld [vmem:[%s467 + $0x18] sm:$0xff]
  %s472 = scalar_lea.vmem %s1, 256
  %v473 = vld [vmem:[%s472] sm:$0xf]
  %v474 = vld [vmem:[%s472 + $0x4] sm:$0xf]
  %v475 = vld [vmem:[%s472 + $0x8] sm:$0xf]
  %v476 = vld [vmem:[%s472 + $0xc] sm:$0xf]
  %v477 = vld [vmem:[%s472 + $0x10] sm:$0xf]
  %v478 = vld [vmem:[%s472 + $0x14] sm:$0xf]
  %v479 = vld [vmem:[%s472 + $0x18] sm:$0xf]
  %v480 = vld [vmem:[%s472 + $0x1c] sm:$0xf]
  %v481 = vld [vmem:[%s472 + $0x20] sm:$0xf]
  %v482 = vld [vmem:[%s472 + $0x24] sm:$0xf]
  %v483 = vld [vmem:[%s472 + $0x28] sm:$0xf]
  %v484 = vld [vmem:[%s472 + $0x2c] sm:$0xf]
  %v485 = vld [vmem:[%s472 + $0x30] sm:$0xf]
  %v486 = vld [vmem:[%s472 + $0x34] sm:$0xf]
  %v487 = vld [vmem:[%s472 + $0x38] sm:$0xf]
  %v488 = vld [vmem:[%s472 + $0x3c] sm:$0xf]
  %v489 = vld [vmem:[%s472 + $0x40] sm:$0xf]
  %v490 = vld [vmem:[%s472 + $0x44] sm:$0xf]
  %v491 = vld [vmem:[%s472 + $0x48] sm:$0xf]
  %v492 = vld [vmem:[%s472 + $0x4c] sm:$0xf]
  %v493 = vld [vmem:[%s472 + $0x50] sm:$0xf]
  %v494 = vld [vmem:[%s472 + $0x54] sm:$0xf]
  %v495 = vld [vmem:[%s472 + $0x58] sm:$0xf]
  %v496 = vld [vmem:[%s472 + $0x5c] sm:$0xf]
  %v497 = vld [vmem:[%s472 + $0x60] sm:$0xf]
  %v498 = vld [vmem:[%s472 + $0x64] sm:$0xf]
  %v499 = vld [vmem:[%s472 + $0x68] sm:$0xf]
  %v500 = vld [vmem:[%s472 + $0x6c] sm:$0xf]
  %v501 = vld [vmem:[%s472 + $0x70] sm:$0xf]
  %v502 = vld [vmem:[%s472 + $0x74] sm:$0xf]
  %v503 = vld [vmem:[%s472 + $0x78] sm:$0xf]
  %v504 = vld [vmem:[%s472 + $0x7c] sm:$0xf]
  %v505 = vld [vmem:[%s2] sm:$0x1]
  %v507 = vlaneseq
  %v508 = vshrl.u32 %v507, 7
  %v509 = vsub.s32 0, %v508
  %v510 = vrot.slane %v505, %v509
  %v516 = vunpack.c.l.b16 %v468
  %v517 = vunpack.c.h.b16 %v468
  %v518 = vunpack.c.l.b16 %v469
  %v519 = vunpack.c.h.b16 %v469
  %v520 = vunpack.c.l.b16 %v470
  %v521 = vunpack.c.h.b16 %v470
  %v522 = vunpack.c.l.b16 %v471
  %v523 = vunpack.c.h.b16 %v471
  %v524 = vpack.c.b16 %v518, %v516
  %v525 = vpack.c.b16 %v519, %v517
  %v526 = vpack.c.b16 %v522, %v520
  %v527 = vpack.c.b16 %v523, %v521
  %v564 = vunpack.c.l.b16 %v473
  %v565 = vunpack.c.l.b16 %v474
  %v566 = vunpack.c.l.b16 %v475
  %v567 = vunpack.c.l.b16 %v476
  %v568 = vunpack.c.l.b16 %v477
  %v569 = vunpack.c.l.b16 %v478
  %v570 = vunpack.c.l.b16 %v479
  %v571 = vunpack.c.l.b16 %v480
  %v572 = vunpack.c.l.b16 %v481
  %v573 = vunpack.c.l.b16 %v482
  %v574 = vunpack.c.l.b16 %v483
  %v575 = vunpack.c.l.b16 %v484
  %v576 = vunpack.c.l.b16 %v485
  %v577 = vunpack.c.l.b16 %v486
  %v578 = vunpack.c.l.b16 %v487
  %v579 = vunpack.c.l.b16 %v488
  %v580 = vunpack.c.l.b16 %v489
  %v581 = vunpack.c.l.b16 %v490
  %v582 = vunpack.c.l.b16 %v491
  %v583 = vunpack.c.l.b16 %v492
  %v584 = vunpack.c.l.b16 %v493
  %v585 = vunpack.c.l.b16 %v494
  %v586 = vunpack.c.l.b16 %v495
  %v587 = vunpack.c.l.b16 %v496
  %v588 = vunpack.c.l.b16 %v497
  %v589 = vunpack.c.l.b16 %v498
  %v590 = vunpack.c.l.b16 %v499
  %v591 = vunpack.c.l.b16 %v500
  %v592 = vunpack.c.l.b16 %v501
  %v593 = vunpack.c.l.b16 %v502
  %v594 = vunpack.c.l.b16 %v503
  %v595 = vunpack.c.l.b16 %v504
  %v596 = vpack.c.b16 %v565, %v564
  %v597 = vpack.c.b16 %v567, %v566
  %v598 = vpack.c.b16 %v569, %v568
  %v599 = vpack.c.b16 %v571, %v570
  %v600 = vpack.c.b16 %v573, %v572
  %v601 = vpack.c.b16 %v575, %v574
  %v602 = vpack.c.b16 %v577, %v576
  %v603 = vpack.c.b16 %v579, %v578
  %v604 = vpack.c.b16 %v581, %v580
  %v605 = vpack.c.b16 %v583, %v582
  %v606 = vpack.c.b16 %v585, %v584
  %v607 = vpack.c.b16 %v587, %v586
  %v608 = vpack.c.b16 %v589, %v588
  %v609 = vpack.c.b16 %v591, %v590
  %v610 = vpack.c.b16 %v593, %v592
  %v611 = vpack.c.b16 %v595, %v594
  %628 = vmatprep.subr.bf16.mxu0 0
  %629 = vmatpush1.bf16.msra.mxu0 %v603
  %630 = vmatprep.subr.bf16.mxu0 0
  %631 = vmatpush1.bf16.msra.mxu0 %v602
  %632 = vmatprep.subr.bf16.mxu0 0
  %633 = vmatpush1.bf16.msra.mxu0 %v601
  %634 = vmatprep.subr.bf16.mxu0 0
  %635 = vmatpush1.bf16.msra.mxu0 %v600
  %636 = vmatprep.subr.bf16.mxu0 0
  %637 = vmatpush1.bf16.msra.mxu0 %v599
  %638 = vmatprep.subr.bf16.mxu0 0
  %639 = vmatpush1.bf16.msra.mxu0 %v598
  %640 = vmatprep.subr.bf16.mxu0 0
  %641 = vmatpush1.bf16.msra.mxu0 %v597
  %642 = vmatprep.subr.bf16.mxu0 0
  %643 = vmatpush1.bf16.msra.mxu0 %v596
  %644 = vmatprep.subr.bf16.mxu0 0
  %645 = vmatpush2.bf16.msra.mxu0 %v611
  %646 = vmatprep.subr.bf16.mxu0 0
  %647 = vmatpush2.bf16.msra.mxu0 %v610
  %648 = vmatprep.subr.bf16.mxu0 0
  %649 = vmatpush2.bf16.msra.mxu0 %v609
  %650 = vmatprep.subr.bf16.mxu0 0
  %651 = vmatpush2.bf16.msra.mxu0 %v608
  %652 = vmatprep.subr.bf16.mxu0 0
  %653 = vmatpush2.bf16.msra.mxu0 %v607
  %654 = vmatprep.subr.bf16.mxu0 0
  %655 = vmatpush2.bf16.msra.mxu0 %v606
  %656 = vmatprep.subr.bf16.mxu0 0
  %657 = vmatpush2.bf16.msra.mxu0 %v605
  %658 = vmatprep.subr.bf16.mxu0 0
  %659 = vmatpush2.bf16.msra.mxu0 %v604
  %660 = vmatprep.mubr.bf16.mxu0 %v525
  %661 = vmatmul.mubr.bf16.gmra.mxu0 %v524
  %v662 = vpop.f32.mrf.mxu0
  %v663 = vadd.f32 %v510, %v662
  %v664 = vpop.f32.mrf.mxu0
  %v665 = vpop.f32.mrf.mxu0
  %v666 = vadd.f32 %v510, %v665
  %v667 = vpop.f32.mrf.mxu0
  %668 = vmatprep.mubr.bf16.mxu0 %v527
  %669 = vmatmul.mubr.bf16.gmra.mxu0 %v526
  %v670 = vpop.f32.mrf.mxu0
  %v671 = vadd.f32 %v510, %v670
  %v672 = vpop.f32.mrf.mxu0
  %v673 = vpop.f32.mrf.mxu0
  %v674 = vadd.f32 %v510, %v673
  %v675 = vpop.f32.mrf.mxu0
  %676 = vdwg.mxu0
  %s677 = scalar_lea.vmem [#allocation2], 64
  %678 = vst [vmem:[%s677] sm:$0xff] %v663
  %679 = vst [vmem:[%s677 + $0x8] sm:$0xff] %v666
  %680 = vst [vmem:[%s677 + $0x10] sm:$0xff] %v671
  %681 = vst [vmem:[%s677 + $0x18] sm:$0xff] %v674
  %v682 = vadd.f32 %v663, %v666
  %v683 = vadd.f32 %v682, %v671
  %v684 = vadd.f32 %v683, %v674
  %v685 = vrot.slane %v684, 4
  %v686 = vadd.f32 %v684, %v685
  %v687 = vrot.slane %v686, 2
  %v688 = vadd.f32 %v686, %v687
  %v689 = vrot.slane %v688, 1
  %v690 = vadd.f32 %v688, %v689
  %v691 = vadd.f32 %v466, %v690
  %s692 = scalar_lea.vmem %s0, 96
  %v693 = vld [vmem:[%s692] sm:$0xff]
  %v694 = vld [vmem:[%s692 + $0x8] sm:$0xff]
  %v695 = vld [vmem:[%s692 + $0x10] sm:$0xff]
  %v696 = vld [vmem:[%s692 + $0x18] sm:$0xff]
  %s697 = scalar_lea.vmem %s1, 384
  %v698 = vld [vmem:[%s697] sm:$0xf]
  %v699 = vld [vmem:[%s697 + $0x4] sm:$0xf]
  %v700 = vld [vmem:[%s697 + $0x8] sm:$0xf]
  %v701 = vld [vmem:[%s697 + $0xc] sm:$0xf]
  %v702 = vld [vmem:[%s697 + $0x10] sm:$0xf]
  %v703 = vld [vmem:[%s697 + $0x14] sm:$0xf]
  %v704 = vld [vmem:[%s697 + $0x18] sm:$0xf]
  %v705 = vld [vmem:[%s697 + $0x1c] sm:$0xf]
  %v706 = vld [vmem:[%s697 + $0x20] sm:$0xf]
  %v707 = vld [vmem:[%s697 + $0x24] sm:$0xf]
  %v708 = vld [vmem:[%s697 + $0x28] sm:$0xf]
  %v709 = vld [vmem:[%s697 + $0x2c] sm:$0xf]
  %v710 = vld [vmem:[%s697 + $0x30] sm:$0xf]
  %v711 = vld [vmem:[%s697 + $0x34] sm:$0xf]
  %v712 = vld [vmem:[%s697 + $0x38] sm:$0xf]
  %v713 = vld [vmem:[%s697 + $0x3c] sm:$0xf]
  %v714 = vld [vmem:[%s697 + $0x40] sm:$0xf]
  %v715 = vld [vmem:[%s697 + $0x44] sm:$0xf]
  %v716 = vld [vmem:[%s697 + $0x48] sm:$0xf]
  %v717 = vld [vmem:[%s697 + $0x4c] sm:$0xf]
  %v718 = vld [vmem:[%s697 + $0x50] sm:$0xf]
  %v719 = vld [vmem:[%s697 + $0x54] sm:$0xf]
  %v720 = vld [vmem:[%s697 + $0x58] sm:$0xf]
  %v721 = vld [vmem:[%s697 + $0x5c] sm:$0xf]
  %v722 = vld [vmem:[%s697 + $0x60] sm:$0xf]
  %v723 = vld [vmem:[%s697 + $0x64] sm:$0xf]
  %v724 = vld [vmem:[%s697 + $0x68] sm:$0xf]
  %v725 = vld [vmem:[%s697 + $0x6c] sm:$0xf]
  %v726 = vld [vmem:[%s697 + $0x70] sm:$0xf]
  %v727 = vld [vmem:[%s697 + $0x74] sm:$0xf]
  %v728 = vld [vmem:[%s697 + $0x78] sm:$0xf]
  %v729 = vld [vmem:[%s697 + $0x7c] sm:$0xf]
  %v730 = vld [vmem:[%s2] sm:$0x1]
  %v732 = vlaneseq
  %v733 = vshrl.u32 %v732, 7
  %v734 = vsub.s32 0, %v733
  %v735 = vrot.slane %v730, %v734
  %v741 = vunpack.c.l.b16 %v693
  %v742 = vunpack.c.h.b16 %v693
  %v743 = vunpack.c.l.b16 %v694
  %v744 = vunpack.c.h.b16 %v694
  %v745 = vunpack.c.l.b16 %v695
  %v746 = vunpack.c.h.b16 %v695
  %v747 = vunpack.c.l.b16 %v696
  %v748 = vunpack.c.h.b16 %v696
  %v749 = vpack.c.b16 %v743, %v741
  %v750 = vpack.c.b16 %v744, %v742
  %v751 = vpack.c.b16 %v747, %v745
  %v752 = vpack.c.b16 %v748, %v746
  %v789 = vunpack.c.l.b16 %v698
  %v790 = vunpack.c.l.b16 %v699
  %v791 = vunpack.c.l.b16 %v700
  %v792 = vunpack.c.l.b16 %v701
  %v793 = vunpack.c.l.b16 %v702
  %v794 = vunpack.c.l.b16 %v703
  %v795 = vunpack.c.l.b16 %v704
  %v796 = vunpack.c.l.b16 %v705
  %v797 = vunpack.c.l.b16 %v706
  %v798 = vunpack.c.l.b16 %v707
  %v799 = vunpack.c.l.b16 %v708
  %v800 = vunpack.c.l.b16 %v709
  %v801 = vunpack.c.l.b16 %v710
  %v802 = vunpack.c.l.b16 %v711
  %v803 = vunpack.c.l.b16 %v712
  %v804 = vunpack.c.l.b16 %v713
  %v805 = vunpack.c.l.b16 %v714
  %v806 = vunpack.c.l.b16 %v715
  %v807 = vunpack.c.l.b16 %v716
  %v808 = vunpack.c.l.b16 %v717
  %v809 = vunpack.c.l.b16 %v718
  %v810 = vunpack.c.l.b16 %v719
  %v811 = vunpack.c.l.b16 %v720
  %v812 = vunpack.c.l.b16 %v721
  %v813 = vunpack.c.l.b16 %v722
  %v814 = vunpack.c.l.b16 %v723
  %v815 = vunpack.c.l.b16 %v724
  %v816 = vunpack.c.l.b16 %v725
  %v817 = vunpack.c.l.b16 %v726
  %v818 = vunpack.c.l.b16 %v727
  %v819 = vunpack.c.l.b16 %v728
  %v820 = vunpack.c.l.b16 %v729
  %v821 = vpack.c.b16 %v790, %v789
  %v822 = vpack.c.b16 %v792, %v791
  %v823 = vpack.c.b16 %v794, %v793
  %v824 = vpack.c.b16 %v796, %v795
  %v825 = vpack.c.b16 %v798, %v797
  %v826 = vpack.c.b16 %v800, %v799
  %v827 = vpack.c.b16 %v802, %v801
  %v828 = vpack.c.b16 %v804, %v803
  %v829 = vpack.c.b16 %v806, %v805
  %v830 = vpack.c.b16 %v808, %v807
  %v831 = vpack.c.b16 %v810, %v809
  %v832 = vpack.c.b16 %v812, %v811
  %v833 = vpack.c.b16 %v814, %v813
  %v834 = vpack.c.b16 %v816, %v815
  %v835 = vpack.c.b16 %v818, %v817
  %v836 = vpack.c.b16 %v820, %v819
  %853 = vmatprep.subr.bf16.mxu0 0
  %854 = vmatpush1.bf16.msra.mxu0 %v828
  %855 = vmatprep.subr.bf16.mxu0 0
  %856 = vmatpush1.bf16.msra.mxu0 %v827
  %857 = vmatprep.subr.bf16.mxu0 0
  %858 = vmatpush1.bf16.msra.mxu0 %v826
  %859 = vmatprep.subr.bf16.mxu0 0
  %860 = vmatpush1.bf16.msra.mxu0 %v825
  %861 = vmatprep.subr.bf16.mxu0 0
  %862 = vmatpush1.bf16.msra.mxu0 %v824
  %863 = vmatprep.subr.bf16.mxu0 0
  %864 = vmatpush1.bf16.msra.mxu0 %v823
  %865 = vmatprep.subr.bf16.mxu0 0
  %866 = vmatpush1.bf16.msra.mxu0 %v822
  %867 = vmatprep.subr.bf16.mxu0 0
  %868 = vmatpush1.bf16.msra.mxu0 %v821
  %869 = vmatprep.subr.bf16.mxu0 0
  %870 = vmatpush2.bf16.msra.mxu0 %v836
  %871 = vmatprep.subr.bf16.mxu0 0
  %872 = vmatpush2.bf16.msra.mxu0 %v835
  %873 = vmatprep.subr.bf16.mxu0 0
  %874 = vmatpush2.bf16.msra.mxu0 %v834
  %875 = vmatprep.subr.bf16.mxu0 0
  %876 = vmatpush2.bf16.msra.mxu0 %v833
  %877 = vmatprep.subr.bf16.mxu0 0
  %878 = vmatpush2.bf16.msra.mxu0 %v832
  %879 = vmatprep.subr.bf16.mxu0 0
  %880 = vmatpush2.bf16.msra.mxu0 %v831
  %881 = vmatprep.subr.bf16.mxu0 0
  %882 = vmatpush2.bf16.msra.mxu0 %v830
  %883 = vmatprep.subr.bf16.mxu0 0
  %884 = vmatpush2.bf16.msra.mxu0 %v829
  %885 = vmatprep.mubr.bf16.mxu0 %v750
  %886 = vmatmul.mubr.bf16.gmra.mxu0 %v749
  %v887 = vpop.f32.mrf.mxu0
  %v888 = vadd.f32 %v735, %v887
  %v889 = vpop.f32.mrf.mxu0
  %v890 = vpop.f32.mrf.mxu0
  %v891 = vadd.f32 %v735, %v890
  %v892 = vpop.f32.mrf.mxu0
  %893 = vmatprep.mubr.bf16.mxu0 %v752
  %894 = vmatmul.mubr.bf16.gmra.mxu0 %v751
  %v895 = vpop.f32.mrf.mxu0
  %v896 = vadd.f32 %v735, %v895
  %v897 = vpop.f32.mrf.mxu0
  %v898 = vpop.f32.mrf.mxu0
  %v899 = vadd.f32 %v735, %v898
  %v900 = vpop.f32.mrf.mxu0
  %901 = vdwg.mxu0
  %s902 = scalar_lea.vmem [#allocation2], 96
  %903 = vst [vmem:[%s902] sm:$0xff] %v888
  %904 = vst [vmem:[%s902 + $0x8] sm:$0xff] %v891
  %905 = vst [vmem:[%s902 + $0x10] sm:$0xff] %v896
  %906 = vst [vmem:[%s902 + $0x18] sm:$0xff] %v899
  %v907 = vadd.f32 %v888, %v891
  %v908 = vadd.f32 %v907, %v896
  %v909 = vadd.f32 %v908, %v899
  %v910 = vrot.slane %v909, 4
  %v911 = vadd.f32 %v909, %v910
  %v912 = vrot.slane %v911, 2
  %v913 = vadd.f32 %v911, %v912
  %v914 = vrot.slane %v913, 1
  %v915 = vadd.f32 %v913, %v914
  %v916 = vadd.f32 %v691, %v915
  %v917 = vmul.f32 %v916, 0.0078125
  %v918 = vld [vmem:[#allocation2] sm:$0xff]
  %v919 = vld [vmem:[#allocation2 + $0x8] sm:$0xff]
  %v920 = vld [vmem:[#allocation2 + $0x10] sm:$0xff]
  %v921 = vld [vmem:[#allocation2 + $0x18] sm:$0xff]
  %v922 = vsub.f32 %v918, %v917
  %v923 = vsub.f32 %v919, %v917
  %v924 = vsub.f32 %v920, %v917
  %v925 = vsub.f32 %v921, %v917
  %v926 = vmul.f32 %v922, %v922
  %v927 = vmul.f32 %v923, %v923
  %v928 = vmul.f32 %v924, %v924
  %v929 = vmul.f32 %v925, %v925
  %v930 = vadd.f32 %v926, %v927
  %v931 = vadd.f32 %v930, %v928
  %v932 = vadd.f32 %v931, %v929
  %v933 = vrot.slane %v932, 4
  %v934 = vadd.f32 %v932, %v933
  %v935 = vrot.slane %v934, 2
  %v936 = vadd.f32 %v934, %v935
  %v937 = vrot.slane %v936, 1
  %v938 = vadd.f32 %v936, %v937
  %v939 = vld [vmem:[%s452] sm:$0xff]
  %v940 = vld [vmem:[%s452 + $0x8] sm:$0xff]
  %v941 = vld [vmem:[%s452 + $0x10] sm:$0xff]
  %v942 = vld [vmem:[%s452 + $0x18] sm:$0xff]
  %v943 = vsub.f32 %v939, %v917
  %v944 = vsub.f32 %v940, %v917
  %v945 = vsub.f32 %v941, %v917
  %v946 = vsub.f32 %v942, %v917
  %v947 = vmul.f32 %v943, %v943
  %v948 = vmul.f32 %v944, %v944
  %v949 = vmul.f32 %v945, %v945
  %v950 = vmul.f32 %v946, %v946
  %v951 = vadd.f32 %v947, %v948
  %v952 = vadd.f32 %v951, %v949
  %v953 = vadd.f32 %v952, %v950
  %v954 = vrot.slane %v953, 4
  %v955 = vadd.f32 %v953, %v954
  %v956 = vrot.slane %v955, 2
  %v957 = vadd.f32 %v955, %v956
  %v958 = vrot.slane %v957, 1
  %v959 = vadd.f32 %v957, %v958
  %v960 = vadd.f32 %v938, %v959
  %v961 = vld [vmem:[%s677] sm:$0xff]
  %v962 = vld [vmem:[%s677 + $0x8] sm:$0xff]
  %v963 = vld [vmem:[%s677 + $0x10] sm:$0xff]
  %v964 = vld [vmem:[%s677 + $0x18] sm:$0xff]
  %v965 = vsub.f32 %v961, %v917
  %v966 = vsub.f32 %v962, %v917
  %v967 = vsub.f32 %v963, %v917
  %v968 = vsub.f32 %v964, %v917
  %v969 = vmul.f32 %v965, %v965
  %v970 = vmul.f32 %v966, %v966
  %v971 = vmul.f32 %v967, %v967
  %v972 = vmul.f32 %v968, %v968
  %v973 = vadd.f32 %v969, %v970
  %v974 = vadd.f32 %v973, %v971
  %v975 = vadd.f32 %v974, %v972
  %v976 = vrot.slane %v975, 4
  %v977 = vadd.f32 %v975, %v976
  %v978 = vrot.slane %v977, 2
  %v979 = vadd.f32 %v977, %v978
  %v980 = vrot.slane %v979, 1
  %v981 = vadd.f32 %v979, %v980
  %v982 = vadd.f32 %v960, %v981
  %v983 = vld [vmem:[%s902] sm:$0xff]
  %v984 = vld [vmem:[%s902 + $0x8] sm:$0xff]
  %v985 = vld [vmem:[%s902 + $0x10] sm:$0xff]
  %v986 = vld [vmem:[%s902 + $0x18] sm:$0xff]
  %v987 = vsub.f32 %v983, %v917
  %v988 = vsub.f32 %v984, %v917
  %v989 = vsub.f32 %v985, %v917
  %v990 = vsub.f32 %v986, %v917
  %v991 = vmul.f32 %v987, %v987
  %v992 = vmul.f32 %v988, %v988
  %v993 = vmul.f32 %v989, %v989
  %v994 = vmul.f32 %v990, %v990
  %v995 = vadd.f32 %v991, %v992
  %v996 = vadd.f32 %v995, %v993
  %v997 = vadd.f32 %v996, %v994
  %v998 = vrot.slane %v997, 4
  %v999 = vadd.f32 %v997, %v998
  %v1000 = vrot.slane %v999, 2
  %v1001 = vadd.f32 %v999, %v1000
  %v1002 = vrot.slane %v1001, 1
  %v1003 = vadd.f32 %v1001, %v1002
  %v1004 = vadd.f32 %v982, %v1003
  %v1005 = vmul.f32 %v1004, 0.0078125
  %v1006 = vmax.f32 %v1005, 0.0
  %v1007 = vld [vmem:[%s3] sm:$0x1]
  %v1008 = vadd.f32 %v1006, 1e-05
  %v1009 = vrsqrt.pop %v1008
  %v1010 = vmul.f32 %v1007, %v1009
  %v1011 = vld [vmem:[%s4] sm:$0x1]
  %v1012 = vmul.f32 %v917, %v1010
  %v1013 = vsub.f32 %v1011, %v1012
  %v1015 = vlaneseq
  %v1016 = vshrl.u32 %v1015, 7
  %v1017 = vsub.s32 0, %v1016
  %v1018 = vrot.slane %v1010, %v1017
  %v1020 = vmul.f32 %v918, %v1018
  %v1021 = vmul.f32 %v919, %v1018
  %v1022 = vmul.f32 %v920, %v1018
  %v1023 = vmul.f32 %v921, %v1018
  %v1025 = vlaneseq
  %v1026 = vshrl.u32 %v1025, 7
  %v1027 = vsub.s32 0, %v1026
  %v1028 = vrot.slane %v1013, %v1027
  %v1030 = vadd.f32 %v1020, %v1028
  %v1031 = vadd.f32 %v1021, %v1028
  %v1032 = vadd.f32 %v1022, %v1028
  %v1033 = vadd.f32 %v1023, %v1028
  %v1034 = vmax.f32 %v1030, 0.0
  %v1035 = vmax.f32 %v1031, 0.0
  %v1036 = vmax.f32 %v1032, 0.0
  %v1037 = vmax.f32 %v1033, 0.0
  %v1038 = vpack.c.bf16 %v1035, %v1034
  %v1039 = vpack.c.bf16 %v1037, %v1036
  %v1042 = vunpack.c.l.b16 %v1038
  %v1043 = vunpack.c.h.b16 %v1038
  %v1044 = vunpack.c.l.b16 %v1039
  %v1045 = vunpack.c.h.b16 %v1039
  %v1046 = vpack.c.b16 %v1042, %v1042
  %v1047 = vpack.c.b16 %v1043, %v1043
  %v1048 = vpack.c.b16 %v1044, %v1044
  %v1049 = vpack.c.b16 %v1045, %v1045
  %1054 = vst [vmem:[%s5] sm:$0xf] %v1046
  %1055 = vst [vmem:[%s5 + $0x4] sm:$0xf] %v1047
  %1056 = vst [vmem:[%s5 + $0x8] sm:$0xf] %v1048
  %1057 = vst [vmem:[%s5 + $0xc] sm:$0xf] %v1049
  %v1058 = vld [vmem:[%s452] sm:$0xff]
  %v1059 = vld [vmem:[%s452 + $0x8] sm:$0xff]
  %v1060 = vld [vmem:[%s452 + $0x10] sm:$0xff]
  %v1061 = vld [vmem:[%s452 + $0x18] sm:$0xff]
  %v1062 = vmul.f32 %v1058, %v1018
  %v1063 = vmul.f32 %v1059, %v1018
  %v1064 = vmul.f32 %v1060, %v1018
  %v1065 = vmul.f32 %v1061, %v1018
  %v1066 = vadd.f32 %v1062, %v1028
  %v1067 = vadd.f32 %v1063, %v1028
  %v1068 = vadd.f32 %v1064, %v1028
  %v1069 = vadd.f32 %v1065, %v1028
  %v1070 = vmax.f32 %v1066, 0.0
  %v1071 = vmax.f32 %v1067, 0.0
  %v1072 = vmax.f32 %v1068, 0.0
  %v1073 = vmax.f32 %v1069, 0.0
  %v1074 = vpack.c.bf16 %v1071, %v1070
  %v1075 = vpack.c.bf16 %v1073, %v1072
  %v1078 = vunpack.c.l.b16 %v1074
  %v1079 = vunpack.c.h.b16 %v1074
  %v1080 = vunpack.c.l.b16 %v1075
  %v1081 = vunpack.c.h.b16 %v1075
  %v1082 = vpack.c.b16 %v1078, %v1078
  %v1083 = vpack.c.b16 %v1079, %v1079
  %v1084 = vpack.c.b16 %v1080, %v1080
  %v1085 = vpack.c.b16 %v1081, %v1081
  %s1090 = scalar_lea.vmem %s5, 16
  %1091 = vst [vmem:[%s1090] sm:$0xf] %v1082
  %1092 = vst [vmem:[%s1090 + $0x4] sm:$0xf] %v1083
  %1093 = vst [vmem:[%s1090 + $0x8] sm:$0xf] %v1084
  %1094 = vst [vmem:[%s1090 + $0xc] sm:$0xf] %v1085
  %v1095 = vld [vmem:[%s677] sm:$0xff]
  %v1096 = vld [vmem:[%s677 + $0x8] sm:$0xff]
  %v1097 = vld [vmem:[%s677 + $0x10] sm:$0xff]
  %v1098 = vld [vmem:[%s677 + $0x18] sm:$0xff]
  %v1099 = vmul.f32 %v1095, %v1018
  %v1100 = vmul.f32 %v1096, %v1018
  %v1101 = vmul.f32 %v1097, %v1018
  %v1102 = vmul.f32 %v1098, %v1018
  %v1103 = vadd.f32 %v1099, %v1028
  %v1104 = vadd.f32 %v1100, %v1028
  %v1105 = vadd.f32 %v1101, %v1028
  %v1106 = vadd.f32 %v1102, %v1028
  %v1107 = vmax.f32 %v1103, 0.0
  %v1108 = vmax.f32 %v1104, 0.0
  %v1109 = vmax.f32 %v1105, 0.0
  %v1110 = vmax.f32 %v1106, 0.0
  %v1111 = vpack.c.bf16 %v1108, %v1107
  %v1112 = vpack.c.bf16 %v1110, %v1109
  %v1115 = vunpack.c.l.b16 %v1111
  %v1116 = vunpack.c.h.b16 %v1111
  %v1117 = vunpack.c.l.b16 %v1112
  %v1118 = vunpack.c.h.b16 %v1112
  %v1119 = vpack.c.b16 %v1115, %v1115
  %v1120 = vpack.c.b16 %v1116, %v1116
  %v1121 = vpack.c.b16 %v1117, %v1117
  %v1122 = vpack.c.b16 %v1118, %v1118
  %s1127 = scalar_lea.vmem %s5, 32
  %1128 = vst [vmem:[%s1127] sm:$0xf] %v1119
  %1129 = vst [vmem:[%s1127 + $0x4] sm:$0xf] %v1120
  %1130 = vst [vmem:[%s1127 + $0x8] sm:$0xf] %v1121
  %1131 = vst [vmem:[%s1127 + $0xc] sm:$0xf] %v1122
  %v1132 = vld [vmem:[%s902] sm:$0xff]
  %v1133 = vld [vmem:[%s902 + $0x8] sm:$0xff]
  %v1134 = vld [vmem:[%s902 + $0x10] sm:$0xff]
  %v1135 = vld [vmem:[%s902 + $0x18] sm:$0xff]
  %v1136 = vmul.f32 %v1132, %v1018
  %v1137 = vmul.f32 %v1133, %v1018
  %v1138 = vmul.f32 %v1134, %v1018
  %v1139 = vmul.f32 %v1135, %v1018
  %v1140 = vadd.f32 %v1136, %v1028
  %v1141 = vadd.f32 %v1137, %v1028
  %v1142 = vadd.f32 %v1138, %v1028
  %v1143 = vadd.f32 %v1139, %v1028
  %v1144 = vmax.f32 %v1140, 0.0
  %v1145 = vmax.f32 %v1141, 0.0
  %v1146 = vmax.f32 %v1142, 0.0
  %v1147 = vmax.f32 %v1143, 0.0
  %v1148 = vpack.c.bf16 %v1145, %v1144
  %v1149 = vpack.c.bf16 %v1147, %v1146
  %v1152 = vunpack.c.l.b16 %v1148
  %v1153 = vunpack.c.h.b16 %v1148
  %v1154 = vunpack.c.l.b16 %v1149
  %v1155 = vunpack.c.h.b16 %v1149
  %v1156 = vpack.c.b16 %v1152, %v1152
  %v1157 = vpack.c.b16 %v1153, %v1153
  %v1158 = vpack.c.b16 %v1154, %v1154
  %v1159 = vpack.c.b16 %v1155, %v1155
  %s1164 = scalar_lea.vmem %s5, 48
  %1165 = vst [vmem:[%s1164] sm:$0xf] %v1156
  %1166 = vst [vmem:[%s1164 + $0x4] sm:$0xf] %v1157
  %1167 = vst [vmem:[%s1164 + $0x8] sm:$0xf] %v1158
  %1168 = vst [vmem:[%s1164 + $0xc] sm:$0xf] %v1159
  // Predicated region
  $region22: #{vae_forward.13} parent=0 // pred_check
    _
  $region23: #{vae_forward.13} parent=0 // pred_check_branch
    %1170 = sbr.rel (0) target = $region25
  $region24: #{vae_forward.13} parent=0 // pred_region
    _
  $region25: #{vae_forward.13} parent=0 // pred_fallthru
    _
  // Predicated region
  $region26: #{vae_forward.13} parent=0 // pred_check
    _
  $region27: #{vae_forward.13} parent=0 // pred_check_branch
    %1172 = sbr.rel (0) target = $region29
  $region28: #{vae_forward.13} parent=0 // pred_region
    _
  $region29: #{vae_forward.13} parent=0 // pred_fallthru
    _

// kernel: vae_forward.14
$region0: #{vae_forward.14}
  #allocation0 [shape = 'u32[]', space=smem, size = 0x4, offset = 0x4, fixed_abs, tag = 'smem constant byte address 0x4 - core index']
  #allocation1 [shape = 'u32[144,128]{1,0:T(1,128)}', space=vmem, size = 0x12000, scoped, tag = 'internal scratch']
  #allocation2 [shape = 'f32[4,128,128]{2,1,0:T(8,128)}', space=vmem, size = 0x40000, scoped, tag = 'scratch operand']
  %s0 = inlined_call_operand.vmem [shape: bf16[4,128,128], index: 0, kind: input, shape index: {}]
  %s1 = inlined_call_operand.vmem [shape: bf16[4,128,128], index: 1, kind: input, shape index: {}]
  %s2 = inlined_call_operand.vmem [shape: f32[1,128], index: 2, kind: input, shape index: {}]
  %s3 = inlined_call_operand.vmem [shape: f32[1,128], index: 3, kind: input, shape index: {}]
  %s4 = inlined_call_operand.vmem [shape: f32[1,128], index: 4, kind: input, shape index: {}]
  %s5 = inlined_call_operand.vmem [shape: bf16[4,128,128], index: 5, kind: output, shape index: {}]
  %s6 = sld [smem:[#allocation0]]
  $region30: #{vae_forward.14} parent=0
    _
  %s8 = ssub.s32 1, %s6
  %s9 = scalar_select 0, %s8, %s6
  // Predicated region
  $region2: #{vae_forward.14} parent=0 // pred_check
    _
  $region3: #{vae_forward.14} parent=0 // pred_check_branch
    %11 = sbr.rel (0) target = $region5
  $region4: #{vae_forward.14} parent=0 // pred_region
    _
  $region5: #{vae_forward.14} parent=0 // pred_fallthru
    _
  // Predicated region
  $region6: #{vae_forward.14} parent=0 // pred_check
    _
  $region7: #{vae_forward.14} parent=0 // pred_check_branch
    %13 = sbr.rel (0) target = $region9
  $region8: #{vae_forward.14} parent=0 // pred_region
    _
  $region9: #{vae_forward.14} parent=0 // pred_fallthru
    _
  // Predicated region
  $region10: #{vae_forward.14} parent=0 // pred_check
    _
  $region11: #{vae_forward.14} parent=0 // pred_check_branch
    %15 = sbr.rel (0) target = $region13
  $region12: #{vae_forward.14} parent=0 // pred_region
    _
  $region13: #{vae_forward.14} parent=0 // pred_fallthru
    _
  // Predicated region
  $region14: #{vae_forward.14} parent=0 // pred_check
    _
  $region15: #{vae_forward.14} parent=0 // pred_check_branch
    %17 = sbr.rel (0) target = $region17
  $region16: #{vae_forward.14} parent=0 // pred_region
    _
  $region17: #{vae_forward.14} parent=0 // pred_fallthru
    _
  // Predicated region
  $region18: #{vae_forward.14} parent=0 // pred_check
    _
  $region19: #{vae_forward.14} parent=0 // pred_check_branch
    %19 = sbr.rel (0) target = $region21
  $region20: #{vae_forward.14} parent=0 // pred_region
    _
  $region21: #{vae_forward.14} parent=0 // pred_fallthru
    _
  %v21 = vld [vmem:[%s0] sm:$0xf]
  %v22 = vld [vmem:[%s0 + $0x4] sm:$0xf]
  %v23 = vld [vmem:[%s0 + $0x8] sm:$0xf]
  %v24 = vld [vmem:[%s0 + $0xc] sm:$0xf]
  %v25 = vld [vmem:[%s0 + $0x10] sm:$0xf]
  %v26 = vld [vmem:[%s0 + $0x14] sm:$0xf]
  %v27 = vld [vmem:[%s0 + $0x18] sm:$0xf]
  %v28 = vld [vmem:[%s0 + $0x1c] sm:$0xf]
  %v29 = vld [vmem:[%s0 + $0x20] sm:$0xf]
  %v30 = vld [vmem:[%s0 + $0x24] sm:$0xf]
  %v31 = vld [vmem:[%s0 + $0x28] sm:$0xf]
  %v32 = vld [vmem:[%s0 + $0x2c] sm:$0xf]
  %v33 = vld [vmem:[%s0 + $0x30] sm:$0xf]
  %v34 = vld [vmem:[%s0 + $0x34] sm:$0xf]
  %v35 = vld [vmem:[%s0 + $0x38] sm:$0xf]
  %v36 = vld [vmem:[%s0 + $0x3c] sm:$0xf]
  %v37 = vld [vmem:[%s1] sm:$0xf]
  %v38 = vld [vmem:[%s1 + $0x4] sm:$0xf]
  %v39 = vld [vmem:[%s1 + $0x8] sm:$0xf]
  %v40 = vld [vmem:[%s1 + $0xc] sm:$0xf]
  %v41 = vld [vmem:[%s1 + $0x10] sm:$0xf]
  %v42 = vld [vmem:[%s1 + $0x14] sm:$0xf]
  %v43 = vld [vmem:[%s1 + $0x18] sm:$0xf]
  %v44 = vld [vmem:[%s1 + $0x1c] sm:$0xf]
  %v45 = vld [vmem:[%s1 + $0x20] sm:$0xf]
  %v46 = vld [vmem:[%s1 + $0x24] sm:$0xf]
  %v47 = vld [vmem:[%s1 + $0x28] sm:$0xf]
  %v48 = vld [vmem:[%s1 + $0x2c] sm:$0xf]
  %v49 = vld [vmem:[%s1 + $0x30] sm:$0xf]
  %v50 = vld [vmem:[%s1 + $0x34] sm:$0xf]
  %v51 = vld [vmem:[%s1 + $0x38] sm:$0xf]
  %v52 = vld [vmem:[%s1 + $0x3c] sm:$0xf]
  %v53 = vld [vmem:[%s2] sm:$0x1]
  %v55 = vlaneseq
  %v56 = vshrl.u32 %v55, 7
  %v57 = vsub.s32 0, %v56
  %v58 = vrot.slane %v53, %v57
  %v76 = vunpack.c.l.b16 %v21
  %v77 = vunpack.c.l.b16 %v22
  %v78 = vunpack.c.l.b16 %v23
  %v79 = vunpack.c.l.b16 %v24
  %v80 = vunpack.c.l.b16 %v25
  %v81 = vunpack.c.l.b16 %v26
  %v82 = vunpack.c.l.b16 %v27
  %v83 = vunpack.c.l.b16 %v28
  %v84 = vunpack.c.l.b16 %v29
  %v85 = vunpack.c.l.b16 %v30
  %v86 = vunpack.c.l.b16 %v31
  %v87 = vunpack.c.l.b16 %v32
  %v88 = vunpack.c.l.b16 %v33
  %v89 = vunpack.c.l.b16 %v34
  %v90 = vunpack.c.l.b16 %v35
  %v91 = vunpack.c.l.b16 %v36
  %v92 = vpack.c.b16 %v77, %v76
  %v93 = vpack.c.b16 %v79, %v78
  %v94 = vpack.c.b16 %v81, %v80
  %v95 = vpack.c.b16 %v83, %v82
  %v96 = vpack.c.b16 %v85, %v84
  %v97 = vpack.c.b16 %v87, %v86
  %v98 = vpack.c.b16 %v89, %v88
  %v99 = vpack.c.b16 %v91, %v90
  %v124 = vunpack.c.l.b16 %v37
  %v125 = vunpack.c.l.b16 %v38
  %v126 = vunpack.c.l.b16 %v39
  %v127 = vunpack.c.l.b16 %v40
  %v128 = vunpack.c.l.b16 %v41
  %v129 = vunpack.c.l.b16 %v42
  %v130 = vunpack.c.l.b16 %v43
  %v131 = vunpack.c.l.b16 %v44
  %v132 = vunpack.c.l.b16 %v45
  %v133 = vunpack.c.l.b16 %v46
  %v134 = vunpack.c.l.b16 %v47
  %v135 = vunpack.c.l.b16 %v48
  %v136 = vunpack.c.l.b16 %v49
  %v137 = vunpack.c.l.b16 %v50
  %v138 = vunpack.c.l.b16 %v51
  %v139 = vunpack.c.l.b16 %v52
  %v140 = vpack.c.b16 %v125, %v124
  %v141 = vpack.c.b16 %v127, %v126
  %v142 = vpack.c.b16 %v129, %v128
  %v143 = vpack.c.b16 %v131, %v130
  %v144 = vpack.c.b16 %v133, %v132
  %v145 = vpack.c.b16 %v135, %v134
  %v146 = vpack.c.b16 %v137, %v136
  %v147 = vpack.c.b16 %v139, %v138
  %156 = vmatprep.subr.bf16.mxu0 0
  %157 = vmatpush1.bf16.msra.mxu0 %v147
  %158 = vmatprep.subr.bf16.mxu0 0
  %159 = vmatpush1.bf16.msra.mxu0 %v146
  %160 = vmatprep.subr.bf16.mxu0 0
  %161 = vmatpush1.bf16.msra.mxu0 %v145
  %162 = vmatprep.subr.bf16.mxu0 0
  %163 = vmatpush1.bf16.msra.mxu0 %v144
  %164 = vmatprep.subr.bf16.mxu0 0
  %165 = vmatpush1.bf16.msra.mxu0 %v143
  %166 = vmatprep.subr.bf16.mxu0 0
  %167 = vmatpush1.bf16.msra.mxu0 %v142
  %168 = vmatprep.subr.bf16.mxu0 0
  %169 = vmatpush1.bf16.msra.mxu0 %v141
  %170 = vmatprep.subr.bf16.mxu0 0
  %171 = vmatpush1.bf16.msra.mxu0 %v140
  %172 = vmatprep.subr.bf16.mxu0 0
  %173 = vmatpush2.bf16.msra.mxu0 0
  %174 = vmatprep.subr.bf16.mxu0 0
  %175 = vmatpush2.bf16.msra.mxu0 0
  %176 = vmatprep.subr.bf16.mxu0 0
  %177 = vmatpush2.bf16.msra.mxu0 0
  %178 = vmatprep.subr.bf16.mxu0 0
  %179 = vmatpush2.bf16.msra.mxu0 0
  %180 = vmatprep.subr.bf16.mxu0 0
  %181 = vmatpush2.bf16.msra.mxu0 0
  %182 = vmatprep.subr.bf16.mxu0 0
  %183 = vmatpush2.bf16.msra.mxu0 0
  %184 = vmatprep.subr.bf16.mxu0 0
  %185 = vmatpush2.bf16.msra.mxu0 0
  %186 = vmatprep.subr.bf16.mxu0 0
  %187 = vmatpush2.bf16.msra.mxu0 0
  %188 = vmatprep.mubr.bf16.mxu0 0
  %189 = vmatmul.mubr.bf16.gmra.mxu0 %v92
  %v190 = vpop.f32.mrf.mxu0
  %v191 = vadd.f32 %v58, %v190
  %v192 = vpop.f32.mrf.mxu0
  %v193 = vpop.f32.mrf.mxu0
  %v194 = vadd.f32 %v58, %v193
  %v195 = vpop.f32.mrf.mxu0
  %196 = vmatprep.mubr.bf16.mxu0 0
  %197 = vmatmul.mubr.bf16.gmra.mxu0 %v93
  %v198 = vpop.f32.mrf.mxu0
  %v199 = vadd.f32 %v58, %v198
  %v200 = vpop.f32.mrf.mxu0
  %v201 = vpop.f32.mrf.mxu0
  %v202 = vadd.f32 %v58, %v201
  %v203 = vpop.f32.mrf.mxu0
  %204 = vmatprep.mubr.bf16.mxu0 0
  %205 = vmatmul.mubr.bf16.gmra.mxu0 %v94
  %v206 = vpop.f32.mrf.mxu0
  %v207 = vadd.f32 %v58, %v206
  %v208 = vpop.f32.mrf.mxu0
  %v209 = vpop.f32.mrf.mxu0
  %v210 = vadd.f32 %v58, %v209
  %v211 = vpop.f32.mrf.mxu0
  %212 = vmatprep.mubr.bf16.mxu0 0
  %213 = vmatmul.mubr.bf16.gmra.mxu0 %v95
  %v214 = vpop.f32.mrf.mxu0
  %v215 = vadd.f32 %v58, %v214
  %v216 = vpop.f32.mrf.mxu0
  %v217 = vpop.f32.mrf.mxu0
  %v218 = vadd.f32 %v58, %v217
  %v219 = vpop.f32.mrf.mxu0
  %220 = vmatprep.mubr.bf16.mxu0 0
  %221 = vmatmul.mubr.bf16.gmra.mxu0 %v96
  %v222 = vpop.f32.mrf.mxu0
  %v223 = vadd.f32 %v58, %v222
  %v224 = vpop.f32.mrf.mxu0
  %v225 = vpop.f32.mrf.mxu0
  %v226 = vadd.f32 %v58, %v225
  %v227 = vpop.f32.mrf.mxu0
  %228 = vmatprep.mubr.bf16.mxu0 0
  %229 = vmatmul.mubr.bf16.gmra.mxu0 %v97
  %v230 = vpop.f32.mrf.mxu0
  %v231 = vadd.f32 %v58, %v230
  %v232 = vpop.f32.mrf.mxu0
  %v233 = vpop.f32.mrf.mxu0
  %v234 = vadd.f32 %v58, %v233
  %v235 = vpop.f32.mrf.mxu0
  %236 = vmatprep.mubr.bf16.mxu0 0
  %237 = vmatmul.mubr.bf16.gmra.mxu0 %v98
  %v238 = vpop.f32.mrf.mxu0
  %v239 = vadd.f32 %v58, %v238
  %v240 = vpop.f32.mrf.mxu0
  %v241 = vpop.f32.mrf.mxu0
  %v242 = vadd.f32 %v58, %v241
  %v243 = vpop.f32.mrf.mxu0
  %244 = vmatprep.mubr.bf16.mxu0 0
  %245 = vmatmul.mubr.bf16.gmra.mxu0 %v99
  %v246 = vpop.f32.mrf.mxu0
  %v247 = vadd.f32 %v58, %v246
  %v248 = vpop.f32.mrf.mxu0
  %v249 = vpop.f32.mrf.mxu0
  %v250 = vadd.f32 %v58, %v249
  %v251 = vpop.f32.mrf.mxu0
  %252 = vdwg.mxu0
  %253 = vst [vmem:[#allocation2] sm:$0xff] %v191
  %254 = vst [vmem:[#allocation2 + $0x8] sm:$0xff] %v194
  %255 = vst [vmem:[#allocation2 + $0x10] sm:$0xff] %v199
  %256 = vst [vmem:[#allocation2 + $0x18] sm:$0xff] %v202
  %257 = vst [vmem:[#allocation2 + $0x20] sm:$0xff] %v207
  %258 = vst [vmem:[#allocation2 + $0x28] sm:$0xff] %v210
  %259 = vst [vmem:[#allocation2 + $0x30] sm:$0xff] %v215
  %260 = vst [vmem:[#allocation2 + $0x38] sm:$0xff] %v218
  %261 = vst [vmem:[#allocation2 + $0x40] sm:$0xff] %v223
  %262 = vst [vmem:[#allocation2 + $0x48] sm:$0xff] %v226
  %263 = vst [vmem:[#allocation2 + $0x50] sm:$0xff] %v231
  %264 = vst [vmem:[#allocation2 + $0x58] sm:$0xff] %v234
  %265 = vst [vmem:[#allocation2 + $0x60] sm:$0xff] %v239
  %266 = vst [vmem:[#allocation2 + $0x68] sm:$0xff] %v242
  %267 = vst [vmem:[#allocation2 + $0x70] sm:$0xff] %v247
  %268 = vst [vmem:[#allocation2 + $0x78] sm:$0xff] %v250
  %v269 = vadd.f32 %v191, %v194
  %v270 = vadd.f32 %v269, %v199
  %v271 = vadd.f32 %v270, %v202
  %v272 = vadd.f32 %v271, %v207
  %v273 = vadd.f32 %v272, %v210
  %v274 = vadd.f32 %v273, %v215
  %v275 = vadd.f32 %v274, %v218
  %v276 = vadd.f32 %v275, %v223
  %v277 = vadd.f32 %v276, %v226
  %v278 = vadd.f32 %v277, %v231
  %v279 = vadd.f32 %v278, %v234
  %v280 = vadd.f32 %v279, %v239
  %v281 = vadd.f32 %v280, %v242
  %v282 = vadd.f32 %v281, %v247
  %v283 = vadd.f32 %v282, %v250
  %v284 = vrot.slane %v283, 4
  %v285 = vadd.f32 %v283, %v284
  %v286 = vrot.slane %v285, 2
  %v287 = vadd.f32 %v285, %v286
  %v288 = vrot.slane %v287, 1
  %v289 = vadd.f32 %v287, %v288
  %s290 = scalar_lea.vmem %s0, 64
  %v291 = vld [vmem:[%s290] sm:$0xf]
  %v292 = vld [vmem:[%s290 + $0x4] sm:$0xf]
  %v293 = vld [vmem:[%s290 + $0x8] sm:$0xf]
  %v294 = vld [vmem:[%s290 + $0xc] sm:$0xf]
  %v295 = vld [vmem:[%s290 + $0x10] sm:$0xf]
  %v296 = vld [vmem:[%s290 + $0x14] sm:$0xf]
  %v297 = vld [vmem:[%s290 + $0x18] sm:$0xf]
  %v298 = vld [vmem:[%s290 + $0x1c] sm:$0xf]
  %v299 = vld [vmem:[%s290 + $0x20] sm:$0xf]
  %v300 = vld [vmem:[%s290 + $0x24] sm:$0xf]
  %v301 = vld [vmem:[%s290 + $0x28] sm:$0xf]
  %v302 = vld [vmem:[%s290 + $0x2c] sm:$0xf]
  %v303 = vld [vmem:[%s290 + $0x30] sm:$0xf]
  %v304 = vld [vmem:[%s290 + $0x34] sm:$0xf]
  %v305 = vld [vmem:[%s290 + $0x38] sm:$0xf]
  %v306 = vld [vmem:[%s290 + $0x3c] sm:$0xf]
  %s307 = scalar_lea.vmem %s1, 64
  %v308 = vld [vmem:[%s307] sm:$0xf]
  %v309 = vld [vmem:[%s307 + $0x4] sm:$0xf]
  %v310 = vld [vmem:[%s307 + $0x8] sm:$0xf]
  %v311 = vld [vmem:[%s307 + $0xc] sm:$0xf]
  %v312 = vld [vmem:[%s307 + $0x10] sm:$0xf]
  %v313 = vld [vmem:[%s307 + $0x14] sm:$0xf]
  %v314 = vld [vmem:[%s307 + $0x18] sm:$0xf]
  %v315 = vld [vmem:[%s307 + $0x1c] sm:$0xf]
  %v316 = vld [vmem:[%s307 + $0x20] sm:$0xf]
  %v317 = vld [vmem:[%s307 + $0x24] sm:$0xf]
  %v318 = vld [vmem:[%s307 + $0x28] sm:$0xf]
  %v319 = vld [vmem:[%s307 + $0x2c] sm:$0xf]
  %v320 = vld [vmem:[%s307 + $0x30] sm:$0xf]
  %v321 = vld [vmem:[%s307 + $0x34] sm:$0xf]
  %v322 = vld [vmem:[%s307 + $0x38] sm:$0xf]
  %v323 = vld [vmem:[%s307 + $0x3c] sm:$0xf]
  %v324 = vld [vmem:[%s2] sm:$0x1]
  %v326 = vlaneseq
  %v327 = vshrl.u32 %v326, 7
  %v328 = vsub.s32 0, %v327
  %v329 = vrot.slane %v324, %v328
  %v347 = vunpack.c.l.b16 %v291
  %v348 = vunpack.c.l.b16 %v292
  %v349 = vunpack.c.l.b16 %v293
  %v350 = vunpack.c.l.b16 %v294
  %v351 = vunpack.c.l.b16 %v295
  %v352 = vunpack.c.l.b16 %v296
  %v353 = vunpack.c.l.b16 %v297
  %v354 = vunpack.c.l.b16 %v298
  %v355 = vunpack.c.l.b16 %v299
  %v356 = vunpack.c.l.b16 %v300
  %v357 = vunpack.c.l.b16 %v301
  %v358 = vunpack.c.l.b16 %v302
  %v359 = vunpack.c.l.b16 %v303
  %v360 = vunpack.c.l.b16 %v304
  %v361 = vunpack.c.l.b16 %v305
  %v362 = vunpack.c.l.b16 %v306
  %v363 = vpack.c.b16 %v348, %v347
  %v364 = vpack.c.b16 %v350, %v349
  %v365 = vpack.c.b16 %v352, %v351
  %v366 = vpack.c.b16 %v354, %v353
  %v367 = vpack.c.b16 %v356, %v355
  %v368 = vpack.c.b16 %v358, %v357
  %v369 = vpack.c.b16 %v360, %v359
  %v370 = vpack.c.b16 %v362, %v361
  %v395 = vunpack.c.l.b16 %v308
  %v396 = vunpack.c.l.b16 %v309
  %v397 = vunpack.c.l.b16 %v310
  %v398 = vunpack.c.l.b16 %v311
  %v399 = vunpack.c.l.b16 %v312
  %v400 = vunpack.c.l.b16 %v313
  %v401 = vunpack.c.l.b16 %v314
  %v402 = vunpack.c.l.b16 %v315
  %v403 = vunpack.c.l.b16 %v316
  %v404 = vunpack.c.l.b16 %v317
  %v405 = vunpack.c.l.b16 %v318
  %v406 = vunpack.c.l.b16 %v319
  %v407 = vunpack.c.l.b16 %v320
  %v408 = vunpack.c.l.b16 %v321
  %v409 = vunpack.c.l.b16 %v322
  %v410 = vunpack.c.l.b16 %v323
  %v411 = vpack.c.b16 %v396, %v395
  %v412 = vpack.c.b16 %v398, %v397
  %v413 = vpack.c.b16 %v400, %v399
  %v414 = vpack.c.b16 %v402, %v401
  %v415 = vpack.c.b16 %v404, %v403
  %v416 = vpack.c.b16 %v406, %v405
  %v417 = vpack.c.b16 %v408, %v407
  %v418 = vpack.c.b16 %v410, %v409
  %427 = vmatprep.subr.bf16.mxu0 0
  %428 = vmatpush1.bf16.msra.mxu0 %v418
  %429 = vmatprep.subr.bf16.mxu0 0
  %430 = vmatpush1.bf16.msra.mxu0 %v417
  %431 = vmatprep.subr.bf16.mxu0 0
  %432 = vmatpush1.bf16.msra.mxu0 %v416
  %433 = vmatprep.subr.bf16.mxu0 0
  %434 = vmatpush1.bf16.msra.mxu0 %v415
  %435 = vmatprep.subr.bf16.mxu0 0
  %436 = vmatpush1.bf16.msra.mxu0 %v414
  %437 = vmatprep.subr.bf16.mxu0 0
  %438 = vmatpush1.bf16.msra.mxu0 %v413
  %439 = vmatprep.subr.bf16.mxu0 0
  %440 = vmatpush1.bf16.msra.mxu0 %v412
  %441 = vmatprep.subr.bf16.mxu0 0
  %442 = vmatpush1.bf16.msra.mxu0 %v411
  %443 = vmatprep.subr.bf16.mxu0 0
  %444 = vmatpush2.bf16.msra.mxu0 0
  %445 = vmatprep.subr.bf16.mxu0 0
  %446 = vmatpush2.bf16.msra.mxu0 0
  %447 = vmatprep.subr.bf16.mxu0 0
  %448 = vmatpush2.bf16.msra.mxu0 0
  %449 = vmatprep.subr.bf16.mxu0 0
  %450 = vmatpush2.bf16.msra.mxu0 0
  %451 = vmatprep.subr.bf16.mxu0 0
  %452 = vmatpush2.bf16.msra.mxu0 0
  %453 = vmatprep.subr.bf16.mxu0 0
  %454 = vmatpush2.bf16.msra.mxu0 0
  %455 = vmatprep.subr.bf16.mxu0 0
  %456 = vmatpush2.bf16.msra.mxu0 0
  %457 = vmatprep.subr.bf16.mxu0 0
  %458 = vmatpush2.bf16.msra.mxu0 0
  %459 = vmatprep.mubr.bf16.mxu0 0
  %460 = vmatmul.mubr.bf16.gmra.mxu0 %v363
  %v461 = vpop.f32.mrf.mxu0
  %v462 = vadd.f32 %v329, %v461
  %v463 = vpop.f32.mrf.mxu0
  %v464 = vpop.f32.mrf.mxu0
  %v465 = vadd.f32 %v329, %v464
  %v466 = vpop.f32.mrf.mxu0
  %467 = vmatprep.mubr.bf16.mxu0 0
  %468 = vmatmul.mubr.bf16.gmra.mxu0 %v364
  %v469 = vpop.f32.mrf.mxu0
  %v470 = vadd.f32 %v329, %v469
  %v471 = vpop.f32.mrf.mxu0
  %v472 = vpop.f32.mrf.mxu0
  %v473 = vadd.f32 %v329, %v472
  %v474 = vpop.f32.mrf.mxu0
  %475 = vmatprep.mubr.bf16.mxu0 0
  %476 = vmatmul.mubr.bf16.gmra.mxu0 %v365
  %v477 = vpop.f32.mrf.mxu0
  %v478 = vadd.f32 %v329, %v477
  %v479 = vpop.f32.mrf.mxu0
  %v480 = vpop.f32.mrf.mxu0
  %v481 = vadd.f32 %v329, %v480
  %v482 = vpop.f32.mrf.mxu0
  %483 = vmatprep.mubr.bf16.mxu0 0
  %484 = vmatmul.mubr.bf16.gmra.mxu0 %v366
  %v485 = vpop.f32.mrf.mxu0
  %v486 = vadd.f32 %v329, %v485
  %v487 = vpop.f32.mrf.mxu0
  %v488 = vpop.f32.mrf.mxu0
  %v489 = vadd.f32 %v329, %v488
  %v490 = vpop.f32.mrf.mxu0
  %491 = vmatprep.mubr.bf16.mxu0 0
  %492 = vmatmul.mubr.bf16.gmra.mxu0 %v367
  %v493 = vpop.f32.mrf.mxu0
  %v494 = vadd.f32 %v329, %v493
  %v495 = vpop.f32.mrf.mxu0
  %v496 = vpop.f32.mrf.mxu0
  %v497 = vadd.f32 %v329, %v496
  %v498 = vpop.f32.mrf.mxu0
  %499 = vmatprep.mubr.bf16.mxu0 0
  %500 = vmatmul.mubr.bf16.gmra.mxu0 %v368
  %v501 = vpop.f32.mrf.mxu0
  %v502 = vadd.f32 %v329, %v501
  %v503 = vpop.f32.mrf.mxu0
  %v504 = vpop.f32.mrf.mxu0
  %v505 = vadd.f32 %v329, %v504
  %v506 = vpop.f32.mrf.mxu0
  %507 = vmatprep.mubr.bf16.mxu0 0
  %508 = vmatmul.mubr.bf16.gmra.mxu0 %v369
  %v509 = vpop.f32.mrf.mxu0
  %v510 = vadd.f32 %v329, %v509
  %v511 = vpop.f32.mrf.mxu0
  %v512 = vpop.f32.mrf.mxu0
  %v513 = vadd.f32 %v329, %v512
  %v514 = vpop.f32.mrf.mxu0
  %515 = vmatprep.mubr.bf16.mxu0 0
  %516 = vmatmul.mubr.bf16.gmra.mxu0 %v370
  %v517 = vpop.f32.mrf.mxu0
  %v518 = vadd.f32 %v329, %v517
  %v519 = vpop.f32.mrf.mxu0
  %v520 = vpop.f32.mrf.mxu0
  %v521 = vadd.f32 %v329, %v520
  %v522 = vpop.f32.mrf.mxu0
  %523 = vdwg.mxu0
  %s524 = scalar_lea.vmem [#allocation2], 128
  %525 = vst [vmem:[%s524] sm:$0xff] %v462
  %526 = vst [vmem:[%s524 + $0x8] sm:$0xff] %v465
  %527 = vst [vmem:[%s524 + $0x10] sm:$0xff] %v470
  %528 = vst [vmem:[%s524 + $0x18] sm:$0xff] %v473
  %529 = vst [vmem:[%s524 + $0x20] sm:$0xff] %v478
  %530 = vst [vmem:[%s524 + $0x28] sm:$0xff] %v481
  %531 = vst [vmem:[%s524 + $0x30] sm:$0xff] %v486
  %532 = vst [vmem:[%s524 + $0x38] sm:$0xff] %v489
  %533 = vst [vmem:[%s524 + $0x40] sm:$0xff] %v494
  %534 = vst [vmem:[%s524 + $0x48] sm:$0xff] %v497
  %535 = vst [vmem:[%s524 + $0x50] sm:$0xff] %v502
  %536 = vst [vmem:[%s524 + $0x58] sm:$0xff] %v505
  %537 = vst [vmem:[%s524 + $0x60] sm:$0xff] %v510
  %538 = vst [vmem:[%s524 + $0x68] sm:$0xff] %v513
  %539 = vst [vmem:[%s524 + $0x70] sm:$0xff] %v518
  %540 = vst [vmem:[%s524 + $0x78] sm:$0xff] %v521
  %v541 = vadd.f32 %v462, %v465
  %v542 = vadd.f32 %v541, %v470
  %v543 = vadd.f32 %v542, %v473
  %v544 = vadd.f32 %v543, %v478
  %v545 = vadd.f32 %v544, %v481
  %v546 = vadd.f32 %v545, %v486
  %v547 = vadd.f32 %v546, %v489
  %v548 = vadd.f32 %v547, %v494
  %v549 = vadd.f32 %v548, %v497
  %v550 = vadd.f32 %v549, %v502
  %v551 = vadd.f32 %v550, %v505
  %v552 = vadd.f32 %v551, %v510
  %v553 = vadd.f32 %v552, %v513
  %v554 = vadd.f32 %v553, %v518
  %v555 = vadd.f32 %v554, %v521
  %v556 = vrot.slane %v555, 4
  %v557 = vadd.f32 %v555, %v556
  %v558 = vrot.slane %v557, 2
  %v559 = vadd.f32 %v557, %v558
  %v560 = vrot.slane %v559, 1
  %v561 = vadd.f32 %v559, %v560
  %v562 = vadd.f32 %v289, %v561
  %s563 = scalar_lea.vmem %s0, 128
  %v564 = vld [vmem:[%s563] sm:$0xf]
  %v565 = vld [vmem:[%s563 + $0x4] sm:$0xf]
  %v566 = vld [vmem:[%s563 + $0x8] sm:$0xf]
  %v567 = vld [vmem:[%s563 + $0xc] sm:$0xf]
  %v568 = vld [vmem:[%s563 + $0x10] sm:$0xf]
  %v569 = vld [vmem:[%s563 + $0x14] sm:$0xf]
  %v570 = vld [vmem:[%s563 + $0x18] sm:$0xf]
  %v571 = vld [vmem:[%s563 + $0x1c] sm:$0xf]
  %v572 = vld [vmem:[%s563 + $0x20] sm:$0xf]
  %v573 = vld [vmem:[%s563 + $0x24] sm:$0xf]
  %v574 = vld [vmem:[%s563 + $0x28] sm:$0xf]
  %v575 = vld [vmem:[%s563 + $0x2c] sm:$0xf]
  %v576 = vld [vmem:[%s563 + $0x30] sm:$0xf]
  %v577 = vld [vmem:[%s563 + $0x34] sm:$0xf]
  %v578 = vld [vmem:[%s563 + $0x38] sm:$0xf]
  %v579 = vld [vmem:[%s563 + $0x3c] sm:$0xf]
  %s580 = scalar_lea.vmem %s1, 128
  %v581 = vld [vmem:[%s580] sm:$0xf]
  %v582 = vld [vmem:[%s580 + $0x4] sm:$0xf]
  %v583 = vld [vmem:[%s580 + $0x8] sm:$0xf]
  %v584 = vld [vmem:[%s580 + $0xc] sm:$0xf]
  %v585 = vld [vmem:[%s580 + $0x10] sm:$0xf]
  %v586 = vld [vmem:[%s580 + $0x14] sm:$0xf]
  %v587 = vld [vmem:[%s580 + $0x18] sm:$0xf]
  %v588 = vld [vmem:[%s580 + $0x1c] sm:$0xf]
  %v589 = vld [vmem:[%s580 + $0x20] sm:$0xf]
  %v590 = vld [vmem:[%s580 + $0x24] sm:$0xf]
  %v591 = vld [vmem:[%s580 + $0x28] sm:$0xf]
  %v592 = vld [vmem:[%s580 + $0x2c] sm:$0xf]
  %v593 = vld [vmem:[%s580 + $0x30] sm:$0xf]
  %v594 = vld [vmem:[%s580 + $0x34] sm:$0xf]
  %v595 = vld [vmem:[%s580 + $0x38] sm:$0xf]
  %v596 = vld [vmem:[%s580 + $0x3c] sm:$0xf]
  %v597 = vld [vmem:[%s2] sm:$0x1]
  %v599 = vlaneseq
  %v600 = vshrl.u32 %v599, 7
  %v601 = vsub.s32 0, %v600
  %v602 = vrot.slane %v597, %v601
  %v620 = vunpack.c.l.b16 %v564
  %v621 = vunpack.c.l.b16 %v565
  %v622 = vunpack.c.l.b16 %v566
  %v623 = vunpack.c.l.b16 %v567
  %v624 = vunpack.c.l.b16 %v568
  %v625 = vunpack.c.l.b16 %v569
  %v626 = vunpack.c.l.b16 %v570
  %v627 = vunpack.c.l.b16 %v571
  %v628 = vunpack.c.l.b16 %v572
  %v629 = vunpack.c.l.b16 %v573
  %v630 = vunpack.c.l.b16 %v574
  %v631 = vunpack.c.l.b16 %v575
  %v632 = vunpack.c.l.b16 %v576
  %v633 = vunpack.c.l.b16 %v577
  %v634 = vunpack.c.l.b16 %v578
  %v635 = vunpack.c.l.b16 %v579
  %v636 = vpack.c.b16 %v621, %v620
  %v637 = vpack.c.b16 %v623, %v622
  %v638 = vpack.c.b16 %v625, %v624
  %v639 = vpack.c.b16 %v627, %v626
  %v640 = vpack.c.b16 %v629, %v628
  %v641 = vpack.c.b16 %v631, %v630
  %v642 = vpack.c.b16 %v633, %v632
  %v643 = vpack.c.b16 %v635, %v634
  %v668 = vunpack.c.l.b16 %v581
  %v669 = vunpack.c.l.b16 %v582
  %v670 = vunpack.c.l.b16 %v583
  %v671 = vunpack.c.l.b16 %v584
  %v672 = vunpack.c.l.b16 %v585
  %v673 = vunpack.c.l.b16 %v586
  %v674 = vunpack.c.l.b16 %v587
  %v675 = vunpack.c.l.b16 %v588
  %v676 = vunpack.c.l.b16 %v589
  %v677 = vunpack.c.l.b16 %v590
  %v678 = vunpack.c.l.b16 %v591
  %v679 = vunpack.c.l.b16 %v592
  %v680 = vunpack.c.l.b16 %v593
  %v681 = vunpack.c.l.b16 %v594
  %v682 = vunpack.c.l.b16 %v595
  %v683 = vunpack.c.l.b16 %v596
  %v684 = vpack.c.b16 %v669, %v668
  %v685 = vpack.c.b16 %v671, %v670
  %v686 = vpack.c.b16 %v673, %v672
  %v687 = vpack.c.b16 %v675, %v674
  %v688 = vpack.c.b16 %v677, %v676
  %v689 = vpack.c.b16 %v679, %v678
  %v690 = vpack.c.b16 %v681, %v680
  %v691 = vpack.c.b16 %v683, %v682
  %700 = vmatprep.subr.bf16.mxu0 0
  %701 = vmatpush1.bf16.msra.mxu0 %v691
  %702 = vmatprep.subr.bf16.mxu0 0
  %703 = vmatpush1.bf16.msra.mxu0 %v690
  %704 = vmatprep.subr.bf16.mxu0 0
  %705 = vmatpush1.bf16.msra.mxu0 %v689
  %706 = vmatprep.subr.bf16.mxu0 0
  %707 = vmatpush1.bf16.msra.mxu0 %v688
  %708 = vmatprep.subr.bf16.mxu0 0
  %709 = vmatpush1.bf16.msra.mxu0 %v687
  %710 = vmatprep.subr.bf16.mxu0 0
  %711 = vmatpush1.bf16.msra.mxu0 %v686
  %712 = vmatprep.subr.bf16.mxu0 0
  %713 = vmatpush1.bf16.msra.mxu0 %v685
  %714 = vmatprep.subr.bf16.mxu0 0
  %715 = vmatpush1.bf16.msra.mxu0 %v684
  %716 = vmatprep.subr.bf16.mxu0 0
  %717 = vmatpush2.bf16.msra.mxu0 0
  %718 = vmatprep.subr.bf16.mxu0 0
  %719 = vmatpush2.bf16.msra.mxu0 0
  %720 = vmatprep.subr.bf16.mxu0 0
  %721 = vmatpush2.bf16.msra.mxu0 0
  %722 = vmatprep.subr.bf16.mxu0 0
  %723 = vmatpush2.bf16.msra.mxu0 0
  %724 = vmatprep.subr.bf16.mxu0 0
  %725 = vmatpush2.bf16.msra.mxu0 0
  %726 = vmatprep.subr.bf16.mxu0 0
  %727 = vmatpush2.bf16.msra.mxu0 0
  %728 = vmatprep.subr.bf16.mxu0 0
  %729 = vmatpush2.bf16.msra.mxu0 0
  %730 = vmatprep.subr.bf16.mxu0 0
  %731 = vmatpush2.bf16.msra.mxu0 0
  %732 = vmatprep.mubr.bf16.mxu0 0
  %733 = vmatmul.mubr.bf16.gmra.mxu0 %v636
  %v734 = vpop.f32.mrf.mxu0
  %v735 = vadd.f32 %v602, %v734
  %v736 = vpop.f32.mrf.mxu0
  %v737 = vpop.f32.mrf.mxu0
  %v738 = vadd.f32 %v602, %v737
  %v739 = vpop.f32.mrf.mxu0
  %740 = vmatprep.mubr.bf16.mxu0 0
  %741 = vmatmul.mubr.bf16.gmra.mxu0 %v637
  %v742 = vpop.f32.mrf.mxu0
  %v743 = vadd.f32 %v602, %v742
  %v744 = vpop.f32.mrf.mxu0
  %v745 = vpop.f32.mrf.mxu0
  %v746 = vadd.f32 %v602, %v745
  %v747 = vpop.f32.mrf.mxu0
  %748 = vmatprep.mubr.bf16.mxu0 0
  %749 = vmatmul.mubr.bf16.gmra.mxu0 %v638
  %v750 = vpop.f32.mrf.mxu0
  %v751 = vadd.f32 %v602, %v750
  %v752 = vpop.f32.mrf.mxu0
  %v753 = vpop.f32.mrf.mxu0
  %v754 = vadd.f32 %v602, %v753
  %v755 = vpop.f32.mrf.mxu0
  %756 = vmatprep.mubr.bf16.mxu0 0
  %757 = vmatmul.mubr.bf16.gmra.mxu0 %v639
  %v758 = vpop.f32.mrf.mxu0
  %v759 = vadd.f32 %v602, %v758
  %v760 = vpop.f32.mrf.mxu0
  %v761 = vpop.f32.mrf.mxu0
  %v762 = vadd.f32 %v602, %v761
  %v763 = vpop.f32.mrf.mxu0
  %764 = vmatprep.mubr.bf16.mxu0 0
  %765 = vmatmul.mubr.bf16.gmra.mxu0 %v640
  %v766 = vpop.f32.mrf.mxu0
  %v767 = vadd.f32 %v602, %v766
  %v768 = vpop.f32.mrf.mxu0
  %v769 = vpop.f32.mrf.mxu0
  %v770 = vadd.f32 %v602, %v769
  %v771 = vpop.f32.mrf.mxu0
  %772 = vmatprep.mubr.bf16.mxu0 0
  %773 = vmatmul.mubr.bf16.gmra.mxu0 %v641
  %v774 = vpop.f32.mrf.mxu0
  %v775 = vadd.f32 %v602, %v774
  %v776 = vpop.f32.mrf.mxu0
  %v777 = vpop.f32.mrf.mxu0
  %v778 = vadd.f32 %v602, %v777
  %v779 = vpop.f32.mrf.mxu0
  %780 = vmatprep.mubr.bf16.mxu0 0
  %781 = vmatmul.mubr.bf16.gmra.mxu0 %v642
  %v782 = vpop.f32.mrf.mxu0
  %v783 = vadd.f32 %v602, %v782
  %v784 = vpop.f32.mrf.mxu0
  %v785 = vpop.f32.mrf.mxu0
  %v786 = vadd.f32 %v602, %v785
  %v787 = vpop.f32.mrf.mxu0
  %788 = vmatprep.mubr.bf16.mxu0 0
  %789 = vmatmul.mubr.bf16.gmra.mxu0 %v643
  %v790 = vpop.f32.mrf.mxu0
  %v791 = vadd.f32 %v602, %v790
  %v792 = vpop.f32.mrf.mxu0
  %v793 = vpop.f32.mrf.mxu0
  %v794 = vadd.f32 %v602, %v793
  %v795 = vpop.f32.mrf.mxu0
  %796 = vdwg.mxu0
  %s797 = scalar_lea.vmem [#allocation2], 256
  %798 = vst [vmem:[%s797] sm:$0xff] %v735
  %799 = vst [vmem:[%s797 + $0x8] sm:$0xff] %v738
  %800 = vst [vmem:[%s797 + $0x10] sm:$0xff] %v743
  %801 = vst [vmem:[%s797 + $0x18] sm:$0xff] %v746
  %802 = vst [vmem:[%s797 + $0x20] sm:$0xff] %v751
  %803 = vst [vmem:[%s797 + $0x28] sm:$0xff] %v754
  %804 = vst [vmem:[%s797 + $0x30] sm:$0xff] %v759
  %805 = vst [vmem:[%s797 + $0x38] sm:$0xff] %v762
  %806 = vst [vmem:[%s797 + $0x40] sm:$0xff] %v767
  %807 = vst [vmem:[%s797 + $0x48] sm:$0xff] %v770
  %808 = vst [vmem:[%s797 + $0x50] sm:$0xff] %v775
  %809 = vst [vmem:[%s797 + $0x58] sm:$0xff] %v778
  %810 = vst [vmem:[%s797 + $0x60] sm:$0xff] %v783
  %811 = vst [vmem:[%s797 + $0x68] sm:$0xff] %v786
  %812 = vst [vmem:[%s797 + $0x70] sm:$0xff] %v791
  %813 = vst [vmem:[%s797 + $0x78] sm:$0xff] %v794
  %v814 = vadd.f32 %v735, %v738
  %v815 = vadd.f32 %v814, %v743
  %v816 = vadd.f32 %v815, %v746
  %v817 = vadd.f32 %v816, %v751
  %v818 = vadd.f32 %v817, %v754
  %v819 = vadd.f32 %v818, %v759
  %v820 = vadd.f32 %v819, %v762
  %v821 = vadd.f32 %v820, %v767
  %v822 = vadd.f32 %v821, %v770
  %v823 = vadd.f32 %v822, %v775
  %v824 = vadd.f32 %v823, %v778
  %v825 = vadd.f32 %v824, %v783
  %v826 = vadd.f32 %v825, %v786
  %v827 = vadd.f32 %v826, %v791
  %v828 = vadd.f32 %v827, %v794
  %v829 = vrot.slane %v828, 4
  %v830 = vadd.f32 %v828, %v829
  %v831 = vrot.slane %v830, 2
  %v832 = vadd.f32 %v830, %v831
  %v833 = vrot.slane %v832, 1
  %v834 = vadd.f32 %v832, %v833
  %v835 = vadd.f32 %v562, %v834
  %s836 = scalar_lea.vmem %s0, 192
  %v837 = vld [vmem:[%s836] sm:$0xf]
  %v838 = vld [vmem:[%s836 + $0x4] sm:$0xf]
  %v839 = vld [vmem:[%s836 + $0x8] sm:$0xf]
  %v840 = vld [vmem:[%s836 + $0xc] sm:$0xf]
  %v841 = vld [vmem:[%s836 + $0x10] sm:$0xf]
  %v842 = vld [vmem:[%s836 + $0x14] sm:$0xf]
  %v843 = vld [vmem:[%s836 + $0x18] sm:$0xf]
  %v844 = vld [vmem:[%s836 + $0x1c] sm:$0xf]
  %v845 = vld [vmem:[%s836 + $0x20] sm:$0xf]
  %v846 = vld [vmem:[%s836 + $0x24] sm:$0xf]
  %v847 = vld [vmem:[%s836 + $0x28] sm:$0xf]
  %v848 = vld [vmem:[%s836 + $0x2c] sm:$0xf]
  %v849 = vld [vmem:[%s836 + $0x30] sm:$0xf]
  %v850 = vld [vmem:[%s836 + $0x34] sm:$0xf]
  %v851 = vld [vmem:[%s836 + $0x38] sm:$0xf]
  %v852 = vld [vmem:[%s836 + $0x3c] sm:$0xf]
  %s853 = scalar_lea.vmem %s1, 192
  %v854 = vld [vmem:[%s853] sm:$0xf]
  %v855 = vld [vmem:[%s853 + $0x4] sm:$0xf]
  %v856 = vld [vmem:[%s853 + $0x8] sm:$0xf]
  %v857 = vld [vmem:[%s853 + $0xc] sm:$0xf]
  %v858 = vld [vmem:[%s853 + $0x10] sm:$0xf]
  %v859 = vld [vmem:[%s853 + $0x14] sm:$0xf]
  %v860 = vld [vmem:[%s853 + $0x18] sm:$0xf]
  %v861 = vld [vmem:[%s853 + $0x1c] sm:$0xf]
  %v862 = vld [vmem:[%s853 + $0x20] sm:$0xf]
  %v863 = vld [vmem:[%s853 + $0x24] sm:$0xf]
  %v864 = vld [vmem:[%s853 + $0x28] sm:$0xf]
  %v865 = vld [vmem:[%s853 + $0x2c] sm:$0xf]
  %v866 = vld [vmem:[%s853 + $0x30] sm:$0xf]
  %v867 = vld [vmem:[%s853 + $0x34] sm:$0xf]
  %v868 = vld [vmem:[%s853 + $0x38] sm:$0xf]
  %v869 = vld [vmem:[%s853 + $0x3c] sm:$0xf]
  %v870 = vld [vmem:[%s2] sm:$0x1]
  %v872 = vlaneseq
  %v873 = vshrl.u32 %v872, 7
  %v874 = vsub.s32 0, %v873
  %v875 = vrot.slane %v870, %v874
  %v893 = vunpack.c.l.b16 %v837
  %v894 = vunpack.c.l.b16 %v838
  %v895 = vunpack.c.l.b16 %v839
  %v896 = vunpack.c.l.b16 %v840
  %v897 = vunpack.c.l.b16 %v841
  %v898 = vunpack.c.l.b16 %v842
  %v899 = vunpack.c.l.b16 %v843
  %v900 = vunpack.c.l.b16 %v844
  %v901 = vunpack.c.l.b16 %v845
  %v902 = vunpack.c.l.b16 %v846
  %v903 = vunpack.c.l.b16 %v847
  %v904 = vunpack.c.l.b16 %v848
  %v905 = vunpack.c.l.b16 %v849
  %v906 = vunpack.c.l.b16 %v850
  %v907 = vunpack.c.l.b16 %v851
  %v908 = vunpack.c.l.b16 %v852
  %v909 = vpack.c.b16 %v894, %v893
  %v910 = vpack.c.b16 %v896, %v895
  %v911 = vpack.c.b16 %v898, %v897
  %v912 = vpack.c.b16 %v900, %v899
  %v913 = vpack.c.b16 %v902, %v901
  %v914 = vpack.c.b16 %v904, %v903
  %v915 = vpack.c.b16 %v906, %v905
  %v916 = vpack.c.b16 %v908, %v907
  %v941 = vunpack.c.l.b16 %v854
  %v942 = vunpack.c.l.b16 %v855
  %v943 = vunpack.c.l.b16 %v856
  %v944 = vunpack.c.l.b16 %v857
  %v945 = vunpack.c.l.b16 %v858
  %v946 = vunpack.c.l.b16 %v859
  %v947 = vunpack.c.l.b16 %v860
  %v948 = vunpack.c.l.b16 %v861
  %v949 = vunpack.c.l.b16 %v862
  %v950 = vunpack.c.l.b16 %v863
  %v951 = vunpack.c.l.b16 %v864
  %v952 = vunpack.c.l.b16 %v865
  %v953 = vunpack.c.l.b16 %v866
  %v954 = vunpack.c.l.b16 %v867
  %v955 = vunpack.c.l.b16 %v868
  %v956 = vunpack.c.l.b16 %v869
  %v957 = vpack.c.b16 %v942, %v941
  %v958 = vpack.c.b16 %v944, %v943
  %v959 = vpack.c.b16 %v946, %v945
  %v960 = vpack.c.b16 %v948, %v947
  %v961 = vpack.c.b16 %v950, %v949
  %v962 = vpack.c.b16 %v952, %v951
  %v963 = vpack.c.b16 %v954, %v953
  %v964 = vpack.c.b16 %v956, %v955
  %973 = vmatprep.subr.bf16.mxu0 0
  %974 = vmatpush1.bf16.msra.mxu0 %v964
  %975 = vmatprep.subr.bf16.mxu0 0
  %976 = vmatpush1.bf16.msra.mxu0 %v963
  %977 = vmatprep.subr.bf16.mxu0 0
  %978 = vmatpush1.bf16.msra.mxu0 %v962
  %979 = vmatprep.subr.bf16.mxu0 0
  %980 = vmatpush1.bf16.msra.mxu0 %v961
  %981 = vmatprep.subr.bf16.mxu0 0
  %982 = vmatpush1.bf16.msra.mxu0 %v960
  %983 = vmatprep.subr.bf16.mxu0 0
  %984 = vmatpush1.bf16.msra.mxu0 %v959
  %985 = vmatprep.subr.bf16.mxu0 0
  %986 = vmatpush1.bf16.msra.mxu0 %v958
  %987 = vmatprep.subr.bf16.mxu0 0
  %988 = vmatpush1.bf16.msra.mxu0 %v957
  %989 = vmatprep.subr.bf16.mxu0 0
  %990 = vmatpush2.bf16.msra.mxu0 0
  %991 = vmatprep.subr.bf16.mxu0 0
  %992 = vmatpush2.bf16.msra.mxu0 0
  %993 = vmatprep.subr.bf16.mxu0 0
  %994 = vmatpush2.bf16.msra.mxu0 0
  %995 = vmatprep.subr.bf16.mxu0 0
  %996 = vmatpush2.bf16.msra.mxu0 0
  %997 = vmatprep.subr.bf16.mxu0 0
  %998 = vmatpush2.bf16.msra.mxu0 0
  %999 = vmatprep.subr.bf16.mxu0 0
  %1000 = vmatpush2.bf16.msra.mxu0 0
  %1001 = vmatprep.subr.bf16.mxu0 0
  %1002 = vmatpush2.bf16.msra.mxu0 0
  %1003 = vmatprep.subr.bf16.mxu0 0
  %1004 = vmatpush2.bf16.msra.mxu0 0
  %1005 = vmatprep.mubr.bf16.mxu0 0
  %1006 = vmatmul.mubr.bf16.gmra.mxu0 %v909
  %v1007 = vpop.f32.mrf.mxu0
  %v1008 = vadd.f32 %v875, %v1007
  %v1009 = vpop.f32.mrf.mxu0
  %v1010 = vpop.f32.mrf.mxu0
  %v1011 = vadd.f32 %v875, %v1010
  %v1012 = vpop.f32.mrf.mxu0
  %1013 = vmatprep.mubr.bf16.mxu0 0
  %1014 = vmatmul.mubr.bf16.gmra.mxu0 %v910
  %v1015 = vpop.f32.mrf.mxu0
  %v1016 = vadd.f32 %v875, %v1015
  %v1017 = vpop.f32.mrf.mxu0
  %v1018 = vpop.f32.mrf.mxu0
  %v1019 = vadd.f32 %v875, %v1018
  %v1020 = vpop.f32.mrf.mxu0
  %1021 = vmatprep.mubr.bf16.mxu0 0
  %1022 = vmatmul.mubr.bf16.gmra.mxu0 %v911
  %v1023 = vpop.f32.mrf.mxu0
  %v1024 = vadd.f32 %v875, %v1023
  %v1025 = vpop.f32.mrf.mxu0
  %v1026 = vpop.f32.mrf.mxu0
  %v1027 = vadd.f32 %v875, %v1026
  %v1028 = vpop.f32.mrf.mxu0
  %1029 = vmatprep.mubr.bf16.mxu0 0
  %1030 = vmatmul.mubr.bf16.gmra.mxu0 %v912
  %v1031 = vpop.f32.mrf.mxu0
  %v1032 = vadd.f32 %v875, %v1031
  %v1033 = vpop.f32.mrf.mxu0
  %v1034 = vpop.f32.mrf.mxu0
  %v1035 = vadd.f32 %v875, %v1034
  %v1036 = vpop.f32.mrf.mxu0
  %1037 = vmatprep.mubr.bf16.mxu0 0
  %1038 = vmatmul.mubr.bf16.gmra.mxu0 %v913
  %v1039 = vpop.f32.mrf.mxu0
  %v1040 = vadd.f32 %v875, %v1039
  %v1041 = vpop.f32.mrf.mxu0
  %v1042 = vpop.f32.mrf.mxu0
  %v1043 = vadd.f32 %v875, %v1042
  %v1044 = vpop.f32.mrf.mxu0
  %1045 = vmatprep.mubr.bf16.mxu0 0
  %1046 = vmatmul.mubr.bf16.gmra.mxu0 %v914
  %v1047 = vpop.f32.mrf.mxu0
  %v1048 = vadd.f32 %v875, %v1047
  %v1049 = vpop.f32.mrf.mxu0
  %v1050 = vpop.f32.mrf.mxu0
  %v1051 = vadd.f32 %v875, %v1050
  %v1052 = vpop.f32.mrf.mxu0
  %1053 = vmatprep.mubr.bf16.mxu0 0
  %1054 = vmatmul.mubr.bf16.gmra.mxu0 %v915
  %v1055 = vpop.f32.mrf.mxu0
  %v1056 = vadd.f32 %v875, %v1055
  %v1057 = vpop.f32.mrf.mxu0
  %v1058 = vpop.f32.mrf.mxu0
  %v1059 = vadd.f32 %v875, %v1058
  %v1060 = vpop.f32.mrf.mxu0
  %1061 = vmatprep.mubr.bf16.mxu0 0
  %1062 = vmatmul.mubr.bf16.gmra.mxu0 %v916
  %v1063 = vpop.f32.mrf.mxu0
  %v1064 = vadd.f32 %v875, %v1063
  %v1065 = vpop.f32.mrf.mxu0
  %v1066 = vpop.f32.mrf.mxu0
  %v1067 = vadd.f32 %v875, %v1066
  %v1068 = vpop.f32.mrf.mxu0
  %1069 = vdwg.mxu0
  %s1070 = scalar_lea.vmem [#allocation2], 384
  %1071 = vst [vmem:[%s1070] sm:$0xff] %v1008
  %1072 = vst [vmem:[%s1070 + $0x8] sm:$0xff] %v1011
  %1073 = vst [vmem:[%s1070 + $0x10] sm:$0xff] %v1016
  %1074 = vst [vmem:[%s1070 + $0x18] sm:$0xff] %v1019
  %1075 = vst [vmem:[%s1070 + $0x20] sm:$0xff] %v1024
  %1076 = vst [vmem:[%s1070 + $0x28] sm:$0xff] %v1027
  %1077 = vst [vmem:[%s1070 + $0x30] sm:$0xff] %v1032
  %1078 = vst [vmem:[%s1070 + $0x38] sm:$0xff] %v1035
  %1079 = vst [vmem:[%s1070 + $0x40] sm:$0xff] %v1040
  %1080 = vst [vmem:[%s1070 + $0x48] sm:$0xff] %v1043
  %1081 = vst [vmem:[%s1070 + $0x50] sm:$0xff] %v1048
  %1082 = vst [vmem:[%s1070 + $0x58] sm:$0xff] %v1051
  %1083 = vst [vmem:[%s1070 + $0x60] sm:$0xff] %v1056
  %1084 = vst [vmem:[%s1070 + $0x68] sm:$0xff] %v1059
  %1085 = vst [vmem:[%s1070 + $0x70] sm:$0xff] %v1064
  %1086 = vst [vmem:[%s1070 + $0x78] sm:$0xff] %v1067
  %v1087 = vadd.f32 %v1008, %v1011
  %v1088 = vadd.f32 %v1087, %v1016
  %v1089 = vadd.f32 %v1088, %v1019
  %v1090 = vadd.f32 %v1089, %v1024
  %v1091 = vadd.f32 %v1090, %v1027
  %v1092 = vadd.f32 %v1091, %v1032
  %v1093 = vadd.f32 %v1092, %v1035
  %v1094 = vadd.f32 %v1093, %v1040
  %v1095 = vadd.f32 %v1094, %v1043
  %v1096 = vadd.f32 %v1095, %v1048
  %v1097 = vadd.f32 %v1096, %v1051
  %v1098 = vadd.f32 %v1097, %v1056
  %v1099 = vadd.f32 %v1098, %v1059
  %v1100 = vadd.f32 %v1099, %v1064
  %v1101 = vadd.f32 %v1100, %v1067
  %v1102 = vrot.slane %v1101, 4
  %v1103 = vadd.f32 %v1101, %v1102
  %v1104 = vrot.slane %v1103, 2
  %v1105 = vadd.f32 %v1103, %v1104
  %v1106 = vrot.slane %v1105, 1
  %v1107 = vadd.f32 %v1105, %v1106
  %v1108 = vadd.f32 %v835, %v1107
  %v1109 = vmul.f32 %v1108, 0.001953125
  %v1110 = vld [vmem:[#allocation2] sm:$0xff]
  %v1111 = vld [vmem:[#allocation2 + $0x8] sm:$0xff]
  %v1112 = vld [vmem:[#allocation2 + $0x10] sm:$0xff]
  %v1113 = vld [vmem:[#allocation2 + $0x18] sm:$0xff]
  %v1114 = vld [vmem:[#allocation2 + $0x20] sm:$0xff]
  %v1115 = vld [vmem:[#allocation2 + $0x28] sm:$0xff]
  %v1116 = vld [vmem:[#allocation2 + $0x30] sm:$0xff]
  %v1117 = vld [vmem:[#allocation2 + $0x38] sm:$0xff]
  %v1118 = vld [vmem:[#allocation2 + $0x40] sm:$0xff]
  %v1119 = vld [vmem:[#allocation2 + $0x48] sm:$0xff]
  %v1120 = vld [vmem:[#allocation2 + $0x50] sm:$0xff]
  %v1121 = vld [vmem:[#allocation2 + $0x58] sm:$0xff]
  %v1122 = vld [vmem:[#allocation2 + $0x60] sm:$0xff]
  %v1123 = vld [vmem:[#allocation2 + $0x68] sm:$0xff]
  %v1124 = vld [vmem:[#allocation2 + $0x70] sm:$0xff]
  %v1125 = vld [vmem:[#allocation2 + $0x78] sm:$0xff]
  %v1126 = vsub.f32 %v1110, %v1109
  %v1127 = vsub.f32 %v1111, %v1109
  %v1128 = vsub.f32 %v1112, %v1109
  %v1129 = vsub.f32 %v1113, %v1109
  %v1130 = vsub.f32 %v1114, %v1109
  %v1131 = vsub.f32 %v1115, %v1109
  %v1132 = vsub.f32 %v1116, %v1109
  %v1133 = vsub.f32 %v1117, %v1109
  %v1134 = vsub.f32 %v1118, %v1109
  %v1135 = vsub.f32 %v1119, %v1109
  %v1136 = vsub.f32 %v1120, %v1109
  %v1137 = vsub.f32 %v1121, %v1109
  %v1138 = vsub.f32 %v1122, %v1109
  %v1139 = vsub.f32 %v1123, %v1109
  %v1140 = vsub.f32 %v1124, %v1109
  %v1141 = vsub.f32 %v1125, %v1109
  %v1142 = vmul.f32 %v1126, %v1126
  %v1143 = vmul.f32 %v1127, %v1127
  %v1144 = vmul.f32 %v1128, %v1128
  %v1145 = vmul.f32 %v1129, %v1129
  %v1146 = vmul.f32 %v1130, %v1130
  %v1147 = vmul.f32 %v1131, %v1131
  %v1148 = vmul.f32 %v1132, %v1132
  %v1149 = vmul.f32 %v1133, %v1133
  %v1150 = vmul.f32 %v1134, %v1134
  %v1151 = vmul.f32 %v1135, %v1135
  %v1152 = vmul.f32 %v1136, %v1136
  %v1153 = vmul.f32 %v1137, %v1137
  %v1154 = vmul.f32 %v1138, %v1138
  %v1155 = vmul.f32 %v1139, %v1139
  %v1156 = vmul.f32 %v1140, %v1140
  %v1157 = vmul.f32 %v1141, %v1141
  %v1158 = vadd.f32 %v1142, %v1143
  %v1159 = vadd.f32 %v1158, %v1144
  %v1160 = vadd.f32 %v1159, %v1145
  %v1161 = vadd.f32 %v1160, %v1146
  %v1162 = vadd.f32 %v1161, %v1147
  %v1163 = vadd.f32 %v1162, %v1148
  %v1164 = vadd.f32 %v1163, %v1149
  %v1165 = vadd.f32 %v1164, %v1150
  %v1166 = vadd.f32 %v1165, %v1151
  %v1167 = vadd.f32 %v1166, %v1152
  %v1168 = vadd.f32 %v1167, %v1153
  %v1169 = vadd.f32 %v1168, %v1154
  %v1170 = vadd.f32 %v1169, %v1155
  %v1171 = vadd.f32 %v1170, %v1156
  %v1172 = vadd.f32 %v1171, %v1157
  %v1173 = vrot.slane %v1172, 4
  %v1174 = vadd.f32 %v1172, %v1173
  %v1175 = vrot.slane %v1174, 2
  %v1176 = vadd.f32 %v1174, %v1175
  %v1177 = vrot.slane %v1176, 1
  %v1178 = vadd.f32 %v1176, %v1177
  %v1179 = vld [vmem:[%s524] sm:$0xff]
  %v1180 = vld [vmem:[%s524 + $0x8] sm:$0xff]
  %v1181 = vld [vmem:[%s524 + $0x10] sm:$0xff]
  %v1182 = vld [vmem:[%s524 + $0x18] sm:$0xff]
  %v1183 = vld [vmem:[%s524 + $0x20] sm:$0xff]
  %v1184 = vld [vmem:[%s524 + $0x28] sm:$0xff]
  %v1185 = vld [vmem:[%s524 + $0x30] sm:$0xff]
  %v1186 = vld [vmem:[%s524 + $0x38] sm:$0xff]
  %v1187 = vld [vmem:[%s524 + $0x40] sm:$0xff]
  %v1188 = vld [vmem:[%s524 + $0x48] sm:$0xff]
  %v1189 = vld [vmem:[%s524 + $0x50] sm:$0xff]
  %v1190 = vld [vmem:[%s524 + $0x58] sm:$0xff]
  %v1191 = vld [vmem:[%s524 + $0x60] sm:$0xff]
  %v1192 = vld [vmem:[%s524 + $0x68] sm:$0xff]
  %v1193 = vld [vmem:[%s524 + $0x70] sm:$0xff]
  %v1194 = vld [vmem:[%s524 + $0x78] sm:$0xff]
  %v1195 = vsub.f32 %v1179, %v1109
  %v1196 = vsub.f32 %v1180, %v1109
  %v1197 = vsub.f32 %v1181, %v1109
  %v1198 = vsub.f32 %v1182, %v1109
  %v1199 = vsub.f32 %v1183, %v1109
  %v1200 = vsub.f32 %v1184, %v1109
  %v1201 = vsub.f32 %v1185, %v1109
  %v1202 = vsub.f32 %v1186, %v1109
  %v1203 = vsub.f32 %v1187, %v1109
  %v1204 = vsub.f32 %v1188, %v1109
  %v1205 = vsub.f32 %v1189, %v1109
  %v1206 = vsub.f32 %v1190, %v1109
  %v1207 = vsub.f32 %v1191, %v1109
  %v1208 = vsub.f32 %v1192, %v1109
  %v1209 = vsub.f32 %v1193, %v1109
  %v1210 = vsub.f32 %v1194, %v1109
  %v1211 = vmul.f32 %v1195, %v1195
  %v1212 = vmul.f32 %v1196, %v1196
  %v1213 = vmul.f32 %v1197, %v1197
  %v1214 = vmul.f32 %v1198, %v1198
  %v1215 = vmul.f32 %v1199, %v1199
  %v1216 = vmul.f32 %v1200, %v1200
  %v1217 = vmul.f32 %v1201, %v1201
  %v1218 = vmul.f32 %v1202, %v1202
  %v1219 = vmul.f32 %v1203, %v1203
  %v1220 = vmul.f32 %v1204, %v1204
  %v1221 = vmul.f32 %v1205, %v1205
  %v1222 = vmul.f32 %v1206, %v1206
  %v1223 = vmul.f32 %v1207, %v1207
  %v1224 = vmul.f32 %v1208, %v1208
  %v1225 = vmul.f32 %v1209, %v1209
  %v1226 = vmul.f32 %v1210, %v1210
  %v1227 = vadd.f32 %v1211, %v1212
  %v1228 = vadd.f32 %v1227, %v1213
  %v1229 = vadd.f32 %v1228, %v1214
  %v1230 = vadd.f32 %v1229, %v1215
  %v1231 = vadd.f32 %v1230, %v1216
  %v1232 = vadd.f32 %v1231, %v1217
  %v1233 = vadd.f32 %v1232, %v1218
  %v1234 = vadd.f32 %v1233, %v1219
  %v1235 = vadd.f32 %v1234, %v1220
  %v1236 = vadd.f32 %v1235, %v1221
  %v1237 = vadd.f32 %v1236, %v1222
  %v1238 = vadd.f32 %v1237, %v1223
  %v1239 = vadd.f32 %v1238, %v1224
  %v1240 = vadd.f32 %v1239, %v1225
  %v1241 = vadd.f32 %v1240, %v1226
  %v1242 = vrot.slane %v1241, 4
  %v1243 = vadd.f32 %v1241, %v1242
  %v1244 = vrot.slane %v1243, 2
  %v1245 = vadd.f32 %v1243, %v1244
  %v1246 = vrot.slane %v1245, 1
  %v1247 = vadd.f32 %v1245, %v1246
  %v1248 = vadd.f32 %v1178, %v1247
  %v1249 = vld [vmem:[%s797] sm:$0xff]
  %v1250 = vld [vmem:[%s797 + $0x8] sm:$0xff]
  %v1251 = vld [vmem:[%s797 + $0x10] sm:$0xff]
  %v1252 = vld [vmem:[%s797 + $0x18] sm:$0xff]
  %v1253 = vld [vmem:[%s797 + $0x20] sm:$0xff]
  %v1254 = vld [vmem:[%s797 + $0x28] sm:$0xff]
  %v1255 = vld [vmem:[%s797 + $0x30] sm:$0xff]
  %v1256 = vld [vmem:[%s797 + $0x38] sm:$0xff]
  %v1257 = vld [vmem:[%s797 + $0x40] sm:$0xff]
  %v1258 = vld [vmem:[%s797 + $0x48] sm:$0xff]
  %v1259 = vld [vmem:[%s797 + $0x50] sm:$0xff]
  %v1260 = vld [vmem:[%s797 + $0x58] sm:$0xff]
  %v1261 = vld [vmem:[%s797 + $0x60] sm:$0xff]
  %v1262 = vld [vmem:[%s797 + $0x68] sm:$0xff]
  %v1263 = vld [vmem:[%s797 + $0x70] sm:$0xff]
  %v1264 = vld [vmem:[%s797 + $0x78] sm:$0xff]
  %v1265 = vsub.f32 %v1249, %v1109
  %v1266 = vsub.f32 %v1250, %v1109
  %v1267 = vsub.f32 %v1251, %v1109
  %v1268 = vsub.f32 %v1252, %v1109
  %v1269 = vsub.f32 %v1253, %v1109
  %v1270 = vsub.f32 %v1254, %v1109
  %v1271 = vsub.f32 %v1255, %v1109
  %v1272 = vsub.f32 %v1256, %v1109
  %v1273 = vsub.f32 %v1257, %v1109
  %v1274 = vsub.f32 %v1258, %v1109
  %v1275 = vsub.f32 %v1259, %v1109
  %v1276 = vsub.f32 %v1260, %v1109
  %v1277 = vsub.f32 %v1261, %v1109
  %v1278 = vsub.f32 %v1262, %v1109
  %v1279 = vsub.f32 %v1263, %v1109
  %v1280 = vsub.f32 %v1264, %v1109
  %v1281 = vmul.f32 %v1265, %v1265
  %v1282 = vmul.f32 %v1266, %v1266
  %v1283 = vmul.f32 %v1267, %v1267
  %v1284 = vmul.f32 %v1268, %v1268
  %v1285 = vmul.f32 %v1269, %v1269
  %v1286 = vmul.f32 %v1270, %v1270
  %v1287 = vmul.f32 %v1271, %v1271
  %v1288 = vmul.f32 %v1272, %v1272
  %v1289 = vmul.f32 %v1273, %v1273
  %v1290 = vmul.f32 %v1274, %v1274
  %v1291 = vmul.f32 %v1275, %v1275
  %v1292 = vmul.f32 %v1276, %v1276
  %v1293 = vmul.f32 %v1277, %v1277
  %v1294 = vmul.f32 %v1278, %v1278
  %v1295 = vmul.f32 %v1279, %v1279
  %v1296 = vmul.f32 %v1280, %v1280
  %v1297 = vadd.f32 %v1281, %v1282
  %v1298 = vadd.f32 %v1297, %v1283
  %v1299 = vadd.f32 %v1298, %v1284
  %v1300 = vadd.f32 %v1299, %v1285
  %v1301 = vadd.f32 %v1300, %v1286
  %v1302 = vadd.f32 %v1301, %v1287
  %v1303 = vadd.f32 %v1302, %v1288
  %v1304 = vadd.f32 %v1303, %v1289
  %v1305 = vadd.f32 %v1304, %v1290
  %v1306 = vadd.f32 %v1305, %v1291
  %v1307 = vadd.f32 %v1306, %v1292
  %v1308 = vadd.f32 %v1307, %v1293
  %v1309 = vadd.f32 %v1308, %v1294
  %v1310 = vadd.f32 %v1309, %v1295
  %v1311 = vadd.f32 %v1310, %v1296
  %v1312 = vrot.slane %v1311, 4
  %v1313 = vadd.f32 %v1311, %v1312
  %v1314 = vrot.slane %v1313, 2
  %v1315 = vadd.f32 %v1313, %v1314
  %v1316 = vrot.slane %v1315, 1
  %v1317 = vadd.f32 %v1315, %v1316
  %v1318 = vadd.f32 %v1248, %v1317
  %v1319 = vld [vmem:[%s1070] sm:$0xff]
  %v1320 = vld [vmem:[%s1070 + $0x8] sm:$0xff]
  %v1321 = vld [vmem:[%s1070 + $0x10] sm:$0xff]
  %v1322 = vld [vmem:[%s1070 + $0x18] sm:$0xff]
  %v1323 = vld [vmem:[%s1070 + $0x20] sm:$0xff]
  %v1324 = vld [vmem:[%s1070 + $0x28] sm:$0xff]
  %v1325 = vld [vmem:[%s1070 + $0x30] sm:$0xff]
  %v1326 = vld [vmem:[%s1070 + $0x38] sm:$0xff]
  %v1327 = vld [vmem:[%s1070 + $0x40] sm:$0xff]
  %v1328 = vld [vmem:[%s1070 + $0x48] sm:$0xff]
  %v1329 = vld [vmem:[%s1070 + $0x50] sm:$0xff]
  %v1330 = vld [vmem:[%s1070 + $0x58] sm:$0xff]
  %v1331 = vld [vmem:[%s1070 + $0x60] sm:$0xff]
  %v1332 = vld [vmem:[%s1070 + $0x68] sm:$0xff]
  %v1333 = vld [vmem:[%s1070 + $0x70] sm:$0xff]
  %v1334 = vld [vmem:[%s1070 + $0x78] sm:$0xff]
  %v1335 = vsub.f32 %v1319, %v1109
  %v1336 = vsub.f32 %v1320, %v1109
  %v1337 = vsub.f32 %v1321, %v1109
  %v1338 = vsub.f32 %v1322, %v1109
  %v1339 = vsub.f32 %v1323, %v1109
  %v1340 = vsub.f32 %v1324, %v1109
  %v1341 = vsub.f32 %v1325, %v1109
  %v1342 = vsub.f32 %v1326, %v1109
  %v1343 = vsub.f32 %v1327, %v1109
  %v1344 = vsub.f32 %v1328, %v1109
  %v1345 = vsub.f32 %v1329, %v1109
  %v1346 = vsub.f32 %v1330, %v1109
  %v1347 = vsub.f32 %v1331, %v1109
  %v1348 = vsub.f32 %v1332, %v1109
  %v1349 = vsub.f32 %v1333, %v1109
  %v1350 = vsub.f32 %v1334, %v1109
  %v1351 = vmul.f32 %v1335, %v1335
  %v1352 = vmul.f32 %v1336, %v1336
  %v1353 = vmul.f32 %v1337, %v1337
  %v1354 = vmul.f32 %v1338, %v1338
  %v1355 = vmul.f32 %v1339, %v1339
  %v1356 = vmul.f32 %v1340, %v1340
  %v1357 = vmul.f32 %v1341, %v1341
  %v1358 = vmul.f32 %v1342, %v1342
  %v1359 = vmul.f32 %v1343, %v1343
  %v1360 = vmul.f32 %v1344, %v1344
  %v1361 = vmul.f32 %v1345, %v1345
  %v1362 = vmul.f32 %v1346, %v1346
  %v1363 = vmul.f32 %v1347, %v1347
  %v1364 = vmul.f32 %v1348, %v1348
  %v1365 = vmul.f32 %v1349, %v1349
  %v1366 = vmul.f32 %v1350, %v1350
  %v1367 = vadd.f32 %v1351, %v1352
  %v1368 = vadd.f32 %v1367, %v1353
  %v1369 = vadd.f32 %v1368, %v1354
  %v1370 = vadd.f32 %v1369, %v1355
  %v1371 = vadd.f32 %v1370, %v1356
  %v1372 = vadd.f32 %v1371, %v1357
  %v1373 = vadd.f32 %v1372, %v1358
  %v1374 = vadd.f32 %v1373, %v1359
  %v1375 = vadd.f32 %v1374, %v1360
  %v1376 = vadd.f32 %v1375, %v1361
  %v1377 = vadd.f32 %v1376, %v1362
  %v1378 = vadd.f32 %v1377, %v1363
  %v1379 = vadd.f32 %v1378, %v1364
  %v1380 = vadd.f32 %v1379, %v1365
  %v1381 = vadd.f32 %v1380, %v1366
  %v1382 = vrot.slane %v1381, 4
  %v1383 = vadd.f32 %v1381, %v1382
  %v1384 = vrot.slane %v1383, 2
  %v1385 = vadd.f32 %v1383, %v1384
  %v1386 = vrot.slane %v1385, 1
  %v1387 = vadd.f32 %v1385, %v1386
  %v1388 = vadd.f32 %v1318, %v1387
  %v1389 = vmul.f32 %v1388, 0.001953125
  %v1390 = vmax.f32 %v1389, 0.0
  %v1391 = vld [vmem:[%s3] sm:$0x1]
  %v1392 = vadd.f32 %v1390, 1e-05
  %v1393 = vrsqrt.pop %v1392
  %v1394 = vmul.f32 %v1391, %v1393
  %v1395 = vld [vmem:[%s4] sm:$0x1]
  %v1396 = vmul.f32 %v1109, %v1394
  %v1397 = vsub.f32 %v1395, %v1396
  %v1399 = vlaneseq
  %v1400 = vshrl.u32 %v1399, 7
  %v1401 = vsub.s32 0, %v1400
  %v1402 = vrot.slane %v1394, %v1401
  %v1404 = vmul.f32 %v1110, %v1402
  %v1405 = vmul.f32 %v1111, %v1402
  %v1406 = vmul.f32 %v1112, %v1402
  %v1407 = vmul.f32 %v1113, %v1402
  %v1408 = vmul.f32 %v1114, %v1402
  %v1409 = vmul.f32 %v1115, %v1402
  %v1410 = vmul.f32 %v1116, %v1402
  %v1411 = vmul.f32 %v1117, %v1402
  %v1412 = vmul.f32 %v1118, %v1402
  %v1413 = vmul.f32 %v1119, %v1402
  %v1414 = vmul.f32 %v1120, %v1402
  %v1415 = vmul.f32 %v1121, %v1402
  %v1416 = vmul.f32 %v1122, %v1402
  %v1417 = vmul.f32 %v1123, %v1402
  %v1418 = vmul.f32 %v1124, %v1402
  %v1419 = vmul.f32 %v1125, %v1402
  %v1421 = vlaneseq
  %v1422 = vshrl.u32 %v1421, 7
  %v1423 = vsub.s32 0, %v1422
  %v1424 = vrot.slane %v1397, %v1423
  %v1426 = vadd.f32 %v1404, %v1424
  %v1427 = vadd.f32 %v1405, %v1424
  %v1428 = vadd.f32 %v1406, %v1424
  %v1429 = vadd.f32 %v1407, %v1424
  %v1430 = vadd.f32 %v1408, %v1424
  %v1431 = vadd.f32 %v1409, %v1424
  %v1432 = vadd.f32 %v1410, %v1424
  %v1433 = vadd.f32 %v1411, %v1424
  %v1434 = vadd.f32 %v1412, %v1424
  %v1435 = vadd.f32 %v1413, %v1424
  %v1436 = vadd.f32 %v1414, %v1424
  %v1437 = vadd.f32 %v1415, %v1424
  %v1438 = vadd.f32 %v1416, %v1424
  %v1439 = vadd.f32 %v1417, %v1424
  %v1440 = vadd.f32 %v1418, %v1424
  %v1441 = vadd.f32 %v1419, %v1424
  %v1442 = vmax.f32 %v1426, 0.0
  %v1443 = vmax.f32 %v1427, 0.0
  %v1444 = vmax.f32 %v1428, 0.0
  %v1445 = vmax.f32 %v1429, 0.0
  %v1446 = vmax.f32 %v1430, 0.0
  %v1447 = vmax.f32 %v1431, 0.0
  %v1448 = vmax.f32 %v1432, 0.0
  %v1449 = vmax.f32 %v1433, 0.0
  %v1450 = vmax.f32 %v1434, 0.0
  %v1451 = vmax.f32 %v1435, 0.0
  %v1452 = vmax.f32 %v1436, 0.0
  %v1453 = vmax.f32 %v1437, 0.0
  %v1454 = vmax.f32 %v1438, 0.0
  %v1455 = vmax.f32 %v1439, 0.0
  %v1456 = vmax.f32 %v1440, 0.0
  %v1457 = vmax.f32 %v1441, 0.0
  %v1458 = vpack.c.bf16 %v1443, %v1442
  %v1459 = vpack.c.bf16 %v1445, %v1444
  %v1460 = vpack.c.bf16 %v1447, %v1446
  %v1461 = vpack.c.bf16 %v1449, %v1448
  %v1462 = vpack.c.bf16 %v1451, %v1450
  %v1463 = vpack.c.bf16 %v1453, %v1452
  %v1464 = vpack.c.bf16 %v1455, %v1454
  %v1465 = vpack.c.bf16 %v1457, %v1456
  %v1474 = vunpack.c.l.b16 %v1458
  %v1475 = vunpack.c.h.b16 %v1458
  %v1476 = vunpack.c.l.b16 %v1459
  %v1477 = vunpack.c.h.b16 %v1459
  %v1478 = vunpack.c.l.b16 %v1460
  %v1479 = vunpack.c.h.b16 %v1460
  %v1480 = vunpack.c.l.b16 %v1461
  %v1481 = vunpack.c.h.b16 %v1461
  %v1482 = vunpack.c.l.b16 %v1462
  %v1483 = vunpack.c.h.b16 %v1462
  %v1484 = vunpack.c.l.b16 %v1463
  %v1485 = vunpack.c.h.b16 %v1463
  %v1486 = vunpack.c.l.b16 %v1464
  %v1487 = vunpack.c.h.b16 %v1464
  %v1488 = vunpack.c.l.b16 %v1465
  %v1489 = vunpack.c.h.b16 %v1465
  %v1490 = vpack.c.b16 %v1474, %v1474
  %v1491 = vpack.c.b16 %v1475, %v1475
  %v1492 = vpack.c.b16 %v1476, %v1476
  %v1493 = vpack.c.b16 %v1477, %v1477
  %v1494 = vpack.c.b16 %v1478, %v1478
  %v1495 = vpack.c.b16 %v1479, %v1479
  %v1496 = vpack.c.b16 %v1480, %v1480
  %v1497 = vpack.c.b16 %v1481, %v1481
  %v1498 = vpack.c.b16 %v1482, %v1482
  %v1499 = vpack.c.b16 %v1483, %v1483
  %v1500 = vpack.c.b16 %v1484, %v1484
  %v1501 = vpack.c.b16 %v1485, %v1485
  %v1502 = vpack.c.b16 %v1486, %v1486
  %v1503 = vpack.c.b16 %v1487, %v1487
  %v1504 = vpack.c.b16 %v1488, %v1488
  %v1505 = vpack.c.b16 %v1489, %v1489
  %1522 = vst [vmem:[%s5] sm:$0xf] %v1490
  %1523 = vst [vmem:[%s5 + $0x4] sm:$0xf] %v1491
  %1524 = vst [vmem:[%s5 + $0x8] sm:$0xf] %v1492
  %1525 = vst [vmem:[%s5 + $0xc] sm:$0xf] %v1493
  %1526 = vst [vmem:[%s5 + $0x10] sm:$0xf] %v1494
  %1527 = vst [vmem:[%s5 + $0x14] sm:$0xf] %v1495
  %1528 = vst [vmem:[%s5 + $0x18] sm:$0xf] %v1496
  %1529 = vst [vmem:[%s5 + $0x1c] sm:$0xf] %v1497
  %1530 = vst [vmem:[%s5 + $0x20] sm:$0xf] %v1498
  %1531 = vst [vmem:[%s5 + $0x24] sm:$0xf] %v1499
  %1532 = vst [vmem:[%s5 + $0x28] sm:$0xf] %v1500
  %1533 = vst [vmem:[%s5 + $0x2c] sm:$0xf] %v1501
  %1534 = vst [vmem:[%s5 + $0x30] sm:$0xf] %v1502
  %1535 = vst [vmem:[%s5 + $0x34] sm:$0xf] %v1503
  %1536 = vst [vmem:[%s5 + $0x38] sm:$0xf] %v1504
  %1537 = vst [vmem:[%s5 + $0x3c] sm:$0xf] %v1505
  %v1538 = vld [vmem:[%s524] sm:$0xff]
  %v1539 = vld [vmem:[%s524 + $0x8] sm:$0xff]
  %v1540 = vld [vmem:[%s524 + $0x10] sm:$0xff]
  %v1541 = vld [vmem:[%s524 + $0x18] sm:$0xff]
  %v1542 = vld [vmem:[%s524 + $0x20] sm:$0xff]
  %v1543 = vld [vmem:[%s524 + $0x28] sm:$0xff]
  %v1544 = vld [vmem:[%s524 + $0x30] sm:$0xff]
  %v1545 = vld [vmem:[%s524 + $0x38] sm:$0xff]
  %v1546 = vld [vmem:[%s524 + $0x40] sm:$0xff]
  %v1547 = vld [vmem:[%s524 + $0x48] sm:$0xff]
  %v1548 = vld [vmem:[%s524 + $0x50] sm:$0xff]
  %v1549 = vld [vmem:[%s524 + $0x58] sm:$0xff]
  %v1550 = vld [vmem:[%s524 + $0x60] sm:$0xff]
  %v1551 = vld [vmem:[%s524 + $0x68] sm:$0xff]
  %v1552 = vld [vmem:[%s524 + $0x70] sm:$0xff]
  %v1553 = vld [vmem:[%s524 + $0x78] sm:$0xff]
  %v1554 = vmul.f32 %v1538, %v1402
  %v1555 = vmul.f32 %v1539, %v1402
  %v1556 = vmul.f32 %v1540, %v1402
  %v1557 = vmul.f32 %v1541, %v1402
  %v1558 = vmul.f32 %v1542, %v1402
  %v1559 = vmul.f32 %v1543, %v1402
  %v1560 = vmul.f32 %v1544, %v1402
  %v1561 = vmul.f32 %v1545, %v1402
  %v1562 = vmul.f32 %v1546, %v1402
  %v1563 = vmul.f32 %v1547, %v1402
  %v1564 = vmul.f32 %v1548, %v1402
  %v1565 = vmul.f32 %v1549, %v1402
  %v1566 = vmul.f32 %v1550, %v1402
  %v1567 = vmul.f32 %v1551, %v1402
  %v1568 = vmul.f32 %v1552, %v1402
  %v1569 = vmul.f32 %v1553, %v1402
  %v1570 = vadd.f32 %v1554, %v1424
  %v1571 = vadd.f32 %v1555, %v1424
  %v1572 = vadd.f32 %v1556, %v1424
  %v1573 = vadd.f32 %v1557, %v1424
  %v1574 = vadd.f32 %v1558, %v1424
  %v1575 = vadd.f32 %v1559, %v1424
  %v1576 = vadd.f32 %v1560, %v1424
  %v1577 = vadd.f32 %v1561, %v1424
  %v1578 = vadd.f32 %v1562, %v1424
  %v1579 = vadd.f32 %v1563, %v1424
  %v1580 = vadd.f32 %v1564, %v1424
  %v1581 = vadd.f32 %v1565, %v1424
  %v1582 = vadd.f32 %v1566, %v1424
  %v1583 = vadd.f32 %v1567, %v1424
  %v1584 = vadd.f32 %v1568, %v1424
  %v1585 = vadd.f32 %v1569, %v1424
  %v1586 = vmax.f32 %v1570, 0.0
  %v1587 = vmax.f32 %v1571, 0.0
  %v1588 = vmax.f32 %v1572, 0.0
  %v1589 = vmax.f32 %v1573, 0.0
  %v1590 = vmax.f32 %v1574, 0.0
  %v1591 = vmax.f32 %v1575, 0.0
  %v1592 = vmax.f32 %v1576, 0.0
  %v1593 = vmax.f32 %v1577, 0.0
  %v1594 = vmax.f32 %v1578, 0.0
  %v1595 = vmax.f32 %v1579, 0.0
  %v1596 = vmax.f32 %v1580, 0.0
  %v1597 = vmax.f32 %v1581, 0.0
  %v1598 = vmax.f32 %v1582, 0.0
  %v1599 = vmax.f32 %v1583, 0.0
  %v1600 = vmax.f32 %v1584, 0.0
  %v1601 = vmax.f32 %v1585, 0.0
  %v1602 = vpack.c.bf16 %v1587, %v1586
  %v1603 = vpack.c.bf16 %v1589, %v1588
  %v1604 = vpack.c.bf16 %v1591, %v1590
  %v1605 = vpack.c.bf16 %v1593, %v1592
  %v1606 = vpack.c.bf16 %v1595, %v1594
  %v1607 = vpack.c.bf16 %v1597, %v1596
  %v1608 = vpack.c.bf16 %v1599, %v1598
  %v1609 = vpack.c.bf16 %v1601, %v1600
  %v1618 = vunpack.c.l.b16 %v1602
  %v1619 = vunpack.c.h.b16 %v1602
  %v1620 = vunpack.c.l.b16 %v1603
  %v1621 = vunpack.c.h.b16 %v1603
  %v1622 = vunpack.c.l.b16 %v1604
  %v1623 = vunpack.c.h.b16 %v1604
  %v1624 = vunpack.c.l.b16 %v1605
  %v1625 = vunpack.c.h.b16 %v1605
  %v1626 = vunpack.c.l.b16 %v1606
  %v1627 = vunpack.c.h.b16 %v1606
  %v1628 = vunpack.c.l.b16 %v1607
  %v1629 = vunpack.c.h.b16 %v1607
  %v1630 = vunpack.c.l.b16 %v1608
  %v1631 = vunpack.c.h.b16 %v1608
  %v1632 = vunpack.c.l.b16 %v1609
  %v1633 = vunpack.c.h.b16 %v1609
  %v1634 = vpack.c.b16 %v1618, %v1618
  %v1635 = vpack.c.b16 %v1619, %v1619
  %v1636 = vpack.c.b16 %v1620, %v1620
  %v1637 = vpack.c.b16 %v1621, %v1621
  %v1638 = vpack.c.b16 %v1622, %v1622
  %v1639 = vpack.c.b16 %v1623, %v1623
  %v1640 = vpack.c.b16 %v1624, %v1624
  %v1641 = vpack.c.b16 %v1625, %v1625
  %v1642 = vpack.c.b16 %v1626, %v1626
  %v1643 = vpack.c.b16 %v1627, %v1627
  %v1644 = vpack.c.b16 %v1628, %v1628
  %v1645 = vpack.c.b16 %v1629, %v1629
  %v1646 = vpack.c.b16 %v1630, %v1630
  %v1647 = vpack.c.b16 %v1631, %v1631
  %v1648 = vpack.c.b16 %v1632, %v1632
  %v1649 = vpack.c.b16 %v1633, %v1633
  %s1666 = scalar_lea.vmem %s5, 64
  %1667 = vst [vmem:[%s1666] sm:$0xf] %v1634
  %1668 = vst [vmem:[%s1666 + $0x4] sm:$0xf] %v1635
  %1669 = vst [vmem:[%s1666 + $0x8] sm:$0xf] %v1636
  %1670 = vst [vmem:[%s1666 + $0xc] sm:$0xf] %v1637
  %1671 = vst [vmem:[%s1666 + $0x10] sm:$0xf] %v1638
  %1672 = vst [vmem:[%s1666 + $0x14] sm:$0xf] %v1639
  %1673 = vst [vmem:[%s1666 + $0x18] sm:$0xf] %v1640
  %1674 = vst [vmem:[%s1666 + $0x1c] sm:$0xf] %v1641
  %1675 = vst [vmem:[%s1666 + $0x20] sm:$0xf] %v1642
  %1676 = vst [vmem:[%s1666 + $0x24] sm:$0xf] %v1643
  %1677 = vst [vmem:[%s1666 + $0x28] sm:$0xf] %v1644
  %1678 = vst [vmem:[%s1666 + $0x2c] sm:$0xf] %v1645
  %1679 = vst [vmem:[%s1666 + $0x30] sm:$0xf] %v1646
  %1680 = vst [vmem:[%s1666 + $0x34] sm:$0xf] %v1647
  %1681 = vst [vmem:[%s1666 + $0x38] sm:$0xf] %v1648
  %1682 = vst [vmem:[%s1666 + $0x3c] sm:$0xf] %v1649
  %v1683 = vld [vmem:[%s797] sm:$0xff]
  %v1684 = vld [vmem:[%s797 + $0x8] sm:$0xff]
  %v1685 = vld [vmem:[%s797 + $0x10] sm:$0xff]
  %v1686 = vld [vmem:[%s797 + $0x18] sm:$0xff]
  %v1687 = vld [vmem:[%s797 + $0x20] sm:$0xff]
  %v1688 = vld [vmem:[%s797 + $0x28] sm:$0xff]
  %v1689 = vld [vmem:[%s797 + $0x30] sm:$0xff]
  %v1690 = vld [vmem:[%s797 + $0x38] sm:$0xff]
  %v1691 = vld [vmem:[%s797 + $0x40] sm:$0xff]
  %v1692 = vld [vmem:[%s797 + $0x48] sm:$0xff]
  %v1693 = vld [vmem:[%s797 + $0x50] sm:$0xff]
  %v1694 = vld [vmem:[%s797 + $0x58] sm:$0xff]
  %v1695 = vld [vmem:[%s797 + $0x60] sm:$0xff]
  %v1696 = vld [vmem:[%s797 + $0x68] sm:$0xff]
  %v1697 = vld [vmem:[%s797 + $0x70] sm:$0xff]
  %v1698 = vld [vmem:[%s797 + $0x78] sm:$0xff]
  %v1699 = vmul.f32 %v1683, %v1402
  %v1700 = vmul.f32 %v1684, %v1402
  %v1701 = vmul.f32 %v1685, %v1402
  %v1702 = vmul.f32 %v1686, %v1402
  %v1703 = vmul.f32 %v1687, %v1402
  %v1704 = vmul.f32 %v1688, %v1402
  %v1705 = vmul.f32 %v1689, %v1402
  %v1706 = vmul.f32 %v1690, %v1402
  %v1707 = vmul.f32 %v1691, %v1402
  %v1708 = vmul.f32 %v1692, %v1402
  %v1709 = vmul.f32 %v1693, %v1402
  %v1710 = vmul.f32 %v1694, %v1402
  %v1711 = vmul.f32 %v1695, %v1402
  %v1712 = vmul.f32 %v1696, %v1402
  %v1713 = vmul.f32 %v1697, %v1402
  %v1714 = vmul.f32 %v1698, %v1402
  %v1715 = vadd.f32 %v1699, %v1424
  %v1716 = vadd.f32 %v1700, %v1424
  %v1717 = vadd.f32 %v1701, %v1424
  %v1718 = vadd.f32 %v1702, %v1424
  %v1719 = vadd.f32 %v1703, %v1424
  %v1720 = vadd.f32 %v1704, %v1424
  %v1721 = vadd.f32 %v1705, %v1424
  %v1722 = vadd.f32 %v1706, %v1424
  %v1723 = vadd.f32 %v1707, %v1424
  %v1724 = vadd.f32 %v1708, %v1424
  %v1725 = vadd.f32 %v1709, %v1424
  %v1726 = vadd.f32 %v1710, %v1424
  %v1727 = vadd.f32 %v1711, %v1424
  %v1728 = vadd.f32 %v1712, %v1424
  %v1729 = vadd.f32 %v1713, %v1424
  %v1730 = vadd.f32 %v1714, %v1424
  %v1731 = vmax.f32 %v1715, 0.0
  %v1732 = vmax.f32 %v1716, 0.0
  %v1733 = vmax.f32 %v1717, 0.0
  %v1734 = vmax.f32 %v1718, 0.0
  %v1735 = vmax.f32 %v1719, 0.0
  %v1736 = vmax.f32 %v1720, 0.0
  %v1737 = vmax.f32 %v1721, 0.0
  %v1738 = vmax.f32 %v1722, 0.0
  %v1739 = vmax.f32 %v1723, 0.0
  %v1740 = vmax.f32 %v1724, 0.0
  %v1741 = vmax.f32 %v1725, 0.0
  %v1742 = vmax.f32 %v1726, 0.0
  %v1743 = vmax.f32 %v1727, 0.0
  %v1744 = vmax.f32 %v1728, 0.0
  %v1745 = vmax.f32 %v1729, 0.0
  %v1746 = vmax.f32 %v1730, 0.0
  %v1747 = vpack.c.bf16 %v1732, %v1731
  %v1748 = vpack.c.bf16 %v1734, %v1733
  %v1749 = vpack.c.bf16 %v1736, %v1735
  %v1750 = vpack.c.bf16 %v1738, %v1737
  %v1751 = vpack.c.bf16 %v1740, %v1739
  %v1752 = vpack.c.bf16 %v1742, %v1741
  %v1753 = vpack.c.bf16 %v1744, %v1743
  %v1754 = vpack.c.bf16 %v1746, %v1745
  %v1763 = vunpack.c.l.b16 %v1747
  %v1764 = vunpack.c.h.b16 %v1747
  %v1765 = vunpack.c.l.b16 %v1748
  %v1766 = vunpack.c.h.b16 %v1748
  %v1767 = vunpack.c.l.b16 %v1749
  %v1768 = vunpack.c.h.b16 %v1749
  %v1769 = vunpack.c.l.b16 %v1750
  %v1770 = vunpack.c.h.b16 %v1750
  %v1771 = vunpack.c.l.b16 %v1751
  %v1772 = vunpack.c.h.b16 %v1751
  %v1773 = vunpack.c.l.b16 %v1752
  %v1774 = vunpack.c.h.b16 %v1752
  %v1775 = vunpack.c.l.b16 %v1753
  %v1776 = vunpack.c.h.b16 %v1753
  %v1777 = vunpack.c.l.b16 %v1754
  %v1778 = vunpack.c.h.b16 %v1754
  %v1779 = vpack.c.b16 %v1763, %v1763
  %v1780 = vpack.c.b16 %v1764, %v1764
  %v1781 = vpack.c.b16 %v1765, %v1765
  %v1782 = vpack.c.b16 %v1766, %v1766
  %v1783 = vpack.c.b16 %v1767, %v1767
  %v1784 = vpack.c.b16 %v1768, %v1768
  %v1785 = vpack.c.b16 %v1769, %v1769
  %v1786 = vpack.c.b16 %v1770, %v1770
  %v1787 = vpack.c.b16 %v1771, %v1771
  %v1788 = vpack.c.b16 %v1772, %v1772
  %v1789 = vpack.c.b16 %v1773, %v1773
  %v1790 = vpack.c.b16 %v1774, %v1774
  %v1791 = vpack.c.b16 %v1775, %v1775
  %v1792 = vpack.c.b16 %v1776, %v1776
  %v1793 = vpack.c.b16 %v1777, %v1777
  %v1794 = vpack.c.b16 %v1778, %v1778
  %s1811 = scalar_lea.vmem %s5, 128
  %1812 = vst [vmem:[%s1811] sm:$0xf] %v1779
  %1813 = vst [vmem:[%s1811 + $0x4] sm:$0xf] %v1780
  %1814 = vst [vmem:[%s1811 + $0x8] sm:$0xf] %v1781
  %1815 = vst [vmem:[%s1811 + $0xc] sm:$0xf] %v1782
  %1816 = vst [vmem:[%s1811 + $0x10] sm:$0xf] %v1783
  %1817 = vst [vmem:[%s1811 + $0x14] sm:$0xf] %v1784
  %1818 = vst [vmem:[%s1811 + $0x18] sm:$0xf] %v1785
  %1819 = vst [vmem:[%s1811 + $0x1c] sm:$0xf] %v1786
  %1820 = vst [vmem:[%s1811 + $0x20] sm:$0xf] %v1787
  %1821 = vst [vmem:[%s1811 + $0x24] sm:$0xf] %v1788
  %1822 = vst [vmem:[%s1811 + $0x28] sm:$0xf] %v1789
  %1823 = vst [vmem:[%s1811 + $0x2c] sm:$0xf] %v1790
  %1824 = vst [vmem:[%s1811 + $0x30] sm:$0xf] %v1791
  %1825 = vst [vmem:[%s1811 + $0x34] sm:$0xf] %v1792
  %1826 = vst [vmem:[%s1811 + $0x38] sm:$0xf] %v1793
  %1827 = vst [vmem:[%s1811 + $0x3c] sm:$0xf] %v1794
  %v1828 = vld [vmem:[%s1070] sm:$0xff]
  %v1829 = vld [vmem:[%s1070 + $0x8] sm:$0xff]
  %v1830 = vld [vmem:[%s1070 + $0x10] sm:$0xff]
  %v1831 = vld [vmem:[%s1070 + $0x18] sm:$0xff]
  %v1832 = vld [vmem:[%s1070 + $0x20] sm:$0xff]
  %v1833 = vld [vmem:[%s1070 + $0x28] sm:$0xff]
  %v1834 = vld [vmem:[%s1070 + $0x30] sm:$0xff]
  %v1835 = vld [vmem:[%s1070 + $0x38] sm:$0xff]
  %v1836 = vld [vmem:[%s1070 + $0x40] sm:$0xff]
  %v1837 = vld [vmem:[%s1070 + $0x48] sm:$0xff]
  %v1838 = vld [vmem:[%s1070 + $0x50] sm:$0xff]
  %v1839 = vld [vmem:[%s1070 + $0x58] sm:$0xff]
  %v1840 = vld [vmem:[%s1070 + $0x60] sm:$0xff]
  %v1841 = vld [vmem:[%s1070 + $0x68] sm:$0xff]
  %v1842 = vld [vmem:[%s1070 + $0x70] sm:$0xff]
  %v1843 = vld [vmem:[%s1070 + $0x78] sm:$0xff]
  %v1844 = vmul.f32 %v1828, %v1402
  %v1845 = vmul.f32 %v1829, %v1402
  %v1846 = vmul.f32 %v1830, %v1402
  %v1847 = vmul.f32 %v1831, %v1402
  %v1848 = vmul.f32 %v1832, %v1402
  %v1849 = vmul.f32 %v1833, %v1402
  %v1850 = vmul.f32 %v1834, %v1402
  %v1851 = vmul.f32 %v1835, %v1402
  %v1852 = vmul.f32 %v1836, %v1402
  %v1853 = vmul.f32 %v1837, %v1402
  %v1854 = vmul.f32 %v1838, %v1402
  %v1855 = vmul.f32 %v1839, %v1402
  %v1856 = vmul.f32 %v1840, %v1402
  %v1857 = vmul.f32 %v1841, %v1402
  %v1858 = vmul.f32 %v1842, %v1402
  %v1859 = vmul.f32 %v1843, %v1402
  %v1860 = vadd.f32 %v1844, %v1424
  %v1861 = vadd.f32 %v1845, %v1424
  %v1862 = vadd.f32 %v1846, %v1424
  %v1863 = vadd.f32 %v1847, %v1424
  %v1864 = vadd.f32 %v1848, %v1424
  %v1865 = vadd.f32 %v1849, %v1424
  %v1866 = vadd.f32 %v1850, %v1424
  %v1867 = vadd.f32 %v1851, %v1424
  %v1868 = vadd.f32 %v1852, %v1424
  %v1869 = vadd.f32 %v1853, %v1424
  %v1870 = vadd.f32 %v1854, %v1424
  %v1871 = vadd.f32 %v1855, %v1424
  %v1872 = vadd.f32 %v1856, %v1424
  %v1873 = vadd.f32 %v1857, %v1424
  %v1874 = vadd.f32 %v1858, %v1424
  %v1875 = vadd.f32 %v1859, %v1424
  %v1876 = vmax.f32 %v1860, 0.0
  %v1877 = vmax.f32 %v1861, 0.0
  %v1878 = vmax.f32 %v1862, 0.0
  %v1879 = vmax.f32 %v1863, 0.0
  %v1880 = vmax.f32 %v1864, 0.0
  %v1881 = vmax.f32 %v1865, 0.0
  %v1882 = vmax.f32 %v1866, 0.0
  %v1883 = vmax.f32 %v1867, 0.0
  %v1884 = vmax.f32 %v1868, 0.0
  %v1885 = vmax.f32 %v1869, 0.0
  %v1886 = vmax.f32 %v1870, 0.0
  %v1887 = vmax.f32 %v1871, 0.0
  %v1888 = vmax.f32 %v1872, 0.0
  %v1889 = vmax.f32 %v1873, 0.0
  %v1890 = vmax.f32 %v1874, 0.0
  %v1891 = vmax.f32 %v1875, 0.0
  %v1892 = vpack.c.bf16 %v1877, %v1876
  %v1893 = vpack.c.bf16 %v1879, %v1878
  %v1894 = vpack.c.bf16 %v1881, %v1880
  %v1895 = vpack.c.bf16 %v1883, %v1882
  %v1896 = vpack.c.bf16 %v1885, %v1884
  %v1897 = vpack.c.bf16 %v1887, %v1886
  %v1898 = vpack.c.bf16 %v1889, %v1888
  %v1899 = vpack.c.bf16 %v1891, %v1890
  %v1908 = vunpack.c.l.b16 %v1892
  %v1909 = vunpack.c.h.b16 %v1892
  %v1910 = vunpack.c.l.b16 %v1893
  %v1911 = vunpack.c.h.b16 %v1893
  %v1912 = vunpack.c.l.b16 %v1894
  %v1913 = vunpack.c.h.b16 %v1894
  %v1914 = vunpack.c.l.b16 %v1895
  %v1915 = vunpack.c.h.b16 %v1895
  %v1916 = vunpack.c.l.b16 %v1896
  %v1917 = vunpack.c.h.b16 %v1896
  %v1918 = vunpack.c.l.b16 %v1897
  %v1919 = vunpack.c.h.b16 %v1897
  %v1920 = vunpack.c.l.b16 %v1898
  %v1921 = vunpack.c.h.b16 %v1898
  %v1922 = vunpack.c.l.b16 %v1899
  %v1923 = vunpack.c.h.b16 %v1899
  %v1924 = vpack.c.b16 %v1908, %v1908
  %v1925 = vpack.c.b16 %v1909, %v1909
  %v1926 = vpack.c.b16 %v1910, %v1910
  %v1927 = vpack.c.b16 %v1911, %v1911
  %v1928 = vpack.c.b16 %v1912, %v1912
  %v1929 = vpack.c.b16 %v1913, %v1913
  %v1930 = vpack.c.b16 %v1914, %v1914
  %v1931 = vpack.c.b16 %v1915, %v1915
  %v1932 = vpack.c.b16 %v1916, %v1916
  %v1933 = vpack.c.b16 %v1917, %v1917
  %v1934 = vpack.c.b16 %v1918, %v1918
  %v1935 = vpack.c.b16 %v1919, %v1919
  %v1936 = vpack.c.b16 %v1920, %v1920
  %v1937 = vpack.c.b16 %v1921, %v1921
  %v1938 = vpack.c.b16 %v1922, %v1922
  %v1939 = vpack.c.b16 %v1923, %v1923
  %s1956 = scalar_lea.vmem %s5, 192
  %1957 = vst [vmem:[%s1956] sm:$0xf] %v1924
  %1958 = vst [vmem:[%s1956 + $0x4] sm:$0xf] %v1925
  %1959 = vst [vmem:[%s1956 + $0x8] sm:$0xf] %v1926
  %1960 = vst [vmem:[%s1956 + $0xc] sm:$0xf] %v1927
  %1961 = vst [vmem:[%s1956 + $0x10] sm:$0xf] %v1928
  %1962 = vst [vmem:[%s1956 + $0x14] sm:$0xf] %v1929
  %1963 = vst [vmem:[%s1956 + $0x18] sm:$0xf] %v1930
  %1964 = vst [vmem:[%s1956 + $0x1c] sm:$0xf] %v1931
  %1965 = vst [vmem:[%s1956 + $0x20] sm:$0xf] %v1932
  %1966 = vst [vmem:[%s1956 + $0x24] sm:$0xf] %v1933
  %1967 = vst [vmem:[%s1956 + $0x28] sm:$0xf] %v1934
  %1968 = vst [vmem:[%s1956 + $0x2c] sm:$0xf] %v1935
  %1969 = vst [vmem:[%s1956 + $0x30] sm:$0xf] %v1936
  %1970 = vst [vmem:[%s1956 + $0x34] sm:$0xf] %v1937
  %1971 = vst [vmem:[%s1956 + $0x38] sm:$0xf] %v1938
  %1972 = vst [vmem:[%s1956 + $0x3c] sm:$0xf] %v1939
  // Predicated region
  $region22: #{vae_forward.14} parent=0 // pred_check
    _
  $region23: #{vae_forward.14} parent=0 // pred_check_branch
    %1974 = sbr.rel (0) target = $region25
  $region24: #{vae_forward.14} parent=0 // pred_region
    _
  $region25: #{vae_forward.14} parent=0 // pred_fallthru
    _
  // Predicated region
  $region26: #{vae_forward.14} parent=0 // pred_check
    _
  $region27: #{vae_forward.14} parent=0 // pred_check_branch
    %1976 = sbr.rel (0) target = $region29
  $region28: #{vae_forward.14} parent=0 // pred_region
    _
  $region29: #{vae_forward.14} parent=0 // pred_fallthru
    _

// kernel: vae_forward.15
$region0: #{vae_forward.15}
  #allocation0 [shape = 'u32[]', space=smem, size = 0x4, offset = 0x4, fixed_abs, tag = 'smem constant byte address 0x4 - core index']
  #allocation1 [shape = 'u32[144,128]{1,0:T(1,128)}', space=vmem, size = 0x12000, scoped, tag = 'internal scratch']
  %s0 = inlined_call_operand.vmem [shape: bf16[4,512,64], index: 0, kind: input, shape index: {}]
  %s1 = inlined_call_operand.vmem [shape: bf16[4,64,128], index: 1, kind: input, shape index: {}]
  %s2 = inlined_call_operand.vmem [shape: f32[1,128], index: 2, kind: input, shape index: {}]
  %s3 = inlined_call_operand.vmem [shape: bf16[4,512,128], index: 3, kind: output, shape index: {}]
  %s4 = sld [smem:[#allocation0]]
  $region45: #{vae_forward.15} parent=0
    _
  %s6 = ssub.s32 1, %s4
  %s7 = scalar_select 0, %s6, %s4
  loop: start=0, step=1, limit=10
  $region2: #{vae_forward.15} parent=0 // loop_pre_header
    _
  $region3: #{vae_forward.15} parent=0 // loop_header
    %s9 = sphi 0, %s13
    %p10 = scmp.ge.s32.totalorder %s9, 10
    %s16 = sphi 0, %s28
    %s17 = sphi 0, %s24
    %s18 = sphi 0, %s16
    %s19 = sphi 0, %s17
    %s20 = sphi 0, %s18
    %s21 = sphi 0, %s19
    %s33 = sphi 0, %s35
    %s36 = sphi 0, %s33
    %s37 = sphi 0, %s36
    %s53 = sphi 0, %s37
    %s59 = sphi 0, %s61
    %s62 = sphi 0, %s59
    %s63 = sphi 0, %s62
    %s79 = sphi 0, %s63
    %s83 = sphi 0, %s83
    %s85 = sphi 0, %s83
    %s86 = sphi 0, %s85
    %s100 = sphi 0, %s86
    %s108 = sphi 0, %s110
    %s111 = sphi 0, %s108
    %s112 = sphi 0, %s111
    %s128 = sphi 0, %s112
  $region4: #{vae_forward.15} parent=0 // loop_header_branch
    %12 = sbr.rel (%p10) target = $region8
  $region5: #{vae_forward.15} parent=0 // loop_body
    %s14 = ssub.s32 %s9, 1
    %s15 = ssub.s32 %s9, 2
    %s22 = sadd.s32 1, %s17
    %p23 = scmp.ge.s32.totalorder %s22, 2
    %s24 = scalar_select %p23, 0, %s22
    %s25 = sadd.s32 1, %s16
    %s26 = scalar_select %p23, %s25, %s16
    %p27 = scmp.ge.s32.totalorder %s26, 4
    %s28 = scalar_select %p27, 0, %s26
    %s29 = ssub.s32 %s16, %s28
    %s30 = ssub.s32 %s17, %s24
    %s31 = sor.u32 %s29, %s30
    %p32 = scmp.eq.s32.totalorder %s31, 0
    %s34 = sadd.s32 %s33, 1
    %s35 = scalar_select %p32, %s33, %s34
    %p38 = pneg %p32
    %p39 = scmp.eq.s32.totalorder %s9, 7
    %p40 = por %p38, %p39
    %p41 = scmp.ne.s32.totalorder %s33, %s36
    %p42 = scmp.eq.s32.totalorder %s9, 0
    %p43 = por %p41, %p42
    %p44 = scmp.ne.s32.totalorder %s33, %s36
    %p45 = scmp.eq.s32.totalorder %s14, 7
    %p46 = por %p44, %p45
    %p47 = scmp.ne.s32.totalorder %s36, %s37
    %p48 = scmp.eq.s32.totalorder %s14, 0
    %p49 = por %p47, %p48
    %p50 = scmp.ne.s32.totalorder %s36, %s37
    %p51 = scmp.eq.s32.totalorder %s15, 7
    %p52 = por %p50, %p51
    %p54 = scmp.ne.s32.totalorder %s37, %s53
    %p55 = scmp.eq.s32.totalorder %s15, 0
    %p56 = por %p54, %p55
    %s57 = ssub.s32 %s16, %s28
    %p58 = scmp.eq.s32.totalorder %s57, 0
    %s60 = sadd.s32 %s59, 1
    %s61 = scalar_select %p58, %s59, %s60
    %p64 = pneg %p58
    %p65 = scmp.eq.s32.totalorder %s9, 7
    %p66 = por %p64, %p65
    %p67 = scmp.ne.s32.totalorder %s59, %s62
    %p68 = scmp.eq.s32.totalorder %s9, 0
    %p69 = por %p67, %p68
    %p70 = scmp.ne.s32.totalorder %s59, %s62
    %p71 = scmp.eq.s32.totalorder %s14, 7
    %p72 = por %p70, %p71
    %p73 = scmp.ne.s32.totalorder %s62, %s63
    %p74 = scmp.eq.s32.totalorder %s14, 0
    %p75 = por %p73, %p74
    %p76 = scmp.ne.s32.totalorder %s62, %s63
    %p77 = scmp.eq.s32.totalorder %s15, 7
    %p78 = por %p76, %p77
    %p80 = scmp.ne.s32.totalorder %s63, %s79
    %p81 = scmp.eq.s32.totalorder %s15, 0
    %p82 = por %p80, %p81
    %s84 = sadd.s32 %s83, 1
    %p87 = scmp.eq.s32.totalorder %s9, 7
    %p88 = scmp.ne.s32.totalorder %s83, %s85
    %p89 = scmp.eq.s32.totalorder %s9, 0
    %p90 = por %p88, %p89
    %p91 = scmp.ne.s32.totalorder %s83, %s85
    %p92 = scmp.eq.s32.totalorder %s14, 7
    %p93 = por %p91, %p92
    %p94 = scmp.ne.s32.totalorder %s85, %s86
    %p95 = scmp.eq.s32.totalorder %s14, 0
    %p96 = por %p94, %p95
    %p97 = scmp.ne.s32.totalorder %s85, %s86
    %p98 = scmp.eq.s32.totalorder %s15, 7
    %p99 = por %p97, %p98
    %p101 = scmp.ne.s32.totalorder %s86, %s100
    %p102 = scmp.eq.s32.totalorder %s15, 0
    %p103 = por %p101, %p102
    %s104 = ssub.s32 %s16, %s28
    %s105 = ssub.s32 %s17, %s24
    %s106 = sor.u32 %s104, %s105
    %p107 = scmp.eq.s32.totalorder %s106, 0
    %s109 = sadd.s32 %s108, 1
    %s110 = scalar_select %p107, %s108, %s109
    %p113 = pneg %p107
    %p114 = scmp.eq.s32.totalorder %s9, 7
    %p115 = por %p113, %p114
    %p116 = scmp.ne.s32.totalorder %s108, %s111
    %p117 = scmp.eq.s32.totalorder %s9, 0
    %p118 = por %p116, %p117
    %p119 = scmp.ne.s32.totalorder %s108, %s111
    %p120 = scmp.eq.s32.totalorder %s14, 7
    %p121 = por %p119, %p120
    %p122 = scmp.ne.s32.totalorder %s111, %s112
    %p123 = scmp.eq.s32.totalorder %s14, 0
    %p124 = por %p122, %p123
    %p125 = scmp.ne.s32.totalorder %s111, %s112
    %p126 = scmp.eq.s32.totalorder %s15, 7
    %p127 = por %p125, %p126
    %p129 = scmp.ne.s32.totalorder %s112, %s128
    %p130 = scmp.eq.s32.totalorder %s15, 0
    %p131 = por %p129, %p130
    %p132 = scmp.le.s32.totalorder 1, %s9
    %p133 = scmp.lt.s32.totalorder %s9, 9
    %p134 = pnand %p132, %p133
    %p135 = pneg %p134
    // Predicated region
    $region9: #{vae_forward.15} parent=5 // pred_check
      _
    $region10: #{vae_forward.15} parent=5 // pred_check_branch
      %137 = sbr.rel (%p134) target = $region12
    $region11: #{vae_forward.15} parent=5 // pred_region
      %s138 = ssub.s32 %s9, 1
      // Predicated region
      $region13: #{vae_forward.15} parent=11 // pred_check
        %p139 = pneg %p96
      $region14: #{vae_forward.15} parent=11 // pred_check_branch
        %141 = sbr.rel (%p139) target = $region16
      $region15: #{vae_forward.15} parent=11 // pred_region
        _
      $region16: #{vae_forward.15} parent=11 // pred_fallthru
        _
    $region12: #{vae_forward.15} parent=5 // pred_fallthru
      _
    %p142 = scmp.lt.s32.totalorder %s9, 8
    // Predicated region
    $region17: #{vae_forward.15} parent=5 // pred_check
      %p143 = pneg %p142
    $region18: #{vae_forward.15} parent=5 // pred_check_branch
      %145 = sbr.rel (%p143) target = $region20
    $region19: #{vae_forward.15} parent=5 // pred_region
      // Predicated region
      $region21: #{vae_forward.15} parent=19 // pred_check
        %p146 = pneg %p43
      $region22: #{vae_forward.15} parent=19 // pred_check_branch
        %148 = sbr.rel (%p146) target = $region24
      $region23: #{vae_forward.15} parent=19 // pred_region
        %s149 = smul.u32 32, %s17
        %p150 = scmp.lt.s32.totalorder %s16, 3
        %s151 = scalar_select %p150, %s16, 3
        %p152 = scmp.lt.s32.totalorder %s149, 63
        %s153 = scalar_select %p152, %s149, 63
        %s154 = smul.addr %s151, 64
        %s155 = sadd.s32 %s153, %s154
        %s156 = smul.addr %s155, 4
        %s157 = scalar_lea.vmem %s0, %s156
        %s158 = smul.u32 32, %s17
      $region24: #{vae_forward.15} parent=19 // pred_fallthru
        _
      // Predicated region
      $region25: #{vae_forward.15} parent=19 // pred_check
        %p159 = pneg %p69
      $region26: #{vae_forward.15} parent=19 // pred_check_branch
        %161 = sbr.rel (%p159) target = $region28
      $region27: #{vae_forward.15} parent=19 // pred_region
        %p162 = scmp.lt.s32.totalorder %s16, 3
        %s163 = scalar_select %p162, %s16, 3
        %s164 = smul.addr %s163, 8
        %s165 = smul.addr %s164, 4
        %s166 = scalar_lea.vmem %s1, %s165
      $region28: #{vae_forward.15} parent=19 // pred_fallthru
        _
    $region20: #{vae_forward.15} parent=5 // pred_fallthru
      _
    %p167 = scmp.le.s32.totalorder 1, %s9
    %p168 = scmp.lt.s32.totalorder %s9, 9
    %p169 = pnand %p167, %p168
    %p170 = pneg %p169
    // Predicated region
    $region29: #{vae_forward.15} parent=5 // pred_check
      _
    $region30: #{vae_forward.15} parent=5 // pred_check_branch
      %172 = sbr.rel (%p169) target = $region32
    $region31: #{vae_forward.15} parent=5 // pred_region
      %s173 = ssub.s32 %s9, 1
      %s174 = smul.u32 32, %s19
      %p175 = scmp.lt.s32.totalorder %s18, 3
      %s176 = scalar_select %p175, %s18, 3
      %p177 = scmp.lt.s32.totalorder %s174, 63
      %s178 = scalar_select %p177, %s174, 63
      %s179 = smul.addr %s176, 64
      %s180 = sadd.s32 %s178, %s179
      %s181 = smul.addr %s180, 4
      %s182 = scalar_lea.vmem %s0, %s181
      %p183 = pneg %p49
      %p184 = pneg %p46
      %p185 = scmp.lt.s32.totalorder %s18, 3
      %s186 = scalar_select %p185, %s18, 3
      %s187 = smul.addr %s186, 8
      %s188 = smul.addr %s187, 4
      %s189 = scalar_lea.vmem %s1, %s188
      %p190 = pneg %p75
      %p191 = pneg %p72
      %p192 = pneg %p96
      %p193 = pneg %p93
      %p194 = pneg %p124
      %p195 = pneg %p121
      %s196 = smul.u32 32, %s19
      %p197 = scmp.lt.s32.totalorder %s18, 3
      %s198 = scalar_select %p197, %s18, 3
      %p199 = scmp.lt.s32.totalorder %s196, 63
      %s200 = scalar_select %p199, %s196, 63
      %s201 = smul.addr %s198, 64
      %s202 = sadd.s32 %s200, %s201
      %s203 = smul.addr %s202, 4
      %s204 = scalar_lea.vmem %s3, %s203
      %s205 = smul.u32 32, %s19
      %p206 = scmp.lt.s32.totalorder %s18, 3
      %s207 = scalar_select %p206, %s18, 3
      %p208 = scmp.lt.s32.totalorder %s205, 63
      %s209 = scalar_select %p208, %s205, 63
      %s210 = smul.addr %s207, 64
      %s211 = sadd.s32 %s209, %s210
      %s212 = smul.addr %s211, 4
      %s213 = scalar_lea.vmem %s0, %s212
      %s214 = smul.u32 32, %s19
      %p215 = scmp.lt.s32.totalorder %s18, 3
      %s216 = scalar_select %p215, %s18, 3
      %s217 = smul.addr %s216, 8
      %s218 = smul.addr %s217, 4
      %s219 = scalar_lea.vmem %s1, %s218
      %s220 = smul.u32 32, %s19
      %p221 = scmp.lt.s32.totalorder %s18, 3
      %s222 = scalar_select %p221, %s18, 3
      %p223 = scmp.lt.s32.totalorder %s220, 63
      %s224 = scalar_select %p223, %s220, 63
      %s225 = smul.addr %s222, 64
      %s226 = sadd.s32 %s224, %s225
      %s227 = smul.addr %s226, 4
      %s228 = scalar_lea.vmem %s3, %s227
      %s229 = smul.u32 32, %s19
      %v231 = vld [vmem:[%s213] sm:$0xf]
      %v232 = vld [vmem:[%s213 + $0x4] sm:$0xf]
      %v233 = vld [vmem:[%s213 + $0x8] sm:$0xf]
      %v234 = vld [vmem:[%s213 + $0xc] sm:$0xf]
      %v235 = vld [vmem:[%s213 + $0x10] sm:$0xf]
      %v236 = vld [vmem:[%s213 + $0x14] sm:$0xf]
      %v237 = vld [vmem:[%s213 + $0x18] sm:$0xf]
      %v238 = vld [vmem:[%s213 + $0x1c] sm:$0xf]
      %v239 = vld [vmem:[%s213 + $0x20] sm:$0xf]
      %v240 = vld [vmem:[%s213 + $0x24] sm:$0xf]
      %v241 = vld [vmem:[%s213 + $0x28] sm:$0xf]
      %v242 = vld [vmem:[%s213 + $0x2c] sm:$0xf]
      %v243 = vld [vmem:[%s213 + $0x30] sm:$0xf]
      %v244 = vld [vmem:[%s213 + $0x34] sm:$0xf]
      %v245 = vld [vmem:[%s213 + $0x38] sm:$0xf]
      %v246 = vld [vmem:[%s213 + $0x3c] sm:$0xf]
      %v247 = vld [vmem:[%s213 + $0x40] sm:$0xf]
      %v248 = vld [vmem:[%s213 + $0x44] sm:$0xf]
      %v249 = vld [vmem:[%s213 + $0x48] sm:$0xf]
      %v250 = vld [vmem:[%s213 + $0x4c] sm:$0xf]
      %v251 = vld [vmem:[%s213 + $0x50] sm:$0xf]
      %v252 = vld [vmem:[%s213 + $0x54] sm:$0xf]
      %v253 = vld [vmem:[%s213 + $0x58] sm:$0xf]
      %v254 = vld [vmem:[%s213 + $0x5c] sm:$0xf]
      %v255 = vld [vmem:[%s213 + $0x60] sm:$0xf]
      %v256 = vld [vmem:[%s213 + $0x64] sm:$0xf]
      %v257 = vld [vmem:[%s213 + $0x68] sm:$0xf]
      %v258 = vld [vmem:[%s213 + $0x6c] sm:$0xf]
      %v259 = vld [vmem:[%s213 + $0x70] sm:$0xf]
      %v260 = vld [vmem:[%s213 + $0x74] sm:$0xf]
      %v261 = vld [vmem:[%s213 + $0x78] sm:$0xf]
      %v262 = vld [vmem:[%s213 + $0x7c] sm:$0xf]
      %v263 = vld [vmem:[%s219] sm:$0xf]
      %v264 = vld [vmem:[%s219 + $0x4] sm:$0xf]
      %v265 = vld [vmem:[%s219 + $0x8] sm:$0xf]
      %v266 = vld [vmem:[%s219 + $0xc] sm:$0xf]
      %v267 = vld [vmem:[%s219 + $0x10] sm:$0xf]
      %v268 = vld [vmem:[%s219 + $0x14] sm:$0xf]
      %v269 = vld [vmem:[%s219 + $0x18] sm:$0xf]
      %v270 = vld [vmem:[%s219 + $0x1c] sm:$0xf]
      %v271 = vld [vmem:[%s2] sm:$0x1]
      %v273 = vlaneseq
      %v274 = vshrl.u32 %v273, 7
      %v275 = vsub.s32 0, %v274
      %v276 = vrot.slane %v271, %v275
      %v310 = vunpack.c.l.b16 %v231
      %v311 = vunpack.c.l.b16 %v232
      %v312 = vunpack.c.l.b16 %v233
      %v313 = vunpack.c.l.b16 %v234
      %v314 = vunpack.c.l.b16 %v235
      %v315 = vunpack.c.l.b16 %v236
      %v316 = vunpack.c.l.b16 %v237
      %v317 = vunpack.c.l.b16 %v238
      %v318 = vunpack.c.l.b16 %v239
      %v319 = vunpack.c.l.b16 %v240
      %v320 = vunpack.c.l.b16 %v241
      %v321 = vunpack.c.l.b16 %v242
      %v322 = vunpack.c.l.b16 %v243
      %v323 = vunpack.c.l.b16 %v244
      %v324 = vunpack.c.l.b16 %v245
      %v325 = vunpack.c.l.b16 %v246
      %v326 = vunpack.c.l.b16 %v247
      %v327 = vunpack.c.l.b16 %v248
      %v328 = vunpack.c.l.b16 %v249
      %v329 = vunpack.c.l.b16 %v250
      %v330 = vunpack.c.l.b16 %v251
      %v331 = vunpack.c.l.b16 %v252
      %v332 = vunpack.c.l.b16 %v253
      %v333 = vunpack.c.l.b16 %v254
      %v334 = vunpack.c.l.b16 %v255
      %v335 = vunpack.c.l.b16 %v256
      %v336 = vunpack.c.l.b16 %v257
      %v337 = vunpack.c.l.b16 %v258
      %v338 = vunpack.c.l.b16 %v259
      %v339 = vunpack.c.l.b16 %v260
      %v340 = vunpack.c.l.b16 %v261
      %v341 = vunpack.c.l.b16 %v262
      %v342 = vpack.c.b16 %v311, %v310
      %v343 = vpack.c.b16 %v313, %v312
      %v344 = vpack.c.b16 %v315, %v314
      %v345 = vpack.c.b16 %v317, %v316
      %v346 = vpack.c.b16 %v319, %v318
      %v347 = vpack.c.b16 %v321, %v320
      %v348 = vpack.c.b16 %v323, %v322
      %v349 = vpack.c.b16 %v325, %v324
      %v350 = vpack.c.b16 %v327, %v326
      %v351 = vpack.c.b16 %v329, %v328
      %v352 = vpack.c.b16 %v331, %v330
      %v353 = vpack.c.b16 %v333, %v332
      %v354 = vpack.c.b16 %v335, %v334
      %v355 = vpack.c.b16 %v337, %v336
      %v356 = vpack.c.b16 %v339, %v338
      %v357 = vpack.c.b16 %v341, %v340
      %v366 = vunpack.c.l.b16 %v263
      %v367 = vunpack.c.l.b16 %v264
      %v368 = vunpack.c.l.b16 %v265
      %v369 = vunpack.c.l.b16 %v266
      %v370 = vunpack.c.l.b16 %v267
      %v371 = vunpack.c.l.b16 %v268
      %v372 = vunpack.c.l.b16 %v269
      %v373 = vunpack.c.l.b16 %v270
      %v374 = vpack.c.b16 %v367, %v366
      %v375 = vpack.c.b16 %v369, %v368
      %v376 = vpack.c.b16 %v371, %v370
      %v377 = vpack.c.b16 %v373, %v372
      %vm382 = vcmask 523264
      %v384 = vsel %vm382, %v342, 0
      %v387 = vsel %vm382, %v343, 0
      %v390 = vsel %vm382, %v344, 0
      %v393 = vsel %vm382, %v345, 0
      %v396 = vsel %vm382, %v346, 0
      %v399 = vsel %vm382, %v347, 0
      %v402 = vsel %vm382, %v348, 0
      %v405 = vsel %vm382, %v349, 0
      %v408 = vsel %vm382, %v350, 0
      %v411 = vsel %vm382, %v351, 0
      %v414 = vsel %vm382, %v352, 0
      %v417 = vsel %vm382, %v353, 0
      %v420 = vsel %vm382, %v354, 0
      %v423 = vsel %vm382, %v355, 0
      %v426 = vsel %vm382, %v356, 0
      %v429 = vsel %vm382, %v357, 0
      %431 = vmatprep.subr.bf16.mxu0 0
      %432 = vmatpush1.bf16.msra.mxu0 0
      %433 = vmatprep.subr.bf16.mxu0 0
      %434 = vmatpush1.bf16.msra.mxu0 0
      %435 = vmatprep.subr.bf16.mxu0 0
      %436 = vmatpush1.bf16.msra.mxu0 0
      %437 = vmatprep.subr.bf16.mxu0 0
      %438 = vmatpush1.bf16.msra.mxu0 0
      %439 = vmatprep.subr.bf16.mxu0 0
      %440 = vmatpush1.bf16.msra.mxu0 %v377
      %441 = vmatprep.subr.bf16.mxu0 0
      %442 = vmatpush1.bf16.msra.mxu0 %v376
      %443 = vmatprep.subr.bf16.mxu0 0
      %444 = vmatpush1.bf16.msra.mxu0 %v375
      %445 = vmatprep.subr.bf16.mxu0 0
      %446 = vmatpush1.bf16.msra.mxu0 %v374
      %447 = vmatprep.subr.bf16.mxu0 0
      %448 = vmatpush2.bf16.msra.mxu0 0
      %449 = vmatprep.subr.bf16.mxu0 0
      %450 = vmatpush2.bf16.msra.mxu0 0
      %451 = vmatprep.subr.bf16.mxu0 0
      %452 = vmatpush2.bf16.msra.mxu0 0
      %453 = vmatprep.subr.bf16.mxu0 0
      %454 = vmatpush2.bf16.msra.mxu0 0
      %455 = vmatprep.subr.bf16.mxu0 0
      %456 = vmatpush2.bf16.msra.mxu0 0
      %457 = vmatprep.subr.bf16.mxu0 0
      %458 = vmatpush2.bf16.msra.mxu0 0
      %459 = vmatprep.subr.bf16.mxu0 0
      %460 = vmatpush2.bf16.msra.mxu0 0
      %461 = vmatprep.subr.bf16.mxu0 0
      %462 = vmatpush2.bf16.msra.mxu0 0
      %463 = vmatprep.mubr.bf16.mxu0 0
      %464 = vmatmul.mubr.bf16.gmra.mxu0 %v384
      %v465 = vpop.f32.mrf.mxu0
      %v466 = vadd.f32 %v276, %v465
      %v467 = vpop.f32.mrf.mxu0
      %v468 = vpop.f32.mrf.mxu0
      %v469 = vadd.f32 %v276, %v468
      %v470 = vpop.f32.mrf.mxu0
      %471 = vmatprep.mubr.bf16.mxu0 0
      %472 = vmatmul.mubr.bf16.gmra.mxu0 %v387
      %v473 = vpop.f32.mrf.mxu0
      %v474 = vadd.f32 %v276, %v473
      %v475 = vpop.f32.mrf.mxu0
      %v476 = vpop.f32.mrf.mxu0
      %v477 = vadd.f32 %v276, %v476
      %v478 = vpop.f32.mrf.mxu0
      %479 = vmatprep.mubr.bf16.mxu0 0
      %480 = vmatmul.mubr.bf16.gmra.mxu0 %v390
      %v481 = vpop.f32.mrf.mxu0
      %v482 = vadd.f32 %v276, %v481
      %v483 = vpop.f32.mrf.mxu0
      %v484 = vpop.f32.mrf.mxu0
      %v485 = vadd.f32 %v276, %v484
      %v486 = vpop.f32.mrf.mxu0
      %487 = vmatprep.mubr.bf16.mxu0 0
      %488 = vmatmul.mubr.bf16.gmra.mxu0 %v393
      %v489 = vpop.f32.mrf.mxu0
      %v490 = vadd.f32 %v276, %v489
      %v491 = vpop.f32.mrf.mxu0
      %v492 = vpop.f32.mrf.mxu0
      %v493 = vadd.f32 %v276, %v492
      %v494 = vpop.f32.mrf.mxu0
      %495 = vmatprep.mubr.bf16.mxu0 0
      %496 = vmatmul.mubr.bf16.gmra.mxu0 %v396
      %v497 = vpop.f32.mrf.mxu0
      %v498 = vadd.f32 %v276, %v497
      %v499 = vpop.f32.mrf.mxu0
      %v500 = vpop.f32.mrf.mxu0
      %v501 = vadd.f32 %v276, %v500
      %v502 = vpop.f32.mrf.mxu0
      %503 = vmatprep.mubr.bf16.mxu0 0
      %504 = vmatmul.mubr.bf16.gmra.mxu0 %v399
      %v505 = vpop.f32.mrf.mxu0
      %v506 = vadd.f32 %v276, %v505
      %v507 = vpop.f32.mrf.mxu0
      %v508 = vpop.f32.mrf.mxu0
      %v509 = vadd.f32 %v276, %v508
      %v510 = vpop.f32.mrf.mxu0
      %511 = vmatprep.mubr.bf16.mxu0 0
      %512 = vmatmul.mubr.bf16.gmra.mxu0 %v402
      %v513 = vpop.f32.mrf.mxu0
      %v514 = vadd.f32 %v276, %v513
      %v515 = vpop.f32.mrf.mxu0
      %v516 = vpop.f32.mrf.mxu0
      %v517 = vadd.f32 %v276, %v516
      %v518 = vpop.f32.mrf.mxu0
      %519 = vmatprep.mubr.bf16.mxu0 0
      %520 = vmatmul.mubr.bf16.gmra.mxu0 %v405
      %v521 = vpop.f32.mrf.mxu0
      %v522 = vadd.f32 %v276, %v521
      %v523 = vpop.f32.mrf.mxu0
      %v524 = vpop.f32.mrf.mxu0
      %v525 = vadd.f32 %v276, %v524
      %v526 = vpop.f32.mrf.mxu0
      %527 = vmatprep.mubr.bf16.mxu0 0
      %528 = vmatmul.mubr.bf16.gmra.mxu0 %v408
      %v529 = vpop.f32.mrf.mxu0
      %v530 = vadd.f32 %v276, %v529
      %v531 = vpop.f32.mrf.mxu0
      %v532 = vpop.f32.mrf.mxu0
      %v533 = vadd.f32 %v276, %v532
      %v534 = vpop.f32.mrf.mxu0
      %535 = vmatprep.mubr.bf16.mxu0 0
      %536 = vmatmul.mubr.bf16.gmra.mxu0 %v411
      %v537 = vpop.f32.mrf.mxu0
      %v538 = vadd.f32 %v276, %v537
      %v539 = vpop.f32.mrf.mxu0
      %v540 = vpop.f32.mrf.mxu0
      %v541 = vadd.f32 %v276, %v540
      %v542 = vpop.f32.mrf.mxu0
      %543 = vmatprep.mubr.bf16.mxu0 0
      %544 = vmatmul.mubr.bf16.gmra.mxu0 %v414
      %v545 = vpop.f32.mrf.mxu0
      %v546 = vadd.f32 %v276, %v545
      %v547 = vpop.f32.mrf.mxu0
      %v548 = vpop.f32.mrf.mxu0
      %v549 = vadd.f32 %v276, %v548
      %v550 = vpop.f32.mrf.mxu0
      %551 = vmatprep.mubr.bf16.mxu0 0
      %552 = vmatmul.mubr.bf16.gmra.mxu0 %v417
      %v553 = vpop.f32.mrf.mxu0
      %v554 = vadd.f32 %v276, %v553
      %v555 = vpop.f32.mrf.mxu0
      %v556 = vpop.f32.mrf.mxu0
      %v557 = vadd.f32 %v276, %v556
      %v558 = vpop.f32.mrf.mxu0
      %559 = vmatprep.mubr.bf16.mxu0 0
      %560 = vmatmul.mubr.bf16.gmra.mxu0 %v420
      %v561 = vpop.f32.mrf.mxu0
      %v562 = vadd.f32 %v276, %v561
      %v563 = vpop.f32.mrf.mxu0
      %v564 = vpop.f32.mrf.mxu0
      %v565 = vadd.f32 %v276, %v564
      %v566 = vpop.f32.mrf.mxu0
      %567 = vmatprep.mubr.bf16.mxu0 0
      %568 = vmatmul.mubr.bf16.gmra.mxu0 %v423
      %v569 = vpop.f32.mrf.mxu0
      %v570 = vadd.f32 %v276, %v569
      %v571 = vpop.f32.mrf.mxu0
      %v572 = vpop.f32.mrf.mxu0
      %v573 = vadd.f32 %v276, %v572
      %v574 = vpop.f32.mrf.mxu0
      %575 = vmatprep.mubr.bf16.mxu0 0
      %576 = vmatmul.mubr.bf16.gmra.mxu0 %v426
      %v577 = vpop.f32.mrf.mxu0
      %v578 = vadd.f32 %v276, %v577
      %v579 = vpop.f32.mrf.mxu0
      %v580 = vpop.f32.mrf.mxu0
      %v581 = vadd.f32 %v276, %v580
      %v582 = vpop.f32.mrf.mxu0
      %583 = vmatprep.mubr.bf16.mxu0 0
      %584 = vmatmul.mubr.bf16.gmra.mxu0 %v429
      %v585 = vpop.f32.mrf.mxu0
      %v586 = vadd.f32 %v276, %v585
      %v587 = vpop.f32.mrf.mxu0
      %v588 = vpop.f32.mrf.mxu0
      %v589 = vadd.f32 %v276, %v588
      %v590 = vpop.f32.mrf.mxu0
      %591 = vdwg.mxu0
      %v592 = vtanh.pop %v466
      %v593 = vtanh.pop %v469
      %v594 = vtanh.pop %v474
      %v595 = vtanh.pop %v477
      %v596 = vtanh.pop %v482
      %v597 = vtanh.pop %v485
      %v598 = vtanh.pop %v490
      %v599 = vtanh.pop %v493
      %v600 = vtanh.pop %v498
      %v601 = vtanh.pop %v501
      %v602 = vtanh.pop %v506
      %v603 = vtanh.pop %v509
      %v604 = vtanh.pop %v514
      %v605 = vtanh.pop %v517
      %v606 = vtanh.pop %v522
      %v607 = vtanh.pop %v525
      %v608 = vtanh.pop %v530
      %v609 = vtanh.pop %v533
      %v610 = vtanh.pop %v538
      %v611 = vtanh.pop %v541
      %v612 = vtanh.pop %v546
      %v613 = vtanh.pop %v549
      %v614 = vtanh.pop %v554
      %v615 = vtanh.pop %v557
      %v616 = vtanh.pop %v562
      %v617 = vtanh.pop %v565
      %v618 = vtanh.pop %v570
      %v619 = vtanh.pop %v573
      %v620 = vtanh.pop %v578
      %v621 = vtanh.pop %v581
      %v622 = vtanh.pop %v586
      %v623 = vtanh.pop %v589
      %v624 = vpack.c.bf16 %v593, %v592
      %v625 = vpack.c.bf16 %v595, %v594
      %v626 = vpack.c.bf16 %v597, %v596
      %v627 = vpack.c.bf16 %v599, %v598
      %v628 = vpack.c.bf16 %v601, %v600
      %v629 = vpack.c.bf16 %v603, %v602
      %v630 = vpack.c.bf16 %v605, %v604
      %v631 = vpack.c.bf16 %v607, %v606
      %v632 = vpack.c.bf16 %v609, %v608
      %v633 = vpack.c.bf16 %v611, %v610
      %v634 = vpack.c.bf16 %v613, %v612
      %v635 = vpack.c.bf16 %v615, %v614
      %v636 = vpack.c.bf16 %v617, %v616
      %v637 = vpack.c.bf16 %v619, %v618
      %v638 = vpack.c.bf16 %v621, %v620
      %v639 = vpack.c.bf16 %v623, %v622
      %v656 = vunpack.c.l.b16 %v624
      %v657 = vunpack.c.h.b16 %v624
      %v658 = vunpack.c.l.b16 %v625
      %v659 = vunpack.c.h.b16 %v625
      %v660 = vunpack.c.l.b16 %v626
      %v661 = vunpack.c.h.b16 %v626
      %v662 = vunpack.c.l.b16 %v627
      %v663 = vunpack.c.h.b16 %v627
      %v664 = vunpack.c.l.b16 %v628
      %v665 = vunpack.c.h.b16 %v628
      %v666 = vunpack.c.l.b16 %v629
      %v667 = vunpack.c.h.b16 %v629
      %v668 = vunpack.c.l.b16 %v630
      %v669 = vunpack.c.h.b16 %v630
      %v670 = vunpack.c.l.b16 %v631
      %v671 = vunpack.c.h.b16 %v631
      %v672 = vunpack.c.l.b16 %v632
      %v673 = vunpack.c.h.b16 %v632
      %v674 = vunpack.c.l.b16 %v633
      %v675 = vunpack.c.h.b16 %v633
      %v676 = vunpack.c.l.b16 %v634
      %v677 = vunpack.c.h.b16 %v634
      %v678 = vunpack.c.l.b16 %v635
      %v679 = vunpack.c.h.b16 %v635
      %v680 = vunpack.c.l.b16 %v636
      %v681 = vunpack.c.h.b16 %v636
      %v682 = vunpack.c.l.b16 %v637
      %v683 = vunpack.c.h.b16 %v637
      %v684 = vunpack.c.l.b16 %v638
      %v685 = vunpack.c.h.b16 %v638
      %v686 = vunpack.c.l.b16 %v639
      %v687 = vunpack.c.h.b16 %v639
      %v688 = vpack.c.b16 %v656, %v656
      %v689 = vpack.c.b16 %v657, %v657
      %v690 = vpack.c.b16 %v658, %v658
      %v691 = vpack.c.b16 %v659, %v659
      %v692 = vpack.c.b16 %v660, %v660
      %v693 = vpack.c.b16 %v661, %v661
      %v694 = vpack.c.b16 %v662, %v662
      %v695 = vpack.c.b16 %v663, %v663
      %v696 = vpack.c.b16 %v664, %v664
      %v697 = vpack.c.b16 %v665, %v665
      %v698 = vpack.c.b16 %v666, %v666
      %v699 = vpack.c.b16 %v667, %v667
      %v700 = vpack.c.b16 %v668, %v668
      %v701 = vpack.c.b16 %v669, %v669
      %v702 = vpack.c.b16 %v670, %v670
      %v703 = vpack.c.b16 %v671, %v671
      %v704 = vpack.c.b16 %v672, %v672
      %v705 = vpack.c.b16 %v673, %v673
      %v706 = vpack.c.b16 %v674, %v674
      %v707 = vpack.c.b16 %v675, %v675
      %v708 = vpack.c.b16 %v676, %v676
      %v709 = vpack.c.b16 %v677, %v677
      %v710 = vpack.c.b16 %v678, %v678
      %v711 = vpack.c.b16 %v679, %v679
      %v712 = vpack.c.b16 %v680, %v680
      %v713 = vpack.c.b16 %v681, %v681
      %v714 = vpack.c.b16 %v682, %v682
      %v715 = vpack.c.b16 %v683, %v683
      %v716 = vpack.c.b16 %v684, %v684
      %v717 = vpack.c.b16 %v685, %v685
      %v718 = vpack.c.b16 %v686, %v686
      %v719 = vpack.c.b16 %v687, %v687
      %752 = vst [vmem:[%s228] sm:$0xf] %v688
      %753 = vst [vmem:[%s228 + $0x4] sm:$0xf] %v689
      %754 = vst [vmem:[%s228 + $0x8] sm:$0xf] %v690
      %755 = vst [vmem:[%s228 + $0xc] sm:$0xf] %v691
      %756 = vst [vmem:[%s228 + $0x10] sm:$0xf] %v692
      %757 = vst [vmem:[%s228 + $0x14] sm:$0xf] %v693
      %758 = vst [vmem:[%s228 + $0x18] sm:$0xf] %v694
      %759 = vst [vmem:[%s228 + $0x1c] sm:$0xf] %v695
      %760 = vst [vmem:[%s228 + $0x20] sm:$0xf] %v696
      %761 = vst [vmem:[%s228 + $0x24] sm:$0xf] %v697
      %762 = vst [vmem:[%s228 + $0x28] sm:$0xf] %v698
      %763 = vst [vmem:[%s228 + $0x2c] sm:$0xf] %v699
      %764 = vst [vmem:[%s228 + $0x30] sm:$0xf] %v700
      %765 = vst [vmem:[%s228 + $0x34] sm:$0xf] %v701
      %766 = vst [vmem:[%s228 + $0x38] sm:$0xf] %v702
      %767 = vst [vmem:[%s228 + $0x3c] sm:$0xf] %v703
      %768 = vst [vmem:[%s228 + $0x40] sm:$0xf] %v704
      %769 = vst [vmem:[%s228 + $0x44] sm:$0xf] %v705
      %770 = vst [vmem:[%s228 + $0x48] sm:$0xf] %v706
      %771 = vst [vmem:[%s228 + $0x4c] sm:$0xf] %v707
      %772 = vst [vmem:[%s228 + $0x50] sm:$0xf] %v708
      %773 = vst [vmem:[%s228 + $0x54] sm:$0xf] %v709
      %774 = vst [vmem:[%s228 + $0x58] sm:$0xf] %v710
      %775 = vst [vmem:[%s228 + $0x5c] sm:$0xf] %v711
      %776 = vst [vmem:[%s228 + $0x60] sm:$0xf] %v712
      %777 = vst [vmem:[%s228 + $0x64] sm:$0xf] %v713
      %778 = vst [vmem:[%s228 + $0x68] sm:$0xf] %v714
      %779 = vst [vmem:[%s228 + $0x6c] sm:$0xf] %v715
      %780 = vst [vmem:[%s228 + $0x70] sm:$0xf] %v716
      %781 = vst [vmem:[%s228 + $0x74] sm:$0xf] %v717
      %782 = vst [vmem:[%s228 + $0x78] sm:$0xf] %v718
      %783 = vst [vmem:[%s228 + $0x7c] sm:$0xf] %v719
      %s784 = smul.u32 32, %s19
      %p785 = scmp.lt.s32.totalorder %s18, 3
      %s786 = scalar_select %p785, %s18, 3
      %p787 = scmp.lt.s32.totalorder %s784, 63
      %s788 = scalar_select %p787, %s784, 63
      %s789 = smul.addr %s786, 64
      %s790 = sadd.s32 %s788, %s789
      %s791 = smul.addr %s790, 4
      %s792 = scalar_lea.vmem %s3, %s791
      // Predicated region
      $region33: #{vae_forward.15} parent=31 // pred_check
        %p793 = pneg %p121
      $region34: #{vae_forward.15} parent=31 // pred_check_branch
        %795 = sbr.rel (%p793) target = $region36
      $region35: #{vae_forward.15} parent=31 // pred_region
        %s796 = smul.u32 32, %s19
      $region36: #{vae_forward.15} parent=31 // pred_fallthru
        _
    $region32: #{vae_forward.15} parent=5 // pred_fallthru
      _
    %p797 = scmp.le.s32.totalorder 2, %s9
    // Predicated region
    $region37: #{vae_forward.15} parent=5 // pred_check
      %p798 = pneg %p797
    $region38: #{vae_forward.15} parent=5 // pred_check_branch
      %800 = sbr.rel (%p798) target = $region40
    $region39: #{vae_forward.15} parent=5 // pred_region
      %s801 = ssub.s32 %s9, 2
      // Predicated region
      $region41: #{vae_forward.15} parent=39 // pred_check
        %p802 = pneg %p127
      $region42: #{vae_forward.15} parent=39 // pred_check_branch
        %804 = sbr.rel (%p802) target = $region44
      $region43: #{vae_forward.15} parent=39 // pred_region
        %s805 = smul.u32 32, %s21
        %p806 = scmp.lt.s32.totalorder %s20, 3
        %s807 = scalar_select %p806, %s20, 3
        %p808 = scmp.lt.s32.totalorder %s805, 63
        %s809 = scalar_select %p808, %s805, 63
        %s810 = smul.addr %s807, 64
        %s811 = sadd.s32 %s809, %s810
        %s812 = smul.addr %s811, 4
        %s813 = scalar_lea.vmem %s3, %s812
      $region44: #{vae_forward.15} parent=39 // pred_fallthru
        _
    $region40: #{vae_forward.15} parent=5 // pred_fallthru
      _
  $region6: #{vae_forward.15} parent=0 // loop_footer
    %s13 = sadd.s32 1, %s9
  $region7: #{vae_forward.15} parent=0 // loop_footer_branch
    %8 = sbr.rel target = $region3
  $region8: #{vae_forward.15} parent=0 // loop_exit
    _

</llo_original>
